<compile_context>
chip_gen: v7x
topology: tpu7x:2x2x1
jax: 0.10.0
libtpu: 0.0.40
codegen_flags: <defaults>
</compile_context>

<pallas_src>
import math

import jax
import jax.numpy as jnp
from jax import lax
from jax.experimental import pallas as pl
from jax.experimental.pallas import tpu as pltpu


def _vmem_limit_bytes():
    """Generation-aware scoped-VMEM limit (leave headroom below physical)."""
    cap = 0
    try:
        info = pltpu.get_tpu_info()
        cap = int(getattr(info, "vmem_capacity_bytes", 0) or 0)
    except Exception:
        cap = 0
    if cap <= 0:
        return 32 * 1024 * 1024          # conservative fallback
    # ~50 MiB on v7x (64 MiB physical), capped at ~100 MiB on v5e/v6e (128).
    return min(int(cap * 0.78), 100 * 1024 * 1024)


# ----------------------------------------------------------------------------
# Pallas kernel 1: fused bidirectional LSTM layer (both directions per step).
# Grid iterates over blocks of block_t timesteps; recurrent state for both
# directions lives in VMEM scratch across grid steps.  The forward direction
# walks blocks 0..nT-1; the backward direction walks blocks nT-1..0 (via the
# reversed index_maps) and reversed order inside the block.
# ----------------------------------------------------------------------------
def make_bilstm_kernel(block_t, hidden):
    H = hidden

    def kernel(x_fw_ref, x_bw_ref, len_ref,
               wih_fw_ref, wih_bw_ref, b_fw_ref, b_bw_ref,
               whh_fw_ref, whh_bw_ref,
               out_fw_ref, out_bw_ref,
               h_fw, c_fw, h_bw, c_bw):
        # x_*_ref : (block_t, B, Din) f32 input block (fw order / bw order)
        # len_ref : (B, 1) int32 sequence lengths
        # wih_*   : (Din, 4H) bf16, whh_*: (H, 4H) bf16, b_*: (1, 4H) f32
        # out_*   : (block_t, B, H) f32
        # h/c scratch: (B, H) f32, carried across grid steps.
        @pl.when(pl.program_id(0) == 0)
        def _():
            h_fw[...] = jnp.zeros_like(h_fw)
            c_fw[...] = jnp.zeros_like(c_fw)
            h_bw[...] = jnp.zeros_like(h_bw)
            c_bw[...] = jnp.zeros_like(c_bw)

        lengths = len_ref[...]                                  # (B, 1) int32
        t0_fw = pl.program_id(0) * block_t
        t0_bw = (pl.num_programs(0) - 1 - pl.program_id(0)) * block_t

        def lstm_cell(x_t, h_ref, c_ref, wih_ref, whh_ref, b_ref, valid):
            # bf16 MXU operands, f32 accumulation; elementwise math in f32.
            gates = (
                jnp.dot(x_t.astype(jnp.bfloat16), wih_ref[...],
                        preferred_element_type=jnp.float32)
                + jnp.dot(h_ref[...].astype(jnp.bfloat16), whh_ref[...],
                          preferred_element_type=jnp.float32)
                + b_ref[...]
            )                                                   # (B, 4H): i,f,g,o
            # Grouped activations: one sigmoid over contiguous (i, f) columns.
            s_if = jax.nn.sigmoid(gates[:, 0:2 * H])
            i_g = s_if[:, 0:H]
            f_g = s_if[:, H:2 * H]
            g_g = jnp.tanh(gates[:, 2 * H:3 * H])
            o_g = jax.nn.sigmoid(gates[:, 3 * H:4 * H])
            c_new = f_g * c_ref[...] + i_g * g_g
            h_new = o_g * jnp.tanh(c_new)
            # Packed-sequence semantics: freeze state / zero output at padding.
            c_ref[...] = jnp.where(valid, c_new, c_ref[...])
            h_ref[...] = jnp.where(valid, h_new, h_ref[...])
            return jnp.where(valid, h_new, 0.0)

        def body(i, carry):
            # ---- forward direction, local step i ----
            t_f = i
            valid_f = (t0_fw + t_f) < lengths                   # (B, 1) bool
            out_fw_ref[t_f] = lstm_cell(
                x_fw_ref[t_f], h_fw, c_fw, wih_fw_ref, whh_fw_ref,
                b_fw_ref, valid_f).astype(out_fw_ref.dtype)

            # ---- backward direction, reversed local step ----
            t_b = block_t - 1 - i
            valid_b = (t0_bw + t_b) < lengths                   # (B, 1) bool
            out_bw_ref[t_b] = lstm_cell(
                x_bw_ref[t_b], h_bw, c_bw, wih_bw_ref, whh_bw_ref,
                b_bw_ref, valid_b).astype(out_bw_ref.dtype)
            return carry

        # Partial unroll: LLO scheduling visibility without vreg-spill cliff.
        lax.fori_loop(0, block_t, body, 0, unroll=max(1, min(block_t, 8)))

    return kernel


def run_bilstm_layer(x_tm, lengths, wih_fw, wih_bw, b_fw, b_bw,
                     whh_fw, whh_bw, *, block_t, vmem_limit):
    # x_tm: (Tp, B, Din) f32 time-major inputs; lengths: (B, 1) int32.
    # Returns (fw, bw): each (Tp, B, H) f32.
    Tp, B, Din = x_tm.shape
    H = whh_fw.shape[0]
    G = 4 * H
    assert Tp % block_t == 0
    nT = Tp // block_t

    fwd_map = lambda t: (t, 0, 0)
    rev_map = lambda t: (nT - 1 - t, 0, 0)
    const2 = lambda t: (0, 0)

    # bf16 weight operands for the MXU (f32 accumulation inside the kernel).
    wih_fw_b = wih_fw.astype(jnp.bfloat16)
    wih_bw_b = wih_bw.astype(jnp.bfloat16)
    whh_fw_b = whh_fw.astype(jnp.bfloat16)
    whh_bw_b = whh_bw.astype(jnp.bfloat16)

    kernel = make_bilstm_kernel(block_t, H)
    fw, bw = pl.pallas_call(
        kernel,
        out_shape=(jax.ShapeDtypeStruct((Tp, B, H), jnp.float32),
                   jax.ShapeDtypeStruct((Tp, B, H), jnp.float32)),
        grid_spec=pltpu.PrefetchScalarGridSpec(
            num_scalar_prefetch=0,
            grid=(nT,),
            in_specs=[
                pl.BlockSpec((block_t, B, Din), fwd_map),     # x, fw order
                pl.BlockSpec((block_t, B, Din), rev_map),     # x, bw order
                pl.BlockSpec((B, 1), const2),                 # lengths
                pl.BlockSpec((Din, G), const2),               # W_ih fw (bf16)
                pl.BlockSpec((Din, G), const2),               # W_ih bw (bf16)
                pl.BlockSpec((1, G), const2),                 # bias fw
                pl.BlockSpec((1, G), const2),                 # bias bw
                pl.BlockSpec((H, G), const2),                 # W_hh fw (bf16)
                pl.BlockSpec((H, G), const2),                 # W_hh bw (bf16)
            ],
            out_specs=[
                pl.BlockSpec((block_t, B, H), fwd_map),       # fw outputs
                pl.BlockSpec((block_t, B, H), rev_map),       # bw outputs
            ],
            scratch_shapes=[
                pltpu.VMEM((B, H), jnp.float32),              # h_fw
                pltpu.VMEM((B, H), jnp.float32),              # c_fw
                pltpu.VMEM((B, H), jnp.float32),              # h_bw
                pltpu.VMEM((B, H), jnp.float32),              # c_bw
            ],
        ),
        compiler_params=pltpu.CompilerParams(
            dimension_semantics=("arbitrary",),               # serial recurrence
            vmem_limit_bytes=vmem_limit,
        ),
    )(x_tm, x_tm, lengths, wih_fw_b, wih_bw_b, b_fw, b_bw, whh_fw_b, whh_bw_b)
    return fw, bw


# ----------------------------------------------------------------------------
# Pallas kernel 2: fw+bw sum, masked self-attention, time pooling, classifier.
# Time-major inputs, tiled over batch with a VMEM-budget-derived tile.
# ----------------------------------------------------------------------------
def attn_pool_cls_kernel(fw_ref, bw_ref, len_ref, watt_ref, batt_ref,
                         wcls_ref, bcls_ref, out_ref):
    # fw/bw: (Tp, TB, H) f32, len: (TB, 1) int32, watt: (1, H), batt: (1, 1),
    # wcls: (H, O), bcls: (1, O), out: (TB, O).  All math in f32.
    Tp, TB, _ = fw_ref.shape
    x = fw_ref[...] + bw_ref[...]                                   # (Tp, TB, H)
    lengths = len_ref[...]                                          # (TB, 1) i32
    t_idx = lax.broadcasted_iota(jnp.int32, (Tp, TB, 1), 0)
    valid = t_idx < lengths                                         # (Tp, TB, 1)

    # TODO(synk): energy could be offloaded to the MXU via a (Tp*TB, H)x(H, 1)
    # matmul; kept as VPU multiply + lane reduce for lowering robustness.
    energy = jnp.sum(x * watt_ref[...], axis=-1, keepdims=True)     # (Tp, TB, 1)
    energy = energy + batt_ref[...]
    energy = jnp.where(valid, energy, -1e30)                        # f32 mask
    e = jnp.exp(energy - jnp.max(energy, axis=0, keepdims=True))
    e = jnp.where(valid, e, 0.0)
    wts = e / jnp.sum(e, axis=0, keepdims=True)                     # softmax(T)
    pooled = jnp.sum(x * wts, axis=0)                               # (TB, H)

    lengths_f = jnp.maximum(lengths.astype(jnp.float32), 1.0)
    avg = pooled / lengths_f                                        # length norm
    logits = jnp.dot(avg, wcls_ref[...],
                     preferred_element_type=jnp.float32) + bcls_ref[...]
    out_ref[...] = logits.astype(out_ref.dtype)


def _pick_batch_tile(B, Tp, H, vmem_limit):
    """Largest divisor of B whose fw+bw (double-buffered) blocks fit VMEM."""
    budget = vmem_limit // 2                    # headroom for weights/scratch
    for tb in range(B, 0, -1):
        if B % tb != 0:
            continue
        blk_bytes = 2 * 2 * Tp * tb * H * 4     # fw+bw inputs, double-buffered
        if blk_bytes <= budget:
            return tb
    # TODO(synk): if even TB=1 overflows (huge Tp*H), switch to time-tiled
    # two-pass softmax with pl.when accumulators.
    return 1


def attn_pool_classify(fw_tm, bw_tm, lengths, w_att, b_att, w_cls_t, b_cls,
                       *, vmem_limit):
    Tp, B, H = fw_tm.shape
    O = w_cls_t.shape[1]
    TB = _pick_batch_tile(B, Tp, H, vmem_limit)

    return pl.pallas_call(
        attn_pool_cls_kernel,
        out_shape=jax.ShapeDtypeStruct((B, O), jnp.float32),
        grid_spec=pltpu.PrefetchScalarGridSpec(
            num_scalar_prefetch=0,
            grid=(B // TB,),
            in_specs=[
                pl.BlockSpec((Tp, TB, H), lambda b: (0, b, 0)),
                pl.BlockSpec((Tp, TB, H), lambda b: (0, b, 0)),
                pl.BlockSpec((TB, 1), lambda b: (b, 0)),
                pl.BlockSpec((1, H), lambda b: (0, 0)),
                pl.BlockSpec((1, 1), lambda b: (0, 0)),
                pl.BlockSpec((H, O), lambda b: (0, 0)),
                pl.BlockSpec((1, O), lambda b: (0, 0)),
            ],
            out_specs=pl.BlockSpec((TB, O), lambda b: (b, 0)),
        ),
        compiler_params=pltpu.CompilerParams(
            dimension_semantics=("parallel",),
            vmem_limit_bytes=vmem_limit,
        ),
    )(fw_tm, bw_tm, lengths, w_att, b_att, w_cls_t, b_cls)


# ----------------------------------------------------------------------------
# Parameters (PyTorch-style init), plain-JAX glue.
# ----------------------------------------------------------------------------
def init_params(key, input_dim, hidden_dim, num_layers, output_dim):
    params = {"layers": []}
    k_lstm = 1.0 / math.sqrt(hidden_dim)
    keys = jax.random.split(key, num_layers * 8 + 4)
    ki = 0

    def u(k, shape, bound):
        return jax.random.uniform(k, shape, jnp.float32, -bound, bound)

    for layer in range(num_layers):
        d_in = input_dim if layer == 0 else 2 * hidden_dim
        lp = {}
        for tag in ("fw", "bw"):
            w_ih = u(keys[ki], (4 * hidden_dim, d_in), k_lstm); ki += 1
            w_hh = u(keys[ki], (4 * hidden_dim, hidden_dim), k_lstm); ki += 1
            b_ih = u(keys[ki], (4 * hidden_dim,), k_lstm); ki += 1
            b_hh = u(keys[ki], (4 * hidden_dim,), k_lstm); ki += 1
            lp["wih_" + tag] = w_ih.T                       # (Din, 4H)
            lp["whh_" + tag] = w_hh.T                       # (H, 4H)
            lp["b_" + tag] = (b_ih + b_hh)[None, :]         # (1, 4H)
        params["layers"].append(lp)

    k_lin = 1.0 / math.sqrt(hidden_dim)
    params["w_att"] = u(keys[ki], (1, hidden_dim), k_lin); ki += 1
    params["b_att"] = u(keys[ki], (1, 1), k_lin); ki += 1
    params["w_cls_t"] = u(keys[ki], (hidden_dim, output_dim), k_lin); ki += 1
    params["b_cls"] = u(keys[ki], (1, output_dim), k_lin); ki += 1
    return params


def bilstm_cls_forward(params, sen_batch, sen_lengths, block_t=16):
    # sen_batch: (B, T, input_dim) float32 (batch-first, like PyTorch);
    # sen_lengths: (B,) int32.
    B, T, _ = sen_batch.shape
    lengths = sen_lengths.astype(jnp.int32)[:, None]                # (B, 1)

    tt = min(block_t, T)
    Tp = int(pl.cdiv(T, tt)) * tt
    vmem_limit = _vmem_limit_bytes()

    # Single layout conversion to time-major; pad time to a multiple of tt.
    x_tm = jnp.transpose(sen_batch, (1, 0, 2)).astype(jnp.float32)  # (T, B, Din)
    if Tp != T:
        x_tm = jnp.pad(x_tm, ((0, Tp - T), (0, 0), (0, 0)))

    layer_in = x_tm
    n_layers = len(params["layers"])
    fw_tm = bw_tm = None
    for li, lp in enumerate(params["layers"]):
        fw_tm, bw_tm = run_bilstm_layer(
            layer_in, lengths,
            lp["wih_fw"], lp["wih_bw"], lp["b_fw"], lp["b_bw"],
            lp["whh_fw"], lp["whh_bw"],
            block_t=tt, vmem_limit=vmem_limit)
        if li + 1 < n_layers:
            # Stay time-major; only interior layers need the concat.
            layer_in = jnp.concatenate([fw_tm, bw_tm], axis=-1)     # (Tp, B, 2H)
        # TODO(synk): inter-layer dropout (training only) omitted.

    logits = attn_pool_classify(fw_tm, bw_tm, lengths,
                                params["w_att"], params["b_att"],
                                params["w_cls_t"], params["b_cls"],
                                vmem_limit=vmem_limit)
    return logits


if __name__ == "__main__":
    # Small shapes consistent with the module's forward.
    B, T = 2, 8
    input_dim, hidden_dim, num_layers, output_dim = 16, 32, 2, 3

    key = jax.random.PRNGKey(0)
    k_par, k_x = jax.random.split(key)
    params = init_params(k_par, input_dim, hidden_dim, num_layers, output_dim)

    sen_batch = jax.random.normal(k_x, (B, T, input_dim), jnp.float32)
    sen_lengths = jnp.array([T, 5], dtype=jnp.int32)   # max length == T

    fwd = jax.jit(bilstm_cls_forward)
    out = jax.block_until_ready(fwd(params, sen_batch, sen_lengths))
    assert out.shape == (B, output_dim)
    assert bool(jnp.all(jnp.isfinite(out)))
    print("KERNEL_OK")
</pallas_src>

<mosaic_0001>
module attributes {stable_mosaic.version = 11 : i64} {
  func.func @attn_pool_cls_kernel(%arg0: i32, %arg1: memref<8x2x32xf32, #tpu.memory_space<vmem>>, %arg2: memref<8x2x32xf32, #tpu.memory_space<vmem>>, %arg3: memref<2x1xi32, #tpu.memory_space<vmem>>, %arg4: memref<1x32xf32, #tpu.memory_space<vmem>>, %arg5: memref<1x1xf32, #tpu.memory_space<vmem>>, %arg6: memref<32x3xf32, #tpu.memory_space<vmem>>, %arg7: memref<1x3xf32, #tpu.memory_space<vmem>>, %arg8: memref<2x3xf32, #tpu.memory_space<vmem>>) attributes {dimension_semantics = [#tpu.dimension_semantics<parallel>], iteration_bounds = array<i64: 1>, scalar_prefetch = 0 : i64, scratch_operands = 0 : i64, tpu.core_type = #tpu.core_type<tc>, window_params = [{transform_indices = @transform_0, window_bounds = array<i64: 8, 2, 32>}, {transform_indices = @transform_1, window_bounds = array<i64: 8, 2, 32>}, {transform_indices = @transform_2, window_bounds = array<i64: 2, 1>}, {pipeline_mode = #tpu.pipeline_mode<synchronous>, transform_indices = @transform_3, window_bounds = array<i64: 1, 32>}, {pipeline_mode = #tpu.pipeline_mode<synchronous>, transform_indices = @transform_4, window_bounds = array<i64: 1, 1>}, {pipeline_mode = #tpu.pipeline_mode<synchronous>, transform_indices = @transform_5, window_bounds = array<i64: 32, 3>}, {pipeline_mode = #tpu.pipeline_mode<synchronous>, transform_indices = @transform_6, window_bounds = array<i64: 1, 3>}, {transform_indices = @transform_7, window_bounds = array<i64: 2, 3>}]} {
    %c0 = arith.constant 0 : index
    %c0_0 = arith.constant 0 : index
    %c0_1 = arith.constant 0 : index
    %0 = vector.load %arg1[%c0, %c0_0, %c0_1] : memref<8x2x32xf32, #tpu.memory_space<vmem>>, vector<8x2x32xf32>
    %c0_2 = arith.constant 0 : index
    %c0_3 = arith.constant 0 : index
    %c0_4 = arith.constant 0 : index
    %1 = vector.load %arg2[%c0_2, %c0_3, %c0_4] : memref<8x2x32xf32, #tpu.memory_space<vmem>>, vector<8x2x32xf32>
    %2 = arith.addf %0, %1 : vector<8x2x32xf32>
    %c0_5 = arith.constant 0 : index
    %c0_6 = arith.constant 0 : index
    %3 = vector.load %arg3[%c0_5, %c0_6] : memref<2x1xi32, #tpu.memory_space<vmem>>, vector<2x1xi32>
    %4 = tpu.iota {dimensions = array<i32: 0>} : vector<8x2x1xi32>
    %5 = vector.shape_cast %3 : vector<2x1xi32> to vector<1x2x1xi32>
    %6 = vector.broadcast %5 : vector<1x2x1xi32> to vector<8x2x1xi32>
    %7 = arith.cmpi slt, %4, %6 : vector<8x2x1xi32>
    %c0_7 = arith.constant 0 : index
    %c0_8 = arith.constant 0 : index
    %8 = vector.load %arg4[%c0_7, %c0_8] : memref<1x32xf32, #tpu.memory_space<vmem>>, vector<1x32xf32>
    %9 = vector.shape_cast %8 : vector<1x32xf32> to vector<1x1x32xf32>
    %10 = vector.broadcast %9 : vector<1x1x32xf32> to vector<8x2x32xf32>
    %11 = arith.mulf %2, %10 : vector<8x2x32xf32>
    %cst = arith.constant dense<0.000000e+00> : vector<8x2xf32>
    %12 = vector.multi_reduction <add>, %11, %cst [2] : vector<8x2x32xf32> to vector<8x2xf32>
    %13 = vector.shape_cast %12 : vector<8x2xf32> to vector<8x2x1xf32>
    %c0_9 = arith.constant 0 : index
    %c0_10 = arith.constant 0 : index
    %14 = vector.load %arg5[%c0_9, %c0_10] : memref<1x1xf32, #tpu.memory_space<vmem>>, vector<1x1xf32>
    %15 = vector.shape_cast %14 : vector<1x1xf32> to vector<1x1x1xf32>
    %16 = vector.broadcast %15 : vector<1x1x1xf32> to vector<8x2x1xf32>
    %17 = arith.addf %13, %16 : vector<8x2x1xf32>
    %cst_11 = arith.constant -1.000000e+30 : f32
    %18 = vector.broadcast %cst_11 : f32 to vector<8x2x1xf32>
    %19 = arith.select %7, %17, %18 : vector<8x2x1xi1>, vector<8x2x1xf32>
    %cst_12 = arith.constant dense<0xFF800000> : vector<2x1xf32>
    %20 = vector.multi_reduction <maximumf>, %19, %cst_12 [0] : vector<8x2x1xf32> to vector<2x1xf32>
    %21 = vector.shape_cast %20 : vector<2x1xf32> to vector<1x2x1xf32>
    %22 = vector.broadcast %21 : vector<1x2x1xf32> to vector<8x2x1xf32>
    %23 = arith.subf %19, %22 : vector<8x2x1xf32>
    %24 = math.exp %23 : vector<8x2x1xf32>
    %cst_13 = arith.constant 0.000000e+00 : f32
    %25 = vector.broadcast %cst_13 : f32 to vector<8x2x1xf32>
    %26 = arith.select %7, %24, %25 : vector<8x2x1xi1>, vector<8x2x1xf32>
    %cst_14 = arith.constant dense<0.000000e+00> : vector<2x1xf32>
    %27 = vector.multi_reduction <add>, %26, %cst_14 [0] : vector<8x2x1xf32> to vector<2x1xf32>
    %28 = vector.shape_cast %27 : vector<2x1xf32> to vector<1x2x1xf32>
    %29 = vector.broadcast %28 : vector<1x2x1xf32> to vector<8x2x1xf32>
    %30 = arith.divf %26, %29 : vector<8x2x1xf32>
    %31 = vector.broadcast %30 : vector<8x2x1xf32> to vector<8x2x32xf32>
    %32 = arith.mulf %2, %31 : vector<8x2x32xf32>
    %cst_15 = arith.constant dense<0.000000e+00> : vector<2x32xf32>
    %33 = vector.multi_reduction <add>, %32, %cst_15 [0] : vector<8x2x32xf32> to vector<2x32xf32>
    %34 = arith.sitofp %3 : vector<2x1xi32> to vector<2x1xf32>
    %cst_16 = arith.constant 1.000000e+00 : f32
    %35 = vector.broadcast %cst_16 : f32 to vector<2x1xf32>
    %36 = arith.maximumf %34, %35 : vector<2x1xf32>
    %37 = vector.broadcast %36 : vector<2x1xf32> to vector<2x32xf32>
    %38 = arith.divf %33, %37 : vector<2x32xf32>
    %c0_17 = arith.constant 0 : index
    %c0_18 = arith.constant 0 : index
    %39 = vector.load %arg6[%c0_17, %c0_18] : memref<32x3xf32, #tpu.memory_space<vmem>>, vector<32x3xf32>
    %cst_19 = arith.constant dense<0.000000e+00> : vector<2x3xf32>
    %40 = tpu.matmul %38, %39, %cst_19 {dimension_numbers = #tpu.dot_dimension_numbers<[1], [0], [0], [1], [0, 0, 1, 1], [], []>} : vector<2x32xf32>, vector<32x3xf32>, vector<2x3xf32> -> vector<2x3xf32>
    %c0_20 = arith.constant 0 : index
    %c0_21 = arith.constant 0 : index
    %41 = vector.load %arg7[%c0_20, %c0_21] : memref<1x3xf32, #tpu.memory_space<vmem>>, vector<1x3xf32>
    %42 = vector.broadcast %41 : vector<1x3xf32> to vector<2x3xf32>
    %43 = arith.addf %40, %42 : vector<2x3xf32>
    %c0_22 = arith.constant 0 : index
    %c0_23 = arith.constant 0 : index
    %44 = vector.load %arg8[%c0_22, %c0_23] : memref<2x3xf32, #tpu.memory_space<vmem>>, vector<2x3xf32>
    tpu.vector_store %arg8[%c0_22, %c0_23], %43 {strides = array<i32>} : memref<2x3xf32, #tpu.memory_space<vmem>>, vector<2x3xf32>,
    return
  }
  func.func @transform_0(%arg0: i32) -> (i32, i32, i32) {
    %c0_i32 = arith.constant 0 : i32
    %c0_i32_0 = arith.constant 0 : i32
    %c0_i32_1 = arith.constant 0 : i32
    return %c0_i32, %arg0, %c0_i32_0 : i32, i32, i32
  }
  func.func @transform_1(%arg0: i32) -> (i32, i32, i32) {
    %c0_i32 = arith.constant 0 : i32
    %c0_i32_0 = arith.constant 0 : i32
    %c0_i32_1 = arith.constant 0 : i32
    return %c0_i32, %arg0, %c0_i32_0 : i32, i32, i32
  }
  func.func @transform_2(%arg0: i32) -> (i32, i32) {
    %c0_i32 = arith.constant 0 : i32
    %c0_i32_0 = arith.constant 0 : i32
    return %arg0, %c0_i32 : i32, i32
  }
  func.func @transform_3(%arg0: i32) -> (i32, i32) {
    %c0_i32 = arith.constant 0 : i32
    %c0_i32_0 = arith.constant 0 : i32
    %c0_i32_1 = arith.constant 0 : i32
    return %c0_i32, %c0_i32_0 : i32, i32
  }
  func.func @transform_4(%arg0: i32) -> (i32, i32) {
    %c0_i32 = arith.constant 0 : i32
    %c0_i32_0 = arith.constant 0 : i32
    %c0_i32_1 = arith.constant 0 : i32
    return %c0_i32, %c0_i32_0 : i32, i32
  }
  func.func @transform_5(%arg0: i32) -> (i32, i32) {
    %c0_i32 = arith.constant 0 : i32
    %c0_i32_0 = arith.constant 0 : i32
    %c0_i32_1 = arith.constant 0 : i32
    return %c0_i32, %c0_i32_0 : i32, i32
  }
  func.func @transform_6(%arg0: i32) -> (i32, i32) {
    %c0_i32 = arith.constant 0 : i32
    %c0_i32_0 = arith.constant 0 : i32
    %c0_i32_1 = arith.constant 0 : i32
    return %c0_i32, %c0_i32_0 : i32, i32
  }
  func.func @transform_7(%arg0: i32) -> (i32, i32) {
    %c0_i32 = arith.constant 0 : i32
    %c0_i32_0 = arith.constant 0 : i32
    return %arg0, %c0_i32 : i32, i32
  }
}

module attributes {stable_mosaic.version = 11 : i64} {
  func.func @kernel(%arg0: i32, %arg1: memref<8x2x16xf32, #tpu.memory_space<vmem>>, %arg2: memref<8x2x16xf32, #tpu.memory_space<vmem>>, %arg3: memref<2x1xi32, #tpu.memory_space<vmem>>, %arg4: memref<16x128xbf16, #tpu.memory_space<vmem>>, %arg5: memref<16x128xbf16, #tpu.memory_space<vmem>>, %arg6: memref<1x128xf32, #tpu.memory_space<vmem>>, %arg7: memref<1x128xf32, #tpu.memory_space<vmem>>, %arg8: memref<32x128xbf16, #tpu.memory_space<vmem>>, %arg9: memref<32x128xbf16, #tpu.memory_space<vmem>>, %arg10: memref<8x2x32xf32, #tpu.memory_space<vmem>>, %arg11: memref<8x2x32xf32, #tpu.memory_space<vmem>>, %arg12: memref<2x32xf32, #tpu.memory_space<vmem>>, %arg13: memref<2x32xf32, #tpu.memory_space<vmem>>, %arg14: memref<2x32xf32, #tpu.memory_space<vmem>>, %arg15: memref<2x32xf32, #tpu.memory_space<vmem>>) attributes {dimension_semantics = [#tpu.dimension_semantics<arbitrary>], iteration_bounds = array<i64: 1>, scalar_prefetch = 0 : i64, scratch_operands = 4 : i64, tpu.core_type = #tpu.core_type<tc>, window_params = [{transform_indices = @transform_0, window_bounds = array<i64: 8, 2, 16>}, {transform_indices = @transform_1, window_bounds = array<i64: 8, 2, 16>}, {pipeline_mode = #tpu.pipeline_mode<synchronous>, transform_indices = @transform_2, window_bounds = array<i64: 2, 1>}, {pipeline_mode = #tpu.pipeline_mode<synchronous>, transform_indices = @transform_3, window_bounds = array<i64: 16, 128>}, {pipeline_mode = #tpu.pipeline_mode<synchronous>, transform_indices = @transform_4, window_bounds = array<i64: 16, 128>}, {pipeline_mode = #tpu.pipeline_mode<synchronous>, transform_indices = @transform_5, window_bounds = array<i64: 1, 128>}, {pipeline_mode = #tpu.pipeline_mode<synchronous>, transform_indices = @transform_6, window_bounds = array<i64: 1, 128>}, {pipeline_mode = #tpu.pipeline_mode<synchronous>, transform_indices = @transform_7, window_bounds = array<i64: 32, 128>}, {pipeline_mode = #tpu.pipeline_mode<synchronous>, transform_indices = @transform_8, window_bounds = array<i64: 32, 128>}, {transform_indices = @transform_9, window_bounds = array<i64: 8, 2, 32>}, {transform_indices = @transform_10, window_bounds = array<i64: 8, 2, 32>}]} {
    %c0_i32 = arith.constant 0 : i32
    %0 = arith.cmpi eq, %arg0, %c0_i32 : i32
    %1 = arith.extui %0 : i1 to i32
    %c0_i32_0 = arith.constant 0 : i32
    %2 = arith.cmpi ne, %1, %c0_i32_0 : i32
    scf.if %2 {
      %cst_445 = arith.constant 0.000000e+00 : f32
      %927 = vector.broadcast %cst_445 : f32 to vector<2x32xf32>
      %c0_446 = arith.constant 0 : index
      %c0_447 = arith.constant 0 : index
      %928 = vector.load %arg12[%c0_446, %c0_447] : memref<2x32xf32, #tpu.memory_space<vmem>>, vector<2x32xf32>
      tpu.vector_store %arg12[%c0_446, %c0_447], %927 {strides = array<i32>} : memref<2x32xf32, #tpu.memory_space<vmem>>, vector<2x32xf32>,
      %cst_448 = arith.constant 0.000000e+00 : f32
      %929 = vector.broadcast %cst_448 : f32 to vector<2x32xf32>
      %c0_449 = arith.constant 0 : index
      %c0_450 = arith.constant 0 : index
      %930 = vector.load %arg13[%c0_449, %c0_450] : memref<2x32xf32, #tpu.memory_space<vmem>>, vector<2x32xf32>
      tpu.vector_store %arg13[%c0_449, %c0_450], %929 {strides = array<i32>} : memref<2x32xf32, #tpu.memory_space<vmem>>, vector<2x32xf32>,
      %cst_451 = arith.constant 0.000000e+00 : f32
      %931 = vector.broadcast %cst_451 : f32 to vector<2x32xf32>
      %c0_452 = arith.constant 0 : index
      %c0_453 = arith.constant 0 : index
      %932 = vector.load %arg14[%c0_452, %c0_453] : memref<2x32xf32, #tpu.memory_space<vmem>>, vector<2x32xf32>
      tpu.vector_store %arg14[%c0_452, %c0_453], %931 {strides = array<i32>} : memref<2x32xf32, #tpu.memory_space<vmem>>, vector<2x32xf32>,
      %cst_454 = arith.constant 0.000000e+00 : f32
      %933 = vector.broadcast %cst_454 : f32 to vector<2x32xf32>
      %c0_455 = arith.constant 0 : index
      %c0_456 = arith.constant 0 : index
      %934 = vector.load %arg15[%c0_455, %c0_456] : memref<2x32xf32, #tpu.memory_space<vmem>>, vector<2x32xf32>
      tpu.vector_store %arg15[%c0_455, %c0_456], %933 {strides = array<i32>} : memref<2x32xf32, #tpu.memory_space<vmem>>, vector<2x32xf32>,
    } else {
    }
    %c0 = arith.constant 0 : index
    %c0_1 = arith.constant 0 : index
    %3 = vector.load %arg3[%c0, %c0_1] : memref<2x1xi32, #tpu.memory_space<vmem>>, vector<2x1xi32>
    %c8_i32 = arith.constant 8 : i32
    %4 = arith.muli %arg0, %c8_i32 : i32
    %c0_i32_2 = arith.constant 0 : i32
    %5 = arith.subi %c0_i32_2, %arg0 : i32
    %c8_i32_3 = arith.constant 8 : i32
    %6 = arith.muli %5, %c8_i32_3 : i32
    %c0_i32_4 = arith.constant 0 : i32
    %7 = arith.addi %4, %c0_i32_4 : i32
    %8 = vector.broadcast %7 : i32 to vector<2x1xi32>
    %9 = arith.cmpi slt, %8, %3 : vector<2x1xi32>
    %10 = arith.index_cast %c0_i32_4 : i32 to index
    %c0_5 = arith.constant 0 : index
    %c0_6 = arith.constant 0 : index
    %11 = vector.load %arg1[%10, %c0_5, %c0_6] : memref<8x2x16xf32, #tpu.memory_space<vmem>>, vector<1x2x16xf32>
    %12 = vector.shape_cast %11 : vector<1x2x16xf32> to vector<2x16xf32>
    %13 = arith.truncf %12 : vector<2x16xf32> to vector<2x16xbf16>
    %c0_7 = arith.constant 0 : index
    %c0_8 = arith.constant 0 : index
    %14 = vector.load %arg4[%c0_7, %c0_8] : memref<16x128xbf16, #tpu.memory_space<vmem>>, vector<16x128xbf16>
    %cst = arith.constant dense<0.000000e+00> : vector<2x128xf32>
    %15 = tpu.matmul %13, %14, %cst {dimension_numbers = #tpu.dot_dimension_numbers<[1], [0], [0], [1], [0, 0, 1, 1], [], []>} : vector<2x16xbf16>, vector<16x128xbf16>, vector<2x128xf32> -> vector<2x128xf32>
    %c0_9 = arith.constant 0 : index
    %c0_10 = arith.constant 0 : index
    %16 = vector.load %arg12[%c0_9, %c0_10] : memref<2x32xf32, #tpu.memory_space<vmem>>, vector<2x32xf32>
    %17 = arith.truncf %16 : vector<2x32xf32> to vector<2x32xbf16>
    %c0_11 = arith.constant 0 : index
    %c0_12 = arith.constant 0 : index
    %18 = vector.load %arg8[%c0_11, %c0_12] : memref<32x128xbf16, #tpu.memory_space<vmem>>, vector<32x128xbf16>
    %cst_13 = arith.constant dense<0.000000e+00> : vector<2x128xf32>
    %19 = tpu.matmul %17, %18, %cst_13 {dimension_numbers = #tpu.dot_dimension_numbers<[1], [0], [0], [1], [0, 0, 1, 1], [], []>} : vector<2x32xbf16>, vector<32x128xbf16>, vector<2x128xf32> -> vector<2x128xf32>
    %20 = arith.addf %15, %19 : vector<2x128xf32>
    %c0_14 = arith.constant 0 : index
    %c0_15 = arith.constant 0 : index
    %21 = vector.load %arg6[%c0_14, %c0_15] : memref<1x128xf32, #tpu.memory_space<vmem>>, vector<1x128xf32>
    %22 = vector.broadcast %21 : vector<1x128xf32> to vector<2x128xf32>
    %23 = arith.addf %20, %22 : vector<2x128xf32>
    %24 = vector.extract_strided_slice %23 {offsets = [0, 0], sizes = [2, 64], strides = [1, 1]} : vector<2x128xf32> to vector<2x64xf32>
    %25 = arith.negf %24 : vector<2x64xf32>
    %26 = math.exp %25 : vector<2x64xf32>
    %cst_16 = arith.constant 1.000000e+00 : f32
    %27 = vector.broadcast %cst_16 : f32 to vector<2x64xf32>
    %28 = arith.addf %27, %26 : vector<2x64xf32>
    %29 = arith.divf %27, %28 : vector<2x64xf32>
    %30 = vector.extract_strided_slice %29 {offsets = [0, 0], sizes = [2, 32], strides = [1, 1]} : vector<2x64xf32> to vector<2x32xf32>
    %31 = vector.extract_strided_slice %29 {offsets = [0, 32], sizes = [2, 32], strides = [1, 1]} : vector<2x64xf32> to vector<2x32xf32>
    %32 = vector.extract_strided_slice %23 {offsets = [0, 64], sizes = [2, 32], strides = [1, 1]} : vector<2x128xf32> to vector<2x32xf32>
    %33 = math.tanh %32 : vector<2x32xf32>
    %34 = vector.extract_strided_slice %23 {offsets = [0, 96], sizes = [2, 32], strides = [1, 1]} : vector<2x128xf32> to vector<2x32xf32>
    %35 = arith.negf %34 : vector<2x32xf32>
    %36 = math.exp %35 : vector<2x32xf32>
    %cst_17 = arith.constant 1.000000e+00 : f32
    %37 = vector.broadcast %cst_17 : f32 to vector<2x32xf32>
    %38 = arith.addf %37, %36 : vector<2x32xf32>
    %39 = arith.divf %37, %38 : vector<2x32xf32>
    %c0_18 = arith.constant 0 : index
    %c0_19 = arith.constant 0 : index
    %40 = vector.load %arg13[%c0_18, %c0_19] : memref<2x32xf32, #tpu.memory_space<vmem>>, vector<2x32xf32>
    %41 = arith.mulf %31, %40 : vector<2x32xf32>
    %42 = arith.mulf %30, %33 : vector<2x32xf32>
    %43 = arith.addf %41, %42 : vector<2x32xf32>
    %44 = math.tanh %43 : vector<2x32xf32>
    %45 = arith.mulf %39, %44 : vector<2x32xf32>
    %c0_20 = arith.constant 0 : index
    %c0_21 = arith.constant 0 : index
    %46 = vector.load %arg13[%c0_20, %c0_21] : memref<2x32xf32, #tpu.memory_space<vmem>>, vector<2x32xf32>
    %47 = vector.shape_cast %9 : vector<2x1xi1> to vector<2x1xi1>
    %48 = vector.broadcast %47 : vector<2x1xi1> to vector<2x32xi1>
    %49 = arith.select %48, %43, %46 : vector<2x32xi1>, vector<2x32xf32>
    %c0_22 = arith.constant 0 : index
    %c0_23 = arith.constant 0 : index
    %50 = vector.load %arg13[%c0_22, %c0_23] : memref<2x32xf32, #tpu.memory_space<vmem>>, vector<2x32xf32>
    tpu.vector_store %arg13[%c0_22, %c0_23], %49 {strides = array<i32>} : memref<2x32xf32, #tpu.memory_space<vmem>>, vector<2x32xf32>,
    %c0_24 = arith.constant 0 : index
    %c0_25 = arith.constant 0 : index
    %51 = vector.load %arg12[%c0_24, %c0_25] : memref<2x32xf32, #tpu.memory_space<vmem>>, vector<2x32xf32>
    %52 = vector.shape_cast %9 : vector<2x1xi1> to vector<2x1xi1>
    %53 = vector.broadcast %52 : vector<2x1xi1> to vector<2x32xi1>
    %54 = arith.select %53, %45, %51 : vector<2x32xi1>, vector<2x32xf32>
    %c0_26 = arith.constant 0 : index
    %c0_27 = arith.constant 0 : index
    %55 = vector.load %arg12[%c0_26, %c0_27] : memref<2x32xf32, #tpu.memory_space<vmem>>, vector<2x32xf32>
    tpu.vector_store %arg12[%c0_26, %c0_27], %54 {strides = array<i32>} : memref<2x32xf32, #tpu.memory_space<vmem>>, vector<2x32xf32>,
    %cst_28 = arith.constant 0.000000e+00 : f32
    %56 = vector.shape_cast %9 : vector<2x1xi1> to vector<2x1xi1>
    %57 = vector.broadcast %56 : vector<2x1xi1> to vector<2x32xi1>
    %58 = vector.broadcast %cst_28 : f32 to vector<2x32xf32>
    %59 = arith.select %57, %45, %58 : vector<2x32xi1>, vector<2x32xf32>
    %60 = arith.index_cast %c0_i32_4 : i32 to index
    %c0_29 = arith.constant 0 : index
    %c0_30 = arith.constant 0 : index
    %61 = vector.load %arg10[%60, %c0_29, %c0_30] : memref<8x2x32xf32, #tpu.memory_space<vmem>>, vector<1x2x32xf32>
    %62 = vector.shape_cast %61 : vector<1x2x32xf32> to vector<2x32xf32>
    %63 = vector.shape_cast %59 : vector<2x32xf32> to vector<1x2x32xf32>
    tpu.vector_store %arg10[%60, %c0_29, %c0_30], %63 {strides = array<i32>} : memref<8x2x32xf32, #tpu.memory_space<vmem>>, vector<1x2x32xf32>,
    %c7_i32 = arith.constant 7 : i32
    %64 = arith.subi %c7_i32, %c0_i32_4 : i32
    %65 = arith.addi %6, %64 : i32
    %66 = vector.broadcast %65 : i32 to vector<2x1xi32>
    %67 = arith.cmpi slt, %66, %3 : vector<2x1xi32>
    %68 = arith.index_cast %64 : i32 to index
    %c0_31 = arith.constant 0 : index
    %c0_32 = arith.constant 0 : index
    %69 = vector.load %arg2[%68, %c0_31, %c0_32] : memref<8x2x16xf32, #tpu.memory_space<vmem>>, vector<1x2x16xf32>
    %70 = vector.shape_cast %69 : vector<1x2x16xf32> to vector<2x16xf32>
    %71 = arith.truncf %70 : vector<2x16xf32> to vector<2x16xbf16>
    %c0_33 = arith.constant 0 : index
    %c0_34 = arith.constant 0 : index
    %72 = vector.load %arg5[%c0_33, %c0_34] : memref<16x128xbf16, #tpu.memory_space<vmem>>, vector<16x128xbf16>
    %cst_35 = arith.constant dense<0.000000e+00> : vector<2x128xf32>
    %73 = tpu.matmul %71, %72, %cst_35 {dimension_numbers = #tpu.dot_dimension_numbers<[1], [0], [0], [1], [0, 0, 1, 1], [], []>} : vector<2x16xbf16>, vector<16x128xbf16>, vector<2x128xf32> -> vector<2x128xf32>
    %c0_36 = arith.constant 0 : index
    %c0_37 = arith.constant 0 : index
    %74 = vector.load %arg14[%c0_36, %c0_37] : memref<2x32xf32, #tpu.memory_space<vmem>>, vector<2x32xf32>
    %75 = arith.truncf %74 : vector<2x32xf32> to vector<2x32xbf16>
    %c0_38 = arith.constant 0 : index
    %c0_39 = arith.constant 0 : index
    %76 = vector.load %arg9[%c0_38, %c0_39] : memref<32x128xbf16, #tpu.memory_space<vmem>>, vector<32x128xbf16>
    %cst_40 = arith.constant dense<0.000000e+00> : vector<2x128xf32>
    %77 = tpu.matmul %75, %76, %cst_40 {dimension_numbers = #tpu.dot_dimension_numbers<[1], [0], [0], [1], [0, 0, 1, 1], [], []>} : vector<2x32xbf16>, vector<32x128xbf16>, vector<2x128xf32> -> vector<2x128xf32>
    %78 = arith.addf %73, %77 : vector<2x128xf32>
    %c0_41 = arith.constant 0 : index
    %c0_42 = arith.constant 0 : index
    %79 = vector.load %arg7[%c0_41, %c0_42] : memref<1x128xf32, #tpu.memory_space<vmem>>, vector<1x128xf32>
    %80 = vector.broadcast %79 : vector<1x128xf32> to vector<2x128xf32>
    %81 = arith.addf %78, %80 : vector<2x128xf32>
    %82 = vector.extract_strided_slice %81 {offsets = [0, 0], sizes = [2, 64], strides = [1, 1]} : vector<2x128xf32> to vector<2x64xf32>
    %83 = arith.negf %82 : vector<2x64xf32>
    %84 = math.exp %83 : vector<2x64xf32>
    %cst_43 = arith.constant 1.000000e+00 : f32
    %85 = vector.broadcast %cst_43 : f32 to vector<2x64xf32>
    %86 = arith.addf %85, %84 : vector<2x64xf32>
    %87 = arith.divf %85, %86 : vector<2x64xf32>
    %88 = vector.extract_strided_slice %87 {offsets = [0, 0], sizes = [2, 32], strides = [1, 1]} : vector<2x64xf32> to vector<2x32xf32>
    %89 = vector.extract_strided_slice %87 {offsets = [0, 32], sizes = [2, 32], strides = [1, 1]} : vector<2x64xf32> to vector<2x32xf32>
    %90 = vector.extract_strided_slice %81 {offsets = [0, 64], sizes = [2, 32], strides = [1, 1]} : vector<2x128xf32> to vector<2x32xf32>
    %91 = math.tanh %90 : vector<2x32xf32>
    %92 = vector.extract_strided_slice %81 {offsets = [0, 96], sizes = [2, 32], strides = [1, 1]} : vector<2x128xf32> to vector<2x32xf32>
    %93 = arith.negf %92 : vector<2x32xf32>
    %94 = math.exp %93 : vector<2x32xf32>
    %cst_44 = arith.constant 1.000000e+00 : f32
    %95 = vector.broadcast %cst_44 : f32 to vector<2x32xf32>
    %96 = arith.addf %95, %94 : vector<2x32xf32>
    %97 = arith.divf %95, %96 : vector<2x32xf32>
    %c0_45 = arith.constant 0 : index
    %c0_46 = arith.constant 0 : index
    %98 = vector.load %arg15[%c0_45, %c0_46] : memref<2x32xf32, #tpu.memory_space<vmem>>, vector<2x32xf32>
    %99 = arith.mulf %89, %98 : vector<2x32xf32>
    %100 = arith.mulf %88, %91 : vector<2x32xf32>
    %101 = arith.addf %99, %100 : vector<2x32xf32>
    %102 = math.tanh %101 : vector<2x32xf32>
    %103 = arith.mulf %97, %102 : vector<2x32xf32>
    %c0_47 = arith.constant 0 : index
    %c0_48 = arith.constant 0 : index
    %104 = vector.load %arg15[%c0_47, %c0_48] : memref<2x32xf32, #tpu.memory_space<vmem>>, vector<2x32xf32>
    %105 = vector.shape_cast %67 : vector<2x1xi1> to vector<2x1xi1>
    %106 = vector.broadcast %105 : vector<2x1xi1> to vector<2x32xi1>
    %107 = arith.select %106, %101, %104 : vector<2x32xi1>, vector<2x32xf32>
    %c0_49 = arith.constant 0 : index
    %c0_50 = arith.constant 0 : index
    %108 = vector.load %arg15[%c0_49, %c0_50] : memref<2x32xf32, #tpu.memory_space<vmem>>, vector<2x32xf32>
    tpu.vector_store %arg15[%c0_49, %c0_50], %107 {strides = array<i32>} : memref<2x32xf32, #tpu.memory_space<vmem>>, vector<2x32xf32>,
    %c0_51 = arith.constant 0 : index
    %c0_52 = arith.constant 0 : index
    %109 = vector.load %arg14[%c0_51, %c0_52] : memref<2x32xf32, #tpu.memory_space<vmem>>, vector<2x32xf32>
    %110 = vector.shape_cast %67 : vector<2x1xi1> to vector<2x1xi1>
    %111 = vector.broadcast %110 : vector<2x1xi1> to vector<2x32xi1>
    %112 = arith.select %111, %103, %109 : vector<2x32xi1>, vector<2x32xf32>
    %c0_53 = arith.constant 0 : index
    %c0_54 = arith.constant 0 : index
    %113 = vector.load %arg14[%c0_53, %c0_54] : memref<2x32xf32, #tpu.memory_space<vmem>>, vector<2x32xf32>
    tpu.vector_store %arg14[%c0_53, %c0_54], %112 {strides = array<i32>} : memref<2x32xf32, #tpu.memory_space<vmem>>, vector<2x32xf32>,
    %cst_55 = arith.constant 0.000000e+00 : f32
    %114 = vector.shape_cast %67 : vector<2x1xi1> to vector<2x1xi1>
    %115 = vector.broadcast %114 : vector<2x1xi1> to vector<2x32xi1>
    %116 = vector.broadcast %cst_55 : f32 to vector<2x32xf32>
    %117 = arith.select %115, %103, %116 : vector<2x32xi1>, vector<2x32xf32>
    %118 = arith.index_cast %64 : i32 to index
    %c0_56 = arith.constant 0 : index
    %c0_57 = arith.constant 0 : index
    %119 = vector.load %arg11[%118, %c0_56, %c0_57] : memref<8x2x32xf32, #tpu.memory_space<vmem>>, vector<1x2x32xf32>
    %120 = vector.shape_cast %119 : vector<1x2x32xf32> to vector<2x32xf32>
    %121 = vector.shape_cast %117 : vector<2x32xf32> to vector<1x2x32xf32>
    tpu.vector_store %arg11[%118, %c0_56, %c0_57], %121 {strides = array<i32>} : memref<8x2x32xf32, #tpu.memory_space<vmem>>, vector<1x2x32xf32>,
    %c1_i32 = arith.constant 1 : i32
    %122 = arith.addi %4, %c1_i32 : i32
    %123 = vector.broadcast %122 : i32 to vector<2x1xi32>
    %124 = arith.cmpi slt, %123, %3 : vector<2x1xi32>
    %125 = arith.index_cast %c1_i32 : i32 to index
    %c0_58 = arith.constant 0 : index
    %c0_59 = arith.constant 0 : index
    %126 = vector.load %arg1[%125, %c0_58, %c0_59] : memref<8x2x16xf32, #tpu.memory_space<vmem>>, vector<1x2x16xf32>
    %127 = vector.shape_cast %126 : vector<1x2x16xf32> to vector<2x16xf32>
    %128 = arith.truncf %127 : vector<2x16xf32> to vector<2x16xbf16>
    %c0_60 = arith.constant 0 : index
    %c0_61 = arith.constant 0 : index
    %129 = vector.load %arg4[%c0_60, %c0_61] : memref<16x128xbf16, #tpu.memory_space<vmem>>, vector<16x128xbf16>
    %cst_62 = arith.constant dense<0.000000e+00> : vector<2x128xf32>
    %130 = tpu.matmul %128, %129, %cst_62 {dimension_numbers = #tpu.dot_dimension_numbers<[1], [0], [0], [1], [0, 0, 1, 1], [], []>} : vector<2x16xbf16>, vector<16x128xbf16>, vector<2x128xf32> -> vector<2x128xf32>
    %c0_63 = arith.constant 0 : index
    %c0_64 = arith.constant 0 : index
    %131 = vector.load %arg12[%c0_63, %c0_64] : memref<2x32xf32, #tpu.memory_space<vmem>>, vector<2x32xf32>
    %132 = arith.truncf %131 : vector<2x32xf32> to vector<2x32xbf16>
    %c0_65 = arith.constant 0 : index
    %c0_66 = arith.constant 0 : index
    %133 = vector.load %arg8[%c0_65, %c0_66] : memref<32x128xbf16, #tpu.memory_space<vmem>>, vector<32x128xbf16>
    %cst_67 = arith.constant dense<0.000000e+00> : vector<2x128xf32>
    %134 = tpu.matmul %132, %133, %cst_67 {dimension_numbers = #tpu.dot_dimension_numbers<[1], [0], [0], [1], [0, 0, 1, 1], [], []>} : vector<2x32xbf16>, vector<32x128xbf16>, vector<2x128xf32> -> vector<2x128xf32>
    %135 = arith.addf %130, %134 : vector<2x128xf32>
    %c0_68 = arith.constant 0 : index
    %c0_69 = arith.constant 0 : index
    %136 = vector.load %arg6[%c0_68, %c0_69] : memref<1x128xf32, #tpu.memory_space<vmem>>, vector<1x128xf32>
    %137 = vector.broadcast %136 : vector<1x128xf32> to vector<2x128xf32>
    %138 = arith.addf %135, %137 : vector<2x128xf32>
    %139 = vector.extract_strided_slice %138 {offsets = [0, 0], sizes = [2, 64], strides = [1, 1]} : vector<2x128xf32> to vector<2x64xf32>
    %140 = arith.negf %139 : vector<2x64xf32>
    %141 = math.exp %140 : vector<2x64xf32>
    %cst_70 = arith.constant 1.000000e+00 : f32
    %142 = vector.broadcast %cst_70 : f32 to vector<2x64xf32>
    %143 = arith.addf %142, %141 : vector<2x64xf32>
    %144 = arith.divf %142, %143 : vector<2x64xf32>
    %145 = vector.extract_strided_slice %144 {offsets = [0, 0], sizes = [2, 32], strides = [1, 1]} : vector<2x64xf32> to vector<2x32xf32>
    %146 = vector.extract_strided_slice %144 {offsets = [0, 32], sizes = [2, 32], strides = [1, 1]} : vector<2x64xf32> to vector<2x32xf32>
    %147 = vector.extract_strided_slice %138 {offsets = [0, 64], sizes = [2, 32], strides = [1, 1]} : vector<2x128xf32> to vector<2x32xf32>
    %148 = math.tanh %147 : vector<2x32xf32>
    %149 = vector.extract_strided_slice %138 {offsets = [0, 96], sizes = [2, 32], strides = [1, 1]} : vector<2x128xf32> to vector<2x32xf32>
    %150 = arith.negf %149 : vector<2x32xf32>
    %151 = math.exp %150 : vector<2x32xf32>
    %cst_71 = arith.constant 1.000000e+00 : f32
    %152 = vector.broadcast %cst_71 : f32 to vector<2x32xf32>
    %153 = arith.addf %152, %151 : vector<2x32xf32>
    %154 = arith.divf %152, %153 : vector<2x32xf32>
    %c0_72 = arith.constant 0 : index
    %c0_73 = arith.constant 0 : index
    %155 = vector.load %arg13[%c0_72, %c0_73] : memref<2x32xf32, #tpu.memory_space<vmem>>, vector<2x32xf32>
    %156 = arith.mulf %146, %155 : vector<2x32xf32>
    %157 = arith.mulf %145, %148 : vector<2x32xf32>
    %158 = arith.addf %156, %157 : vector<2x32xf32>
    %159 = math.tanh %158 : vector<2x32xf32>
    %160 = arith.mulf %154, %159 : vector<2x32xf32>
    %c0_74 = arith.constant 0 : index
    %c0_75 = arith.constant 0 : index
    %161 = vector.load %arg13[%c0_74, %c0_75] : memref<2x32xf32, #tpu.memory_space<vmem>>, vector<2x32xf32>
    %162 = vector.shape_cast %124 : vector<2x1xi1> to vector<2x1xi1>
    %163 = vector.broadcast %162 : vector<2x1xi1> to vector<2x32xi1>
    %164 = arith.select %163, %158, %161 : vector<2x32xi1>, vector<2x32xf32>
    %c0_76 = arith.constant 0 : index
    %c0_77 = arith.constant 0 : index
    %165 = vector.load %arg13[%c0_76, %c0_77] : memref<2x32xf32, #tpu.memory_space<vmem>>, vector<2x32xf32>
    tpu.vector_store %arg13[%c0_76, %c0_77], %164 {strides = array<i32>} : memref<2x32xf32, #tpu.memory_space<vmem>>, vector<2x32xf32>,
    %c0_78 = arith.constant 0 : index
    %c0_79 = arith.constant 0 : index
    %166 = vector.load %arg12[%c0_78, %c0_79] : memref<2x32xf32, #tpu.memory_space<vmem>>, vector<2x32xf32>
    %167 = vector.shape_cast %124 : vector<2x1xi1> to vector<2x1xi1>
    %168 = vector.broadcast %167 : vector<2x1xi1> to vector<2x32xi1>
    %169 = arith.select %168, %160, %166 : vector<2x32xi1>, vector<2x32xf32>
    %c0_80 = arith.constant 0 : index
    %c0_81 = arith.constant 0 : index
    %170 = vector.load %arg12[%c0_80, %c0_81] : memref<2x32xf32, #tpu.memory_space<vmem>>, vector<2x32xf32>
    tpu.vector_store %arg12[%c0_80, %c0_81], %169 {strides = array<i32>} : memref<2x32xf32, #tpu.memory_space<vmem>>, vector<2x32xf32>,
    %cst_82 = arith.constant 0.000000e+00 : f32
    %171 = vector.shape_cast %124 : vector<2x1xi1> to vector<2x1xi1>
    %172 = vector.broadcast %171 : vector<2x1xi1> to vector<2x32xi1>
    %173 = vector.broadcast %cst_82 : f32 to vector<2x32xf32>
    %174 = arith.select %172, %160, %173 : vector<2x32xi1>, vector<2x32xf32>
    %175 = arith.index_cast %c1_i32 : i32 to index
    %c0_83 = arith.constant 0 : index
    %c0_84 = arith.constant 0 : index
    %176 = vector.load %arg10[%175, %c0_83, %c0_84] : memref<8x2x32xf32, #tpu.memory_space<vmem>>, vector<1x2x32xf32>
    %177 = vector.shape_cast %176 : vector<1x2x32xf32> to vector<2x32xf32>
    %178 = vector.shape_cast %174 : vector<2x32xf32> to vector<1x2x32xf32>
    tpu.vector_store %arg10[%175, %c0_83, %c0_84], %178 {strides = array<i32>} : memref<8x2x32xf32, #tpu.memory_space<vmem>>, vector<1x2x32xf32>,
    %c7_i32_85 = arith.constant 7 : i32
    %179 = arith.subi %c7_i32_85, %c1_i32 : i32
    %180 = arith.addi %6, %179 : i32
    %181 = vector.broadcast %180 : i32 to vector<2x1xi32>
    %182 = arith.cmpi slt, %181, %3 : vector<2x1xi32>
    %183 = arith.index_cast %179 : i32 to index
    %c0_86 = arith.constant 0 : index
    %c0_87 = arith.constant 0 : index
    %184 = vector.load %arg2[%183, %c0_86, %c0_87] : memref<8x2x16xf32, #tpu.memory_space<vmem>>, vector<1x2x16xf32>
    %185 = vector.shape_cast %184 : vector<1x2x16xf32> to vector<2x16xf32>
    %186 = arith.truncf %185 : vector<2x16xf32> to vector<2x16xbf16>
    %c0_88 = arith.constant 0 : index
    %c0_89 = arith.constant 0 : index
    %187 = vector.load %arg5[%c0_88, %c0_89] : memref<16x128xbf16, #tpu.memory_space<vmem>>, vector<16x128xbf16>
    %cst_90 = arith.constant dense<0.000000e+00> : vector<2x128xf32>
    %188 = tpu.matmul %186, %187, %cst_90 {dimension_numbers = #tpu.dot_dimension_numbers<[1], [0], [0], [1], [0, 0, 1, 1], [], []>} : vector<2x16xbf16>, vector<16x128xbf16>, vector<2x128xf32> -> vector<2x128xf32>
    %c0_91 = arith.constant 0 : index
    %c0_92 = arith.constant 0 : index
    %189 = vector.load %arg14[%c0_91, %c0_92] : memref<2x32xf32, #tpu.memory_space<vmem>>, vector<2x32xf32>
    %190 = arith.truncf %189 : vector<2x32xf32> to vector<2x32xbf16>
    %c0_93 = arith.constant 0 : index
    %c0_94 = arith.constant 0 : index
    %191 = vector.load %arg9[%c0_93, %c0_94] : memref<32x128xbf16, #tpu.memory_space<vmem>>, vector<32x128xbf16>
    %cst_95 = arith.constant dense<0.000000e+00> : vector<2x128xf32>
    %192 = tpu.matmul %190, %191, %cst_95 {dimension_numbers = #tpu.dot_dimension_numbers<[1], [0], [0], [1], [0, 0, 1, 1], [], []>} : vector<2x32xbf16>, vector<32x128xbf16>, vector<2x128xf32> -> vector<2x128xf32>
    %193 = arith.addf %188, %192 : vector<2x128xf32>
    %c0_96 = arith.constant 0 : index
    %c0_97 = arith.constant 0 : index
    %194 = vector.load %arg7[%c0_96, %c0_97] : memref<1x128xf32, #tpu.memory_space<vmem>>, vector<1x128xf32>
    %195 = vector.broadcast %194 : vector<1x128xf32> to vector<2x128xf32>
    %196 = arith.addf %193, %195 : vector<2x128xf32>
    %197 = vector.extract_strided_slice %196 {offsets = [0, 0], sizes = [2, 64], strides = [1, 1]} : vector<2x128xf32> to vector<2x64xf32>
    %198 = arith.negf %197 : vector<2x64xf32>
    %199 = math.exp %198 : vector<2x64xf32>
    %cst_98 = arith.constant 1.000000e+00 : f32
    %200 = vector.broadcast %cst_98 : f32 to vector<2x64xf32>
    %201 = arith.addf %200, %199 : vector<2x64xf32>
    %202 = arith.divf %200, %201 : vector<2x64xf32>
    %203 = vector.extract_strided_slice %202 {offsets = [0, 0], sizes = [2, 32], strides = [1, 1]} : vector<2x64xf32> to vector<2x32xf32>
    %204 = vector.extract_strided_slice %202 {offsets = [0, 32], sizes = [2, 32], strides = [1, 1]} : vector<2x64xf32> to vector<2x32xf32>
    %205 = vector.extract_strided_slice %196 {offsets = [0, 64], sizes = [2, 32], strides = [1, 1]} : vector<2x128xf32> to vector<2x32xf32>
    %206 = math.tanh %205 : vector<2x32xf32>
    %207 = vector.extract_strided_slice %196 {offsets = [0, 96], sizes = [2, 32], strides = [1, 1]} : vector<2x128xf32> to vector<2x32xf32>
    %208 = arith.negf %207 : vector<2x32xf32>
    %209 = math.exp %208 : vector<2x32xf32>
    %cst_99 = arith.constant 1.000000e+00 : f32
    %210 = vector.broadcast %cst_99 : f32 to vector<2x32xf32>
    %211 = arith.addf %210, %209 : vector<2x32xf32>
    %212 = arith.divf %210, %211 : vector<2x32xf32>
    %c0_100 = arith.constant 0 : index
    %c0_101 = arith.constant 0 : index
    %213 = vector.load %arg15[%c0_100, %c0_101] : memref<2x32xf32, #tpu.memory_space<vmem>>, vector<2x32xf32>
    %214 = arith.mulf %204, %213 : vector<2x32xf32>
    %215 = arith.mulf %203, %206 : vector<2x32xf32>
    %216 = arith.addf %214, %215 : vector<2x32xf32>
    %217 = math.tanh %216 : vector<2x32xf32>
    %218 = arith.mulf %212, %217 : vector<2x32xf32>
    %c0_102 = arith.constant 0 : index
    %c0_103 = arith.constant 0 : index
    %219 = vector.load %arg15[%c0_102, %c0_103] : memref<2x32xf32, #tpu.memory_space<vmem>>, vector<2x32xf32>
    %220 = vector.shape_cast %182 : vector<2x1xi1> to vector<2x1xi1>
    %221 = vector.broadcast %220 : vector<2x1xi1> to vector<2x32xi1>
    %222 = arith.select %221, %216, %219 : vector<2x32xi1>, vector<2x32xf32>
    %c0_104 = arith.constant 0 : index
    %c0_105 = arith.constant 0 : index
    %223 = vector.load %arg15[%c0_104, %c0_105] : memref<2x32xf32, #tpu.memory_space<vmem>>, vector<2x32xf32>
    tpu.vector_store %arg15[%c0_104, %c0_105], %222 {strides = array<i32>} : memref<2x32xf32, #tpu.memory_space<vmem>>, vector<2x32xf32>,
    %c0_106 = arith.constant 0 : index
    %c0_107 = arith.constant 0 : index
    %224 = vector.load %arg14[%c0_106, %c0_107] : memref<2x32xf32, #tpu.memory_space<vmem>>, vector<2x32xf32>
    %225 = vector.shape_cast %182 : vector<2x1xi1> to vector<2x1xi1>
    %226 = vector.broadcast %225 : vector<2x1xi1> to vector<2x32xi1>
    %227 = arith.select %226, %218, %224 : vector<2x32xi1>, vector<2x32xf32>
    %c0_108 = arith.constant 0 : index
    %c0_109 = arith.constant 0 : index
    %228 = vector.load %arg14[%c0_108, %c0_109] : memref<2x32xf32, #tpu.memory_space<vmem>>, vector<2x32xf32>
    tpu.vector_store %arg14[%c0_108, %c0_109], %227 {strides = array<i32>} : memref<2x32xf32, #tpu.memory_space<vmem>>, vector<2x32xf32>,
    %cst_110 = arith.constant 0.000000e+00 : f32
    %229 = vector.shape_cast %182 : vector<2x1xi1> to vector<2x1xi1>
    %230 = vector.broadcast %229 : vector<2x1xi1> to vector<2x32xi1>
    %231 = vector.broadcast %cst_110 : f32 to vector<2x32xf32>
    %232 = arith.select %230, %218, %231 : vector<2x32xi1>, vector<2x32xf32>
    %233 = arith.index_cast %179 : i32 to index
    %c0_111 = arith.constant 0 : index
    %c0_112 = arith.constant 0 : index
    %234 = vector.load %arg11[%233, %c0_111, %c0_112] : memref<8x2x32xf32, #tpu.memory_space<vmem>>, vector<1x2x32xf32>
    %235 = vector.shape_cast %234 : vector<1x2x32xf32> to vector<2x32xf32>
    %236 = vector.shape_cast %232 : vector<2x32xf32> to vector<1x2x32xf32>
    tpu.vector_store %arg11[%233, %c0_111, %c0_112], %236 {strides = array<i32>} : memref<8x2x32xf32, #tpu.memory_space<vmem>>, vector<1x2x32xf32>,
    %c2_i32 = arith.constant 2 : i32
    %237 = arith.addi %4, %c2_i32 : i32
    %238 = vector.broadcast %237 : i32 to vector<2x1xi32>
    %239 = arith.cmpi slt, %238, %3 : vector<2x1xi32>
    %240 = arith.index_cast %c2_i32 : i32 to index
    %c0_113 = arith.constant 0 : index
    %c0_114 = arith.constant 0 : index
    %241 = vector.load %arg1[%240, %c0_113, %c0_114] : memref<8x2x16xf32, #tpu.memory_space<vmem>>, vector<1x2x16xf32>
    %242 = vector.shape_cast %241 : vector<1x2x16xf32> to vector<2x16xf32>
    %243 = arith.truncf %242 : vector<2x16xf32> to vector<2x16xbf16>
    %c0_115 = arith.constant 0 : index
    %c0_116 = arith.constant 0 : index
    %244 = vector.load %arg4[%c0_115, %c0_116] : memref<16x128xbf16, #tpu.memory_space<vmem>>, vector<16x128xbf16>
    %cst_117 = arith.constant dense<0.000000e+00> : vector<2x128xf32>
    %245 = tpu.matmul %243, %244, %cst_117 {dimension_numbers = #tpu.dot_dimension_numbers<[1], [0], [0], [1], [0, 0, 1, 1], [], []>} : vector<2x16xbf16>, vector<16x128xbf16>, vector<2x128xf32> -> vector<2x128xf32>
    %c0_118 = arith.constant 0 : index
    %c0_119 = arith.constant 0 : index
    %246 = vector.load %arg12[%c0_118, %c0_119] : memref<2x32xf32, #tpu.memory_space<vmem>>, vector<2x32xf32>
    %247 = arith.truncf %246 : vector<2x32xf32> to vector<2x32xbf16>
    %c0_120 = arith.constant 0 : index
    %c0_121 = arith.constant 0 : index
    %248 = vector.load %arg8[%c0_120, %c0_121] : memref<32x128xbf16, #tpu.memory_space<vmem>>, vector<32x128xbf16>
    %cst_122 = arith.constant dense<0.000000e+00> : vector<2x128xf32>
    %249 = tpu.matmul %247, %248, %cst_122 {dimension_numbers = #tpu.dot_dimension_numbers<[1], [0], [0], [1], [0, 0, 1, 1], [], []>} : vector<2x32xbf16>, vector<32x128xbf16>, vector<2x128xf32> -> vector<2x128xf32>
    %250 = arith.addf %245, %249 : vector<2x128xf32>
    %c0_123 = arith.constant 0 : index
    %c0_124 = arith.constant 0 : index
    %251 = vector.load %arg6[%c0_123, %c0_124] : memref<1x128xf32, #tpu.memory_space<vmem>>, vector<1x128xf32>
    %252 = vector.broadcast %251 : vector<1x128xf32> to vector<2x128xf32>
    %253 = arith.addf %250, %252 : vector<2x128xf32>
    %254 = vector.extract_strided_slice %253 {offsets = [0, 0], sizes = [2, 64], strides = [1, 1]} : vector<2x128xf32> to vector<2x64xf32>
    %255 = arith.negf %254 : vector<2x64xf32>
    %256 = math.exp %255 : vector<2x64xf32>
    %cst_125 = arith.constant 1.000000e+00 : f32
    %257 = vector.broadcast %cst_125 : f32 to vector<2x64xf32>
    %258 = arith.addf %257, %256 : vector<2x64xf32>
    %259 = arith.divf %257, %258 : vector<2x64xf32>
    %260 = vector.extract_strided_slice %259 {offsets = [0, 0], sizes = [2, 32], strides = [1, 1]} : vector<2x64xf32> to vector<2x32xf32>
    %261 = vector.extract_strided_slice %259 {offsets = [0, 32], sizes = [2, 32], strides = [1, 1]} : vector<2x64xf32> to vector<2x32xf32>
    %262 = vector.extract_strided_slice %253 {offsets = [0, 64], sizes = [2, 32], strides = [1, 1]} : vector<2x128xf32> to vector<2x32xf32>
    %263 = math.tanh %262 : vector<2x32xf32>
    %264 = vector.extract_strided_slice %253 {offsets = [0, 96], sizes = [2, 32], strides = [1, 1]} : vector<2x128xf32> to vector<2x32xf32>
    %265 = arith.negf %264 : vector<2x32xf32>
    %266 = math.exp %265 : vector<2x32xf32>
    %cst_126 = arith.constant 1.000000e+00 : f32
    %267 = vector.broadcast %cst_126 : f32 to vector<2x32xf32>
    %268 = arith.addf %267, %266 : vector<2x32xf32>
    %269 = arith.divf %267, %268 : vector<2x32xf32>
    %c0_127 = arith.constant 0 : index
    %c0_128 = arith.constant 0 : index
    %270 = vector.load %arg13[%c0_127, %c0_128] : memref<2x32xf32, #tpu.memory_space<vmem>>, vector<2x32xf32>
    %271 = arith.mulf %261, %270 : vector<2x32xf32>
    %272 = arith.mulf %260, %263 : vector<2x32xf32>
    %273 = arith.addf %271, %272 : vector<2x32xf32>
    %274 = math.tanh %273 : vector<2x32xf32>
    %275 = arith.mulf %269, %274 : vector<2x32xf32>
    %c0_129 = arith.constant 0 : index
    %c0_130 = arith.constant 0 : index
    %276 = vector.load %arg13[%c0_129, %c0_130] : memref<2x32xf32, #tpu.memory_space<vmem>>, vector<2x32xf32>
    %277 = vector.shape_cast %239 : vector<2x1xi1> to vector<2x1xi1>
    %278 = vector.broadcast %277 : vector<2x1xi1> to vector<2x32xi1>
    %279 = arith.select %278, %273, %276 : vector<2x32xi1>, vector<2x32xf32>
    %c0_131 = arith.constant 0 : index
    %c0_132 = arith.constant 0 : index
    %280 = vector.load %arg13[%c0_131, %c0_132] : memref<2x32xf32, #tpu.memory_space<vmem>>, vector<2x32xf32>
    tpu.vector_store %arg13[%c0_131, %c0_132], %279 {strides = array<i32>} : memref<2x32xf32, #tpu.memory_space<vmem>>, vector<2x32xf32>,
    %c0_133 = arith.constant 0 : index
    %c0_134 = arith.constant 0 : index
    %281 = vector.load %arg12[%c0_133, %c0_134] : memref<2x32xf32, #tpu.memory_space<vmem>>, vector<2x32xf32>
    %282 = vector.shape_cast %239 : vector<2x1xi1> to vector<2x1xi1>
    %283 = vector.broadcast %282 : vector<2x1xi1> to vector<2x32xi1>
    %284 = arith.select %283, %275, %281 : vector<2x32xi1>, vector<2x32xf32>
    %c0_135 = arith.constant 0 : index
    %c0_136 = arith.constant 0 : index
    %285 = vector.load %arg12[%c0_135, %c0_136] : memref<2x32xf32, #tpu.memory_space<vmem>>, vector<2x32xf32>
    tpu.vector_store %arg12[%c0_135, %c0_136], %284 {strides = array<i32>} : memref<2x32xf32, #tpu.memory_space<vmem>>, vector<2x32xf32>,
    %cst_137 = arith.constant 0.000000e+00 : f32
    %286 = vector.shape_cast %239 : vector<2x1xi1> to vector<2x1xi1>
    %287 = vector.broadcast %286 : vector<2x1xi1> to vector<2x32xi1>
    %288 = vector.broadcast %cst_137 : f32 to vector<2x32xf32>
    %289 = arith.select %287, %275, %288 : vector<2x32xi1>, vector<2x32xf32>
    %290 = arith.index_cast %c2_i32 : i32 to index
    %c0_138 = arith.constant 0 : index
    %c0_139 = arith.constant 0 : index
    %291 = vector.load %arg10[%290, %c0_138, %c0_139] : memref<8x2x32xf32, #tpu.memory_space<vmem>>, vector<1x2x32xf32>
    %292 = vector.shape_cast %291 : vector<1x2x32xf32> to vector<2x32xf32>
    %293 = vector.shape_cast %289 : vector<2x32xf32> to vector<1x2x32xf32>
    tpu.vector_store %arg10[%290, %c0_138, %c0_139], %293 {strides = array<i32>} : memref<8x2x32xf32, #tpu.memory_space<vmem>>, vector<1x2x32xf32>,
    %c7_i32_140 = arith.constant 7 : i32
    %294 = arith.subi %c7_i32_140, %c2_i32 : i32
    %295 = arith.addi %6, %294 : i32
    %296 = vector.broadcast %295 : i32 to vector<2x1xi32>
    %297 = arith.cmpi slt, %296, %3 : vector<2x1xi32>
    %298 = arith.index_cast %294 : i32 to index
    %c0_141 = arith.constant 0 : index
    %c0_142 = arith.constant 0 : index
    %299 = vector.load %arg2[%298, %c0_141, %c0_142] : memref<8x2x16xf32, #tpu.memory_space<vmem>>, vector<1x2x16xf32>
    %300 = vector.shape_cast %299 : vector<1x2x16xf32> to vector<2x16xf32>
    %301 = arith.truncf %300 : vector<2x16xf32> to vector<2x16xbf16>
    %c0_143 = arith.constant 0 : index
    %c0_144 = arith.constant 0 : index
    %302 = vector.load %arg5[%c0_143, %c0_144] : memref<16x128xbf16, #tpu.memory_space<vmem>>, vector<16x128xbf16>
    %cst_145 = arith.constant dense<0.000000e+00> : vector<2x128xf32>
    %303 = tpu.matmul %301, %302, %cst_145 {dimension_numbers = #tpu.dot_dimension_numbers<[1], [0], [0], [1], [0, 0, 1, 1], [], []>} : vector<2x16xbf16>, vector<16x128xbf16>, vector<2x128xf32> -> vector<2x128xf32>
    %c0_146 = arith.constant 0 : index
    %c0_147 = arith.constant 0 : index
    %304 = vector.load %arg14[%c0_146, %c0_147] : memref<2x32xf32, #tpu.memory_space<vmem>>, vector<2x32xf32>
    %305 = arith.truncf %304 : vector<2x32xf32> to vector<2x32xbf16>
    %c0_148 = arith.constant 0 : index
    %c0_149 = arith.constant 0 : index
    %306 = vector.load %arg9[%c0_148, %c0_149] : memref<32x128xbf16, #tpu.memory_space<vmem>>, vector<32x128xbf16>
    %cst_150 = arith.constant dense<0.000000e+00> : vector<2x128xf32>
    %307 = tpu.matmul %305, %306, %cst_150 {dimension_numbers = #tpu.dot_dimension_numbers<[1], [0], [0], [1], [0, 0, 1, 1], [], []>} : vector<2x32xbf16>, vector<32x128xbf16>, vector<2x128xf32> -> vector<2x128xf32>
    %308 = arith.addf %303, %307 : vector<2x128xf32>
    %c0_151 = arith.constant 0 : index
    %c0_152 = arith.constant 0 : index
    %309 = vector.load %arg7[%c0_151, %c0_152] : memref<1x128xf32, #tpu.memory_space<vmem>>, vector<1x128xf32>
    %310 = vector.broadcast %309 : vector<1x128xf32> to vector<2x128xf32>
    %311 = arith.addf %308, %310 : vector<2x128xf32>
    %312 = vector.extract_strided_slice %311 {offsets = [0, 0], sizes = [2, 64], strides = [1, 1]} : vector<2x128xf32> to vector<2x64xf32>
    %313 = arith.negf %312 : vector<2x64xf32>
    %314 = math.exp %313 : vector<2x64xf32>
    %cst_153 = arith.constant 1.000000e+00 : f32
    %315 = vector.broadcast %cst_153 : f32 to vector<2x64xf32>
    %316 = arith.addf %315, %314 : vector<2x64xf32>
    %317 = arith.divf %315, %316 : vector<2x64xf32>
    %318 = vector.extract_strided_slice %317 {offsets = [0, 0], sizes = [2, 32], strides = [1, 1]} : vector<2x64xf32> to vector<2x32xf32>
    %319 = vector.extract_strided_slice %317 {offsets = [0, 32], sizes = [2, 32], strides = [1, 1]} : vector<2x64xf32> to vector<2x32xf32>
    %320 = vector.extract_strided_slice %311 {offsets = [0, 64], sizes = [2, 32], strides = [1, 1]} : vector<2x128xf32> to vector<2x32xf32>
    %321 = math.tanh %320 : vector<2x32xf32>
    %322 = vector.extract_strided_slice %311 {offsets = [0, 96], sizes = [2, 32], strides = [1, 1]} : vector<2x128xf32> to vector<2x32xf32>
    %323 = arith.negf %322 : vector<2x32xf32>
    %324 = math.exp %323 : vector<2x32xf32>
    %cst_154 = arith.constant 1.000000e+00 : f32
    %325 = vector.broadcast %cst_154 : f32 to vector<2x32xf32>
    %326 = arith.addf %325, %324 : vector<2x32xf32>
    %327 = arith.divf %325, %326 : vector<2x32xf32>
    %c0_155 = arith.constant 0 : index
    %c0_156 = arith.constant 0 : index
    %328 = vector.load %arg15[%c0_155, %c0_156] : memref<2x32xf32, #tpu.memory_space<vmem>>, vector<2x32xf32>
    %329 = arith.mulf %319, %328 : vector<2x32xf32>
    %330 = arith.mulf %318, %321 : vector<2x32xf32>
    %331 = arith.addf %329, %330 : vector<2x32xf32>
    %332 = math.tanh %331 : vector<2x32xf32>
    %333 = arith.mulf %327, %332 : vector<2x32xf32>
    %c0_157 = arith.constant 0 : index
    %c0_158 = arith.constant 0 : index
    %334 = vector.load %arg15[%c0_157, %c0_158] : memref<2x32xf32, #tpu.memory_space<vmem>>, vector<2x32xf32>
    %335 = vector.shape_cast %297 : vector<2x1xi1> to vector<2x1xi1>
    %336 = vector.broadcast %335 : vector<2x1xi1> to vector<2x32xi1>
    %337 = arith.select %336, %331, %334 : vector<2x32xi1>, vector<2x32xf32>
    %c0_159 = arith.constant 0 : index
    %c0_160 = arith.constant 0 : index
    %338 = vector.load %arg15[%c0_159, %c0_160] : memref<2x32xf32, #tpu.memory_space<vmem>>, vector<2x32xf32>
    tpu.vector_store %arg15[%c0_159, %c0_160], %337 {strides = array<i32>} : memref<2x32xf32, #tpu.memory_space<vmem>>, vector<2x32xf32>,
    %c0_161 = arith.constant 0 : index
    %c0_162 = arith.constant 0 : index
    %339 = vector.load %arg14[%c0_161, %c0_162] : memref<2x32xf32, #tpu.memory_space<vmem>>, vector<2x32xf32>
    %340 = vector.shape_cast %297 : vector<2x1xi1> to vector<2x1xi1>
    %341 = vector.broadcast %340 : vector<2x1xi1> to vector<2x32xi1>
    %342 = arith.select %341, %333, %339 : vector<2x32xi1>, vector<2x32xf32>
    %c0_163 = arith.constant 0 : index
    %c0_164 = arith.constant 0 : index
    %343 = vector.load %arg14[%c0_163, %c0_164] : memref<2x32xf32, #tpu.memory_space<vmem>>, vector<2x32xf32>
    tpu.vector_store %arg14[%c0_163, %c0_164], %342 {strides = array<i32>} : memref<2x32xf32, #tpu.memory_space<vmem>>, vector<2x32xf32>,
    %cst_165 = arith.constant 0.000000e+00 : f32
    %344 = vector.shape_cast %297 : vector<2x1xi1> to vector<2x1xi1>
    %345 = vector.broadcast %344 : vector<2x1xi1> to vector<2x32xi1>
    %346 = vector.broadcast %cst_165 : f32 to vector<2x32xf32>
    %347 = arith.select %345, %333, %346 : vector<2x32xi1>, vector<2x32xf32>
    %348 = arith.index_cast %294 : i32 to index
    %c0_166 = arith.constant 0 : index
    %c0_167 = arith.constant 0 : index
    %349 = vector.load %arg11[%348, %c0_166, %c0_167] : memref<8x2x32xf32, #tpu.memory_space<vmem>>, vector<1x2x32xf32>
    %350 = vector.shape_cast %349 : vector<1x2x32xf32> to vector<2x32xf32>
    %351 = vector.shape_cast %347 : vector<2x32xf32> to vector<1x2x32xf32>
    tpu.vector_store %arg11[%348, %c0_166, %c0_167], %351 {strides = array<i32>} : memref<8x2x32xf32, #tpu.memory_space<vmem>>, vector<1x2x32xf32>,
    %c3_i32 = arith.constant 3 : i32
    %352 = arith.addi %4, %c3_i32 : i32
    %353 = vector.broadcast %352 : i32 to vector<2x1xi32>
    %354 = arith.cmpi slt, %353, %3 : vector<2x1xi32>
    %355 = arith.index_cast %c3_i32 : i32 to index
    %c0_168 = arith.constant 0 : index
    %c0_169 = arith.constant 0 : index
    %356 = vector.load %arg1[%355, %c0_168, %c0_169] : memref<8x2x16xf32, #tpu.memory_space<vmem>>, vector<1x2x16xf32>
    %357 = vector.shape_cast %356 : vector<1x2x16xf32> to vector<2x16xf32>
    %358 = arith.truncf %357 : vector<2x16xf32> to vector<2x16xbf16>
    %c0_170 = arith.constant 0 : index
    %c0_171 = arith.constant 0 : index
    %359 = vector.load %arg4[%c0_170, %c0_171] : memref<16x128xbf16, #tpu.memory_space<vmem>>, vector<16x128xbf16>
    %cst_172 = arith.constant dense<0.000000e+00> : vector<2x128xf32>
    %360 = tpu.matmul %358, %359, %cst_172 {dimension_numbers = #tpu.dot_dimension_numbers<[1], [0], [0], [1], [0, 0, 1, 1], [], []>} : vector<2x16xbf16>, vector<16x128xbf16>, vector<2x128xf32> -> vector<2x128xf32>
    %c0_173 = arith.constant 0 : index
    %c0_174 = arith.constant 0 : index
    %361 = vector.load %arg12[%c0_173, %c0_174] : memref<2x32xf32, #tpu.memory_space<vmem>>, vector<2x32xf32>
    %362 = arith.truncf %361 : vector<2x32xf32> to vector<2x32xbf16>
    %c0_175 = arith.constant 0 : index
    %c0_176 = arith.constant 0 : index
    %363 = vector.load %arg8[%c0_175, %c0_176] : memref<32x128xbf16, #tpu.memory_space<vmem>>, vector<32x128xbf16>
    %cst_177 = arith.constant dense<0.000000e+00> : vector<2x128xf32>
    %364 = tpu.matmul %362, %363, %cst_177 {dimension_numbers = #tpu.dot_dimension_numbers<[1], [0], [0], [1], [0, 0, 1, 1], [], []>} : vector<2x32xbf16>, vector<32x128xbf16>, vector<2x128xf32> -> vector<2x128xf32>
    %365 = arith.addf %360, %364 : vector<2x128xf32>
    %c0_178 = arith.constant 0 : index
    %c0_179 = arith.constant 0 : index
    %366 = vector.load %arg6[%c0_178, %c0_179] : memref<1x128xf32, #tpu.memory_space<vmem>>, vector<1x128xf32>
    %367 = vector.broadcast %366 : vector<1x128xf32> to vector<2x128xf32>
    %368 = arith.addf %365, %367 : vector<2x128xf32>
    %369 = vector.extract_strided_slice %368 {offsets = [0, 0], sizes = [2, 64], strides = [1, 1]} : vector<2x128xf32> to vector<2x64xf32>
    %370 = arith.negf %369 : vector<2x64xf32>
    %371 = math.exp %370 : vector<2x64xf32>
    %cst_180 = arith.constant 1.000000e+00 : f32
    %372 = vector.broadcast %cst_180 : f32 to vector<2x64xf32>
    %373 = arith.addf %372, %371 : vector<2x64xf32>
    %374 = arith.divf %372, %373 : vector<2x64xf32>
    %375 = vector.extract_strided_slice %374 {offsets = [0, 0], sizes = [2, 32], strides = [1, 1]} : vector<2x64xf32> to vector<2x32xf32>
    %376 = vector.extract_strided_slice %374 {offsets = [0, 32], sizes = [2, 32], strides = [1, 1]} : vector<2x64xf32> to vector<2x32xf32>
    %377 = vector.extract_strided_slice %368 {offsets = [0, 64], sizes = [2, 32], strides = [1, 1]} : vector<2x128xf32> to vector<2x32xf32>
    %378 = math.tanh %377 : vector<2x32xf32>
    %379 = vector.extract_strided_slice %368 {offsets = [0, 96], sizes = [2, 32], strides = [1, 1]} : vector<2x128xf32> to vector<2x32xf32>
    %380 = arith.negf %379 : vector<2x32xf32>
    %381 = math.exp %380 : vector<2x32xf32>
    %cst_181 = arith.constant 1.000000e+00 : f32
    %382 = vector.broadcast %cst_181 : f32 to vector<2x32xf32>
    %383 = arith.addf %382, %381 : vector<2x32xf32>
    %384 = arith.divf %382, %383 : vector<2x32xf32>
    %c0_182 = arith.constant 0 : index
    %c0_183 = arith.constant 0 : index
    %385 = vector.load %arg13[%c0_182, %c0_183] : memref<2x32xf32, #tpu.memory_space<vmem>>, vector<2x32xf32>
    %386 = arith.mulf %376, %385 : vector<2x32xf32>
    %387 = arith.mulf %375, %378 : vector<2x32xf32>
    %388 = arith.addf %386, %387 : vector<2x32xf32>
    %389 = math.tanh %388 : vector<2x32xf32>
    %390 = arith.mulf %384, %389 : vector<2x32xf32>
    %c0_184 = arith.constant 0 : index
    %c0_185 = arith.constant 0 : index
    %391 = vector.load %arg13[%c0_184, %c0_185] : memref<2x32xf32, #tpu.memory_space<vmem>>, vector<2x32xf32>
    %392 = vector.shape_cast %354 : vector<2x1xi1> to vector<2x1xi1>
    %393 = vector.broadcast %392 : vector<2x1xi1> to vector<2x32xi1>
    %394 = arith.select %393, %388, %391 : vector<2x32xi1>, vector<2x32xf32>
    %c0_186 = arith.constant 0 : index
    %c0_187 = arith.constant 0 : index
    %395 = vector.load %arg13[%c0_186, %c0_187] : memref<2x32xf32, #tpu.memory_space<vmem>>, vector<2x32xf32>
    tpu.vector_store %arg13[%c0_186, %c0_187], %394 {strides = array<i32>} : memref<2x32xf32, #tpu.memory_space<vmem>>, vector<2x32xf32>,
    %c0_188 = arith.constant 0 : index
    %c0_189 = arith.constant 0 : index
    %396 = vector.load %arg12[%c0_188, %c0_189] : memref<2x32xf32, #tpu.memory_space<vmem>>, vector<2x32xf32>
    %397 = vector.shape_cast %354 : vector<2x1xi1> to vector<2x1xi1>
    %398 = vector.broadcast %397 : vector<2x1xi1> to vector<2x32xi1>
    %399 = arith.select %398, %390, %396 : vector<2x32xi1>, vector<2x32xf32>
    %c0_190 = arith.constant 0 : index
    %c0_191 = arith.constant 0 : index
    %400 = vector.load %arg12[%c0_190, %c0_191] : memref<2x32xf32, #tpu.memory_space<vmem>>, vector<2x32xf32>
    tpu.vector_store %arg12[%c0_190, %c0_191], %399 {strides = array<i32>} : memref<2x32xf32, #tpu.memory_space<vmem>>, vector<2x32xf32>,
    %cst_192 = arith.constant 0.000000e+00 : f32
    %401 = vector.shape_cast %354 : vector<2x1xi1> to vector<2x1xi1>
    %402 = vector.broadcast %401 : vector<2x1xi1> to vector<2x32xi1>
    %403 = vector.broadcast %cst_192 : f32 to vector<2x32xf32>
    %404 = arith.select %402, %390, %403 : vector<2x32xi1>, vector<2x32xf32>
    %405 = arith.index_cast %c3_i32 : i32 to index
    %c0_193 = arith.constant 0 : index
    %c0_194 = arith.constant 0 : index
    %406 = vector.load %arg10[%405, %c0_193, %c0_194] : memref<8x2x32xf32, #tpu.memory_space<vmem>>, vector<1x2x32xf32>
    %407 = vector.shape_cast %406 : vector<1x2x32xf32> to vector<2x32xf32>
    %408 = vector.shape_cast %404 : vector<2x32xf32> to vector<1x2x32xf32>
    tpu.vector_store %arg10[%405, %c0_193, %c0_194], %408 {strides = array<i32>} : memref<8x2x32xf32, #tpu.memory_space<vmem>>, vector<1x2x32xf32>,
    %c7_i32_195 = arith.constant 7 : i32
    %409 = arith.subi %c7_i32_195, %c3_i32 : i32
    %410 = arith.addi %6, %409 : i32
    %411 = vector.broadcast %410 : i32 to vector<2x1xi32>
    %412 = arith.cmpi slt, %411, %3 : vector<2x1xi32>
    %413 = arith.index_cast %409 : i32 to index
    %c0_196 = arith.constant 0 : index
    %c0_197 = arith.constant 0 : index
    %414 = vector.load %arg2[%413, %c0_196, %c0_197] : memref<8x2x16xf32, #tpu.memory_space<vmem>>, vector<1x2x16xf32>
    %415 = vector.shape_cast %414 : vector<1x2x16xf32> to vector<2x16xf32>
    %416 = arith.truncf %415 : vector<2x16xf32> to vector<2x16xbf16>
    %c0_198 = arith.constant 0 : index
    %c0_199 = arith.constant 0 : index
    %417 = vector.load %arg5[%c0_198, %c0_199] : memref<16x128xbf16, #tpu.memory_space<vmem>>, vector<16x128xbf16>
    %cst_200 = arith.constant dense<0.000000e+00> : vector<2x128xf32>
    %418 = tpu.matmul %416, %417, %cst_200 {dimension_numbers = #tpu.dot_dimension_numbers<[1], [0], [0], [1], [0, 0, 1, 1], [], []>} : vector<2x16xbf16>, vector<16x128xbf16>, vector<2x128xf32> -> vector<2x128xf32>
    %c0_201 = arith.constant 0 : index
    %c0_202 = arith.constant 0 : index
    %419 = vector.load %arg14[%c0_201, %c0_202] : memref<2x32xf32, #tpu.memory_space<vmem>>, vector<2x32xf32>
    %420 = arith.truncf %419 : vector<2x32xf32> to vector<2x32xbf16>
    %c0_203 = arith.constant 0 : index
    %c0_204 = arith.constant 0 : index
    %421 = vector.load %arg9[%c0_203, %c0_204] : memref<32x128xbf16, #tpu.memory_space<vmem>>, vector<32x128xbf16>
    %cst_205 = arith.constant dense<0.000000e+00> : vector<2x128xf32>
    %422 = tpu.matmul %420, %421, %cst_205 {dimension_numbers = #tpu.dot_dimension_numbers<[1], [0], [0], [1], [0, 0, 1, 1], [], []>} : vector<2x32xbf16>, vector<32x128xbf16>, vector<2x128xf32> -> vector<2x128xf32>
    %423 = arith.addf %418, %422 : vector<2x128xf32>
    %c0_206 = arith.constant 0 : index
    %c0_207 = arith.constant 0 : index
    %424 = vector.load %arg7[%c0_206, %c0_207] : memref<1x128xf32, #tpu.memory_space<vmem>>, vector<1x128xf32>
    %425 = vector.broadcast %424 : vector<1x128xf32> to vector<2x128xf32>
    %426 = arith.addf %423, %425 : vector<2x128xf32>
    %427 = vector.extract_strided_slice %426 {offsets = [0, 0], sizes = [2, 64], strides = [1, 1]} : vector<2x128xf32> to vector<2x64xf32>
    %428 = arith.negf %427 : vector<2x64xf32>
    %429 = math.exp %428 : vector<2x64xf32>
    %cst_208 = arith.constant 1.000000e+00 : f32
    %430 = vector.broadcast %cst_208 : f32 to vector<2x64xf32>
    %431 = arith.addf %430, %429 : vector<2x64xf32>
    %432 = arith.divf %430, %431 : vector<2x64xf32>
    %433 = vector.extract_strided_slice %432 {offsets = [0, 0], sizes = [2, 32], strides = [1, 1]} : vector<2x64xf32> to vector<2x32xf32>
    %434 = vector.extract_strided_slice %432 {offsets = [0, 32], sizes = [2, 32], strides = [1, 1]} : vector<2x64xf32> to vector<2x32xf32>
    %435 = vector.extract_strided_slice %426 {offsets = [0, 64], sizes = [2, 32], strides = [1, 1]} : vector<2x128xf32> to vector<2x32xf32>
    %436 = math.tanh %435 : vector<2x32xf32>
    %437 = vector.extract_strided_slice %426 {offsets = [0, 96], sizes = [2, 32], strides = [1, 1]} : vector<2x128xf32> to vector<2x32xf32>
    %438 = arith.negf %437 : vector<2x32xf32>
    %439 = math.exp %438 : vector<2x32xf32>
    %cst_209 = arith.constant 1.000000e+00 : f32
    %440 = vector.broadcast %cst_209 : f32 to vector<2x32xf32>
    %441 = arith.addf %440, %439 : vector<2x32xf32>
    %442 = arith.divf %440, %441 : vector<2x32xf32>
    %c0_210 = arith.constant 0 : index
    %c0_211 = arith.constant 0 : index
    %443 = vector.load %arg15[%c0_210, %c0_211] : memref<2x32xf32, #tpu.memory_space<vmem>>, vector<2x32xf32>
    %444 = arith.mulf %434, %443 : vector<2x32xf32>
    %445 = arith.mulf %433, %436 : vector<2x32xf32>
    %446 = arith.addf %444, %445 : vector<2x32xf32>
    %447 = math.tanh %446 : vector<2x32xf32>
    %448 = arith.mulf %442, %447 : vector<2x32xf32>
    %c0_212 = arith.constant 0 : index
    %c0_213 = arith.constant 0 : index
    %449 = vector.load %arg15[%c0_212, %c0_213] : memref<2x32xf32, #tpu.memory_space<vmem>>, vector<2x32xf32>
    %450 = vector.shape_cast %412 : vector<2x1xi1> to vector<2x1xi1>
    %451 = vector.broadcast %450 : vector<2x1xi1> to vector<2x32xi1>
    %452 = arith.select %451, %446, %449 : vector<2x32xi1>, vector<2x32xf32>
    %c0_214 = arith.constant 0 : index
    %c0_215 = arith.constant 0 : index
    %453 = vector.load %arg15[%c0_214, %c0_215] : memref<2x32xf32, #tpu.memory_space<vmem>>, vector<2x32xf32>
    tpu.vector_store %arg15[%c0_214, %c0_215], %452 {strides = array<i32>} : memref<2x32xf32, #tpu.memory_space<vmem>>, vector<2x32xf32>,
    %c0_216 = arith.constant 0 : index
    %c0_217 = arith.constant 0 : index
    %454 = vector.load %arg14[%c0_216, %c0_217] : memref<2x32xf32, #tpu.memory_space<vmem>>, vector<2x32xf32>
    %455 = vector.shape_cast %412 : vector<2x1xi1> to vector<2x1xi1>
    %456 = vector.broadcast %455 : vector<2x1xi1> to vector<2x32xi1>
    %457 = arith.select %456, %448, %454 : vector<2x32xi1>, vector<2x32xf32>
    %c0_218 = arith.constant 0 : index
    %c0_219 = arith.constant 0 : index
    %458 = vector.load %arg14[%c0_218, %c0_219] : memref<2x32xf32, #tpu.memory_space<vmem>>, vector<2x32xf32>
    tpu.vector_store %arg14[%c0_218, %c0_219], %457 {strides = array<i32>} : memref<2x32xf32, #tpu.memory_space<vmem>>, vector<2x32xf32>,
    %cst_220 = arith.constant 0.000000e+00 : f32
    %459 = vector.shape_cast %412 : vector<2x1xi1> to vector<2x1xi1>
    %460 = vector.broadcast %459 : vector<2x1xi1> to vector<2x32xi1>
    %461 = vector.broadcast %cst_220 : f32 to vector<2x32xf32>
    %462 = arith.select %460, %448, %461 : vector<2x32xi1>, vector<2x32xf32>
    %463 = arith.index_cast %409 : i32 to index
    %c0_221 = arith.constant 0 : index
    %c0_222 = arith.constant 0 : index
    %464 = vector.load %arg11[%463, %c0_221, %c0_222] : memref<8x2x32xf32, #tpu.memory_space<vmem>>, vector<1x2x32xf32>
    %465 = vector.shape_cast %464 : vector<1x2x32xf32> to vector<2x32xf32>
    %466 = vector.shape_cast %462 : vector<2x32xf32> to vector<1x2x32xf32>
    tpu.vector_store %arg11[%463, %c0_221, %c0_222], %466 {strides = array<i32>} : memref<8x2x32xf32, #tpu.memory_space<vmem>>, vector<1x2x32xf32>,
    %c4_i32 = arith.constant 4 : i32
    %467 = arith.addi %4, %c4_i32 : i32
    %468 = vector.broadcast %467 : i32 to vector<2x1xi32>
    %469 = arith.cmpi slt, %468, %3 : vector<2x1xi32>
    %470 = arith.index_cast %c4_i32 : i32 to index
    %c0_223 = arith.constant 0 : index
    %c0_224 = arith.constant 0 : index
    %471 = vector.load %arg1[%470, %c0_223, %c0_224] : memref<8x2x16xf32, #tpu.memory_space<vmem>>, vector<1x2x16xf32>
    %472 = vector.shape_cast %471 : vector<1x2x16xf32> to vector<2x16xf32>
    %473 = arith.truncf %472 : vector<2x16xf32> to vector<2x16xbf16>
    %c0_225 = arith.constant 0 : index
    %c0_226 = arith.constant 0 : index
    %474 = vector.load %arg4[%c0_225, %c0_226] : memref<16x128xbf16, #tpu.memory_space<vmem>>, vector<16x128xbf16>
    %cst_227 = arith.constant dense<0.000000e+00> : vector<2x128xf32>
    %475 = tpu.matmul %473, %474, %cst_227 {dimension_numbers = #tpu.dot_dimension_numbers<[1], [0], [0], [1], [0, 0, 1, 1], [], []>} : vector<2x16xbf16>, vector<16x128xbf16>, vector<2x128xf32> -> vector<2x128xf32>
    %c0_228 = arith.constant 0 : index
    %c0_229 = arith.constant 0 : index
    %476 = vector.load %arg12[%c0_228, %c0_229] : memref<2x32xf32, #tpu.memory_space<vmem>>, vector<2x32xf32>
    %477 = arith.truncf %476 : vector<2x32xf32> to vector<2x32xbf16>
    %c0_230 = arith.constant 0 : index
    %c0_231 = arith.constant 0 : index
    %478 = vector.load %arg8[%c0_230, %c0_231] : memref<32x128xbf16, #tpu.memory_space<vmem>>, vector<32x128xbf16>
    %cst_232 = arith.constant dense<0.000000e+00> : vector<2x128xf32>
    %479 = tpu.matmul %477, %478, %cst_232 {dimension_numbers = #tpu.dot_dimension_numbers<[1], [0], [0], [1], [0, 0, 1, 1], [], []>} : vector<2x32xbf16>, vector<32x128xbf16>, vector<2x128xf32> -> vector<2x128xf32>
    %480 = arith.addf %475, %479 : vector<2x128xf32>
    %c0_233 = arith.constant 0 : index
    %c0_234 = arith.constant 0 : index
    %481 = vector.load %arg6[%c0_233, %c0_234] : memref<1x128xf32, #tpu.memory_space<vmem>>, vector<1x128xf32>
    %482 = vector.broadcast %481 : vector<1x128xf32> to vector<2x128xf32>
    %483 = arith.addf %480, %482 : vector<2x128xf32>
    %484 = vector.extract_strided_slice %483 {offsets = [0, 0], sizes = [2, 64], strides = [1, 1]} : vector<2x128xf32> to vector<2x64xf32>
    %485 = arith.negf %484 : vector<2x64xf32>
    %486 = math.exp %485 : vector<2x64xf32>
    %cst_235 = arith.constant 1.000000e+00 : f32
    %487 = vector.broadcast %cst_235 : f32 to vector<2x64xf32>
    %488 = arith.addf %487, %486 : vector<2x64xf32>
    %489 = arith.divf %487, %488 : vector<2x64xf32>
    %490 = vector.extract_strided_slice %489 {offsets = [0, 0], sizes = [2, 32], strides = [1, 1]} : vector<2x64xf32> to vector<2x32xf32>
    %491 = vector.extract_strided_slice %489 {offsets = [0, 32], sizes = [2, 32], strides = [1, 1]} : vector<2x64xf32> to vector<2x32xf32>
    %492 = vector.extract_strided_slice %483 {offsets = [0, 64], sizes = [2, 32], strides = [1, 1]} : vector<2x128xf32> to vector<2x32xf32>
    %493 = math.tanh %492 : vector<2x32xf32>
    %494 = vector.extract_strided_slice %483 {offsets = [0, 96], sizes = [2, 32], strides = [1, 1]} : vector<2x128xf32> to vector<2x32xf32>
    %495 = arith.negf %494 : vector<2x32xf32>
    %496 = math.exp %495 : vector<2x32xf32>
    %cst_236 = arith.constant 1.000000e+00 : f32
    %497 = vector.broadcast %cst_236 : f32 to vector<2x32xf32>
    %498 = arith.addf %497, %496 : vector<2x32xf32>
    %499 = arith.divf %497, %498 : vector<2x32xf32>
    %c0_237 = arith.constant 0 : index
    %c0_238 = arith.constant 0 : index
    %500 = vector.load %arg13[%c0_237, %c0_238] : memref<2x32xf32, #tpu.memory_space<vmem>>, vector<2x32xf32>
    %501 = arith.mulf %491, %500 : vector<2x32xf32>
    %502 = arith.mulf %490, %493 : vector<2x32xf32>
    %503 = arith.addf %501, %502 : vector<2x32xf32>
    %504 = math.tanh %503 : vector<2x32xf32>
    %505 = arith.mulf %499, %504 : vector<2x32xf32>
    %c0_239 = arith.constant 0 : index
    %c0_240 = arith.constant 0 : index
    %506 = vector.load %arg13[%c0_239, %c0_240] : memref<2x32xf32, #tpu.memory_space<vmem>>, vector<2x32xf32>
    %507 = vector.shape_cast %469 : vector<2x1xi1> to vector<2x1xi1>
    %508 = vector.broadcast %507 : vector<2x1xi1> to vector<2x32xi1>
    %509 = arith.select %508, %503, %506 : vector<2x32xi1>, vector<2x32xf32>
    %c0_241 = arith.constant 0 : index
    %c0_242 = arith.constant 0 : index
    %510 = vector.load %arg13[%c0_241, %c0_242] : memref<2x32xf32, #tpu.memory_space<vmem>>, vector<2x32xf32>
    tpu.vector_store %arg13[%c0_241, %c0_242], %509 {strides = array<i32>} : memref<2x32xf32, #tpu.memory_space<vmem>>, vector<2x32xf32>,
    %c0_243 = arith.constant 0 : index
    %c0_244 = arith.constant 0 : index
    %511 = vector.load %arg12[%c0_243, %c0_244] : memref<2x32xf32, #tpu.memory_space<vmem>>, vector<2x32xf32>
    %512 = vector.shape_cast %469 : vector<2x1xi1> to vector<2x1xi1>
    %513 = vector.broadcast %512 : vector<2x1xi1> to vector<2x32xi1>
    %514 = arith.select %513, %505, %511 : vector<2x32xi1>, vector<2x32xf32>
    %c0_245 = arith.constant 0 : index
    %c0_246 = arith.constant 0 : index
    %515 = vector.load %arg12[%c0_245, %c0_246] : memref<2x32xf32, #tpu.memory_space<vmem>>, vector<2x32xf32>
    tpu.vector_store %arg12[%c0_245, %c0_246], %514 {strides = array<i32>} : memref<2x32xf32, #tpu.memory_space<vmem>>, vector<2x32xf32>,
    %cst_247 = arith.constant 0.000000e+00 : f32
    %516 = vector.shape_cast %469 : vector<2x1xi1> to vector<2x1xi1>
    %517 = vector.broadcast %516 : vector<2x1xi1> to vector<2x32xi1>
    %518 = vector.broadcast %cst_247 : f32 to vector<2x32xf32>
    %519 = arith.select %517, %505, %518 : vector<2x32xi1>, vector<2x32xf32>
    %520 = arith.index_cast %c4_i32 : i32 to index
    %c0_248 = arith.constant 0 : index
    %c0_249 = arith.constant 0 : index
    %521 = vector.load %arg10[%520, %c0_248, %c0_249] : memref<8x2x32xf32, #tpu.memory_space<vmem>>, vector<1x2x32xf32>
    %522 = vector.shape_cast %521 : vector<1x2x32xf32> to vector<2x32xf32>
    %523 = vector.shape_cast %519 : vector<2x32xf32> to vector<1x2x32xf32>
    tpu.vector_store %arg10[%520, %c0_248, %c0_249], %523 {strides = array<i32>} : memref<8x2x32xf32, #tpu.memory_space<vmem>>, vector<1x2x32xf32>,
    %c7_i32_250 = arith.constant 7 : i32
    %524 = arith.subi %c7_i32_250, %c4_i32 : i32
    %525 = arith.addi %6, %524 : i32
    %526 = vector.broadcast %525 : i32 to vector<2x1xi32>
    %527 = arith.cmpi slt, %526, %3 : vector<2x1xi32>
    %528 = arith.index_cast %524 : i32 to index
    %c0_251 = arith.constant 0 : index
    %c0_252 = arith.constant 0 : index
    %529 = vector.load %arg2[%528, %c0_251, %c0_252] : memref<8x2x16xf32, #tpu.memory_space<vmem>>, vector<1x2x16xf32>
    %530 = vector.shape_cast %529 : vector<1x2x16xf32> to vector<2x16xf32>
    %531 = arith.truncf %530 : vector<2x16xf32> to vector<2x16xbf16>
    %c0_253 = arith.constant 0 : index
    %c0_254 = arith.constant 0 : index
    %532 = vector.load %arg5[%c0_253, %c0_254] : memref<16x128xbf16, #tpu.memory_space<vmem>>, vector<16x128xbf16>
    %cst_255 = arith.constant dense<0.000000e+00> : vector<2x128xf32>
    %533 = tpu.matmul %531, %532, %cst_255 {dimension_numbers = #tpu.dot_dimension_numbers<[1], [0], [0], [1], [0, 0, 1, 1], [], []>} : vector<2x16xbf16>, vector<16x128xbf16>, vector<2x128xf32> -> vector<2x128xf32>
    %c0_256 = arith.constant 0 : index
    %c0_257 = arith.constant 0 : index
    %534 = vector.load %arg14[%c0_256, %c0_257] : memref<2x32xf32, #tpu.memory_space<vmem>>, vector<2x32xf32>
    %535 = arith.truncf %534 : vector<2x32xf32> to vector<2x32xbf16>
    %c0_258 = arith.constant 0 : index
    %c0_259 = arith.constant 0 : index
    %536 = vector.load %arg9[%c0_258, %c0_259] : memref<32x128xbf16, #tpu.memory_space<vmem>>, vector<32x128xbf16>
    %cst_260 = arith.constant dense<0.000000e+00> : vector<2x128xf32>
    %537 = tpu.matmul %535, %536, %cst_260 {dimension_numbers = #tpu.dot_dimension_numbers<[1], [0], [0], [1], [0, 0, 1, 1], [], []>} : vector<2x32xbf16>, vector<32x128xbf16>, vector<2x128xf32> -> vector<2x128xf32>
    %538 = arith.addf %533, %537 : vector<2x128xf32>
    %c0_261 = arith.constant 0 : index
    %c0_262 = arith.constant 0 : index
    %539 = vector.load %arg7[%c0_261, %c0_262] : memref<1x128xf32, #tpu.memory_space<vmem>>, vector<1x128xf32>
    %540 = vector.broadcast %539 : vector<1x128xf32> to vector<2x128xf32>
    %541 = arith.addf %538, %540 : vector<2x128xf32>
    %542 = vector.extract_strided_slice %541 {offsets = [0, 0], sizes = [2, 64], strides = [1, 1]} : vector<2x128xf32> to vector<2x64xf32>
    %543 = arith.negf %542 : vector<2x64xf32>
    %544 = math.exp %543 : vector<2x64xf32>
    %cst_263 = arith.constant 1.000000e+00 : f32
    %545 = vector.broadcast %cst_263 : f32 to vector<2x64xf32>
    %546 = arith.addf %545, %544 : vector<2x64xf32>
    %547 = arith.divf %545, %546 : vector<2x64xf32>
    %548 = vector.extract_strided_slice %547 {offsets = [0, 0], sizes = [2, 32], strides = [1, 1]} : vector<2x64xf32> to vector<2x32xf32>
    %549 = vector.extract_strided_slice %547 {offsets = [0, 32], sizes = [2, 32], strides = [1, 1]} : vector<2x64xf32> to vector<2x32xf32>
    %550 = vector.extract_strided_slice %541 {offsets = [0, 64], sizes = [2, 32], strides = [1, 1]} : vector<2x128xf32> to vector<2x32xf32>
    %551 = math.tanh %550 : vector<2x32xf32>
    %552 = vector.extract_strided_slice %541 {offsets = [0, 96], sizes = [2, 32], strides = [1, 1]} : vector<2x128xf32> to vector<2x32xf32>
    %553 = arith.negf %552 : vector<2x32xf32>
    %554 = math.exp %553 : vector<2x32xf32>
    %cst_264 = arith.constant 1.000000e+00 : f32
    %555 = vector.broadcast %cst_264 : f32 to vector<2x32xf32>
    %556 = arith.addf %555, %554 : vector<2x32xf32>
    %557 = arith.divf %555, %556 : vector<2x32xf32>
    %c0_265 = arith.constant 0 : index
    %c0_266 = arith.constant 0 : index
    %558 = vector.load %arg15[%c0_265, %c0_266] : memref<2x32xf32, #tpu.memory_space<vmem>>, vector<2x32xf32>
    %559 = arith.mulf %549, %558 : vector<2x32xf32>
    %560 = arith.mulf %548, %551 : vector<2x32xf32>
    %561 = arith.addf %559, %560 : vector<2x32xf32>
    %562 = math.tanh %561 : vector<2x32xf32>
    %563 = arith.mulf %557, %562 : vector<2x32xf32>
    %c0_267 = arith.constant 0 : index
    %c0_268 = arith.constant 0 : index
    %564 = vector.load %arg15[%c0_267, %c0_268] : memref<2x32xf32, #tpu.memory_space<vmem>>, vector<2x32xf32>
    %565 = vector.shape_cast %527 : vector<2x1xi1> to vector<2x1xi1>
    %566 = vector.broadcast %565 : vector<2x1xi1> to vector<2x32xi1>
    %567 = arith.select %566, %561, %564 : vector<2x32xi1>, vector<2x32xf32>
    %c0_269 = arith.constant 0 : index
    %c0_270 = arith.constant 0 : index
    %568 = vector.load %arg15[%c0_269, %c0_270] : memref<2x32xf32, #tpu.memory_space<vmem>>, vector<2x32xf32>
    tpu.vector_store %arg15[%c0_269, %c0_270], %567 {strides = array<i32>} : memref<2x32xf32, #tpu.memory_space<vmem>>, vector<2x32xf32>,
    %c0_271 = arith.constant 0 : index
    %c0_272 = arith.constant 0 : index
    %569 = vector.load %arg14[%c0_271, %c0_272] : memref<2x32xf32, #tpu.memory_space<vmem>>, vector<2x32xf32>
    %570 = vector.shape_cast %527 : vector<2x1xi1> to vector<2x1xi1>
    %571 = vector.broadcast %570 : vector<2x1xi1> to vector<2x32xi1>
    %572 = arith.select %571, %563, %569 : vector<2x32xi1>, vector<2x32xf32>
    %c0_273 = arith.constant 0 : index
    %c0_274 = arith.constant 0 : index
    %573 = vector.load %arg14[%c0_273, %c0_274] : memref<2x32xf32, #tpu.memory_space<vmem>>, vector<2x32xf32>
    tpu.vector_store %arg14[%c0_273, %c0_274], %572 {strides = array<i32>} : memref<2x32xf32, #tpu.memory_space<vmem>>, vector<2x32xf32>,
    %cst_275 = arith.constant 0.000000e+00 : f32
    %574 = vector.shape_cast %527 : vector<2x1xi1> to vector<2x1xi1>
    %575 = vector.broadcast %574 : vector<2x1xi1> to vector<2x32xi1>
    %576 = vector.broadcast %cst_275 : f32 to vector<2x32xf32>
    %577 = arith.select %575, %563, %576 : vector<2x32xi1>, vector<2x32xf32>
    %578 = arith.index_cast %524 : i32 to index
    %c0_276 = arith.constant 0 : index
    %c0_277 = arith.constant 0 : index
    %579 = vector.load %arg11[%578, %c0_276, %c0_277] : memref<8x2x32xf32, #tpu.memory_space<vmem>>, vector<1x2x32xf32>
    %580 = vector.shape_cast %579 : vector<1x2x32xf32> to vector<2x32xf32>
    %581 = vector.shape_cast %577 : vector<2x32xf32> to vector<1x2x32xf32>
    tpu.vector_store %arg11[%578, %c0_276, %c0_277], %581 {strides = array<i32>} : memref<8x2x32xf32, #tpu.memory_space<vmem>>, vector<1x2x32xf32>,
    %c5_i32 = arith.constant 5 : i32
    %582 = arith.addi %4, %c5_i32 : i32
    %583 = vector.broadcast %582 : i32 to vector<2x1xi32>
    %584 = arith.cmpi slt, %583, %3 : vector<2x1xi32>
    %585 = arith.index_cast %c5_i32 : i32 to index
    %c0_278 = arith.constant 0 : index
    %c0_279 = arith.constant 0 : index
    %586 = vector.load %arg1[%585, %c0_278, %c0_279] : memref<8x2x16xf32, #tpu.memory_space<vmem>>, vector<1x2x16xf32>
    %587 = vector.shape_cast %586 : vector<1x2x16xf32> to vector<2x16xf32>
    %588 = arith.truncf %587 : vector<2x16xf32> to vector<2x16xbf16>
    %c0_280 = arith.constant 0 : index
    %c0_281 = arith.constant 0 : index
    %589 = vector.load %arg4[%c0_280, %c0_281] : memref<16x128xbf16, #tpu.memory_space<vmem>>, vector<16x128xbf16>
    %cst_282 = arith.constant dense<0.000000e+00> : vector<2x128xf32>
    %590 = tpu.matmul %588, %589, %cst_282 {dimension_numbers = #tpu.dot_dimension_numbers<[1], [0], [0], [1], [0, 0, 1, 1], [], []>} : vector<2x16xbf16>, vector<16x128xbf16>, vector<2x128xf32> -> vector<2x128xf32>
    %c0_283 = arith.constant 0 : index
    %c0_284 = arith.constant 0 : index
    %591 = vector.load %arg12[%c0_283, %c0_284] : memref<2x32xf32, #tpu.memory_space<vmem>>, vector<2x32xf32>
    %592 = arith.truncf %591 : vector<2x32xf32> to vector<2x32xbf16>
    %c0_285 = arith.constant 0 : index
    %c0_286 = arith.constant 0 : index
    %593 = vector.load %arg8[%c0_285, %c0_286] : memref<32x128xbf16, #tpu.memory_space<vmem>>, vector<32x128xbf16>
    %cst_287 = arith.constant dense<0.000000e+00> : vector<2x128xf32>
    %594 = tpu.matmul %592, %593, %cst_287 {dimension_numbers = #tpu.dot_dimension_numbers<[1], [0], [0], [1], [0, 0, 1, 1], [], []>} : vector<2x32xbf16>, vector<32x128xbf16>, vector<2x128xf32> -> vector<2x128xf32>
    %595 = arith.addf %590, %594 : vector<2x128xf32>
    %c0_288 = arith.constant 0 : index
    %c0_289 = arith.constant 0 : index
    %596 = vector.load %arg6[%c0_288, %c0_289] : memref<1x128xf32, #tpu.memory_space<vmem>>, vector<1x128xf32>
    %597 = vector.broadcast %596 : vector<1x128xf32> to vector<2x128xf32>
    %598 = arith.addf %595, %597 : vector<2x128xf32>
    %599 = vector.extract_strided_slice %598 {offsets = [0, 0], sizes = [2, 64], strides = [1, 1]} : vector<2x128xf32> to vector<2x64xf32>
    %600 = arith.negf %599 : vector<2x64xf32>
    %601 = math.exp %600 : vector<2x64xf32>
    %cst_290 = arith.constant 1.000000e+00 : f32
    %602 = vector.broadcast %cst_290 : f32 to vector<2x64xf32>
    %603 = arith.addf %602, %601 : vector<2x64xf32>
    %604 = arith.divf %602, %603 : vector<2x64xf32>
    %605 = vector.extract_strided_slice %604 {offsets = [0, 0], sizes = [2, 32], strides = [1, 1]} : vector<2x64xf32> to vector<2x32xf32>
    %606 = vector.extract_strided_slice %604 {offsets = [0, 32], sizes = [2, 32], strides = [1, 1]} : vector<2x64xf32> to vector<2x32xf32>
    %607 = vector.extract_strided_slice %598 {offsets = [0, 64], sizes = [2, 32], strides = [1, 1]} : vector<2x128xf32> to vector<2x32xf32>
    %608 = math.tanh %607 : vector<2x32xf32>
    %609 = vector.extract_strided_slice %598 {offsets = [0, 96], sizes = [2, 32], strides = [1, 1]} : vector<2x128xf32> to vector<2x32xf32>
    %610 = arith.negf %609 : vector<2x32xf32>
    %611 = math.exp %610 : vector<2x32xf32>
    %cst_291 = arith.constant 1.000000e+00 : f32
    %612 = vector.broadcast %cst_291 : f32 to vector<2x32xf32>
    %613 = arith.addf %612, %611 : vector<2x32xf32>
    %614 = arith.divf %612, %613 : vector<2x32xf32>
    %c0_292 = arith.constant 0 : index
    %c0_293 = arith.constant 0 : index
    %615 = vector.load %arg13[%c0_292, %c0_293] : memref<2x32xf32, #tpu.memory_space<vmem>>, vector<2x32xf32>
    %616 = arith.mulf %606, %615 : vector<2x32xf32>
    %617 = arith.mulf %605, %608 : vector<2x32xf32>
    %618 = arith.addf %616, %617 : vector<2x32xf32>
    %619 = math.tanh %618 : vector<2x32xf32>
    %620 = arith.mulf %614, %619 : vector<2x32xf32>
    %c0_294 = arith.constant 0 : index
    %c0_295 = arith.constant 0 : index
    %621 = vector.load %arg13[%c0_294, %c0_295] : memref<2x32xf32, #tpu.memory_space<vmem>>, vector<2x32xf32>
    %622 = vector.shape_cast %584 : vector<2x1xi1> to vector<2x1xi1>
    %623 = vector.broadcast %622 : vector<2x1xi1> to vector<2x32xi1>
    %624 = arith.select %623, %618, %621 : vector<2x32xi1>, vector<2x32xf32>
    %c0_296 = arith.constant 0 : index
    %c0_297 = arith.constant 0 : index
    %625 = vector.load %arg13[%c0_296, %c0_297] : memref<2x32xf32, #tpu.memory_space<vmem>>, vector<2x32xf32>
    tpu.vector_store %arg13[%c0_296, %c0_297], %624 {strides = array<i32>} : memref<2x32xf32, #tpu.memory_space<vmem>>, vector<2x32xf32>,
    %c0_298 = arith.constant 0 : index
    %c0_299 = arith.constant 0 : index
    %626 = vector.load %arg12[%c0_298, %c0_299] : memref<2x32xf32, #tpu.memory_space<vmem>>, vector<2x32xf32>
    %627 = vector.shape_cast %584 : vector<2x1xi1> to vector<2x1xi1>
    %628 = vector.broadcast %627 : vector<2x1xi1> to vector<2x32xi1>
    %629 = arith.select %628, %620, %626 : vector<2x32xi1>, vector<2x32xf32>
    %c0_300 = arith.constant 0 : index
    %c0_301 = arith.constant 0 : index
    %630 = vector.load %arg12[%c0_300, %c0_301] : memref<2x32xf32, #tpu.memory_space<vmem>>, vector<2x32xf32>
    tpu.vector_store %arg12[%c0_300, %c0_301], %629 {strides = array<i32>} : memref<2x32xf32, #tpu.memory_space<vmem>>, vector<2x32xf32>,
    %cst_302 = arith.constant 0.000000e+00 : f32
    %631 = vector.shape_cast %584 : vector<2x1xi1> to vector<2x1xi1>
    %632 = vector.broadcast %631 : vector<2x1xi1> to vector<2x32xi1>
    %633 = vector.broadcast %cst_302 : f32 to vector<2x32xf32>
    %634 = arith.select %632, %620, %633 : vector<2x32xi1>, vector<2x32xf32>
    %635 = arith.index_cast %c5_i32 : i32 to index
    %c0_303 = arith.constant 0 : index
    %c0_304 = arith.constant 0 : index
    %636 = vector.load %arg10[%635, %c0_303, %c0_304] : memref<8x2x32xf32, #tpu.memory_space<vmem>>, vector<1x2x32xf32>
    %637 = vector.shape_cast %636 : vector<1x2x32xf32> to vector<2x32xf32>
    %638 = vector.shape_cast %634 : vector<2x32xf32> to vector<1x2x32xf32>
    tpu.vector_store %arg10[%635, %c0_303, %c0_304], %638 {strides = array<i32>} : memref<8x2x32xf32, #tpu.memory_space<vmem>>, vector<1x2x32xf32>,
    %c7_i32_305 = arith.constant 7 : i32
    %639 = arith.subi %c7_i32_305, %c5_i32 : i32
    %640 = arith.addi %6, %639 : i32
    %641 = vector.broadcast %640 : i32 to vector<2x1xi32>
    %642 = arith.cmpi slt, %641, %3 : vector<2x1xi32>
    %643 = arith.index_cast %639 : i32 to index
    %c0_306 = arith.constant 0 : index
    %c0_307 = arith.constant 0 : index
    %644 = vector.load %arg2[%643, %c0_306, %c0_307] : memref<8x2x16xf32, #tpu.memory_space<vmem>>, vector<1x2x16xf32>
    %645 = vector.shape_cast %644 : vector<1x2x16xf32> to vector<2x16xf32>
    %646 = arith.truncf %645 : vector<2x16xf32> to vector<2x16xbf16>
    %c0_308 = arith.constant 0 : index
    %c0_309 = arith.constant 0 : index
    %647 = vector.load %arg5[%c0_308, %c0_309] : memref<16x128xbf16, #tpu.memory_space<vmem>>, vector<16x128xbf16>
    %cst_310 = arith.constant dense<0.000000e+00> : vector<2x128xf32>
    %648 = tpu.matmul %646, %647, %cst_310 {dimension_numbers = #tpu.dot_dimension_numbers<[1], [0], [0], [1], [0, 0, 1, 1], [], []>} : vector<2x16xbf16>, vector<16x128xbf16>, vector<2x128xf32> -> vector<2x128xf32>
    %c0_311 = arith.constant 0 : index
    %c0_312 = arith.constant 0 : index
    %649 = vector.load %arg14[%c0_311, %c0_312] : memref<2x32xf32, #tpu.memory_space<vmem>>, vector<2x32xf32>
    %650 = arith.truncf %649 : vector<2x32xf32> to vector<2x32xbf16>
    %c0_313 = arith.constant 0 : index
    %c0_314 = arith.constant 0 : index
    %651 = vector.load %arg9[%c0_313, %c0_314] : memref<32x128xbf16, #tpu.memory_space<vmem>>, vector<32x128xbf16>
    %cst_315 = arith.constant dense<0.000000e+00> : vector<2x128xf32>
    %652 = tpu.matmul %650, %651, %cst_315 {dimension_numbers = #tpu.dot_dimension_numbers<[1], [0], [0], [1], [0, 0, 1, 1], [], []>} : vector<2x32xbf16>, vector<32x128xbf16>, vector<2x128xf32> -> vector<2x128xf32>
    %653 = arith.addf %648, %652 : vector<2x128xf32>
    %c0_316 = arith.constant 0 : index
    %c0_317 = arith.constant 0 : index
    %654 = vector.load %arg7[%c0_316, %c0_317] : memref<1x128xf32, #tpu.memory_space<vmem>>, vector<1x128xf32>
    %655 = vector.broadcast %654 : vector<1x128xf32> to vector<2x128xf32>
    %656 = arith.addf %653, %655 : vector<2x128xf32>
    %657 = vector.extract_strided_slice %656 {offsets = [0, 0], sizes = [2, 64], strides = [1, 1]} : vector<2x128xf32> to vector<2x64xf32>
    %658 = arith.negf %657 : vector<2x64xf32>
    %659 = math.exp %658 : vector<2x64xf32>
    %cst_318 = arith.constant 1.000000e+00 : f32
    %660 = vector.broadcast %cst_318 : f32 to vector<2x64xf32>
    %661 = arith.addf %660, %659 : vector<2x64xf32>
    %662 = arith.divf %660, %661 : vector<2x64xf32>
    %663 = vector.extract_strided_slice %662 {offsets = [0, 0], sizes = [2, 32], strides = [1, 1]} : vector<2x64xf32> to vector<2x32xf32>
    %664 = vector.extract_strided_slice %662 {offsets = [0, 32], sizes = [2, 32], strides = [1, 1]} : vector<2x64xf32> to vector<2x32xf32>
    %665 = vector.extract_strided_slice %656 {offsets = [0, 64], sizes = [2, 32], strides = [1, 1]} : vector<2x128xf32> to vector<2x32xf32>
    %666 = math.tanh %665 : vector<2x32xf32>
    %667 = vector.extract_strided_slice %656 {offsets = [0, 96], sizes = [2, 32], strides = [1, 1]} : vector<2x128xf32> to vector<2x32xf32>
    %668 = arith.negf %667 : vector<2x32xf32>
    %669 = math.exp %668 : vector<2x32xf32>
    %cst_319 = arith.constant 1.000000e+00 : f32
    %670 = vector.broadcast %cst_319 : f32 to vector<2x32xf32>
    %671 = arith.addf %670, %669 : vector<2x32xf32>
    %672 = arith.divf %670, %671 : vector<2x32xf32>
    %c0_320 = arith.constant 0 : index
    %c0_321 = arith.constant 0 : index
    %673 = vector.load %arg15[%c0_320, %c0_321] : memref<2x32xf32, #tpu.memory_space<vmem>>, vector<2x32xf32>
    %674 = arith.mulf %664, %673 : vector<2x32xf32>
    %675 = arith.mulf %663, %666 : vector<2x32xf32>
    %676 = arith.addf %674, %675 : vector<2x32xf32>
    %677 = math.tanh %676 : vector<2x32xf32>
    %678 = arith.mulf %672, %677 : vector<2x32xf32>
    %c0_322 = arith.constant 0 : index
    %c0_323 = arith.constant 0 : index
    %679 = vector.load %arg15[%c0_322, %c0_323] : memref<2x32xf32, #tpu.memory_space<vmem>>, vector<2x32xf32>
    %680 = vector.shape_cast %642 : vector<2x1xi1> to vector<2x1xi1>
    %681 = vector.broadcast %680 : vector<2x1xi1> to vector<2x32xi1>
    %682 = arith.select %681, %676, %679 : vector<2x32xi1>, vector<2x32xf32>
    %c0_324 = arith.constant 0 : index
    %c0_325 = arith.constant 0 : index
    %683 = vector.load %arg15[%c0_324, %c0_325] : memref<2x32xf32, #tpu.memory_space<vmem>>, vector<2x32xf32>
    tpu.vector_store %arg15[%c0_324, %c0_325], %682 {strides = array<i32>} : memref<2x32xf32, #tpu.memory_space<vmem>>, vector<2x32xf32>,
    %c0_326 = arith.constant 0 : index
    %c0_327 = arith.constant 0 : index
    %684 = vector.load %arg14[%c0_326, %c0_327] : memref<2x32xf32, #tpu.memory_space<vmem>>, vector<2x32xf32>
    %685 = vector.shape_cast %642 : vector<2x1xi1> to vector<2x1xi1>
    %686 = vector.broadcast %685 : vector<2x1xi1> to vector<2x32xi1>
    %687 = arith.select %686, %678, %684 : vector<2x32xi1>, vector<2x32xf32>
    %c0_328 = arith.constant 0 : index
    %c0_329 = arith.constant 0 : index
    %688 = vector.load %arg14[%c0_328, %c0_329] : memref<2x32xf32, #tpu.memory_space<vmem>>, vector<2x32xf32>
    tpu.vector_store %arg14[%c0_328, %c0_329], %687 {strides = array<i32>} : memref<2x32xf32, #tpu.memory_space<vmem>>, vector<2x32xf32>,
    %cst_330 = arith.constant 0.000000e+00 : f32
    %689 = vector.shape_cast %642 : vector<2x1xi1> to vector<2x1xi1>
    %690 = vector.broadcast %689 : vector<2x1xi1> to vector<2x32xi1>
    %691 = vector.broadcast %cst_330 : f32 to vector<2x32xf32>
    %692 = arith.select %690, %678, %691 : vector<2x32xi1>, vector<2x32xf32>
    %693 = arith.index_cast %639 : i32 to index
    %c0_331 = arith.constant 0 : index
    %c0_332 = arith.constant 0 : index
    %694 = vector.load %arg11[%693, %c0_331, %c0_332] : memref<8x2x32xf32, #tpu.memory_space<vmem>>, vector<1x2x32xf32>
    %695 = vector.shape_cast %694 : vector<1x2x32xf32> to vector<2x32xf32>
    %696 = vector.shape_cast %692 : vector<2x32xf32> to vector<1x2x32xf32>
    tpu.vector_store %arg11[%693, %c0_331, %c0_332], %696 {strides = array<i32>} : memref<8x2x32xf32, #tpu.memory_space<vmem>>, vector<1x2x32xf32>,
    %c6_i32 = arith.constant 6 : i32
    %697 = arith.addi %4, %c6_i32 : i32
    %698 = vector.broadcast %697 : i32 to vector<2x1xi32>
    %699 = arith.cmpi slt, %698, %3 : vector<2x1xi32>
    %700 = arith.index_cast %c6_i32 : i32 to index
    %c0_333 = arith.constant 0 : index
    %c0_334 = arith.constant 0 : index
    %701 = vector.load %arg1[%700, %c0_333, %c0_334] : memref<8x2x16xf32, #tpu.memory_space<vmem>>, vector<1x2x16xf32>
    %702 = vector.shape_cast %701 : vector<1x2x16xf32> to vector<2x16xf32>
    %703 = arith.truncf %702 : vector<2x16xf32> to vector<2x16xbf16>
    %c0_335 = arith.constant 0 : index
    %c0_336 = arith.constant 0 : index
    %704 = vector.load %arg4[%c0_335, %c0_336] : memref<16x128xbf16, #tpu.memory_space<vmem>>, vector<16x128xbf16>
    %cst_337 = arith.constant dense<0.000000e+00> : vector<2x128xf32>
    %705 = tpu.matmul %703, %704, %cst_337 {dimension_numbers = #tpu.dot_dimension_numbers<[1], [0], [0], [1], [0, 0, 1, 1], [], []>} : vector<2x16xbf16>, vector<16x128xbf16>, vector<2x128xf32> -> vector<2x128xf32>
    %c0_338 = arith.constant 0 : index
    %c0_339 = arith.constant 0 : index
    %706 = vector.load %arg12[%c0_338, %c0_339] : memref<2x32xf32, #tpu.memory_space<vmem>>, vector<2x32xf32>
    %707 = arith.truncf %706 : vector<2x32xf32> to vector<2x32xbf16>
    %c0_340 = arith.constant 0 : index
    %c0_341 = arith.constant 0 : index
    %708 = vector.load %arg8[%c0_340, %c0_341] : memref<32x128xbf16, #tpu.memory_space<vmem>>, vector<32x128xbf16>
    %cst_342 = arith.constant dense<0.000000e+00> : vector<2x128xf32>
    %709 = tpu.matmul %707, %708, %cst_342 {dimension_numbers = #tpu.dot_dimension_numbers<[1], [0], [0], [1], [0, 0, 1, 1], [], []>} : vector<2x32xbf16>, vector<32x128xbf16>, vector<2x128xf32> -> vector<2x128xf32>
    %710 = arith.addf %705, %709 : vector<2x128xf32>
    %c0_343 = arith.constant 0 : index
    %c0_344 = arith.constant 0 : index
    %711 = vector.load %arg6[%c0_343, %c0_344] : memref<1x128xf32, #tpu.memory_space<vmem>>, vector<1x128xf32>
    %712 = vector.broadcast %711 : vector<1x128xf32> to vector<2x128xf32>
    %713 = arith.addf %710, %712 : vector<2x128xf32>
    %714 = vector.extract_strided_slice %713 {offsets = [0, 0], sizes = [2, 64], strides = [1, 1]} : vector<2x128xf32> to vector<2x64xf32>
    %715 = arith.negf %714 : vector<2x64xf32>
    %716 = math.exp %715 : vector<2x64xf32>
    %cst_345 = arith.constant 1.000000e+00 : f32
    %717 = vector.broadcast %cst_345 : f32 to vector<2x64xf32>
    %718 = arith.addf %717, %716 : vector<2x64xf32>
    %719 = arith.divf %717, %718 : vector<2x64xf32>
    %720 = vector.extract_strided_slice %719 {offsets = [0, 0], sizes = [2, 32], strides = [1, 1]} : vector<2x64xf32> to vector<2x32xf32>
    %721 = vector.extract_strided_slice %719 {offsets = [0, 32], sizes = [2, 32], strides = [1, 1]} : vector<2x64xf32> to vector<2x32xf32>
    %722 = vector.extract_strided_slice %713 {offsets = [0, 64], sizes = [2, 32], strides = [1, 1]} : vector<2x128xf32> to vector<2x32xf32>
    %723 = math.tanh %722 : vector<2x32xf32>
    %724 = vector.extract_strided_slice %713 {offsets = [0, 96], sizes = [2, 32], strides = [1, 1]} : vector<2x128xf32> to vector<2x32xf32>
    %725 = arith.negf %724 : vector<2x32xf32>
    %726 = math.exp %725 : vector<2x32xf32>
    %cst_346 = arith.constant 1.000000e+00 : f32
    %727 = vector.broadcast %cst_346 : f32 to vector<2x32xf32>
    %728 = arith.addf %727, %726 : vector<2x32xf32>
    %729 = arith.divf %727, %728 : vector<2x32xf32>
    %c0_347 = arith.constant 0 : index
    %c0_348 = arith.constant 0 : index
    %730 = vector.load %arg13[%c0_347, %c0_348] : memref<2x32xf32, #tpu.memory_space<vmem>>, vector<2x32xf32>
    %731 = arith.mulf %721, %730 : vector<2x32xf32>
    %732 = arith.mulf %720, %723 : vector<2x32xf32>
    %733 = arith.addf %731, %732 : vector<2x32xf32>
    %734 = math.tanh %733 : vector<2x32xf32>
    %735 = arith.mulf %729, %734 : vector<2x32xf32>
    %c0_349 = arith.constant 0 : index
    %c0_350 = arith.constant 0 : index
    %736 = vector.load %arg13[%c0_349, %c0_350] : memref<2x32xf32, #tpu.memory_space<vmem>>, vector<2x32xf32>
    %737 = vector.shape_cast %699 : vector<2x1xi1> to vector<2x1xi1>
    %738 = vector.broadcast %737 : vector<2x1xi1> to vector<2x32xi1>
    %739 = arith.select %738, %733, %736 : vector<2x32xi1>, vector<2x32xf32>
    %c0_351 = arith.constant 0 : index
    %c0_352 = arith.constant 0 : index
    %740 = vector.load %arg13[%c0_351, %c0_352] : memref<2x32xf32, #tpu.memory_space<vmem>>, vector<2x32xf32>
    tpu.vector_store %arg13[%c0_351, %c0_352], %739 {strides = array<i32>} : memref<2x32xf32, #tpu.memory_space<vmem>>, vector<2x32xf32>,
    %c0_353 = arith.constant 0 : index
    %c0_354 = arith.constant 0 : index
    %741 = vector.load %arg12[%c0_353, %c0_354] : memref<2x32xf32, #tpu.memory_space<vmem>>, vector<2x32xf32>
    %742 = vector.shape_cast %699 : vector<2x1xi1> to vector<2x1xi1>
    %743 = vector.broadcast %742 : vector<2x1xi1> to vector<2x32xi1>
    %744 = arith.select %743, %735, %741 : vector<2x32xi1>, vector<2x32xf32>
    %c0_355 = arith.constant 0 : index
    %c0_356 = arith.constant 0 : index
    %745 = vector.load %arg12[%c0_355, %c0_356] : memref<2x32xf32, #tpu.memory_space<vmem>>, vector<2x32xf32>
    tpu.vector_store %arg12[%c0_355, %c0_356], %744 {strides = array<i32>} : memref<2x32xf32, #tpu.memory_space<vmem>>, vector<2x32xf32>,
    %cst_357 = arith.constant 0.000000e+00 : f32
    %746 = vector.shape_cast %699 : vector<2x1xi1> to vector<2x1xi1>
    %747 = vector.broadcast %746 : vector<2x1xi1> to vector<2x32xi1>
    %748 = vector.broadcast %cst_357 : f32 to vector<2x32xf32>
    %749 = arith.select %747, %735, %748 : vector<2x32xi1>, vector<2x32xf32>
    %750 = arith.index_cast %c6_i32 : i32 to index
    %c0_358 = arith.constant 0 : index
    %c0_359 = arith.constant 0 : index
    %751 = vector.load %arg10[%750, %c0_358, %c0_359] : memref<8x2x32xf32, #tpu.memory_space<vmem>>, vector<1x2x32xf32>
    %752 = vector.shape_cast %751 : vector<1x2x32xf32> to vector<2x32xf32>
    %753 = vector.shape_cast %749 : vector<2x32xf32> to vector<1x2x32xf32>
    tpu.vector_store %arg10[%750, %c0_358, %c0_359], %753 {strides = array<i32>} : memref<8x2x32xf32, #tpu.memory_space<vmem>>, vector<1x2x32xf32>,
    %c7_i32_360 = arith.constant 7 : i32
    %754 = arith.subi %c7_i32_360, %c6_i32 : i32
    %755 = arith.addi %6, %754 : i32
    %756 = vector.broadcast %755 : i32 to vector<2x1xi32>
    %757 = arith.cmpi slt, %756, %3 : vector<2x1xi32>
    %758 = arith.index_cast %754 : i32 to index
    %c0_361 = arith.constant 0 : index
    %c0_362 = arith.constant 0 : index
    %759 = vector.load %arg2[%758, %c0_361, %c0_362] : memref<8x2x16xf32, #tpu.memory_space<vmem>>, vector<1x2x16xf32>
    %760 = vector.shape_cast %759 : vector<1x2x16xf32> to vector<2x16xf32>
    %761 = arith.truncf %760 : vector<2x16xf32> to vector<2x16xbf16>
    %c0_363 = arith.constant 0 : index
    %c0_364 = arith.constant 0 : index
    %762 = vector.load %arg5[%c0_363, %c0_364] : memref<16x128xbf16, #tpu.memory_space<vmem>>, vector<16x128xbf16>
    %cst_365 = arith.constant dense<0.000000e+00> : vector<2x128xf32>
    %763 = tpu.matmul %761, %762, %cst_365 {dimension_numbers = #tpu.dot_dimension_numbers<[1], [0], [0], [1], [0, 0, 1, 1], [], []>} : vector<2x16xbf16>, vector<16x128xbf16>, vector<2x128xf32> -> vector<2x128xf32>
    %c0_366 = arith.constant 0 : index
    %c0_367 = arith.constant 0 : index
    %764 = vector.load %arg14[%c0_366, %c0_367] : memref<2x32xf32, #tpu.memory_space<vmem>>, vector<2x32xf32>
    %765 = arith.truncf %764 : vector<2x32xf32> to vector<2x32xbf16>
    %c0_368 = arith.constant 0 : index
    %c0_369 = arith.constant 0 : index
    %766 = vector.load %arg9[%c0_368, %c0_369] : memref<32x128xbf16, #tpu.memory_space<vmem>>, vector<32x128xbf16>
    %cst_370 = arith.constant dense<0.000000e+00> : vector<2x128xf32>
    %767 = tpu.matmul %765, %766, %cst_370 {dimension_numbers = #tpu.dot_dimension_numbers<[1], [0], [0], [1], [0, 0, 1, 1], [], []>} : vector<2x32xbf16>, vector<32x128xbf16>, vector<2x128xf32> -> vector<2x128xf32>
    %768 = arith.addf %763, %767 : vector<2x128xf32>
    %c0_371 = arith.constant 0 : index
    %c0_372 = arith.constant 0 : index
    %769 = vector.load %arg7[%c0_371, %c0_372] : memref<1x128xf32, #tpu.memory_space<vmem>>, vector<1x128xf32>
    %770 = vector.broadcast %769 : vector<1x128xf32> to vector<2x128xf32>
    %771 = arith.addf %768, %770 : vector<2x128xf32>
    %772 = vector.extract_strided_slice %771 {offsets = [0, 0], sizes = [2, 64], strides = [1, 1]} : vector<2x128xf32> to vector<2x64xf32>
    %773 = arith.negf %772 : vector<2x64xf32>
    %774 = math.exp %773 : vector<2x64xf32>
    %cst_373 = arith.constant 1.000000e+00 : f32
    %775 = vector.broadcast %cst_373 : f32 to vector<2x64xf32>
    %776 = arith.addf %775, %774 : vector<2x64xf32>
    %777 = arith.divf %775, %776 : vector<2x64xf32>
    %778 = vector.extract_strided_slice %777 {offsets = [0, 0], sizes = [2, 32], strides = [1, 1]} : vector<2x64xf32> to vector<2x32xf32>
    %779 = vector.extract_strided_slice %777 {offsets = [0, 32], sizes = [2, 32], strides = [1, 1]} : vector<2x64xf32> to vector<2x32xf32>
    %780 = vector.extract_strided_slice %771 {offsets = [0, 64], sizes = [2, 32], strides = [1, 1]} : vector<2x128xf32> to vector<2x32xf32>
    %781 = math.tanh %780 : vector<2x32xf32>
    %782 = vector.extract_strided_slice %771 {offsets = [0, 96], sizes = [2, 32], strides = [1, 1]} : vector<2x128xf32> to vector<2x32xf32>
    %783 = arith.negf %782 : vector<2x32xf32>
    %784 = math.exp %783 : vector<2x32xf32>
    %cst_374 = arith.constant 1.000000e+00 : f32
    %785 = vector.broadcast %cst_374 : f32 to vector<2x32xf32>
    %786 = arith.addf %785, %784 : vector<2x32xf32>
    %787 = arith.divf %785, %786 : vector<2x32xf32>
    %c0_375 = arith.constant 0 : index
    %c0_376 = arith.constant 0 : index
    %788 = vector.load %arg15[%c0_375, %c0_376] : memref<2x32xf32, #tpu.memory_space<vmem>>, vector<2x32xf32>
    %789 = arith.mulf %779, %788 : vector<2x32xf32>
    %790 = arith.mulf %778, %781 : vector<2x32xf32>
    %791 = arith.addf %789, %790 : vector<2x32xf32>
    %792 = math.tanh %791 : vector<2x32xf32>
    %793 = arith.mulf %787, %792 : vector<2x32xf32>
    %c0_377 = arith.constant 0 : index
    %c0_378 = arith.constant 0 : index
    %794 = vector.load %arg15[%c0_377, %c0_378] : memref<2x32xf32, #tpu.memory_space<vmem>>, vector<2x32xf32>
    %795 = vector.shape_cast %757 : vector<2x1xi1> to vector<2x1xi1>
    %796 = vector.broadcast %795 : vector<2x1xi1> to vector<2x32xi1>
    %797 = arith.select %796, %791, %794 : vector<2x32xi1>, vector<2x32xf32>
    %c0_379 = arith.constant 0 : index
    %c0_380 = arith.constant 0 : index
    %798 = vector.load %arg15[%c0_379, %c0_380] : memref<2x32xf32, #tpu.memory_space<vmem>>, vector<2x32xf32>
    tpu.vector_store %arg15[%c0_379, %c0_380], %797 {strides = array<i32>} : memref<2x32xf32, #tpu.memory_space<vmem>>, vector<2x32xf32>,
    %c0_381 = arith.constant 0 : index
    %c0_382 = arith.constant 0 : index
    %799 = vector.load %arg14[%c0_381, %c0_382] : memref<2x32xf32, #tpu.memory_space<vmem>>, vector<2x32xf32>
    %800 = vector.shape_cast %757 : vector<2x1xi1> to vector<2x1xi1>
    %801 = vector.broadcast %800 : vector<2x1xi1> to vector<2x32xi1>
    %802 = arith.select %801, %793, %799 : vector<2x32xi1>, vector<2x32xf32>
    %c0_383 = arith.constant 0 : index
    %c0_384 = arith.constant 0 : index
    %803 = vector.load %arg14[%c0_383, %c0_384] : memref<2x32xf32, #tpu.memory_space<vmem>>, vector<2x32xf32>
    tpu.vector_store %arg14[%c0_383, %c0_384], %802 {strides = array<i32>} : memref<2x32xf32, #tpu.memory_space<vmem>>, vector<2x32xf32>,
    %cst_385 = arith.constant 0.000000e+00 : f32
    %804 = vector.shape_cast %757 : vector<2x1xi1> to vector<2x1xi1>
    %805 = vector.broadcast %804 : vector<2x1xi1> to vector<2x32xi1>
    %806 = vector.broadcast %cst_385 : f32 to vector<2x32xf32>
    %807 = arith.select %805, %793, %806 : vector<2x32xi1>, vector<2x32xf32>
    %808 = arith.index_cast %754 : i32 to index
    %c0_386 = arith.constant 0 : index
    %c0_387 = arith.constant 0 : index
    %809 = vector.load %arg11[%808, %c0_386, %c0_387] : memref<8x2x32xf32, #tpu.memory_space<vmem>>, vector<1x2x32xf32>
    %810 = vector.shape_cast %809 : vector<1x2x32xf32> to vector<2x32xf32>
    %811 = vector.shape_cast %807 : vector<2x32xf32> to vector<1x2x32xf32>
    tpu.vector_store %arg11[%808, %c0_386, %c0_387], %811 {strides = array<i32>} : memref<8x2x32xf32, #tpu.memory_space<vmem>>, vector<1x2x32xf32>,
    %c7_i32_388 = arith.constant 7 : i32
    %812 = arith.addi %4, %c7_i32_388 : i32
    %813 = vector.broadcast %812 : i32 to vector<2x1xi32>
    %814 = arith.cmpi slt, %813, %3 : vector<2x1xi32>
    %815 = arith.index_cast %c7_i32_388 : i32 to index
    %c0_389 = arith.constant 0 : index
    %c0_390 = arith.constant 0 : index
    %816 = vector.load %arg1[%815, %c0_389, %c0_390] : memref<8x2x16xf32, #tpu.memory_space<vmem>>, vector<1x2x16xf32>
    %817 = vector.shape_cast %816 : vector<1x2x16xf32> to vector<2x16xf32>
    %818 = arith.truncf %817 : vector<2x16xf32> to vector<2x16xbf16>
    %c0_391 = arith.constant 0 : index
    %c0_392 = arith.constant 0 : index
    %819 = vector.load %arg4[%c0_391, %c0_392] : memref<16x128xbf16, #tpu.memory_space<vmem>>, vector<16x128xbf16>
    %cst_393 = arith.constant dense<0.000000e+00> : vector<2x128xf32>
    %820 = tpu.matmul %818, %819, %cst_393 {dimension_numbers = #tpu.dot_dimension_numbers<[1], [0], [0], [1], [0, 0, 1, 1], [], []>} : vector<2x16xbf16>, vector<16x128xbf16>, vector<2x128xf32> -> vector<2x128xf32>
    %c0_394 = arith.constant 0 : index
    %c0_395 = arith.constant 0 : index
    %821 = vector.load %arg12[%c0_394, %c0_395] : memref<2x32xf32, #tpu.memory_space<vmem>>, vector<2x32xf32>
    %822 = arith.truncf %821 : vector<2x32xf32> to vector<2x32xbf16>
    %c0_396 = arith.constant 0 : index
    %c0_397 = arith.constant 0 : index
    %823 = vector.load %arg8[%c0_396, %c0_397] : memref<32x128xbf16, #tpu.memory_space<vmem>>, vector<32x128xbf16>
    %cst_398 = arith.constant dense<0.000000e+00> : vector<2x128xf32>
    %824 = tpu.matmul %822, %823, %cst_398 {dimension_numbers = #tpu.dot_dimension_numbers<[1], [0], [0], [1], [0, 0, 1, 1], [], []>} : vector<2x32xbf16>, vector<32x128xbf16>, vector<2x128xf32> -> vector<2x128xf32>
    %825 = arith.addf %820, %824 : vector<2x128xf32>
    %c0_399 = arith.constant 0 : index
    %c0_400 = arith.constant 0 : index
    %826 = vector.load %arg6[%c0_399, %c0_400] : memref<1x128xf32, #tpu.memory_space<vmem>>, vector<1x128xf32>
    %827 = vector.broadcast %826 : vector<1x128xf32> to vector<2x128xf32>
    %828 = arith.addf %825, %827 : vector<2x128xf32>
    %829 = vector.extract_strided_slice %828 {offsets = [0, 0], sizes = [2, 64], strides = [1, 1]} : vector<2x128xf32> to vector<2x64xf32>
    %830 = arith.negf %829 : vector<2x64xf32>
    %831 = math.exp %830 : vector<2x64xf32>
    %cst_401 = arith.constant 1.000000e+00 : f32
    %832 = vector.broadcast %cst_401 : f32 to vector<2x64xf32>
    %833 = arith.addf %832, %831 : vector<2x64xf32>
    %834 = arith.divf %832, %833 : vector<2x64xf32>
    %835 = vector.extract_strided_slice %834 {offsets = [0, 0], sizes = [2, 32], strides = [1, 1]} : vector<2x64xf32> to vector<2x32xf32>
    %836 = vector.extract_strided_slice %834 {offsets = [0, 32], sizes = [2, 32], strides = [1, 1]} : vector<2x64xf32> to vector<2x32xf32>
    %837 = vector.extract_strided_slice %828 {offsets = [0, 64], sizes = [2, 32], strides = [1, 1]} : vector<2x128xf32> to vector<2x32xf32>
    %838 = math.tanh %837 : vector<2x32xf32>
    %839 = vector.extract_strided_slice %828 {offsets = [0, 96], sizes = [2, 32], strides = [1, 1]} : vector<2x128xf32> to vector<2x32xf32>
    %840 = arith.negf %839 : vector<2x32xf32>
    %841 = math.exp %840 : vector<2x32xf32>
    %cst_402 = arith.constant 1.000000e+00 : f32
    %842 = vector.broadcast %cst_402 : f32 to vector<2x32xf32>
    %843 = arith.addf %842, %841 : vector<2x32xf32>
    %844 = arith.divf %842, %843 : vector<2x32xf32>
    %c0_403 = arith.constant 0 : index
    %c0_404 = arith.constant 0 : index
    %845 = vector.load %arg13[%c0_403, %c0_404] : memref<2x32xf32, #tpu.memory_space<vmem>>, vector<2x32xf32>
    %846 = arith.mulf %836, %845 : vector<2x32xf32>
    %847 = arith.mulf %835, %838 : vector<2x32xf32>
    %848 = arith.addf %846, %847 : vector<2x32xf32>
    %849 = math.tanh %848 : vector<2x32xf32>
    %850 = arith.mulf %844, %849 : vector<2x32xf32>
    %c0_405 = arith.constant 0 : index
    %c0_406 = arith.constant 0 : index
    %851 = vector.load %arg13[%c0_405, %c0_406] : memref<2x32xf32, #tpu.memory_space<vmem>>, vector<2x32xf32>
    %852 = vector.shape_cast %814 : vector<2x1xi1> to vector<2x1xi1>
    %853 = vector.broadcast %852 : vector<2x1xi1> to vector<2x32xi1>
    %854 = arith.select %853, %848, %851 : vector<2x32xi1>, vector<2x32xf32>
    %c0_407 = arith.constant 0 : index
    %c0_408 = arith.constant 0 : index
    %855 = vector.load %arg13[%c0_407, %c0_408] : memref<2x32xf32, #tpu.memory_space<vmem>>, vector<2x32xf32>
    tpu.vector_store %arg13[%c0_407, %c0_408], %854 {strides = array<i32>} : memref<2x32xf32, #tpu.memory_space<vmem>>, vector<2x32xf32>,
    %c0_409 = arith.constant 0 : index
    %c0_410 = arith.constant 0 : index
    %856 = vector.load %arg12[%c0_409, %c0_410] : memref<2x32xf32, #tpu.memory_space<vmem>>, vector<2x32xf32>
    %857 = vector.shape_cast %814 : vector<2x1xi1> to vector<2x1xi1>
    %858 = vector.broadcast %857 : vector<2x1xi1> to vector<2x32xi1>
    %859 = arith.select %858, %850, %856 : vector<2x32xi1>, vector<2x32xf32>
    %c0_411 = arith.constant 0 : index
    %c0_412 = arith.constant 0 : index
    %860 = vector.load %arg12[%c0_411, %c0_412] : memref<2x32xf32, #tpu.memory_space<vmem>>, vector<2x32xf32>
    tpu.vector_store %arg12[%c0_411, %c0_412], %859 {strides = array<i32>} : memref<2x32xf32, #tpu.memory_space<vmem>>, vector<2x32xf32>,
    %cst_413 = arith.constant 0.000000e+00 : f32
    %861 = vector.shape_cast %814 : vector<2x1xi1> to vector<2x1xi1>
    %862 = vector.broadcast %861 : vector<2x1xi1> to vector<2x32xi1>
    %863 = vector.broadcast %cst_413 : f32 to vector<2x32xf32>
    %864 = arith.select %862, %850, %863 : vector<2x32xi1>, vector<2x32xf32>
    %865 = arith.index_cast %c7_i32_388 : i32 to index
    %c0_414 = arith.constant 0 : index
    %c0_415 = arith.constant 0 : index
    %866 = vector.load %arg10[%865, %c0_414, %c0_415] : memref<8x2x32xf32, #tpu.memory_space<vmem>>, vector<1x2x32xf32>
    %867 = vector.shape_cast %866 : vector<1x2x32xf32> to vector<2x32xf32>
    %868 = vector.shape_cast %864 : vector<2x32xf32> to vector<1x2x32xf32>
    tpu.vector_store %arg10[%865, %c0_414, %c0_415], %868 {strides = array<i32>} : memref<8x2x32xf32, #tpu.memory_space<vmem>>, vector<1x2x32xf32>,
    %c7_i32_416 = arith.constant 7 : i32
    %869 = arith.subi %c7_i32_416, %c7_i32_388 : i32
    %870 = arith.addi %6, %869 : i32
    %871 = vector.broadcast %870 : i32 to vector<2x1xi32>
    %872 = arith.cmpi slt, %871, %3 : vector<2x1xi32>
    %873 = arith.index_cast %869 : i32 to index
    %c0_417 = arith.constant 0 : index
    %c0_418 = arith.constant 0 : index
    %874 = vector.load %arg2[%873, %c0_417, %c0_418] : memref<8x2x16xf32, #tpu.memory_space<vmem>>, vector<1x2x16xf32>
    %875 = vector.shape_cast %874 : vector<1x2x16xf32> to vector<2x16xf32>
    %876 = arith.truncf %875 : vector<2x16xf32> to vector<2x16xbf16>
    %c0_419 = arith.constant 0 : index
    %c0_420 = arith.constant 0 : index
    %877 = vector.load %arg5[%c0_419, %c0_420] : memref<16x128xbf16, #tpu.memory_space<vmem>>, vector<16x128xbf16>
    %cst_421 = arith.constant dense<0.000000e+00> : vector<2x128xf32>
    %878 = tpu.matmul %876, %877, %cst_421 {dimension_numbers = #tpu.dot_dimension_numbers<[1], [0], [0], [1], [0, 0, 1, 1], [], []>} : vector<2x16xbf16>, vector<16x128xbf16>, vector<2x128xf32> -> vector<2x128xf32>
    %c0_422 = arith.constant 0 : index
    %c0_423 = arith.constant 0 : index
    %879 = vector.load %arg14[%c0_422, %c0_423] : memref<2x32xf32, #tpu.memory_space<vmem>>, vector<2x32xf32>
    %880 = arith.truncf %879 : vector<2x32xf32> to vector<2x32xbf16>
    %c0_424 = arith.constant 0 : index
    %c0_425 = arith.constant 0 : index
    %881 = vector.load %arg9[%c0_424, %c0_425] : memref<32x128xbf16, #tpu.memory_space<vmem>>, vector<32x128xbf16>
    %cst_426 = arith.constant dense<0.000000e+00> : vector<2x128xf32>
    %882 = tpu.matmul %880, %881, %cst_426 {dimension_numbers = #tpu.dot_dimension_numbers<[1], [0], [0], [1], [0, 0, 1, 1], [], []>} : vector<2x32xbf16>, vector<32x128xbf16>, vector<2x128xf32> -> vector<2x128xf32>
    %883 = arith.addf %878, %882 : vector<2x128xf32>
    %c0_427 = arith.constant 0 : index
    %c0_428 = arith.constant 0 : index
    %884 = vector.load %arg7[%c0_427, %c0_428] : memref<1x128xf32, #tpu.memory_space<vmem>>, vector<1x128xf32>
    %885 = vector.broadcast %884 : vector<1x128xf32> to vector<2x128xf32>
    %886 = arith.addf %883, %885 : vector<2x128xf32>
    %887 = vector.extract_strided_slice %886 {offsets = [0, 0], sizes = [2, 64], strides = [1, 1]} : vector<2x128xf32> to vector<2x64xf32>
    %888 = arith.negf %887 : vector<2x64xf32>
    %889 = math.exp %888 : vector<2x64xf32>
    %cst_429 = arith.constant 1.000000e+00 : f32
    %890 = vector.broadcast %cst_429 : f32 to vector<2x64xf32>
    %891 = arith.addf %890, %889 : vector<2x64xf32>
    %892 = arith.divf %890, %891 : vector<2x64xf32>
    %893 = vector.extract_strided_slice %892 {offsets = [0, 0], sizes = [2, 32], strides = [1, 1]} : vector<2x64xf32> to vector<2x32xf32>
    %894 = vector.extract_strided_slice %892 {offsets = [0, 32], sizes = [2, 32], strides = [1, 1]} : vector<2x64xf32> to vector<2x32xf32>
    %895 = vector.extract_strided_slice %886 {offsets = [0, 64], sizes = [2, 32], strides = [1, 1]} : vector<2x128xf32> to vector<2x32xf32>
    %896 = math.tanh %895 : vector<2x32xf32>
    %897 = vector.extract_strided_slice %886 {offsets = [0, 96], sizes = [2, 32], strides = [1, 1]} : vector<2x128xf32> to vector<2x32xf32>
    %898 = arith.negf %897 : vector<2x32xf32>
    %899 = math.exp %898 : vector<2x32xf32>
    %cst_430 = arith.constant 1.000000e+00 : f32
    %900 = vector.broadcast %cst_430 : f32 to vector<2x32xf32>
    %901 = arith.addf %900, %899 : vector<2x32xf32>
    %902 = arith.divf %900, %901 : vector<2x32xf32>
    %c0_431 = arith.constant 0 : index
    %c0_432 = arith.constant 0 : index
    %903 = vector.load %arg15[%c0_431, %c0_432] : memref<2x32xf32, #tpu.memory_space<vmem>>, vector<2x32xf32>
    %904 = arith.mulf %894, %903 : vector<2x32xf32>
    %905 = arith.mulf %893, %896 : vector<2x32xf32>
    %906 = arith.addf %904, %905 : vector<2x32xf32>
    %907 = math.tanh %906 : vector<2x32xf32>
    %908 = arith.mulf %902, %907 : vector<2x32xf32>
    %c0_433 = arith.constant 0 : index
    %c0_434 = arith.constant 0 : index
    %909 = vector.load %arg15[%c0_433, %c0_434] : memref<2x32xf32, #tpu.memory_space<vmem>>, vector<2x32xf32>
    %910 = vector.shape_cast %872 : vector<2x1xi1> to vector<2x1xi1>
    %911 = vector.broadcast %910 : vector<2x1xi1> to vector<2x32xi1>
    %912 = arith.select %911, %906, %909 : vector<2x32xi1>, vector<2x32xf32>
    %c0_435 = arith.constant 0 : index
    %c0_436 = arith.constant 0 : index
    %913 = vector.load %arg15[%c0_435, %c0_436] : memref<2x32xf32, #tpu.memory_space<vmem>>, vector<2x32xf32>
    tpu.vector_store %arg15[%c0_435, %c0_436], %912 {strides = array<i32>} : memref<2x32xf32, #tpu.memory_space<vmem>>, vector<2x32xf32>,
    %c0_437 = arith.constant 0 : index
    %c0_438 = arith.constant 0 : index
    %914 = vector.load %arg14[%c0_437, %c0_438] : memref<2x32xf32, #tpu.memory_space<vmem>>, vector<2x32xf32>
    %915 = vector.shape_cast %872 : vector<2x1xi1> to vector<2x1xi1>
    %916 = vector.broadcast %915 : vector<2x1xi1> to vector<2x32xi1>
    %917 = arith.select %916, %908, %914 : vector<2x32xi1>, vector<2x32xf32>
    %c0_439 = arith.constant 0 : index
    %c0_440 = arith.constant 0 : index
    %918 = vector.load %arg14[%c0_439, %c0_440] : memref<2x32xf32, #tpu.memory_space<vmem>>, vector<2x32xf32>
    tpu.vector_store %arg14[%c0_439, %c0_440], %917 {strides = array<i32>} : memref<2x32xf32, #tpu.memory_space<vmem>>, vector<2x32xf32>,
    %cst_441 = arith.constant 0.000000e+00 : f32
    %919 = vector.shape_cast %872 : vector<2x1xi1> to vector<2x1xi1>
    %920 = vector.broadcast %919 : vector<2x1xi1> to vector<2x32xi1>
    %921 = vector.broadcast %cst_441 : f32 to vector<2x32xf32>
    %922 = arith.select %920, %908, %921 : vector<2x32xi1>, vector<2x32xf32>
    %923 = arith.index_cast %869 : i32 to index
    %c0_442 = arith.constant 0 : index
    %c0_443 = arith.constant 0 : index
    %924 = vector.load %arg11[%923, %c0_442, %c0_443] : memref<8x2x32xf32, #tpu.memory_space<vmem>>, vector<1x2x32xf32>
    %925 = vector.shape_cast %924 : vector<1x2x32xf32> to vector<2x32xf32>
    %926 = vector.shape_cast %922 : vector<2x32xf32> to vector<1x2x32xf32>
    tpu.vector_store %arg11[%923, %c0_442, %c0_443], %926 {strides = array<i32>} : memref<8x2x32xf32, #tpu.memory_space<vmem>>, vector<1x2x32xf32>,
    %c8_i32_444 = arith.constant 8 : i32
    return
  }
  func.func @transform_0(%arg0: i32) -> (i32, i32, i32) {
    %c0_i32 = arith.constant 0 : i32
    %c0_i32_0 = arith.constant 0 : i32
    %c0_i32_1 = arith.constant 0 : i32
    return %arg0, %c0_i32, %c0_i32_0 : i32, i32, i32
  }
  func.func @transform_1(%arg0: i32) -> (i32, i32, i32) {
    %c0_i32 = arith.constant 0 : i32
    %0 = arith.subi %c0_i32, %arg0 : i32
    %c0_i32_0 = arith.constant 0 : i32
    %c0_i32_1 = arith.constant 0 : i32
    %c0_i32_2 = arith.constant 0 : i32
    return %0, %c0_i32_0, %c0_i32_1 : i32, i32, i32
  }
  func.func @transform_2(%arg0: i32) -> (i32, i32) {
    %c0_i32 = arith.constant 0 : i32
    %c0_i32_0 = arith.constant 0 : i32
    %c0_i32_1 = arith.constant 0 : i32
    return %c0_i32, %c0_i32_0 : i32, i32
  }
  func.func @transform_3(%arg0: i32) -> (i32, i32) {
    %c0_i32 = arith.constant 0 : i32
    %c0_i32_0 = arith.constant 0 : i32
    %c0_i32_1 = arith.constant 0 : i32
    return %c0_i32, %c0_i32_0 : i32, i32
  }
  func.func @transform_4(%arg0: i32) -> (i32, i32) {
    %c0_i32 = arith.constant 0 : i32
    %c0_i32_0 = arith.constant 0 : i32
    %c0_i32_1 = arith.constant 0 : i32
    return %c0_i32, %c0_i32_0 : i32, i32
  }
  func.func @transform_5(%arg0: i32) -> (i32, i32) {
    %c0_i32 = arith.constant 0 : i32
    %c0_i32_0 = arith.constant 0 : i32
    %c0_i32_1 = arith.constant 0 : i32
    return %c0_i32, %c0_i32_0 : i32, i32
  }
  func.func @transform_6(%arg0: i32) -> (i32, i32) {
    %c0_i32 = arith.constant 0 : i32
    %c0_i32_0 = arith.constant 0 : i32
    %c0_i32_1 = arith.constant 0 : i32
    return %c0_i32, %c0_i32_0 : i32, i32
  }
  func.func @transform_7(%arg0: i32) -> (i32, i32) {
    %c0_i32 = arith.constant 0 : i32
    %c0_i32_0 = arith.constant 0 : i32
    %c0_i32_1 = arith.constant 0 : i32
    return %c0_i32, %c0_i32_0 : i32, i32
  }
  func.func @transform_8(%arg0: i32) -> (i32, i32) {
    %c0_i32 = arith.constant 0 : i32
    %c0_i32_0 = arith.constant 0 : i32
    %c0_i32_1 = arith.constant 0 : i32
    return %c0_i32, %c0_i32_0 : i32, i32
  }
  func.func @transform_9(%arg0: i32) -> (i32, i32, i32) {
    %c0_i32 = arith.constant 0 : i32
    %c0_i32_0 = arith.constant 0 : i32
    %c0_i32_1 = arith.constant 0 : i32
    return %arg0, %c0_i32, %c0_i32_0 : i32, i32, i32
  }
  func.func @transform_10(%arg0: i32) -> (i32, i32, i32) {
    %c0_i32 = arith.constant 0 : i32
    %0 = arith.subi %c0_i32, %arg0 : i32
    %c0_i32_0 = arith.constant 0 : i32
    %c0_i32_1 = arith.constant 0 : i32
    %c0_i32_2 = arith.constant 0 : i32
    return %0, %c0_i32_0, %c0_i32_1 : i32, i32, i32
  }
}

module attributes {stable_mosaic.version = 11 : i64} {
  func.func @kernel(%arg0: i32, %arg1: memref<8x2x64xf32, #tpu.memory_space<vmem>>, %arg2: memref<8x2x64xf32, #tpu.memory_space<vmem>>, %arg3: memref<2x1xi32, #tpu.memory_space<vmem>>, %arg4: memref<64x128xbf16, #tpu.memory_space<vmem>>, %arg5: memref<64x128xbf16, #tpu.memory_space<vmem>>, %arg6: memref<1x128xf32, #tpu.memory_space<vmem>>, %arg7: memref<1x128xf32, #tpu.memory_space<vmem>>, %arg8: memref<32x128xbf16, #tpu.memory_space<vmem>>, %arg9: memref<32x128xbf16, #tpu.memory_space<vmem>>, %arg10: memref<8x2x32xf32, #tpu.memory_space<vmem>>, %arg11: memref<8x2x32xf32, #tpu.memory_space<vmem>>, %arg12: memref<2x32xf32, #tpu.memory_space<vmem>>, %arg13: memref<2x32xf32, #tpu.memory_space<vmem>>, %arg14: memref<2x32xf32, #tpu.memory_space<vmem>>, %arg15: memref<2x32xf32, #tpu.memory_space<vmem>>) attributes {dimension_semantics = [#tpu.dimension_semantics<arbitrary>], iteration_bounds = array<i64: 1>, scalar_prefetch = 0 : i64, scratch_operands = 4 : i64, tpu.core_type = #tpu.core_type<tc>, window_params = [{transform_indices = @transform_0, window_bounds = array<i64: 8, 2, 64>}, {transform_indices = @transform_1, window_bounds = array<i64: 8, 2, 64>}, {pipeline_mode = #tpu.pipeline_mode<synchronous>, transform_indices = @transform_2, window_bounds = array<i64: 2, 1>}, {pipeline_mode = #tpu.pipeline_mode<synchronous>, transform_indices = @transform_3, window_bounds = array<i64: 64, 128>}, {pipeline_mode = #tpu.pipeline_mode<synchronous>, transform_indices = @transform_4, window_bounds = array<i64: 64, 128>}, {pipeline_mode = #tpu.pipeline_mode<synchronous>, transform_indices = @transform_5, window_bounds = array<i64: 1, 128>}, {pipeline_mode = #tpu.pipeline_mode<synchronous>, transform_indices = @transform_6, window_bounds = array<i64: 1, 128>}, {pipeline_mode = #tpu.pipeline_mode<synchronous>, transform_indices = @transform_7, window_bounds = array<i64: 32, 128>}, {pipeline_mode = #tpu.pipeline_mode<synchronous>, transform_indices = @transform_8, window_bounds = array<i64: 32, 128>}, {transform_indices = @transform_9, window_bounds = array<i64: 8, 2, 32>}, {transform_indices = @transform_10, window_bounds = array<i64: 8, 2, 32>}]} {
    %c0_i32 = arith.constant 0 : i32
    %0 = arith.cmpi eq, %arg0, %c0_i32 : i32
    %1 = arith.extui %0 : i1 to i32
    %c0_i32_0 = arith.constant 0 : i32
    %2 = arith.cmpi ne, %1, %c0_i32_0 : i32
    scf.if %2 {
      %cst_445 = arith.constant 0.000000e+00 : f32
      %927 = vector.broadcast %cst_445 : f32 to vector<2x32xf32>
      %c0_446 = arith.constant 0 : index
      %c0_447 = arith.constant 0 : index
      %928 = vector.load %arg12[%c0_446, %c0_447] : memref<2x32xf32, #tpu.memory_space<vmem>>, vector<2x32xf32>
      tpu.vector_store %arg12[%c0_446, %c0_447], %927 {strides = array<i32>} : memref<2x32xf32, #tpu.memory_space<vmem>>, vector<2x32xf32>,
      %cst_448 = arith.constant 0.000000e+00 : f32
      %929 = vector.broadcast %cst_448 : f32 to vector<2x32xf32>
      %c0_449 = arith.constant 0 : index
      %c0_450 = arith.constant 0 : index
      %930 = vector.load %arg13[%c0_449, %c0_450] : memref<2x32xf32, #tpu.memory_space<vmem>>, vector<2x32xf32>
      tpu.vector_store %arg13[%c0_449, %c0_450], %929 {strides = array<i32>} : memref<2x32xf32, #tpu.memory_space<vmem>>, vector<2x32xf32>,
      %cst_451 = arith.constant 0.000000e+00 : f32
      %931 = vector.broadcast %cst_451 : f32 to vector<2x32xf32>
      %c0_452 = arith.constant 0 : index
      %c0_453 = arith.constant 0 : index
      %932 = vector.load %arg14[%c0_452, %c0_453] : memref<2x32xf32, #tpu.memory_space<vmem>>, vector<2x32xf32>
      tpu.vector_store %arg14[%c0_452, %c0_453], %931 {strides = array<i32>} : memref<2x32xf32, #tpu.memory_space<vmem>>, vector<2x32xf32>,
      %cst_454 = arith.constant 0.000000e+00 : f32
      %933 = vector.broadcast %cst_454 : f32 to vector<2x32xf32>
      %c0_455 = arith.constant 0 : index
      %c0_456 = arith.constant 0 : index
      %934 = vector.load %arg15[%c0_455, %c0_456] : memref<2x32xf32, #tpu.memory_space<vmem>>, vector<2x32xf32>
      tpu.vector_store %arg15[%c0_455, %c0_456], %933 {strides = array<i32>} : memref<2x32xf32, #tpu.memory_space<vmem>>, vector<2x32xf32>,
    } else {
    }
    %c0 = arith.constant 0 : index
    %c0_1 = arith.constant 0 : index
    %3 = vector.load %arg3[%c0, %c0_1] : memref<2x1xi32, #tpu.memory_space<vmem>>, vector<2x1xi32>
    %c8_i32 = arith.constant 8 : i32
    %4 = arith.muli %arg0, %c8_i32 : i32
    %c0_i32_2 = arith.constant 0 : i32
    %5 = arith.subi %c0_i32_2, %arg0 : i32
    %c8_i32_3 = arith.constant 8 : i32
    %6 = arith.muli %5, %c8_i32_3 : i32
    %c0_i32_4 = arith.constant 0 : i32
    %7 = arith.addi %4, %c0_i32_4 : i32
    %8 = vector.broadcast %7 : i32 to vector<2x1xi32>
    %9 = arith.cmpi slt, %8, %3 : vector<2x1xi32>
    %10 = arith.index_cast %c0_i32_4 : i32 to index
    %c0_5 = arith.constant 0 : index
    %c0_6 = arith.constant 0 : index
    %11 = vector.load %arg1[%10, %c0_5, %c0_6] : memref<8x2x64xf32, #tpu.memory_space<vmem>>, vector<1x2x64xf32>
    %12 = vector.shape_cast %11 : vector<1x2x64xf32> to vector<2x64xf32>
    %13 = arith.truncf %12 : vector<2x64xf32> to vector<2x64xbf16>
    %c0_7 = arith.constant 0 : index
    %c0_8 = arith.constant 0 : index
    %14 = vector.load %arg4[%c0_7, %c0_8] : memref<64x128xbf16, #tpu.memory_space<vmem>>, vector<64x128xbf16>
    %cst = arith.constant dense<0.000000e+00> : vector<2x128xf32>
    %15 = tpu.matmul %13, %14, %cst {dimension_numbers = #tpu.dot_dimension_numbers<[1], [0], [0], [1], [0, 0, 1, 1], [], []>} : vector<2x64xbf16>, vector<64x128xbf16>, vector<2x128xf32> -> vector<2x128xf32>
    %c0_9 = arith.constant 0 : index
    %c0_10 = arith.constant 0 : index
    %16 = vector.load %arg12[%c0_9, %c0_10] : memref<2x32xf32, #tpu.memory_space<vmem>>, vector<2x32xf32>
    %17 = arith.truncf %16 : vector<2x32xf32> to vector<2x32xbf16>
    %c0_11 = arith.constant 0 : index
    %c0_12 = arith.constant 0 : index
    %18 = vector.load %arg8[%c0_11, %c0_12] : memref<32x128xbf16, #tpu.memory_space<vmem>>, vector<32x128xbf16>
    %cst_13 = arith.constant dense<0.000000e+00> : vector<2x128xf32>
    %19 = tpu.matmul %17, %18, %cst_13 {dimension_numbers = #tpu.dot_dimension_numbers<[1], [0], [0], [1], [0, 0, 1, 1], [], []>} : vector<2x32xbf16>, vector<32x128xbf16>, vector<2x128xf32> -> vector<2x128xf32>
    %20 = arith.addf %15, %19 : vector<2x128xf32>
    %c0_14 = arith.constant 0 : index
    %c0_15 = arith.constant 0 : index
    %21 = vector.load %arg6[%c0_14, %c0_15] : memref<1x128xf32, #tpu.memory_space<vmem>>, vector<1x128xf32>
    %22 = vector.broadcast %21 : vector<1x128xf32> to vector<2x128xf32>
    %23 = arith.addf %20, %22 : vector<2x128xf32>
    %24 = vector.extract_strided_slice %23 {offsets = [0, 0], sizes = [2, 64], strides = [1, 1]} : vector<2x128xf32> to vector<2x64xf32>
    %25 = arith.negf %24 : vector<2x64xf32>
    %26 = math.exp %25 : vector<2x64xf32>
    %cst_16 = arith.constant 1.000000e+00 : f32
    %27 = vector.broadcast %cst_16 : f32 to vector<2x64xf32>
    %28 = arith.addf %27, %26 : vector<2x64xf32>
    %29 = arith.divf %27, %28 : vector<2x64xf32>
    %30 = vector.extract_strided_slice %29 {offsets = [0, 0], sizes = [2, 32], strides = [1, 1]} : vector<2x64xf32> to vector<2x32xf32>
    %31 = vector.extract_strided_slice %29 {offsets = [0, 32], sizes = [2, 32], strides = [1, 1]} : vector<2x64xf32> to vector<2x32xf32>
    %32 = vector.extract_strided_slice %23 {offsets = [0, 64], sizes = [2, 32], strides = [1, 1]} : vector<2x128xf32> to vector<2x32xf32>
    %33 = math.tanh %32 : vector<2x32xf32>
    %34 = vector.extract_strided_slice %23 {offsets = [0, 96], sizes = [2, 32], strides = [1, 1]} : vector<2x128xf32> to vector<2x32xf32>
    %35 = arith.negf %34 : vector<2x32xf32>
    %36 = math.exp %35 : vector<2x32xf32>
    %cst_17 = arith.constant 1.000000e+00 : f32
    %37 = vector.broadcast %cst_17 : f32 to vector<2x32xf32>
    %38 = arith.addf %37, %36 : vector<2x32xf32>
    %39 = arith.divf %37, %38 : vector<2x32xf32>
    %c0_18 = arith.constant 0 : index
    %c0_19 = arith.constant 0 : index
    %40 = vector.load %arg13[%c0_18, %c0_19] : memref<2x32xf32, #tpu.memory_space<vmem>>, vector<2x32xf32>
    %41 = arith.mulf %31, %40 : vector<2x32xf32>
    %42 = arith.mulf %30, %33 : vector<2x32xf32>
    %43 = arith.addf %41, %42 : vector<2x32xf32>
    %44 = math.tanh %43 : vector<2x32xf32>
    %45 = arith.mulf %39, %44 : vector<2x32xf32>
    %c0_20 = arith.constant 0 : index
    %c0_21 = arith.constant 0 : index
    %46 = vector.load %arg13[%c0_20, %c0_21] : memref<2x32xf32, #tpu.memory_space<vmem>>, vector<2x32xf32>
    %47 = vector.shape_cast %9 : vector<2x1xi1> to vector<2x1xi1>
    %48 = vector.broadcast %47 : vector<2x1xi1> to vector<2x32xi1>
    %49 = arith.select %48, %43, %46 : vector<2x32xi1>, vector<2x32xf32>
    %c0_22 = arith.constant 0 : index
    %c0_23 = arith.constant 0 : index
    %50 = vector.load %arg13[%c0_22, %c0_23] : memref<2x32xf32, #tpu.memory_space<vmem>>, vector<2x32xf32>
    tpu.vector_store %arg13[%c0_22, %c0_23], %49 {strides = array<i32>} : memref<2x32xf32, #tpu.memory_space<vmem>>, vector<2x32xf32>,
    %c0_24 = arith.constant 0 : index
    %c0_25 = arith.constant 0 : index
    %51 = vector.load %arg12[%c0_24, %c0_25] : memref<2x32xf32, #tpu.memory_space<vmem>>, vector<2x32xf32>
    %52 = vector.shape_cast %9 : vector<2x1xi1> to vector<2x1xi1>
    %53 = vector.broadcast %52 : vector<2x1xi1> to vector<2x32xi1>
    %54 = arith.select %53, %45, %51 : vector<2x32xi1>, vector<2x32xf32>
    %c0_26 = arith.constant 0 : index
    %c0_27 = arith.constant 0 : index
    %55 = vector.load %arg12[%c0_26, %c0_27] : memref<2x32xf32, #tpu.memory_space<vmem>>, vector<2x32xf32>
    tpu.vector_store %arg12[%c0_26, %c0_27], %54 {strides = array<i32>} : memref<2x32xf32, #tpu.memory_space<vmem>>, vector<2x32xf32>,
    %cst_28 = arith.constant 0.000000e+00 : f32
    %56 = vector.shape_cast %9 : vector<2x1xi1> to vector<2x1xi1>
    %57 = vector.broadcast %56 : vector<2x1xi1> to vector<2x32xi1>
    %58 = vector.broadcast %cst_28 : f32 to vector<2x32xf32>
    %59 = arith.select %57, %45, %58 : vector<2x32xi1>, vector<2x32xf32>
    %60 = arith.index_cast %c0_i32_4 : i32 to index
    %c0_29 = arith.constant 0 : index
    %c0_30 = arith.constant 0 : index
    %61 = vector.load %arg10[%60, %c0_29, %c0_30] : memref<8x2x32xf32, #tpu.memory_space<vmem>>, vector<1x2x32xf32>
    %62 = vector.shape_cast %61 : vector<1x2x32xf32> to vector<2x32xf32>
    %63 = vector.shape_cast %59 : vector<2x32xf32> to vector<1x2x32xf32>
    tpu.vector_store %arg10[%60, %c0_29, %c0_30], %63 {strides = array<i32>} : memref<8x2x32xf32, #tpu.memory_space<vmem>>, vector<1x2x32xf32>,
    %c7_i32 = arith.constant 7 : i32
    %64 = arith.subi %c7_i32, %c0_i32_4 : i32
    %65 = arith.addi %6, %64 : i32
    %66 = vector.broadcast %65 : i32 to vector<2x1xi32>
    %67 = arith.cmpi slt, %66, %3 : vector<2x1xi32>
    %68 = arith.index_cast %64 : i32 to index
    %c0_31 = arith.constant 0 : index
    %c0_32 = arith.constant 0 : index
    %69 = vector.load %arg2[%68, %c0_31, %c0_32] : memref<8x2x64xf32, #tpu.memory_space<vmem>>, vector<1x2x64xf32>
    %70 = vector.shape_cast %69 : vector<1x2x64xf32> to vector<2x64xf32>
    %71 = arith.truncf %70 : vector<2x64xf32> to vector<2x64xbf16>
    %c0_33 = arith.constant 0 : index
    %c0_34 = arith.constant 0 : index
    %72 = vector.load %arg5[%c0_33, %c0_34] : memref<64x128xbf16, #tpu.memory_space<vmem>>, vector<64x128xbf16>
    %cst_35 = arith.constant dense<0.000000e+00> : vector<2x128xf32>
    %73 = tpu.matmul %71, %72, %cst_35 {dimension_numbers = #tpu.dot_dimension_numbers<[1], [0], [0], [1], [0, 0, 1, 1], [], []>} : vector<2x64xbf16>, vector<64x128xbf16>, vector<2x128xf32> -> vector<2x128xf32>
    %c0_36 = arith.constant 0 : index
    %c0_37 = arith.constant 0 : index
    %74 = vector.load %arg14[%c0_36, %c0_37] : memref<2x32xf32, #tpu.memory_space<vmem>>, vector<2x32xf32>
    %75 = arith.truncf %74 : vector<2x32xf32> to vector<2x32xbf16>
    %c0_38 = arith.constant 0 : index
    %c0_39 = arith.constant 0 : index
    %76 = vector.load %arg9[%c0_38, %c0_39] : memref<32x128xbf16, #tpu.memory_space<vmem>>, vector<32x128xbf16>
    %cst_40 = arith.constant dense<0.000000e+00> : vector<2x128xf32>
    %77 = tpu.matmul %75, %76, %cst_40 {dimension_numbers = #tpu.dot_dimension_numbers<[1], [0], [0], [1], [0, 0, 1, 1], [], []>} : vector<2x32xbf16>, vector<32x128xbf16>, vector<2x128xf32> -> vector<2x128xf32>
    %78 = arith.addf %73, %77 : vector<2x128xf32>
    %c0_41 = arith.constant 0 : index
    %c0_42 = arith.constant 0 : index
    %79 = vector.load %arg7[%c0_41, %c0_42] : memref<1x128xf32, #tpu.memory_space<vmem>>, vector<1x128xf32>
    %80 = vector.broadcast %79 : vector<1x128xf32> to vector<2x128xf32>
    %81 = arith.addf %78, %80 : vector<2x128xf32>
    %82 = vector.extract_strided_slice %81 {offsets = [0, 0], sizes = [2, 64], strides = [1, 1]} : vector<2x128xf32> to vector<2x64xf32>
    %83 = arith.negf %82 : vector<2x64xf32>
    %84 = math.exp %83 : vector<2x64xf32>
    %cst_43 = arith.constant 1.000000e+00 : f32
    %85 = vector.broadcast %cst_43 : f32 to vector<2x64xf32>
    %86 = arith.addf %85, %84 : vector<2x64xf32>
    %87 = arith.divf %85, %86 : vector<2x64xf32>
    %88 = vector.extract_strided_slice %87 {offsets = [0, 0], sizes = [2, 32], strides = [1, 1]} : vector<2x64xf32> to vector<2x32xf32>
    %89 = vector.extract_strided_slice %87 {offsets = [0, 32], sizes = [2, 32], strides = [1, 1]} : vector<2x64xf32> to vector<2x32xf32>
    %90 = vector.extract_strided_slice %81 {offsets = [0, 64], sizes = [2, 32], strides = [1, 1]} : vector<2x128xf32> to vector<2x32xf32>
    %91 = math.tanh %90 : vector<2x32xf32>
    %92 = vector.extract_strided_slice %81 {offsets = [0, 96], sizes = [2, 32], strides = [1, 1]} : vector<2x128xf32> to vector<2x32xf32>
    %93 = arith.negf %92 : vector<2x32xf32>
    %94 = math.exp %93 : vector<2x32xf32>
    %cst_44 = arith.constant 1.000000e+00 : f32
    %95 = vector.broadcast %cst_44 : f32 to vector<2x32xf32>
    %96 = arith.addf %95, %94 : vector<2x32xf32>
    %97 = arith.divf %95, %96 : vector<2x32xf32>
    %c0_45 = arith.constant 0 : index
    %c0_46 = arith.constant 0 : index
    %98 = vector.load %arg15[%c0_45, %c0_46] : memref<2x32xf32, #tpu.memory_space<vmem>>, vector<2x32xf32>
    %99 = arith.mulf %89, %98 : vector<2x32xf32>
    %100 = arith.mulf %88, %91 : vector<2x32xf32>
    %101 = arith.addf %99, %100 : vector<2x32xf32>
    %102 = math.tanh %101 : vector<2x32xf32>
    %103 = arith.mulf %97, %102 : vector<2x32xf32>
    %c0_47 = arith.constant 0 : index
    %c0_48 = arith.constant 0 : index
    %104 = vector.load %arg15[%c0_47, %c0_48] : memref<2x32xf32, #tpu.memory_space<vmem>>, vector<2x32xf32>
    %105 = vector.shape_cast %67 : vector<2x1xi1> to vector<2x1xi1>
    %106 = vector.broadcast %105 : vector<2x1xi1> to vector<2x32xi1>
    %107 = arith.select %106, %101, %104 : vector<2x32xi1>, vector<2x32xf32>
    %c0_49 = arith.constant 0 : index
    %c0_50 = arith.constant 0 : index
    %108 = vector.load %arg15[%c0_49, %c0_50] : memref<2x32xf32, #tpu.memory_space<vmem>>, vector<2x32xf32>
    tpu.vector_store %arg15[%c0_49, %c0_50], %107 {strides = array<i32>} : memref<2x32xf32, #tpu.memory_space<vmem>>, vector<2x32xf32>,
    %c0_51 = arith.constant 0 : index
    %c0_52 = arith.constant 0 : index
    %109 = vector.load %arg14[%c0_51, %c0_52] : memref<2x32xf32, #tpu.memory_space<vmem>>, vector<2x32xf32>
    %110 = vector.shape_cast %67 : vector<2x1xi1> to vector<2x1xi1>
    %111 = vector.broadcast %110 : vector<2x1xi1> to vector<2x32xi1>
    %112 = arith.select %111, %103, %109 : vector<2x32xi1>, vector<2x32xf32>
    %c0_53 = arith.constant 0 : index
    %c0_54 = arith.constant 0 : index
    %113 = vector.load %arg14[%c0_53, %c0_54] : memref<2x32xf32, #tpu.memory_space<vmem>>, vector<2x32xf32>
    tpu.vector_store %arg14[%c0_53, %c0_54], %112 {strides = array<i32>} : memref<2x32xf32, #tpu.memory_space<vmem>>, vector<2x32xf32>,
    %cst_55 = arith.constant 0.000000e+00 : f32
    %114 = vector.shape_cast %67 : vector<2x1xi1> to vector<2x1xi1>
    %115 = vector.broadcast %114 : vector<2x1xi1> to vector<2x32xi1>
    %116 = vector.broadcast %cst_55 : f32 to vector<2x32xf32>
    %117 = arith.select %115, %103, %116 : vector<2x32xi1>, vector<2x32xf32>
    %118 = arith.index_cast %64 : i32 to index
    %c0_56 = arith.constant 0 : index
    %c0_57 = arith.constant 0 : index
    %119 = vector.load %arg11[%118, %c0_56, %c0_57] : memref<8x2x32xf32, #tpu.memory_space<vmem>>, vector<1x2x32xf32>
    %120 = vector.shape_cast %119 : vector<1x2x32xf32> to vector<2x32xf32>
    %121 = vector.shape_cast %117 : vector<2x32xf32> to vector<1x2x32xf32>
    tpu.vector_store %arg11[%118, %c0_56, %c0_57], %121 {strides = array<i32>} : memref<8x2x32xf32, #tpu.memory_space<vmem>>, vector<1x2x32xf32>,
    %c1_i32 = arith.constant 1 : i32
    %122 = arith.addi %4, %c1_i32 : i32
    %123 = vector.broadcast %122 : i32 to vector<2x1xi32>
    %124 = arith.cmpi slt, %123, %3 : vector<2x1xi32>
    %125 = arith.index_cast %c1_i32 : i32 to index
    %c0_58 = arith.constant 0 : index
    %c0_59 = arith.constant 0 : index
    %126 = vector.load %arg1[%125, %c0_58, %c0_59] : memref<8x2x64xf32, #tpu.memory_space<vmem>>, vector<1x2x64xf32>
    %127 = vector.shape_cast %126 : vector<1x2x64xf32> to vector<2x64xf32>
    %128 = arith.truncf %127 : vector<2x64xf32> to vector<2x64xbf16>
    %c0_60 = arith.constant 0 : index
    %c0_61 = arith.constant 0 : index
    %129 = vector.load %arg4[%c0_60, %c0_61] : memref<64x128xbf16, #tpu.memory_space<vmem>>, vector<64x128xbf16>
    %cst_62 = arith.constant dense<0.000000e+00> : vector<2x128xf32>
    %130 = tpu.matmul %128, %129, %cst_62 {dimension_numbers = #tpu.dot_dimension_numbers<[1], [0], [0], [1], [0, 0, 1, 1], [], []>} : vector<2x64xbf16>, vector<64x128xbf16>, vector<2x128xf32> -> vector<2x128xf32>
    %c0_63 = arith.constant 0 : index
    %c0_64 = arith.constant 0 : index
    %131 = vector.load %arg12[%c0_63, %c0_64] : memref<2x32xf32, #tpu.memory_space<vmem>>, vector<2x32xf32>
    %132 = arith.truncf %131 : vector<2x32xf32> to vector<2x32xbf16>
    %c0_65 = arith.constant 0 : index
    %c0_66 = arith.constant 0 : index
    %133 = vector.load %arg8[%c0_65, %c0_66] : memref<32x128xbf16, #tpu.memory_space<vmem>>, vector<32x128xbf16>
    %cst_67 = arith.constant dense<0.000000e+00> : vector<2x128xf32>
    %134 = tpu.matmul %132, %133, %cst_67 {dimension_numbers = #tpu.dot_dimension_numbers<[1], [0], [0], [1], [0, 0, 1, 1], [], []>} : vector<2x32xbf16>, vector<32x128xbf16>, vector<2x128xf32> -> vector<2x128xf32>
    %135 = arith.addf %130, %134 : vector<2x128xf32>
    %c0_68 = arith.constant 0 : index
    %c0_69 = arith.constant 0 : index
    %136 = vector.load %arg6[%c0_68, %c0_69] : memref<1x128xf32, #tpu.memory_space<vmem>>, vector<1x128xf32>
    %137 = vector.broadcast %136 : vector<1x128xf32> to vector<2x128xf32>
    %138 = arith.addf %135, %137 : vector<2x128xf32>
    %139 = vector.extract_strided_slice %138 {offsets = [0, 0], sizes = [2, 64], strides = [1, 1]} : vector<2x128xf32> to vector<2x64xf32>
    %140 = arith.negf %139 : vector<2x64xf32>
    %141 = math.exp %140 : vector<2x64xf32>
    %cst_70 = arith.constant 1.000000e+00 : f32
    %142 = vector.broadcast %cst_70 : f32 to vector<2x64xf32>
    %143 = arith.addf %142, %141 : vector<2x64xf32>
    %144 = arith.divf %142, %143 : vector<2x64xf32>
    %145 = vector.extract_strided_slice %144 {offsets = [0, 0], sizes = [2, 32], strides = [1, 1]} : vector<2x64xf32> to vector<2x32xf32>
    %146 = vector.extract_strided_slice %144 {offsets = [0, 32], sizes = [2, 32], strides = [1, 1]} : vector<2x64xf32> to vector<2x32xf32>
    %147 = vector.extract_strided_slice %138 {offsets = [0, 64], sizes = [2, 32], strides = [1, 1]} : vector<2x128xf32> to vector<2x32xf32>
    %148 = math.tanh %147 : vector<2x32xf32>
    %149 = vector.extract_strided_slice %138 {offsets = [0, 96], sizes = [2, 32], strides = [1, 1]} : vector<2x128xf32> to vector<2x32xf32>
    %150 = arith.negf %149 : vector<2x32xf32>
    %151 = math.exp %150 : vector<2x32xf32>
    %cst_71 = arith.constant 1.000000e+00 : f32
    %152 = vector.broadcast %cst_71 : f32 to vector<2x32xf32>
    %153 = arith.addf %152, %151 : vector<2x32xf32>
    %154 = arith.divf %152, %153 : vector<2x32xf32>
    %c0_72 = arith.constant 0 : index
    %c0_73 = arith.constant 0 : index
    %155 = vector.load %arg13[%c0_72, %c0_73] : memref<2x32xf32, #tpu.memory_space<vmem>>, vector<2x32xf32>
    %156 = arith.mulf %146, %155 : vector<2x32xf32>
    %157 = arith.mulf %145, %148 : vector<2x32xf32>
    %158 = arith.addf %156, %157 : vector<2x32xf32>
    %159 = math.tanh %158 : vector<2x32xf32>
    %160 = arith.mulf %154, %159 : vector<2x32xf32>
    %c0_74 = arith.constant 0 : index
    %c0_75 = arith.constant 0 : index
    %161 = vector.load %arg13[%c0_74, %c0_75] : memref<2x32xf32, #tpu.memory_space<vmem>>, vector<2x32xf32>
    %162 = vector.shape_cast %124 : vector<2x1xi1> to vector<2x1xi1>
    %163 = vector.broadcast %162 : vector<2x1xi1> to vector<2x32xi1>
    %164 = arith.select %163, %158, %161 : vector<2x32xi1>, vector<2x32xf32>
    %c0_76 = arith.constant 0 : index
    %c0_77 = arith.constant 0 : index
    %165 = vector.load %arg13[%c0_76, %c0_77] : memref<2x32xf32, #tpu.memory_space<vmem>>, vector<2x32xf32>
    tpu.vector_store %arg13[%c0_76, %c0_77], %164 {strides = array<i32>} : memref<2x32xf32, #tpu.memory_space<vmem>>, vector<2x32xf32>,
    %c0_78 = arith.constant 0 : index
    %c0_79 = arith.constant 0 : index
    %166 = vector.load %arg12[%c0_78, %c0_79] : memref<2x32xf32, #tpu.memory_space<vmem>>, vector<2x32xf32>
    %167 = vector.shape_cast %124 : vector<2x1xi1> to vector<2x1xi1>
    %168 = vector.broadcast %167 : vector<2x1xi1> to vector<2x32xi1>
    %169 = arith.select %168, %160, %166 : vector<2x32xi1>, vector<2x32xf32>
    %c0_80 = arith.constant 0 : index
    %c0_81 = arith.constant 0 : index
    %170 = vector.load %arg12[%c0_80, %c0_81] : memref<2x32xf32, #tpu.memory_space<vmem>>, vector<2x32xf32>
    tpu.vector_store %arg12[%c0_80, %c0_81], %169 {strides = array<i32>} : memref<2x32xf32, #tpu.memory_space<vmem>>, vector<2x32xf32>,
    %cst_82 = arith.constant 0.000000e+00 : f32
    %171 = vector.shape_cast %124 : vector<2x1xi1> to vector<2x1xi1>
    %172 = vector.broadcast %171 : vector<2x1xi1> to vector<2x32xi1>
    %173 = vector.broadcast %cst_82 : f32 to vector<2x32xf32>
    %174 = arith.select %172, %160, %173 : vector<2x32xi1>, vector<2x32xf32>
    %175 = arith.index_cast %c1_i32 : i32 to index
    %c0_83 = arith.constant 0 : index
    %c0_84 = arith.constant 0 : index
    %176 = vector.load %arg10[%175, %c0_83, %c0_84] : memref<8x2x32xf32, #tpu.memory_space<vmem>>, vector<1x2x32xf32>
    %177 = vector.shape_cast %176 : vector<1x2x32xf32> to vector<2x32xf32>
    %178 = vector.shape_cast %174 : vector<2x32xf32> to vector<1x2x32xf32>
    tpu.vector_store %arg10[%175, %c0_83, %c0_84], %178 {strides = array<i32>} : memref<8x2x32xf32, #tpu.memory_space<vmem>>, vector<1x2x32xf32>,
    %c7_i32_85 = arith.constant 7 : i32
    %179 = arith.subi %c7_i32_85, %c1_i32 : i32
    %180 = arith.addi %6, %179 : i32
    %181 = vector.broadcast %180 : i32 to vector<2x1xi32>
    %182 = arith.cmpi slt, %181, %3 : vector<2x1xi32>
    %183 = arith.index_cast %179 : i32 to index
    %c0_86 = arith.constant 0 : index
    %c0_87 = arith.constant 0 : index
    %184 = vector.load %arg2[%183, %c0_86, %c0_87] : memref<8x2x64xf32, #tpu.memory_space<vmem>>, vector<1x2x64xf32>
    %185 = vector.shape_cast %184 : vector<1x2x64xf32> to vector<2x64xf32>
    %186 = arith.truncf %185 : vector<2x64xf32> to vector<2x64xbf16>
    %c0_88 = arith.constant 0 : index
    %c0_89 = arith.constant 0 : index
    %187 = vector.load %arg5[%c0_88, %c0_89] : memref<64x128xbf16, #tpu.memory_space<vmem>>, vector<64x128xbf16>
    %cst_90 = arith.constant dense<0.000000e+00> : vector<2x128xf32>
    %188 = tpu.matmul %186, %187, %cst_90 {dimension_numbers = #tpu.dot_dimension_numbers<[1], [0], [0], [1], [0, 0, 1, 1], [], []>} : vector<2x64xbf16>, vector<64x128xbf16>, vector<2x128xf32> -> vector<2x128xf32>
    %c0_91 = arith.constant 0 : index
    %c0_92 = arith.constant 0 : index
    %189 = vector.load %arg14[%c0_91, %c0_92] : memref<2x32xf32, #tpu.memory_space<vmem>>, vector<2x32xf32>
    %190 = arith.truncf %189 : vector<2x32xf32> to vector<2x32xbf16>
    %c0_93 = arith.constant 0 : index
    %c0_94 = arith.constant 0 : index
    %191 = vector.load %arg9[%c0_93, %c0_94] : memref<32x128xbf16, #tpu.memory_space<vmem>>, vector<32x128xbf16>
    %cst_95 = arith.constant dense<0.000000e+00> : vector<2x128xf32>
    %192 = tpu.matmul %190, %191, %cst_95 {dimension_numbers = #tpu.dot_dimension_numbers<[1], [0], [0], [1], [0, 0, 1, 1], [], []>} : vector<2x32xbf16>, vector<32x128xbf16>, vector<2x128xf32> -> vector<2x128xf32>
    %193 = arith.addf %188, %192 : vector<2x128xf32>
    %c0_96 = arith.constant 0 : index
    %c0_97 = arith.constant 0 : index
    %194 = vector.load %arg7[%c0_96, %c0_97] : memref<1x128xf32, #tpu.memory_space<vmem>>, vector<1x128xf32>
    %195 = vector.broadcast %194 : vector<1x128xf32> to vector<2x128xf32>
    %196 = arith.addf %193, %195 : vector<2x128xf32>
    %197 = vector.extract_strided_slice %196 {offsets = [0, 0], sizes = [2, 64], strides = [1, 1]} : vector<2x128xf32> to vector<2x64xf32>
    %198 = arith.negf %197 : vector<2x64xf32>
    %199 = math.exp %198 : vector<2x64xf32>
    %cst_98 = arith.constant 1.000000e+00 : f32
    %200 = vector.broadcast %cst_98 : f32 to vector<2x64xf32>
    %201 = arith.addf %200, %199 : vector<2x64xf32>
    %202 = arith.divf %200, %201 : vector<2x64xf32>
    %203 = vector.extract_strided_slice %202 {offsets = [0, 0], sizes = [2, 32], strides = [1, 1]} : vector<2x64xf32> to vector<2x32xf32>
    %204 = vector.extract_strided_slice %202 {offsets = [0, 32], sizes = [2, 32], strides = [1, 1]} : vector<2x64xf32> to vector<2x32xf32>
    %205 = vector.extract_strided_slice %196 {offsets = [0, 64], sizes = [2, 32], strides = [1, 1]} : vector<2x128xf32> to vector<2x32xf32>
    %206 = math.tanh %205 : vector<2x32xf32>
    %207 = vector.extract_strided_slice %196 {offsets = [0, 96], sizes = [2, 32], strides = [1, 1]} : vector<2x128xf32> to vector<2x32xf32>
    %208 = arith.negf %207 : vector<2x32xf32>
    %209 = math.exp %208 : vector<2x32xf32>
    %cst_99 = arith.constant 1.000000e+00 : f32
    %210 = vector.broadcast %cst_99 : f32 to vector<2x32xf32>
    %211 = arith.addf %210, %209 : vector<2x32xf32>
    %212 = arith.divf %210, %211 : vector<2x32xf32>
    %c0_100 = arith.constant 0 : index
    %c0_101 = arith.constant 0 : index
    %213 = vector.load %arg15[%c0_100, %c0_101] : memref<2x32xf32, #tpu.memory_space<vmem>>, vector<2x32xf32>
    %214 = arith.mulf %204, %213 : vector<2x32xf32>
    %215 = arith.mulf %203, %206 : vector<2x32xf32>
    %216 = arith.addf %214, %215 : vector<2x32xf32>
    %217 = math.tanh %216 : vector<2x32xf32>
    %218 = arith.mulf %212, %217 : vector<2x32xf32>
    %c0_102 = arith.constant 0 : index
    %c0_103 = arith.constant 0 : index
    %219 = vector.load %arg15[%c0_102, %c0_103] : memref<2x32xf32, #tpu.memory_space<vmem>>, vector<2x32xf32>
    %220 = vector.shape_cast %182 : vector<2x1xi1> to vector<2x1xi1>
    %221 = vector.broadcast %220 : vector<2x1xi1> to vector<2x32xi1>
    %222 = arith.select %221, %216, %219 : vector<2x32xi1>, vector<2x32xf32>
    %c0_104 = arith.constant 0 : index
    %c0_105 = arith.constant 0 : index
    %223 = vector.load %arg15[%c0_104, %c0_105] : memref<2x32xf32, #tpu.memory_space<vmem>>, vector<2x32xf32>
    tpu.vector_store %arg15[%c0_104, %c0_105], %222 {strides = array<i32>} : memref<2x32xf32, #tpu.memory_space<vmem>>, vector<2x32xf32>,
    %c0_106 = arith.constant 0 : index
    %c0_107 = arith.constant 0 : index
    %224 = vector.load %arg14[%c0_106, %c0_107] : memref<2x32xf32, #tpu.memory_space<vmem>>, vector<2x32xf32>
    %225 = vector.shape_cast %182 : vector<2x1xi1> to vector<2x1xi1>
    %226 = vector.broadcast %225 : vector<2x1xi1> to vector<2x32xi1>
    %227 = arith.select %226, %218, %224 : vector<2x32xi1>, vector<2x32xf32>
    %c0_108 = arith.constant 0 : index
    %c0_109 = arith.constant 0 : index
    %228 = vector.load %arg14[%c0_108, %c0_109] : memref<2x32xf32, #tpu.memory_space<vmem>>, vector<2x32xf32>
    tpu.vector_store %arg14[%c0_108, %c0_109], %227 {strides = array<i32>} : memref<2x32xf32, #tpu.memory_space<vmem>>, vector<2x32xf32>,
    %cst_110 = arith.constant 0.000000e+00 : f32
    %229 = vector.shape_cast %182 : vector<2x1xi1> to vector<2x1xi1>
    %230 = vector.broadcast %229 : vector<2x1xi1> to vector<2x32xi1>
    %231 = vector.broadcast %cst_110 : f32 to vector<2x32xf32>
    %232 = arith.select %230, %218, %231 : vector<2x32xi1>, vector<2x32xf32>
    %233 = arith.index_cast %179 : i32 to index
    %c0_111 = arith.constant 0 : index
    %c0_112 = arith.constant 0 : index
    %234 = vector.load %arg11[%233, %c0_111, %c0_112] : memref<8x2x32xf32, #tpu.memory_space<vmem>>, vector<1x2x32xf32>
    %235 = vector.shape_cast %234 : vector<1x2x32xf32> to vector<2x32xf32>
    %236 = vector.shape_cast %232 : vector<2x32xf32> to vector<1x2x32xf32>
    tpu.vector_store %arg11[%233, %c0_111, %c0_112], %236 {strides = array<i32>} : memref<8x2x32xf32, #tpu.memory_space<vmem>>, vector<1x2x32xf32>,
    %c2_i32 = arith.constant 2 : i32
    %237 = arith.addi %4, %c2_i32 : i32
    %238 = vector.broadcast %237 : i32 to vector<2x1xi32>
    %239 = arith.cmpi slt, %238, %3 : vector<2x1xi32>
    %240 = arith.index_cast %c2_i32 : i32 to index
    %c0_113 = arith.constant 0 : index
    %c0_114 = arith.constant 0 : index
    %241 = vector.load %arg1[%240, %c0_113, %c0_114] : memref<8x2x64xf32, #tpu.memory_space<vmem>>, vector<1x2x64xf32>
    %242 = vector.shape_cast %241 : vector<1x2x64xf32> to vector<2x64xf32>
    %243 = arith.truncf %242 : vector<2x64xf32> to vector<2x64xbf16>
    %c0_115 = arith.constant 0 : index
    %c0_116 = arith.constant 0 : index
    %244 = vector.load %arg4[%c0_115, %c0_116] : memref<64x128xbf16, #tpu.memory_space<vmem>>, vector<64x128xbf16>
    %cst_117 = arith.constant dense<0.000000e+00> : vector<2x128xf32>
    %245 = tpu.matmul %243, %244, %cst_117 {dimension_numbers = #tpu.dot_dimension_numbers<[1], [0], [0], [1], [0, 0, 1, 1], [], []>} : vector<2x64xbf16>, vector<64x128xbf16>, vector<2x128xf32> -> vector<2x128xf32>
    %c0_118 = arith.constant 0 : index
    %c0_119 = arith.constant 0 : index
    %246 = vector.load %arg12[%c0_118, %c0_119] : memref<2x32xf32, #tpu.memory_space<vmem>>, vector<2x32xf32>
    %247 = arith.truncf %246 : vector<2x32xf32> to vector<2x32xbf16>
    %c0_120 = arith.constant 0 : index
    %c0_121 = arith.constant 0 : index
    %248 = vector.load %arg8[%c0_120, %c0_121] : memref<32x128xbf16, #tpu.memory_space<vmem>>, vector<32x128xbf16>
    %cst_122 = arith.constant dense<0.000000e+00> : vector<2x128xf32>
    %249 = tpu.matmul %247, %248, %cst_122 {dimension_numbers = #tpu.dot_dimension_numbers<[1], [0], [0], [1], [0, 0, 1, 1], [], []>} : vector<2x32xbf16>, vector<32x128xbf16>, vector<2x128xf32> -> vector<2x128xf32>
    %250 = arith.addf %245, %249 : vector<2x128xf32>
    %c0_123 = arith.constant 0 : index
    %c0_124 = arith.constant 0 : index
    %251 = vector.load %arg6[%c0_123, %c0_124] : memref<1x128xf32, #tpu.memory_space<vmem>>, vector<1x128xf32>
    %252 = vector.broadcast %251 : vector<1x128xf32> to vector<2x128xf32>
    %253 = arith.addf %250, %252 : vector<2x128xf32>
    %254 = vector.extract_strided_slice %253 {offsets = [0, 0], sizes = [2, 64], strides = [1, 1]} : vector<2x128xf32> to vector<2x64xf32>
    %255 = arith.negf %254 : vector<2x64xf32>
    %256 = math.exp %255 : vector<2x64xf32>
    %cst_125 = arith.constant 1.000000e+00 : f32
    %257 = vector.broadcast %cst_125 : f32 to vector<2x64xf32>
    %258 = arith.addf %257, %256 : vector<2x64xf32>
    %259 = arith.divf %257, %258 : vector<2x64xf32>
    %260 = vector.extract_strided_slice %259 {offsets = [0, 0], sizes = [2, 32], strides = [1, 1]} : vector<2x64xf32> to vector<2x32xf32>
    %261 = vector.extract_strided_slice %259 {offsets = [0, 32], sizes = [2, 32], strides = [1, 1]} : vector<2x64xf32> to vector<2x32xf32>
    %262 = vector.extract_strided_slice %253 {offsets = [0, 64], sizes = [2, 32], strides = [1, 1]} : vector<2x128xf32> to vector<2x32xf32>
    %263 = math.tanh %262 : vector<2x32xf32>
    %264 = vector.extract_strided_slice %253 {offsets = [0, 96], sizes = [2, 32], strides = [1, 1]} : vector<2x128xf32> to vector<2x32xf32>
    %265 = arith.negf %264 : vector<2x32xf32>
    %266 = math.exp %265 : vector<2x32xf32>
    %cst_126 = arith.constant 1.000000e+00 : f32
    %267 = vector.broadcast %cst_126 : f32 to vector<2x32xf32>
    %268 = arith.addf %267, %266 : vector<2x32xf32>
    %269 = arith.divf %267, %268 : vector<2x32xf32>
    %c0_127 = arith.constant 0 : index
    %c0_128 = arith.constant 0 : index
    %270 = vector.load %arg13[%c0_127, %c0_128] : memref<2x32xf32, #tpu.memory_space<vmem>>, vector<2x32xf32>
    %271 = arith.mulf %261, %270 : vector<2x32xf32>
    %272 = arith.mulf %260, %263 : vector<2x32xf32>
    %273 = arith.addf %271, %272 : vector<2x32xf32>
    %274 = math.tanh %273 : vector<2x32xf32>
    %275 = arith.mulf %269, %274 : vector<2x32xf32>
    %c0_129 = arith.constant 0 : index
    %c0_130 = arith.constant 0 : index
    %276 = vector.load %arg13[%c0_129, %c0_130] : memref<2x32xf32, #tpu.memory_space<vmem>>, vector<2x32xf32>
    %277 = vector.shape_cast %239 : vector<2x1xi1> to vector<2x1xi1>
    %278 = vector.broadcast %277 : vector<2x1xi1> to vector<2x32xi1>
    %279 = arith.select %278, %273, %276 : vector<2x32xi1>, vector<2x32xf32>
    %c0_131 = arith.constant 0 : index
    %c0_132 = arith.constant 0 : index
    %280 = vector.load %arg13[%c0_131, %c0_132] : memref<2x32xf32, #tpu.memory_space<vmem>>, vector<2x32xf32>
    tpu.vector_store %arg13[%c0_131, %c0_132], %279 {strides = array<i32>} : memref<2x32xf32, #tpu.memory_space<vmem>>, vector<2x32xf32>,
    %c0_133 = arith.constant 0 : index
    %c0_134 = arith.constant 0 : index
    %281 = vector.load %arg12[%c0_133, %c0_134] : memref<2x32xf32, #tpu.memory_space<vmem>>, vector<2x32xf32>
    %282 = vector.shape_cast %239 : vector<2x1xi1> to vector<2x1xi1>
    %283 = vector.broadcast %282 : vector<2x1xi1> to vector<2x32xi1>
    %284 = arith.select %283, %275, %281 : vector<2x32xi1>, vector<2x32xf32>
    %c0_135 = arith.constant 0 : index
    %c0_136 = arith.constant 0 : index
    %285 = vector.load %arg12[%c0_135, %c0_136] : memref<2x32xf32, #tpu.memory_space<vmem>>, vector<2x32xf32>
    tpu.vector_store %arg12[%c0_135, %c0_136], %284 {strides = array<i32>} : memref<2x32xf32, #tpu.memory_space<vmem>>, vector<2x32xf32>,
    %cst_137 = arith.constant 0.000000e+00 : f32
    %286 = vector.shape_cast %239 : vector<2x1xi1> to vector<2x1xi1>
    %287 = vector.broadcast %286 : vector<2x1xi1> to vector<2x32xi1>
    %288 = vector.broadcast %cst_137 : f32 to vector<2x32xf32>
    %289 = arith.select %287, %275, %288 : vector<2x32xi1>, vector<2x32xf32>
    %290 = arith.index_cast %c2_i32 : i32 to index
    %c0_138 = arith.constant 0 : index
    %c0_139 = arith.constant 0 : index
    %291 = vector.load %arg10[%290, %c0_138, %c0_139] : memref<8x2x32xf32, #tpu.memory_space<vmem>>, vector<1x2x32xf32>
    %292 = vector.shape_cast %291 : vector<1x2x32xf32> to vector<2x32xf32>
    %293 = vector.shape_cast %289 : vector<2x32xf32> to vector<1x2x32xf32>
    tpu.vector_store %arg10[%290, %c0_138, %c0_139], %293 {strides = array<i32>} : memref<8x2x32xf32, #tpu.memory_space<vmem>>, vector<1x2x32xf32>,
    %c7_i32_140 = arith.constant 7 : i32
    %294 = arith.subi %c7_i32_140, %c2_i32 : i32
    %295 = arith.addi %6, %294 : i32
    %296 = vector.broadcast %295 : i32 to vector<2x1xi32>
    %297 = arith.cmpi slt, %296, %3 : vector<2x1xi32>
    %298 = arith.index_cast %294 : i32 to index
    %c0_141 = arith.constant 0 : index
    %c0_142 = arith.constant 0 : index
    %299 = vector.load %arg2[%298, %c0_141, %c0_142] : memref<8x2x64xf32, #tpu.memory_space<vmem>>, vector<1x2x64xf32>
    %300 = vector.shape_cast %299 : vector<1x2x64xf32> to vector<2x64xf32>
    %301 = arith.truncf %300 : vector<2x64xf32> to vector<2x64xbf16>
    %c0_143 = arith.constant 0 : index
    %c0_144 = arith.constant 0 : index
    %302 = vector.load %arg5[%c0_143, %c0_144] : memref<64x128xbf16, #tpu.memory_space<vmem>>, vector<64x128xbf16>
    %cst_145 = arith.constant dense<0.000000e+00> : vector<2x128xf32>
    %303 = tpu.matmul %301, %302, %cst_145 {dimension_numbers = #tpu.dot_dimension_numbers<[1], [0], [0], [1], [0, 0, 1, 1], [], []>} : vector<2x64xbf16>, vector<64x128xbf16>, vector<2x128xf32> -> vector<2x128xf32>
    %c0_146 = arith.constant 0 : index
    %c0_147 = arith.constant 0 : index
    %304 = vector.load %arg14[%c0_146, %c0_147] : memref<2x32xf32, #tpu.memory_space<vmem>>, vector<2x32xf32>
    %305 = arith.truncf %304 : vector<2x32xf32> to vector<2x32xbf16>
    %c0_148 = arith.constant 0 : index
    %c0_149 = arith.constant 0 : index
    %306 = vector.load %arg9[%c0_148, %c0_149] : memref<32x128xbf16, #tpu.memory_space<vmem>>, vector<32x128xbf16>
    %cst_150 = arith.constant dense<0.000000e+00> : vector<2x128xf32>
    %307 = tpu.matmul %305, %306, %cst_150 {dimension_numbers = #tpu.dot_dimension_numbers<[1], [0], [0], [1], [0, 0, 1, 1], [], []>} : vector<2x32xbf16>, vector<32x128xbf16>, vector<2x128xf32> -> vector<2x128xf32>
    %308 = arith.addf %303, %307 : vector<2x128xf32>
    %c0_151 = arith.constant 0 : index
    %c0_152 = arith.constant 0 : index
    %309 = vector.load %arg7[%c0_151, %c0_152] : memref<1x128xf32, #tpu.memory_space<vmem>>, vector<1x128xf32>
    %310 = vector.broadcast %309 : vector<1x128xf32> to vector<2x128xf32>
    %311 = arith.addf %308, %310 : vector<2x128xf32>
    %312 = vector.extract_strided_slice %311 {offsets = [0, 0], sizes = [2, 64], strides = [1, 1]} : vector<2x128xf32> to vector<2x64xf32>
    %313 = arith.negf %312 : vector<2x64xf32>
    %314 = math.exp %313 : vector<2x64xf32>
    %cst_153 = arith.constant 1.000000e+00 : f32
    %315 = vector.broadcast %cst_153 : f32 to vector<2x64xf32>
    %316 = arith.addf %315, %314 : vector<2x64xf32>
    %317 = arith.divf %315, %316 : vector<2x64xf32>
    %318 = vector.extract_strided_slice %317 {offsets = [0, 0], sizes = [2, 32], strides = [1, 1]} : vector<2x64xf32> to vector<2x32xf32>
    %319 = vector.extract_strided_slice %317 {offsets = [0, 32], sizes = [2, 32], strides = [1, 1]} : vector<2x64xf32> to vector<2x32xf32>
    %320 = vector.extract_strided_slice %311 {offsets = [0, 64], sizes = [2, 32], strides = [1, 1]} : vector<2x128xf32> to vector<2x32xf32>
    %321 = math.tanh %320 : vector<2x32xf32>
    %322 = vector.extract_strided_slice %311 {offsets = [0, 96], sizes = [2, 32], strides = [1, 1]} : vector<2x128xf32> to vector<2x32xf32>
    %323 = arith.negf %322 : vector<2x32xf32>
    %324 = math.exp %323 : vector<2x32xf32>
    %cst_154 = arith.constant 1.000000e+00 : f32
    %325 = vector.broadcast %cst_154 : f32 to vector<2x32xf32>
    %326 = arith.addf %325, %324 : vector<2x32xf32>
    %327 = arith.divf %325, %326 : vector<2x32xf32>
    %c0_155 = arith.constant 0 : index
    %c0_156 = arith.constant 0 : index
    %328 = vector.load %arg15[%c0_155, %c0_156] : memref<2x32xf32, #tpu.memory_space<vmem>>, vector<2x32xf32>
    %329 = arith.mulf %319, %328 : vector<2x32xf32>
    %330 = arith.mulf %318, %321 : vector<2x32xf32>
    %331 = arith.addf %329, %330 : vector<2x32xf32>
    %332 = math.tanh %331 : vector<2x32xf32>
    %333 = arith.mulf %327, %332 : vector<2x32xf32>
    %c0_157 = arith.constant 0 : index
    %c0_158 = arith.constant 0 : index
    %334 = vector.load %arg15[%c0_157, %c0_158] : memref<2x32xf32, #tpu.memory_space<vmem>>, vector<2x32xf32>
    %335 = vector.shape_cast %297 : vector<2x1xi1> to vector<2x1xi1>
    %336 = vector.broadcast %335 : vector<2x1xi1> to vector<2x32xi1>
    %337 = arith.select %336, %331, %334 : vector<2x32xi1>, vector<2x32xf32>
    %c0_159 = arith.constant 0 : index
    %c0_160 = arith.constant 0 : index
    %338 = vector.load %arg15[%c0_159, %c0_160] : memref<2x32xf32, #tpu.memory_space<vmem>>, vector<2x32xf32>
    tpu.vector_store %arg15[%c0_159, %c0_160], %337 {strides = array<i32>} : memref<2x32xf32, #tpu.memory_space<vmem>>, vector<2x32xf32>,
    %c0_161 = arith.constant 0 : index
    %c0_162 = arith.constant 0 : index
    %339 = vector.load %arg14[%c0_161, %c0_162] : memref<2x32xf32, #tpu.memory_space<vmem>>, vector<2x32xf32>
    %340 = vector.shape_cast %297 : vector<2x1xi1> to vector<2x1xi1>
    %341 = vector.broadcast %340 : vector<2x1xi1> to vector<2x32xi1>
    %342 = arith.select %341, %333, %339 : vector<2x32xi1>, vector<2x32xf32>
    %c0_163 = arith.constant 0 : index
    %c0_164 = arith.constant 0 : index
    %343 = vector.load %arg14[%c0_163, %c0_164] : memref<2x32xf32, #tpu.memory_space<vmem>>, vector<2x32xf32>
    tpu.vector_store %arg14[%c0_163, %c0_164], %342 {strides = array<i32>} : memref<2x32xf32, #tpu.memory_space<vmem>>, vector<2x32xf32>,
    %cst_165 = arith.constant 0.000000e+00 : f32
    %344 = vector.shape_cast %297 : vector<2x1xi1> to vector<2x1xi1>
    %345 = vector.broadcast %344 : vector<2x1xi1> to vector<2x32xi1>
    %346 = vector.broadcast %cst_165 : f32 to vector<2x32xf32>
    %347 = arith.select %345, %333, %346 : vector<2x32xi1>, vector<2x32xf32>
    %348 = arith.index_cast %294 : i32 to index
    %c0_166 = arith.constant 0 : index
    %c0_167 = arith.constant 0 : index
    %349 = vector.load %arg11[%348, %c0_166, %c0_167] : memref<8x2x32xf32, #tpu.memory_space<vmem>>, vector<1x2x32xf32>
    %350 = vector.shape_cast %349 : vector<1x2x32xf32> to vector<2x32xf32>
    %351 = vector.shape_cast %347 : vector<2x32xf32> to vector<1x2x32xf32>
    tpu.vector_store %arg11[%348, %c0_166, %c0_167], %351 {strides = array<i32>} : memref<8x2x32xf32, #tpu.memory_space<vmem>>, vector<1x2x32xf32>,
    %c3_i32 = arith.constant 3 : i32
    %352 = arith.addi %4, %c3_i32 : i32
    %353 = vector.broadcast %352 : i32 to vector<2x1xi32>
    %354 = arith.cmpi slt, %353, %3 : vector<2x1xi32>
    %355 = arith.index_cast %c3_i32 : i32 to index
    %c0_168 = arith.constant 0 : index
    %c0_169 = arith.constant 0 : index
    %356 = vector.load %arg1[%355, %c0_168, %c0_169] : memref<8x2x64xf32, #tpu.memory_space<vmem>>, vector<1x2x64xf32>
    %357 = vector.shape_cast %356 : vector<1x2x64xf32> to vector<2x64xf32>
    %358 = arith.truncf %357 : vector<2x64xf32> to vector<2x64xbf16>
    %c0_170 = arith.constant 0 : index
    %c0_171 = arith.constant 0 : index
    %359 = vector.load %arg4[%c0_170, %c0_171] : memref<64x128xbf16, #tpu.memory_space<vmem>>, vector<64x128xbf16>
    %cst_172 = arith.constant dense<0.000000e+00> : vector<2x128xf32>
    %360 = tpu.matmul %358, %359, %cst_172 {dimension_numbers = #tpu.dot_dimension_numbers<[1], [0], [0], [1], [0, 0, 1, 1], [], []>} : vector<2x64xbf16>, vector<64x128xbf16>, vector<2x128xf32> -> vector<2x128xf32>
    %c0_173 = arith.constant 0 : index
    %c0_174 = arith.constant 0 : index
    %361 = vector.load %arg12[%c0_173, %c0_174] : memref<2x32xf32, #tpu.memory_space<vmem>>, vector<2x32xf32>
    %362 = arith.truncf %361 : vector<2x32xf32> to vector<2x32xbf16>
    %c0_175 = arith.constant 0 : index
    %c0_176 = arith.constant 0 : index
    %363 = vector.load %arg8[%c0_175, %c0_176] : memref<32x128xbf16, #tpu.memory_space<vmem>>, vector<32x128xbf16>
    %cst_177 = arith.constant dense<0.000000e+00> : vector<2x128xf32>
    %364 = tpu.matmul %362, %363, %cst_177 {dimension_numbers = #tpu.dot_dimension_numbers<[1], [0], [0], [1], [0, 0, 1, 1], [], []>} : vector<2x32xbf16>, vector<32x128xbf16>, vector<2x128xf32> -> vector<2x128xf32>
    %365 = arith.addf %360, %364 : vector<2x128xf32>
    %c0_178 = arith.constant 0 : index
    %c0_179 = arith.constant 0 : index
    %366 = vector.load %arg6[%c0_178, %c0_179] : memref<1x128xf32, #tpu.memory_space<vmem>>, vector<1x128xf32>
    %367 = vector.broadcast %366 : vector<1x128xf32> to vector<2x128xf32>
    %368 = arith.addf %365, %367 : vector<2x128xf32>
    %369 = vector.extract_strided_slice %368 {offsets = [0, 0], sizes = [2, 64], strides = [1, 1]} : vector<2x128xf32> to vector<2x64xf32>
    %370 = arith.negf %369 : vector<2x64xf32>
    %371 = math.exp %370 : vector<2x64xf32>
    %cst_180 = arith.constant 1.000000e+00 : f32
    %372 = vector.broadcast %cst_180 : f32 to vector<2x64xf32>
    %373 = arith.addf %372, %371 : vector<2x64xf32>
    %374 = arith.divf %372, %373 : vector<2x64xf32>
    %375 = vector.extract_strided_slice %374 {offsets = [0, 0], sizes = [2, 32], strides = [1, 1]} : vector<2x64xf32> to vector<2x32xf32>
    %376 = vector.extract_strided_slice %374 {offsets = [0, 32], sizes = [2, 32], strides = [1, 1]} : vector<2x64xf32> to vector<2x32xf32>
    %377 = vector.extract_strided_slice %368 {offsets = [0, 64], sizes = [2, 32], strides = [1, 1]} : vector<2x128xf32> to vector<2x32xf32>
    %378 = math.tanh %377 : vector<2x32xf32>
    %379 = vector.extract_strided_slice %368 {offsets = [0, 96], sizes = [2, 32], strides = [1, 1]} : vector<2x128xf32> to vector<2x32xf32>
    %380 = arith.negf %379 : vector<2x32xf32>
    %381 = math.exp %380 : vector<2x32xf32>
    %cst_181 = arith.constant 1.000000e+00 : f32
    %382 = vector.broadcast %cst_181 : f32 to vector<2x32xf32>
    %383 = arith.addf %382, %381 : vector<2x32xf32>
    %384 = arith.divf %382, %383 : vector<2x32xf32>
    %c0_182 = arith.constant 0 : index
    %c0_183 = arith.constant 0 : index
    %385 = vector.load %arg13[%c0_182, %c0_183] : memref<2x32xf32, #tpu.memory_space<vmem>>, vector<2x32xf32>
    %386 = arith.mulf %376, %385 : vector<2x32xf32>
    %387 = arith.mulf %375, %378 : vector<2x32xf32>
    %388 = arith.addf %386, %387 : vector<2x32xf32>
    %389 = math.tanh %388 : vector<2x32xf32>
    %390 = arith.mulf %384, %389 : vector<2x32xf32>
    %c0_184 = arith.constant 0 : index
    %c0_185 = arith.constant 0 : index
    %391 = vector.load %arg13[%c0_184, %c0_185] : memref<2x32xf32, #tpu.memory_space<vmem>>, vector<2x32xf32>
    %392 = vector.shape_cast %354 : vector<2x1xi1> to vector<2x1xi1>
    %393 = vector.broadcast %392 : vector<2x1xi1> to vector<2x32xi1>
    %394 = arith.select %393, %388, %391 : vector<2x32xi1>, vector<2x32xf32>
    %c0_186 = arith.constant 0 : index
    %c0_187 = arith.constant 0 : index
    %395 = vector.load %arg13[%c0_186, %c0_187] : memref<2x32xf32, #tpu.memory_space<vmem>>, vector<2x32xf32>
    tpu.vector_store %arg13[%c0_186, %c0_187], %394 {strides = array<i32>} : memref<2x32xf32, #tpu.memory_space<vmem>>, vector<2x32xf32>,
    %c0_188 = arith.constant 0 : index
    %c0_189 = arith.constant 0 : index
    %396 = vector.load %arg12[%c0_188, %c0_189] : memref<2x32xf32, #tpu.memory_space<vmem>>, vector<2x32xf32>
    %397 = vector.shape_cast %354 : vector<2x1xi1> to vector<2x1xi1>
    %398 = vector.broadcast %397 : vector<2x1xi1> to vector<2x32xi1>
    %399 = arith.select %398, %390, %396 : vector<2x32xi1>, vector<2x32xf32>
    %c0_190 = arith.constant 0 : index
    %c0_191 = arith.constant 0 : index
    %400 = vector.load %arg12[%c0_190, %c0_191] : memref<2x32xf32, #tpu.memory_space<vmem>>, vector<2x32xf32>
    tpu.vector_store %arg12[%c0_190, %c0_191], %399 {strides = array<i32>} : memref<2x32xf32, #tpu.memory_space<vmem>>, vector<2x32xf32>,
    %cst_192 = arith.constant 0.000000e+00 : f32
    %401 = vector.shape_cast %354 : vector<2x1xi1> to vector<2x1xi1>
    %402 = vector.broadcast %401 : vector<2x1xi1> to vector<2x32xi1>
    %403 = vector.broadcast %cst_192 : f32 to vector<2x32xf32>
    %404 = arith.select %402, %390, %403 : vector<2x32xi1>, vector<2x32xf32>
    %405 = arith.index_cast %c3_i32 : i32 to index
    %c0_193 = arith.constant 0 : index
    %c0_194 = arith.constant 0 : index
    %406 = vector.load %arg10[%405, %c0_193, %c0_194] : memref<8x2x32xf32, #tpu.memory_space<vmem>>, vector<1x2x32xf32>
    %407 = vector.shape_cast %406 : vector<1x2x32xf32> to vector<2x32xf32>
    %408 = vector.shape_cast %404 : vector<2x32xf32> to vector<1x2x32xf32>
    tpu.vector_store %arg10[%405, %c0_193, %c0_194], %408 {strides = array<i32>} : memref<8x2x32xf32, #tpu.memory_space<vmem>>, vector<1x2x32xf32>,
    %c7_i32_195 = arith.constant 7 : i32
    %409 = arith.subi %c7_i32_195, %c3_i32 : i32
    %410 = arith.addi %6, %409 : i32
    %411 = vector.broadcast %410 : i32 to vector<2x1xi32>
    %412 = arith.cmpi slt, %411, %3 : vector<2x1xi32>
    %413 = arith.index_cast %409 : i32 to index
    %c0_196 = arith.constant 0 : index
    %c0_197 = arith.constant 0 : index
    %414 = vector.load %arg2[%413, %c0_196, %c0_197] : memref<8x2x64xf32, #tpu.memory_space<vmem>>, vector<1x2x64xf32>
    %415 = vector.shape_cast %414 : vector<1x2x64xf32> to vector<2x64xf32>
    %416 = arith.truncf %415 : vector<2x64xf32> to vector<2x64xbf16>
    %c0_198 = arith.constant 0 : index
    %c0_199 = arith.constant 0 : index
    %417 = vector.load %arg5[%c0_198, %c0_199] : memref<64x128xbf16, #tpu.memory_space<vmem>>, vector<64x128xbf16>
    %cst_200 = arith.constant dense<0.000000e+00> : vector<2x128xf32>
    %418 = tpu.matmul %416, %417, %cst_200 {dimension_numbers = #tpu.dot_dimension_numbers<[1], [0], [0], [1], [0, 0, 1, 1], [], []>} : vector<2x64xbf16>, vector<64x128xbf16>, vector<2x128xf32> -> vector<2x128xf32>
    %c0_201 = arith.constant 0 : index
    %c0_202 = arith.constant 0 : index
    %419 = vector.load %arg14[%c0_201, %c0_202] : memref<2x32xf32, #tpu.memory_space<vmem>>, vector<2x32xf32>
    %420 = arith.truncf %419 : vector<2x32xf32> to vector<2x32xbf16>
    %c0_203 = arith.constant 0 : index
    %c0_204 = arith.constant 0 : index
    %421 = vector.load %arg9[%c0_203, %c0_204] : memref<32x128xbf16, #tpu.memory_space<vmem>>, vector<32x128xbf16>
    %cst_205 = arith.constant dense<0.000000e+00> : vector<2x128xf32>
    %422 = tpu.matmul %420, %421, %cst_205 {dimension_numbers = #tpu.dot_dimension_numbers<[1], [0], [0], [1], [0, 0, 1, 1], [], []>} : vector<2x32xbf16>, vector<32x128xbf16>, vector<2x128xf32> -> vector<2x128xf32>
    %423 = arith.addf %418, %422 : vector<2x128xf32>
    %c0_206 = arith.constant 0 : index
    %c0_207 = arith.constant 0 : index
    %424 = vector.load %arg7[%c0_206, %c0_207] : memref<1x128xf32, #tpu.memory_space<vmem>>, vector<1x128xf32>
    %425 = vector.broadcast %424 : vector<1x128xf32> to vector<2x128xf32>
    %426 = arith.addf %423, %425 : vector<2x128xf32>
    %427 = vector.extract_strided_slice %426 {offsets = [0, 0], sizes = [2, 64], strides = [1, 1]} : vector<2x128xf32> to vector<2x64xf32>
    %428 = arith.negf %427 : vector<2x64xf32>
    %429 = math.exp %428 : vector<2x64xf32>
    %cst_208 = arith.constant 1.000000e+00 : f32
    %430 = vector.broadcast %cst_208 : f32 to vector<2x64xf32>
    %431 = arith.addf %430, %429 : vector<2x64xf32>
    %432 = arith.divf %430, %431 : vector<2x64xf32>
    %433 = vector.extract_strided_slice %432 {offsets = [0, 0], sizes = [2, 32], strides = [1, 1]} : vector<2x64xf32> to vector<2x32xf32>
    %434 = vector.extract_strided_slice %432 {offsets = [0, 32], sizes = [2, 32], strides = [1, 1]} : vector<2x64xf32> to vector<2x32xf32>
    %435 = vector.extract_strided_slice %426 {offsets = [0, 64], sizes = [2, 32], strides = [1, 1]} : vector<2x128xf32> to vector<2x32xf32>
    %436 = math.tanh %435 : vector<2x32xf32>
    %437 = vector.extract_strided_slice %426 {offsets = [0, 96], sizes = [2, 32], strides = [1, 1]} : vector<2x128xf32> to vector<2x32xf32>
    %438 = arith.negf %437 : vector<2x32xf32>
    %439 = math.exp %438 : vector<2x32xf32>
    %cst_209 = arith.constant 1.000000e+00 : f32
    %440 = vector.broadcast %cst_209 : f32 to vector<2x32xf32>
    %441 = arith.addf %440, %439 : vector<2x32xf32>
    %442 = arith.divf %440, %441 : vector<2x32xf32>
    %c0_210 = arith.constant 0 : index
    %c0_211 = arith.constant 0 : index
    %443 = vector.load %arg15[%c0_210, %c0_211] : memref<2x32xf32, #tpu.memory_space<vmem>>, vector<2x32xf32>
    %444 = arith.mulf %434, %443 : vector<2x32xf32>
    %445 = arith.mulf %433, %436 : vector<2x32xf32>
    %446 = arith.addf %444, %445 : vector<2x32xf32>
    %447 = math.tanh %446 : vector<2x32xf32>
    %448 = arith.mulf %442, %447 : vector<2x32xf32>
    %c0_212 = arith.constant 0 : index
    %c0_213 = arith.constant 0 : index
    %449 = vector.load %arg15[%c0_212, %c0_213] : memref<2x32xf32, #tpu.memory_space<vmem>>, vector<2x32xf32>
    %450 = vector.shape_cast %412 : vector<2x1xi1> to vector<2x1xi1>
    %451 = vector.broadcast %450 : vector<2x1xi1> to vector<2x32xi1>
    %452 = arith.select %451, %446, %449 : vector<2x32xi1>, vector<2x32xf32>
    %c0_214 = arith.constant 0 : index
    %c0_215 = arith.constant 0 : index
    %453 = vector.load %arg15[%c0_214, %c0_215] : memref<2x32xf32, #tpu.memory_space<vmem>>, vector<2x32xf32>
    tpu.vector_store %arg15[%c0_214, %c0_215], %452 {strides = array<i32>} : memref<2x32xf32, #tpu.memory_space<vmem>>, vector<2x32xf32>,
    %c0_216 = arith.constant 0 : index
    %c0_217 = arith.constant 0 : index
    %454 = vector.load %arg14[%c0_216, %c0_217] : memref<2x32xf32, #tpu.memory_space<vmem>>, vector<2x32xf32>
    %455 = vector.shape_cast %412 : vector<2x1xi1> to vector<2x1xi1>
    %456 = vector.broadcast %455 : vector<2x1xi1> to vector<2x32xi1>
    %457 = arith.select %456, %448, %454 : vector<2x32xi1>, vector<2x32xf32>
    %c0_218 = arith.constant 0 : index
    %c0_219 = arith.constant 0 : index
    %458 = vector.load %arg14[%c0_218, %c0_219] : memref<2x32xf32, #tpu.memory_space<vmem>>, vector<2x32xf32>
    tpu.vector_store %arg14[%c0_218, %c0_219], %457 {strides = array<i32>} : memref<2x32xf32, #tpu.memory_space<vmem>>, vector<2x32xf32>,
    %cst_220 = arith.constant 0.000000e+00 : f32
    %459 = vector.shape_cast %412 : vector<2x1xi1> to vector<2x1xi1>
    %460 = vector.broadcast %459 : vector<2x1xi1> to vector<2x32xi1>
    %461 = vector.broadcast %cst_220 : f32 to vector<2x32xf32>
    %462 = arith.select %460, %448, %461 : vector<2x32xi1>, vector<2x32xf32>
    %463 = arith.index_cast %409 : i32 to index
    %c0_221 = arith.constant 0 : index
    %c0_222 = arith.constant 0 : index
    %464 = vector.load %arg11[%463, %c0_221, %c0_222] : memref<8x2x32xf32, #tpu.memory_space<vmem>>, vector<1x2x32xf32>
    %465 = vector.shape_cast %464 : vector<1x2x32xf32> to vector<2x32xf32>
    %466 = vector.shape_cast %462 : vector<2x32xf32> to vector<1x2x32xf32>
    tpu.vector_store %arg11[%463, %c0_221, %c0_222], %466 {strides = array<i32>} : memref<8x2x32xf32, #tpu.memory_space<vmem>>, vector<1x2x32xf32>,
    %c4_i32 = arith.constant 4 : i32
    %467 = arith.addi %4, %c4_i32 : i32
    %468 = vector.broadcast %467 : i32 to vector<2x1xi32>
    %469 = arith.cmpi slt, %468, %3 : vector<2x1xi32>
    %470 = arith.index_cast %c4_i32 : i32 to index
    %c0_223 = arith.constant 0 : index
    %c0_224 = arith.constant 0 : index
    %471 = vector.load %arg1[%470, %c0_223, %c0_224] : memref<8x2x64xf32, #tpu.memory_space<vmem>>, vector<1x2x64xf32>
    %472 = vector.shape_cast %471 : vector<1x2x64xf32> to vector<2x64xf32>
    %473 = arith.truncf %472 : vector<2x64xf32> to vector<2x64xbf16>
    %c0_225 = arith.constant 0 : index
    %c0_226 = arith.constant 0 : index
    %474 = vector.load %arg4[%c0_225, %c0_226] : memref<64x128xbf16, #tpu.memory_space<vmem>>, vector<64x128xbf16>
    %cst_227 = arith.constant dense<0.000000e+00> : vector<2x128xf32>
    %475 = tpu.matmul %473, %474, %cst_227 {dimension_numbers = #tpu.dot_dimension_numbers<[1], [0], [0], [1], [0, 0, 1, 1], [], []>} : vector<2x64xbf16>, vector<64x128xbf16>, vector<2x128xf32> -> vector<2x128xf32>
    %c0_228 = arith.constant 0 : index
    %c0_229 = arith.constant 0 : index
    %476 = vector.load %arg12[%c0_228, %c0_229] : memref<2x32xf32, #tpu.memory_space<vmem>>, vector<2x32xf32>
    %477 = arith.truncf %476 : vector<2x32xf32> to vector<2x32xbf16>
    %c0_230 = arith.constant 0 : index
    %c0_231 = arith.constant 0 : index
    %478 = vector.load %arg8[%c0_230, %c0_231] : memref<32x128xbf16, #tpu.memory_space<vmem>>, vector<32x128xbf16>
    %cst_232 = arith.constant dense<0.000000e+00> : vector<2x128xf32>
    %479 = tpu.matmul %477, %478, %cst_232 {dimension_numbers = #tpu.dot_dimension_numbers<[1], [0], [0], [1], [0, 0, 1, 1], [], []>} : vector<2x32xbf16>, vector<32x128xbf16>, vector<2x128xf32> -> vector<2x128xf32>
    %480 = arith.addf %475, %479 : vector<2x128xf32>
    %c0_233 = arith.constant 0 : index
    %c0_234 = arith.constant 0 : index
    %481 = vector.load %arg6[%c0_233, %c0_234] : memref<1x128xf32, #tpu.memory_space<vmem>>, vector<1x128xf32>
    %482 = vector.broadcast %481 : vector<1x128xf32> to vector<2x128xf32>
    %483 = arith.addf %480, %482 : vector<2x128xf32>
    %484 = vector.extract_strided_slice %483 {offsets = [0, 0], sizes = [2, 64], strides = [1, 1]} : vector<2x128xf32> to vector<2x64xf32>
    %485 = arith.negf %484 : vector<2x64xf32>
    %486 = math.exp %485 : vector<2x64xf32>
    %cst_235 = arith.constant 1.000000e+00 : f32
    %487 = vector.broadcast %cst_235 : f32 to vector<2x64xf32>
    %488 = arith.addf %487, %486 : vector<2x64xf32>
    %489 = arith.divf %487, %488 : vector<2x64xf32>
    %490 = vector.extract_strided_slice %489 {offsets = [0, 0], sizes = [2, 32], strides = [1, 1]} : vector<2x64xf32> to vector<2x32xf32>
    %491 = vector.extract_strided_slice %489 {offsets = [0, 32], sizes = [2, 32], strides = [1, 1]} : vector<2x64xf32> to vector<2x32xf32>
    %492 = vector.extract_strided_slice %483 {offsets = [0, 64], sizes = [2, 32], strides = [1, 1]} : vector<2x128xf32> to vector<2x32xf32>
    %493 = math.tanh %492 : vector<2x32xf32>
    %494 = vector.extract_strided_slice %483 {offsets = [0, 96], sizes = [2, 32], strides = [1, 1]} : vector<2x128xf32> to vector<2x32xf32>
    %495 = arith.negf %494 : vector<2x32xf32>
    %496 = math.exp %495 : vector<2x32xf32>
    %cst_236 = arith.constant 1.000000e+00 : f32
    %497 = vector.broadcast %cst_236 : f32 to vector<2x32xf32>
    %498 = arith.addf %497, %496 : vector<2x32xf32>
    %499 = arith.divf %497, %498 : vector<2x32xf32>
    %c0_237 = arith.constant 0 : index
    %c0_238 = arith.constant 0 : index
    %500 = vector.load %arg13[%c0_237, %c0_238] : memref<2x32xf32, #tpu.memory_space<vmem>>, vector<2x32xf32>
    %501 = arith.mulf %491, %500 : vector<2x32xf32>
    %502 = arith.mulf %490, %493 : vector<2x32xf32>
    %503 = arith.addf %501, %502 : vector<2x32xf32>
    %504 = math.tanh %503 : vector<2x32xf32>
    %505 = arith.mulf %499, %504 : vector<2x32xf32>
    %c0_239 = arith.constant 0 : index
    %c0_240 = arith.constant 0 : index
    %506 = vector.load %arg13[%c0_239, %c0_240] : memref<2x32xf32, #tpu.memory_space<vmem>>, vector<2x32xf32>
    %507 = vector.shape_cast %469 : vector<2x1xi1> to vector<2x1xi1>
    %508 = vector.broadcast %507 : vector<2x1xi1> to vector<2x32xi1>
    %509 = arith.select %508, %503, %506 : vector<2x32xi1>, vector<2x32xf32>
    %c0_241 = arith.constant 0 : index
    %c0_242 = arith.constant 0 : index
    %510 = vector.load %arg13[%c0_241, %c0_242] : memref<2x32xf32, #tpu.memory_space<vmem>>, vector<2x32xf32>
    tpu.vector_store %arg13[%c0_241, %c0_242], %509 {strides = array<i32>} : memref<2x32xf32, #tpu.memory_space<vmem>>, vector<2x32xf32>,
    %c0_243 = arith.constant 0 : index
    %c0_244 = arith.constant 0 : index
    %511 = vector.load %arg12[%c0_243, %c0_244] : memref<2x32xf32, #tpu.memory_space<vmem>>, vector<2x32xf32>
    %512 = vector.shape_cast %469 : vector<2x1xi1> to vector<2x1xi1>
    %513 = vector.broadcast %512 : vector<2x1xi1> to vector<2x32xi1>
    %514 = arith.select %513, %505, %511 : vector<2x32xi1>, vector<2x32xf32>
    %c0_245 = arith.constant 0 : index
    %c0_246 = arith.constant 0 : index
    %515 = vector.load %arg12[%c0_245, %c0_246] : memref<2x32xf32, #tpu.memory_space<vmem>>, vector<2x32xf32>
    tpu.vector_store %arg12[%c0_245, %c0_246], %514 {strides = array<i32>} : memref<2x32xf32, #tpu.memory_space<vmem>>, vector<2x32xf32>,
    %cst_247 = arith.constant 0.000000e+00 : f32
    %516 = vector.shape_cast %469 : vector<2x1xi1> to vector<2x1xi1>
    %517 = vector.broadcast %516 : vector<2x1xi1> to vector<2x32xi1>
    %518 = vector.broadcast %cst_247 : f32 to vector<2x32xf32>
    %519 = arith.select %517, %505, %518 : vector<2x32xi1>, vector<2x32xf32>
    %520 = arith.index_cast %c4_i32 : i32 to index
    %c0_248 = arith.constant 0 : index
    %c0_249 = arith.constant 0 : index
    %521 = vector.load %arg10[%520, %c0_248, %c0_249] : memref<8x2x32xf32, #tpu.memory_space<vmem>>, vector<1x2x32xf32>
    %522 = vector.shape_cast %521 : vector<1x2x32xf32> to vector<2x32xf32>
    %523 = vector.shape_cast %519 : vector<2x32xf32> to vector<1x2x32xf32>
    tpu.vector_store %arg10[%520, %c0_248, %c0_249], %523 {strides = array<i32>} : memref<8x2x32xf32, #tpu.memory_space<vmem>>, vector<1x2x32xf32>,
    %c7_i32_250 = arith.constant 7 : i32
    %524 = arith.subi %c7_i32_250, %c4_i32 : i32
    %525 = arith.addi %6, %524 : i32
    %526 = vector.broadcast %525 : i32 to vector<2x1xi32>
    %527 = arith.cmpi slt, %526, %3 : vector<2x1xi32>
    %528 = arith.index_cast %524 : i32 to index
    %c0_251 = arith.constant 0 : index
    %c0_252 = arith.constant 0 : index
    %529 = vector.load %arg2[%528, %c0_251, %c0_252] : memref<8x2x64xf32, #tpu.memory_space<vmem>>, vector<1x2x64xf32>
    %530 = vector.shape_cast %529 : vector<1x2x64xf32> to vector<2x64xf32>
    %531 = arith.truncf %530 : vector<2x64xf32> to vector<2x64xbf16>
    %c0_253 = arith.constant 0 : index
    %c0_254 = arith.constant 0 : index
    %532 = vector.load %arg5[%c0_253, %c0_254] : memref<64x128xbf16, #tpu.memory_space<vmem>>, vector<64x128xbf16>
    %cst_255 = arith.constant dense<0.000000e+00> : vector<2x128xf32>
    %533 = tpu.matmul %531, %532, %cst_255 {dimension_numbers = #tpu.dot_dimension_numbers<[1], [0], [0], [1], [0, 0, 1, 1], [], []>} : vector<2x64xbf16>, vector<64x128xbf16>, vector<2x128xf32> -> vector<2x128xf32>
    %c0_256 = arith.constant 0 : index
    %c0_257 = arith.constant 0 : index
    %534 = vector.load %arg14[%c0_256, %c0_257] : memref<2x32xf32, #tpu.memory_space<vmem>>, vector<2x32xf32>
    %535 = arith.truncf %534 : vector<2x32xf32> to vector<2x32xbf16>
    %c0_258 = arith.constant 0 : index
    %c0_259 = arith.constant 0 : index
    %536 = vector.load %arg9[%c0_258, %c0_259] : memref<32x128xbf16, #tpu.memory_space<vmem>>, vector<32x128xbf16>
    %cst_260 = arith.constant dense<0.000000e+00> : vector<2x128xf32>
    %537 = tpu.matmul %535, %536, %cst_260 {dimension_numbers = #tpu.dot_dimension_numbers<[1], [0], [0], [1], [0, 0, 1, 1], [], []>} : vector<2x32xbf16>, vector<32x128xbf16>, vector<2x128xf32> -> vector<2x128xf32>
    %538 = arith.addf %533, %537 : vector<2x128xf32>
    %c0_261 = arith.constant 0 : index
    %c0_262 = arith.constant 0 : index
    %539 = vector.load %arg7[%c0_261, %c0_262] : memref<1x128xf32, #tpu.memory_space<vmem>>, vector<1x128xf32>
    %540 = vector.broadcast %539 : vector<1x128xf32> to vector<2x128xf32>
    %541 = arith.addf %538, %540 : vector<2x128xf32>
    %542 = vector.extract_strided_slice %541 {offsets = [0, 0], sizes = [2, 64], strides = [1, 1]} : vector<2x128xf32> to vector<2x64xf32>
    %543 = arith.negf %542 : vector<2x64xf32>
    %544 = math.exp %543 : vector<2x64xf32>
    %cst_263 = arith.constant 1.000000e+00 : f32
    %545 = vector.broadcast %cst_263 : f32 to vector<2x64xf32>
    %546 = arith.addf %545, %544 : vector<2x64xf32>
    %547 = arith.divf %545, %546 : vector<2x64xf32>
    %548 = vector.extract_strided_slice %547 {offsets = [0, 0], sizes = [2, 32], strides = [1, 1]} : vector<2x64xf32> to vector<2x32xf32>
    %549 = vector.extract_strided_slice %547 {offsets = [0, 32], sizes = [2, 32], strides = [1, 1]} : vector<2x64xf32> to vector<2x32xf32>
    %550 = vector.extract_strided_slice %541 {offsets = [0, 64], sizes = [2, 32], strides = [1, 1]} : vector<2x128xf32> to vector<2x32xf32>
    %551 = math.tanh %550 : vector<2x32xf32>
    %552 = vector.extract_strided_slice %541 {offsets = [0, 96], sizes = [2, 32], strides = [1, 1]} : vector<2x128xf32> to vector<2x32xf32>
    %553 = arith.negf %552 : vector<2x32xf32>
    %554 = math.exp %553 : vector<2x32xf32>
    %cst_264 = arith.constant 1.000000e+00 : f32
    %555 = vector.broadcast %cst_264 : f32 to vector<2x32xf32>
    %556 = arith.addf %555, %554 : vector<2x32xf32>
    %557 = arith.divf %555, %556 : vector<2x32xf32>
    %c0_265 = arith.constant 0 : index
    %c0_266 = arith.constant 0 : index
    %558 = vector.load %arg15[%c0_265, %c0_266] : memref<2x32xf32, #tpu.memory_space<vmem>>, vector<2x32xf32>
    %559 = arith.mulf %549, %558 : vector<2x32xf32>
    %560 = arith.mulf %548, %551 : vector<2x32xf32>
    %561 = arith.addf %559, %560 : vector<2x32xf32>
    %562 = math.tanh %561 : vector<2x32xf32>
    %563 = arith.mulf %557, %562 : vector<2x32xf32>
    %c0_267 = arith.constant 0 : index
    %c0_268 = arith.constant 0 : index
    %564 = vector.load %arg15[%c0_267, %c0_268] : memref<2x32xf32, #tpu.memory_space<vmem>>, vector<2x32xf32>
    %565 = vector.shape_cast %527 : vector<2x1xi1> to vector<2x1xi1>
    %566 = vector.broadcast %565 : vector<2x1xi1> to vector<2x32xi1>
    %567 = arith.select %566, %561, %564 : vector<2x32xi1>, vector<2x32xf32>
    %c0_269 = arith.constant 0 : index
    %c0_270 = arith.constant 0 : index
    %568 = vector.load %arg15[%c0_269, %c0_270] : memref<2x32xf32, #tpu.memory_space<vmem>>, vector<2x32xf32>
    tpu.vector_store %arg15[%c0_269, %c0_270], %567 {strides = array<i32>} : memref<2x32xf32, #tpu.memory_space<vmem>>, vector<2x32xf32>,
    %c0_271 = arith.constant 0 : index
    %c0_272 = arith.constant 0 : index
    %569 = vector.load %arg14[%c0_271, %c0_272] : memref<2x32xf32, #tpu.memory_space<vmem>>, vector<2x32xf32>
    %570 = vector.shape_cast %527 : vector<2x1xi1> to vector<2x1xi1>
    %571 = vector.broadcast %570 : vector<2x1xi1> to vector<2x32xi1>
    %572 = arith.select %571, %563, %569 : vector<2x32xi1>, vector<2x32xf32>
    %c0_273 = arith.constant 0 : index
    %c0_274 = arith.constant 0 : index
    %573 = vector.load %arg14[%c0_273, %c0_274] : memref<2x32xf32, #tpu.memory_space<vmem>>, vector<2x32xf32>
    tpu.vector_store %arg14[%c0_273, %c0_274], %572 {strides = array<i32>} : memref<2x32xf32, #tpu.memory_space<vmem>>, vector<2x32xf32>,
    %cst_275 = arith.constant 0.000000e+00 : f32
    %574 = vector.shape_cast %527 : vector<2x1xi1> to vector<2x1xi1>
    %575 = vector.broadcast %574 : vector<2x1xi1> to vector<2x32xi1>
    %576 = vector.broadcast %cst_275 : f32 to vector<2x32xf32>
    %577 = arith.select %575, %563, %576 : vector<2x32xi1>, vector<2x32xf32>
    %578 = arith.index_cast %524 : i32 to index
    %c0_276 = arith.constant 0 : index
    %c0_277 = arith.constant 0 : index
    %579 = vector.load %arg11[%578, %c0_276, %c0_277] : memref<8x2x32xf32, #tpu.memory_space<vmem>>, vector<1x2x32xf32>
    %580 = vector.shape_cast %579 : vector<1x2x32xf32> to vector<2x32xf32>
    %581 = vector.shape_cast %577 : vector<2x32xf32> to vector<1x2x32xf32>
    tpu.vector_store %arg11[%578, %c0_276, %c0_277], %581 {strides = array<i32>} : memref<8x2x32xf32, #tpu.memory_space<vmem>>, vector<1x2x32xf32>,
    %c5_i32 = arith.constant 5 : i32
    %582 = arith.addi %4, %c5_i32 : i32
    %583 = vector.broadcast %582 : i32 to vector<2x1xi32>
    %584 = arith.cmpi slt, %583, %3 : vector<2x1xi32>
    %585 = arith.index_cast %c5_i32 : i32 to index
    %c0_278 = arith.constant 0 : index
    %c0_279 = arith.constant 0 : index
    %586 = vector.load %arg1[%585, %c0_278, %c0_279] : memref<8x2x64xf32, #tpu.memory_space<vmem>>, vector<1x2x64xf32>
    %587 = vector.shape_cast %586 : vector<1x2x64xf32> to vector<2x64xf32>
    %588 = arith.truncf %587 : vector<2x64xf32> to vector<2x64xbf16>
    %c0_280 = arith.constant 0 : index
    %c0_281 = arith.constant 0 : index
    %589 = vector.load %arg4[%c0_280, %c0_281] : memref<64x128xbf16, #tpu.memory_space<vmem>>, vector<64x128xbf16>
    %cst_282 = arith.constant dense<0.000000e+00> : vector<2x128xf32>
    %590 = tpu.matmul %588, %589, %cst_282 {dimension_numbers = #tpu.dot_dimension_numbers<[1], [0], [0], [1], [0, 0, 1, 1], [], []>} : vector<2x64xbf16>, vector<64x128xbf16>, vector<2x128xf32> -> vector<2x128xf32>
    %c0_283 = arith.constant 0 : index
    %c0_284 = arith.constant 0 : index
    %591 = vector.load %arg12[%c0_283, %c0_284] : memref<2x32xf32, #tpu.memory_space<vmem>>, vector<2x32xf32>
    %592 = arith.truncf %591 : vector<2x32xf32> to vector<2x32xbf16>
    %c0_285 = arith.constant 0 : index
    %c0_286 = arith.constant 0 : index
    %593 = vector.load %arg8[%c0_285, %c0_286] : memref<32x128xbf16, #tpu.memory_space<vmem>>, vector<32x128xbf16>
    %cst_287 = arith.constant dense<0.000000e+00> : vector<2x128xf32>
    %594 = tpu.matmul %592, %593, %cst_287 {dimension_numbers = #tpu.dot_dimension_numbers<[1], [0], [0], [1], [0, 0, 1, 1], [], []>} : vector<2x32xbf16>, vector<32x128xbf16>, vector<2x128xf32> -> vector<2x128xf32>
    %595 = arith.addf %590, %594 : vector<2x128xf32>
    %c0_288 = arith.constant 0 : index
    %c0_289 = arith.constant 0 : index
    %596 = vector.load %arg6[%c0_288, %c0_289] : memref<1x128xf32, #tpu.memory_space<vmem>>, vector<1x128xf32>
    %597 = vector.broadcast %596 : vector<1x128xf32> to vector<2x128xf32>
    %598 = arith.addf %595, %597 : vector<2x128xf32>
    %599 = vector.extract_strided_slice %598 {offsets = [0, 0], sizes = [2, 64], strides = [1, 1]} : vector<2x128xf32> to vector<2x64xf32>
    %600 = arith.negf %599 : vector<2x64xf32>
    %601 = math.exp %600 : vector<2x64xf32>
    %cst_290 = arith.constant 1.000000e+00 : f32
    %602 = vector.broadcast %cst_290 : f32 to vector<2x64xf32>
    %603 = arith.addf %602, %601 : vector<2x64xf32>
    %604 = arith.divf %602, %603 : vector<2x64xf32>
    %605 = vector.extract_strided_slice %604 {offsets = [0, 0], sizes = [2, 32], strides = [1, 1]} : vector<2x64xf32> to vector<2x32xf32>
    %606 = vector.extract_strided_slice %604 {offsets = [0, 32], sizes = [2, 32], strides = [1, 1]} : vector<2x64xf32> to vector<2x32xf32>
    %607 = vector.extract_strided_slice %598 {offsets = [0, 64], sizes = [2, 32], strides = [1, 1]} : vector<2x128xf32> to vector<2x32xf32>
    %608 = math.tanh %607 : vector<2x32xf32>
    %609 = vector.extract_strided_slice %598 {offsets = [0, 96], sizes = [2, 32], strides = [1, 1]} : vector<2x128xf32> to vector<2x32xf32>
    %610 = arith.negf %609 : vector<2x32xf32>
    %611 = math.exp %610 : vector<2x32xf32>
    %cst_291 = arith.constant 1.000000e+00 : f32
    %612 = vector.broadcast %cst_291 : f32 to vector<2x32xf32>
    %613 = arith.addf %612, %611 : vector<2x32xf32>
    %614 = arith.divf %612, %613 : vector<2x32xf32>
    %c0_292 = arith.constant 0 : index
    %c0_293 = arith.constant 0 : index
    %615 = vector.load %arg13[%c0_292, %c0_293] : memref<2x32xf32, #tpu.memory_space<vmem>>, vector<2x32xf32>
    %616 = arith.mulf %606, %615 : vector<2x32xf32>
    %617 = arith.mulf %605, %608 : vector<2x32xf32>
    %618 = arith.addf %616, %617 : vector<2x32xf32>
    %619 = math.tanh %618 : vector<2x32xf32>
    %620 = arith.mulf %614, %619 : vector<2x32xf32>
    %c0_294 = arith.constant 0 : index
    %c0_295 = arith.constant 0 : index
    %621 = vector.load %arg13[%c0_294, %c0_295] : memref<2x32xf32, #tpu.memory_space<vmem>>, vector<2x32xf32>
    %622 = vector.shape_cast %584 : vector<2x1xi1> to vector<2x1xi1>
    %623 = vector.broadcast %622 : vector<2x1xi1> to vector<2x32xi1>
    %624 = arith.select %623, %618, %621 : vector<2x32xi1>, vector<2x32xf32>
    %c0_296 = arith.constant 0 : index
    %c0_297 = arith.constant 0 : index
    %625 = vector.load %arg13[%c0_296, %c0_297] : memref<2x32xf32, #tpu.memory_space<vmem>>, vector<2x32xf32>
    tpu.vector_store %arg13[%c0_296, %c0_297], %624 {strides = array<i32>} : memref<2x32xf32, #tpu.memory_space<vmem>>, vector<2x32xf32>,
    %c0_298 = arith.constant 0 : index
    %c0_299 = arith.constant 0 : index
    %626 = vector.load %arg12[%c0_298, %c0_299] : memref<2x32xf32, #tpu.memory_space<vmem>>, vector<2x32xf32>
    %627 = vector.shape_cast %584 : vector<2x1xi1> to vector<2x1xi1>
    %628 = vector.broadcast %627 : vector<2x1xi1> to vector<2x32xi1>
    %629 = arith.select %628, %620, %626 : vector<2x32xi1>, vector<2x32xf32>
    %c0_300 = arith.constant 0 : index
    %c0_301 = arith.constant 0 : index
    %630 = vector.load %arg12[%c0_300, %c0_301] : memref<2x32xf32, #tpu.memory_space<vmem>>, vector<2x32xf32>
    tpu.vector_store %arg12[%c0_300, %c0_301], %629 {strides = array<i32>} : memref<2x32xf32, #tpu.memory_space<vmem>>, vector<2x32xf32>,
    %cst_302 = arith.constant 0.000000e+00 : f32
    %631 = vector.shape_cast %584 : vector<2x1xi1> to vector<2x1xi1>
    %632 = vector.broadcast %631 : vector<2x1xi1> to vector<2x32xi1>
    %633 = vector.broadcast %cst_302 : f32 to vector<2x32xf32>
    %634 = arith.select %632, %620, %633 : vector<2x32xi1>, vector<2x32xf32>
    %635 = arith.index_cast %c5_i32 : i32 to index
    %c0_303 = arith.constant 0 : index
    %c0_304 = arith.constant 0 : index
    %636 = vector.load %arg10[%635, %c0_303, %c0_304] : memref<8x2x32xf32, #tpu.memory_space<vmem>>, vector<1x2x32xf32>
    %637 = vector.shape_cast %636 : vector<1x2x32xf32> to vector<2x32xf32>
    %638 = vector.shape_cast %634 : vector<2x32xf32> to vector<1x2x32xf32>
    tpu.vector_store %arg10[%635, %c0_303, %c0_304], %638 {strides = array<i32>} : memref<8x2x32xf32, #tpu.memory_space<vmem>>, vector<1x2x32xf32>,
    %c7_i32_305 = arith.constant 7 : i32
    %639 = arith.subi %c7_i32_305, %c5_i32 : i32
    %640 = arith.addi %6, %639 : i32
    %641 = vector.broadcast %640 : i32 to vector<2x1xi32>
    %642 = arith.cmpi slt, %641, %3 : vector<2x1xi32>
    %643 = arith.index_cast %639 : i32 to index
    %c0_306 = arith.constant 0 : index
    %c0_307 = arith.constant 0 : index
    %644 = vector.load %arg2[%643, %c0_306, %c0_307] : memref<8x2x64xf32, #tpu.memory_space<vmem>>, vector<1x2x64xf32>
    %645 = vector.shape_cast %644 : vector<1x2x64xf32> to vector<2x64xf32>
    %646 = arith.truncf %645 : vector<2x64xf32> to vector<2x64xbf16>
    %c0_308 = arith.constant 0 : index
    %c0_309 = arith.constant 0 : index
    %647 = vector.load %arg5[%c0_308, %c0_309] : memref<64x128xbf16, #tpu.memory_space<vmem>>, vector<64x128xbf16>
    %cst_310 = arith.constant dense<0.000000e+00> : vector<2x128xf32>
    %648 = tpu.matmul %646, %647, %cst_310 {dimension_numbers = #tpu.dot_dimension_numbers<[1], [0], [0], [1], [0, 0, 1, 1], [], []>} : vector<2x64xbf16>, vector<64x128xbf16>, vector<2x128xf32> -> vector<2x128xf32>
    %c0_311 = arith.constant 0 : index
    %c0_312 = arith.constant 0 : index
    %649 = vector.load %arg14[%c0_311, %c0_312] : memref<2x32xf32, #tpu.memory_space<vmem>>, vector<2x32xf32>
    %650 = arith.truncf %649 : vector<2x32xf32> to vector<2x32xbf16>
    %c0_313 = arith.constant 0 : index
    %c0_314 = arith.constant 0 : index
    %651 = vector.load %arg9[%c0_313, %c0_314] : memref<32x128xbf16, #tpu.memory_space<vmem>>, vector<32x128xbf16>
    %cst_315 = arith.constant dense<0.000000e+00> : vector<2x128xf32>
    %652 = tpu.matmul %650, %651, %cst_315 {dimension_numbers = #tpu.dot_dimension_numbers<[1], [0], [0], [1], [0, 0, 1, 1], [], []>} : vector<2x32xbf16>, vector<32x128xbf16>, vector<2x128xf32> -> vector<2x128xf32>
    %653 = arith.addf %648, %652 : vector<2x128xf32>
    %c0_316 = arith.constant 0 : index
    %c0_317 = arith.constant 0 : index
    %654 = vector.load %arg7[%c0_316, %c0_317] : memref<1x128xf32, #tpu.memory_space<vmem>>, vector<1x128xf32>
    %655 = vector.broadcast %654 : vector<1x128xf32> to vector<2x128xf32>
    %656 = arith.addf %653, %655 : vector<2x128xf32>
    %657 = vector.extract_strided_slice %656 {offsets = [0, 0], sizes = [2, 64], strides = [1, 1]} : vector<2x128xf32> to vector<2x64xf32>
    %658 = arith.negf %657 : vector<2x64xf32>
    %659 = math.exp %658 : vector<2x64xf32>
    %cst_318 = arith.constant 1.000000e+00 : f32
    %660 = vector.broadcast %cst_318 : f32 to vector<2x64xf32>
    %661 = arith.addf %660, %659 : vector<2x64xf32>
    %662 = arith.divf %660, %661 : vector<2x64xf32>
    %663 = vector.extract_strided_slice %662 {offsets = [0, 0], sizes = [2, 32], strides = [1, 1]} : vector<2x64xf32> to vector<2x32xf32>
    %664 = vector.extract_strided_slice %662 {offsets = [0, 32], sizes = [2, 32], strides = [1, 1]} : vector<2x64xf32> to vector<2x32xf32>
    %665 = vector.extract_strided_slice %656 {offsets = [0, 64], sizes = [2, 32], strides = [1, 1]} : vector<2x128xf32> to vector<2x32xf32>
    %666 = math.tanh %665 : vector<2x32xf32>
    %667 = vector.extract_strided_slice %656 {offsets = [0, 96], sizes = [2, 32], strides = [1, 1]} : vector<2x128xf32> to vector<2x32xf32>
    %668 = arith.negf %667 : vector<2x32xf32>
    %669 = math.exp %668 : vector<2x32xf32>
    %cst_319 = arith.constant 1.000000e+00 : f32
    %670 = vector.broadcast %cst_319 : f32 to vector<2x32xf32>
    %671 = arith.addf %670, %669 : vector<2x32xf32>
    %672 = arith.divf %670, %671 : vector<2x32xf32>
    %c0_320 = arith.constant 0 : index
    %c0_321 = arith.constant 0 : index
    %673 = vector.load %arg15[%c0_320, %c0_321] : memref<2x32xf32, #tpu.memory_space<vmem>>, vector<2x32xf32>
    %674 = arith.mulf %664, %673 : vector<2x32xf32>
    %675 = arith.mulf %663, %666 : vector<2x32xf32>
    %676 = arith.addf %674, %675 : vector<2x32xf32>
    %677 = math.tanh %676 : vector<2x32xf32>
    %678 = arith.mulf %672, %677 : vector<2x32xf32>
    %c0_322 = arith.constant 0 : index
    %c0_323 = arith.constant 0 : index
    %679 = vector.load %arg15[%c0_322, %c0_323] : memref<2x32xf32, #tpu.memory_space<vmem>>, vector<2x32xf32>
    %680 = vector.shape_cast %642 : vector<2x1xi1> to vector<2x1xi1>
    %681 = vector.broadcast %680 : vector<2x1xi1> to vector<2x32xi1>
    %682 = arith.select %681, %676, %679 : vector<2x32xi1>, vector<2x32xf32>
    %c0_324 = arith.constant 0 : index
    %c0_325 = arith.constant 0 : index
    %683 = vector.load %arg15[%c0_324, %c0_325] : memref<2x32xf32, #tpu.memory_space<vmem>>, vector<2x32xf32>
    tpu.vector_store %arg15[%c0_324, %c0_325], %682 {strides = array<i32>} : memref<2x32xf32, #tpu.memory_space<vmem>>, vector<2x32xf32>,
    %c0_326 = arith.constant 0 : index
    %c0_327 = arith.constant 0 : index
    %684 = vector.load %arg14[%c0_326, %c0_327] : memref<2x32xf32, #tpu.memory_space<vmem>>, vector<2x32xf32>
    %685 = vector.shape_cast %642 : vector<2x1xi1> to vector<2x1xi1>
    %686 = vector.broadcast %685 : vector<2x1xi1> to vector<2x32xi1>
    %687 = arith.select %686, %678, %684 : vector<2x32xi1>, vector<2x32xf32>
    %c0_328 = arith.constant 0 : index
    %c0_329 = arith.constant 0 : index
    %688 = vector.load %arg14[%c0_328, %c0_329] : memref<2x32xf32, #tpu.memory_space<vmem>>, vector<2x32xf32>
    tpu.vector_store %arg14[%c0_328, %c0_329], %687 {strides = array<i32>} : memref<2x32xf32, #tpu.memory_space<vmem>>, vector<2x32xf32>,
    %cst_330 = arith.constant 0.000000e+00 : f32
    %689 = vector.shape_cast %642 : vector<2x1xi1> to vector<2x1xi1>
    %690 = vector.broadcast %689 : vector<2x1xi1> to vector<2x32xi1>
    %691 = vector.broadcast %cst_330 : f32 to vector<2x32xf32>
    %692 = arith.select %690, %678, %691 : vector<2x32xi1>, vector<2x32xf32>
    %693 = arith.index_cast %639 : i32 to index
    %c0_331 = arith.constant 0 : index
    %c0_332 = arith.constant 0 : index
    %694 = vector.load %arg11[%693, %c0_331, %c0_332] : memref<8x2x32xf32, #tpu.memory_space<vmem>>, vector<1x2x32xf32>
    %695 = vector.shape_cast %694 : vector<1x2x32xf32> to vector<2x32xf32>
    %696 = vector.shape_cast %692 : vector<2x32xf32> to vector<1x2x32xf32>
    tpu.vector_store %arg11[%693, %c0_331, %c0_332], %696 {strides = array<i32>} : memref<8x2x32xf32, #tpu.memory_space<vmem>>, vector<1x2x32xf32>,
    %c6_i32 = arith.constant 6 : i32
    %697 = arith.addi %4, %c6_i32 : i32
    %698 = vector.broadcast %697 : i32 to vector<2x1xi32>
    %699 = arith.cmpi slt, %698, %3 : vector<2x1xi32>
    %700 = arith.index_cast %c6_i32 : i32 to index
    %c0_333 = arith.constant 0 : index
    %c0_334 = arith.constant 0 : index
    %701 = vector.load %arg1[%700, %c0_333, %c0_334] : memref<8x2x64xf32, #tpu.memory_space<vmem>>, vector<1x2x64xf32>
    %702 = vector.shape_cast %701 : vector<1x2x64xf32> to vector<2x64xf32>
    %703 = arith.truncf %702 : vector<2x64xf32> to vector<2x64xbf16>
    %c0_335 = arith.constant 0 : index
    %c0_336 = arith.constant 0 : index
    %704 = vector.load %arg4[%c0_335, %c0_336] : memref<64x128xbf16, #tpu.memory_space<vmem>>, vector<64x128xbf16>
    %cst_337 = arith.constant dense<0.000000e+00> : vector<2x128xf32>
    %705 = tpu.matmul %703, %704, %cst_337 {dimension_numbers = #tpu.dot_dimension_numbers<[1], [0], [0], [1], [0, 0, 1, 1], [], []>} : vector<2x64xbf16>, vector<64x128xbf16>, vector<2x128xf32> -> vector<2x128xf32>
    %c0_338 = arith.constant 0 : index
    %c0_339 = arith.constant 0 : index
    %706 = vector.load %arg12[%c0_338, %c0_339] : memref<2x32xf32, #tpu.memory_space<vmem>>, vector<2x32xf32>
    %707 = arith.truncf %706 : vector<2x32xf32> to vector<2x32xbf16>
    %c0_340 = arith.constant 0 : index
    %c0_341 = arith.constant 0 : index
    %708 = vector.load %arg8[%c0_340, %c0_341] : memref<32x128xbf16, #tpu.memory_space<vmem>>, vector<32x128xbf16>
    %cst_342 = arith.constant dense<0.000000e+00> : vector<2x128xf32>
    %709 = tpu.matmul %707, %708, %cst_342 {dimension_numbers = #tpu.dot_dimension_numbers<[1], [0], [0], [1], [0, 0, 1, 1], [], []>} : vector<2x32xbf16>, vector<32x128xbf16>, vector<2x128xf32> -> vector<2x128xf32>
    %710 = arith.addf %705, %709 : vector<2x128xf32>
    %c0_343 = arith.constant 0 : index
    %c0_344 = arith.constant 0 : index
    %711 = vector.load %arg6[%c0_343, %c0_344] : memref<1x128xf32, #tpu.memory_space<vmem>>, vector<1x128xf32>
    %712 = vector.broadcast %711 : vector<1x128xf32> to vector<2x128xf32>
    %713 = arith.addf %710, %712 : vector<2x128xf32>
    %714 = vector.extract_strided_slice %713 {offsets = [0, 0], sizes = [2, 64], strides = [1, 1]} : vector<2x128xf32> to vector<2x64xf32>
    %715 = arith.negf %714 : vector<2x64xf32>
    %716 = math.exp %715 : vector<2x64xf32>
    %cst_345 = arith.constant 1.000000e+00 : f32
    %717 = vector.broadcast %cst_345 : f32 to vector<2x64xf32>
    %718 = arith.addf %717, %716 : vector<2x64xf32>
    %719 = arith.divf %717, %718 : vector<2x64xf32>
    %720 = vector.extract_strided_slice %719 {offsets = [0, 0], sizes = [2, 32], strides = [1, 1]} : vector<2x64xf32> to vector<2x32xf32>
    %721 = vector.extract_strided_slice %719 {offsets = [0, 32], sizes = [2, 32], strides = [1, 1]} : vector<2x64xf32> to vector<2x32xf32>
    %722 = vector.extract_strided_slice %713 {offsets = [0, 64], sizes = [2, 32], strides = [1, 1]} : vector<2x128xf32> to vector<2x32xf32>
    %723 = math.tanh %722 : vector<2x32xf32>
    %724 = vector.extract_strided_slice %713 {offsets = [0, 96], sizes = [2, 32], strides = [1, 1]} : vector<2x128xf32> to vector<2x32xf32>
    %725 = arith.negf %724 : vector<2x32xf32>
    %726 = math.exp %725 : vector<2x32xf32>
    %cst_346 = arith.constant 1.000000e+00 : f32
    %727 = vector.broadcast %cst_346 : f32 to vector<2x32xf32>
    %728 = arith.addf %727, %726 : vector<2x32xf32>
    %729 = arith.divf %727, %728 : vector<2x32xf32>
    %c0_347 = arith.constant 0 : index
    %c0_348 = arith.constant 0 : index
    %730 = vector.load %arg13[%c0_347, %c0_348] : memref<2x32xf32, #tpu.memory_space<vmem>>, vector<2x32xf32>
    %731 = arith.mulf %721, %730 : vector<2x32xf32>
    %732 = arith.mulf %720, %723 : vector<2x32xf32>
    %733 = arith.addf %731, %732 : vector<2x32xf32>
    %734 = math.tanh %733 : vector<2x32xf32>
    %735 = arith.mulf %729, %734 : vector<2x32xf32>
    %c0_349 = arith.constant 0 : index
    %c0_350 = arith.constant 0 : index
    %736 = vector.load %arg13[%c0_349, %c0_350] : memref<2x32xf32, #tpu.memory_space<vmem>>, vector<2x32xf32>
    %737 = vector.shape_cast %699 : vector<2x1xi1> to vector<2x1xi1>
    %738 = vector.broadcast %737 : vector<2x1xi1> to vector<2x32xi1>
    %739 = arith.select %738, %733, %736 : vector<2x32xi1>, vector<2x32xf32>
    %c0_351 = arith.constant 0 : index
    %c0_352 = arith.constant 0 : index
    %740 = vector.load %arg13[%c0_351, %c0_352] : memref<2x32xf32, #tpu.memory_space<vmem>>, vector<2x32xf32>
    tpu.vector_store %arg13[%c0_351, %c0_352], %739 {strides = array<i32>} : memref<2x32xf32, #tpu.memory_space<vmem>>, vector<2x32xf32>,
    %c0_353 = arith.constant 0 : index
    %c0_354 = arith.constant 0 : index
    %741 = vector.load %arg12[%c0_353, %c0_354] : memref<2x32xf32, #tpu.memory_space<vmem>>, vector<2x32xf32>
    %742 = vector.shape_cast %699 : vector<2x1xi1> to vector<2x1xi1>
    %743 = vector.broadcast %742 : vector<2x1xi1> to vector<2x32xi1>
    %744 = arith.select %743, %735, %741 : vector<2x32xi1>, vector<2x32xf32>
    %c0_355 = arith.constant 0 : index
    %c0_356 = arith.constant 0 : index
    %745 = vector.load %arg12[%c0_355, %c0_356] : memref<2x32xf32, #tpu.memory_space<vmem>>, vector<2x32xf32>
    tpu.vector_store %arg12[%c0_355, %c0_356], %744 {strides = array<i32>} : memref<2x32xf32, #tpu.memory_space<vmem>>, vector<2x32xf32>,
    %cst_357 = arith.constant 0.000000e+00 : f32
    %746 = vector.shape_cast %699 : vector<2x1xi1> to vector<2x1xi1>
    %747 = vector.broadcast %746 : vector<2x1xi1> to vector<2x32xi1>
    %748 = vector.broadcast %cst_357 : f32 to vector<2x32xf32>
    %749 = arith.select %747, %735, %748 : vector<2x32xi1>, vector<2x32xf32>
    %750 = arith.index_cast %c6_i32 : i32 to index
    %c0_358 = arith.constant 0 : index
    %c0_359 = arith.constant 0 : index
    %751 = vector.load %arg10[%750, %c0_358, %c0_359] : memref<8x2x32xf32, #tpu.memory_space<vmem>>, vector<1x2x32xf32>
    %752 = vector.shape_cast %751 : vector<1x2x32xf32> to vector<2x32xf32>
    %753 = vector.shape_cast %749 : vector<2x32xf32> to vector<1x2x32xf32>
    tpu.vector_store %arg10[%750, %c0_358, %c0_359], %753 {strides = array<i32>} : memref<8x2x32xf32, #tpu.memory_space<vmem>>, vector<1x2x32xf32>,
    %c7_i32_360 = arith.constant 7 : i32
    %754 = arith.subi %c7_i32_360, %c6_i32 : i32
    %755 = arith.addi %6, %754 : i32
    %756 = vector.broadcast %755 : i32 to vector<2x1xi32>
    %757 = arith.cmpi slt, %756, %3 : vector<2x1xi32>
    %758 = arith.index_cast %754 : i32 to index
    %c0_361 = arith.constant 0 : index
    %c0_362 = arith.constant 0 : index
    %759 = vector.load %arg2[%758, %c0_361, %c0_362] : memref<8x2x64xf32, #tpu.memory_space<vmem>>, vector<1x2x64xf32>
    %760 = vector.shape_cast %759 : vector<1x2x64xf32> to vector<2x64xf32>
    %761 = arith.truncf %760 : vector<2x64xf32> to vector<2x64xbf16>
    %c0_363 = arith.constant 0 : index
    %c0_364 = arith.constant 0 : index
    %762 = vector.load %arg5[%c0_363, %c0_364] : memref<64x128xbf16, #tpu.memory_space<vmem>>, vector<64x128xbf16>
    %cst_365 = arith.constant dense<0.000000e+00> : vector<2x128xf32>
    %763 = tpu.matmul %761, %762, %cst_365 {dimension_numbers = #tpu.dot_dimension_numbers<[1], [0], [0], [1], [0, 0, 1, 1], [], []>} : vector<2x64xbf16>, vector<64x128xbf16>, vector<2x128xf32> -> vector<2x128xf32>
    %c0_366 = arith.constant 0 : index
    %c0_367 = arith.constant 0 : index
    %764 = vector.load %arg14[%c0_366, %c0_367] : memref<2x32xf32, #tpu.memory_space<vmem>>, vector<2x32xf32>
    %765 = arith.truncf %764 : vector<2x32xf32> to vector<2x32xbf16>
    %c0_368 = arith.constant 0 : index
    %c0_369 = arith.constant 0 : index
    %766 = vector.load %arg9[%c0_368, %c0_369] : memref<32x128xbf16, #tpu.memory_space<vmem>>, vector<32x128xbf16>
    %cst_370 = arith.constant dense<0.000000e+00> : vector<2x128xf32>
    %767 = tpu.matmul %765, %766, %cst_370 {dimension_numbers = #tpu.dot_dimension_numbers<[1], [0], [0], [1], [0, 0, 1, 1], [], []>} : vector<2x32xbf16>, vector<32x128xbf16>, vector<2x128xf32> -> vector<2x128xf32>
    %768 = arith.addf %763, %767 : vector<2x128xf32>
    %c0_371 = arith.constant 0 : index
    %c0_372 = arith.constant 0 : index
    %769 = vector.load %arg7[%c0_371, %c0_372] : memref<1x128xf32, #tpu.memory_space<vmem>>, vector<1x128xf32>
    %770 = vector.broadcast %769 : vector<1x128xf32> to vector<2x128xf32>
    %771 = arith.addf %768, %770 : vector<2x128xf32>
    %772 = vector.extract_strided_slice %771 {offsets = [0, 0], sizes = [2, 64], strides = [1, 1]} : vector<2x128xf32> to vector<2x64xf32>
    %773 = arith.negf %772 : vector<2x64xf32>
    %774 = math.exp %773 : vector<2x64xf32>
    %cst_373 = arith.constant 1.000000e+00 : f32
    %775 = vector.broadcast %cst_373 : f32 to vector<2x64xf32>
    %776 = arith.addf %775, %774 : vector<2x64xf32>
    %777 = arith.divf %775, %776 : vector<2x64xf32>
    %778 = vector.extract_strided_slice %777 {offsets = [0, 0], sizes = [2, 32], strides = [1, 1]} : vector<2x64xf32> to vector<2x32xf32>
    %779 = vector.extract_strided_slice %777 {offsets = [0, 32], sizes = [2, 32], strides = [1, 1]} : vector<2x64xf32> to vector<2x32xf32>
    %780 = vector.extract_strided_slice %771 {offsets = [0, 64], sizes = [2, 32], strides = [1, 1]} : vector<2x128xf32> to vector<2x32xf32>
    %781 = math.tanh %780 : vector<2x32xf32>
    %782 = vector.extract_strided_slice %771 {offsets = [0, 96], sizes = [2, 32], strides = [1, 1]} : vector<2x128xf32> to vector<2x32xf32>
    %783 = arith.negf %782 : vector<2x32xf32>
    %784 = math.exp %783 : vector<2x32xf32>
    %cst_374 = arith.constant 1.000000e+00 : f32
    %785 = vector.broadcast %cst_374 : f32 to vector<2x32xf32>
    %786 = arith.addf %785, %784 : vector<2x32xf32>
    %787 = arith.divf %785, %786 : vector<2x32xf32>
    %c0_375 = arith.constant 0 : index
    %c0_376 = arith.constant 0 : index
    %788 = vector.load %arg15[%c0_375, %c0_376] : memref<2x32xf32, #tpu.memory_space<vmem>>, vector<2x32xf32>
    %789 = arith.mulf %779, %788 : vector<2x32xf32>
    %790 = arith.mulf %778, %781 : vector<2x32xf32>
    %791 = arith.addf %789, %790 : vector<2x32xf32>
    %792 = math.tanh %791 : vector<2x32xf32>
    %793 = arith.mulf %787, %792 : vector<2x32xf32>
    %c0_377 = arith.constant 0 : index
    %c0_378 = arith.constant 0 : index
    %794 = vector.load %arg15[%c0_377, %c0_378] : memref<2x32xf32, #tpu.memory_space<vmem>>, vector<2x32xf32>
    %795 = vector.shape_cast %757 : vector<2x1xi1> to vector<2x1xi1>
    %796 = vector.broadcast %795 : vector<2x1xi1> to vector<2x32xi1>
    %797 = arith.select %796, %791, %794 : vector<2x32xi1>, vector<2x32xf32>
    %c0_379 = arith.constant 0 : index
    %c0_380 = arith.constant 0 : index
    %798 = vector.load %arg15[%c0_379, %c0_380] : memref<2x32xf32, #tpu.memory_space<vmem>>, vector<2x32xf32>
    tpu.vector_store %arg15[%c0_379, %c0_380], %797 {strides = array<i32>} : memref<2x32xf32, #tpu.memory_space<vmem>>, vector<2x32xf32>,
    %c0_381 = arith.constant 0 : index
    %c0_382 = arith.constant 0 : index
    %799 = vector.load %arg14[%c0_381, %c0_382] : memref<2x32xf32, #tpu.memory_space<vmem>>, vector<2x32xf32>
    %800 = vector.shape_cast %757 : vector<2x1xi1> to vector<2x1xi1>
    %801 = vector.broadcast %800 : vector<2x1xi1> to vector<2x32xi1>
    %802 = arith.select %801, %793, %799 : vector<2x32xi1>, vector<2x32xf32>
    %c0_383 = arith.constant 0 : index
    %c0_384 = arith.constant 0 : index
    %803 = vector.load %arg14[%c0_383, %c0_384] : memref<2x32xf32, #tpu.memory_space<vmem>>, vector<2x32xf32>
    tpu.vector_store %arg14[%c0_383, %c0_384], %802 {strides = array<i32>} : memref<2x32xf32, #tpu.memory_space<vmem>>, vector<2x32xf32>,
    %cst_385 = arith.constant 0.000000e+00 : f32
    %804 = vector.shape_cast %757 : vector<2x1xi1> to vector<2x1xi1>
    %805 = vector.broadcast %804 : vector<2x1xi1> to vector<2x32xi1>
    %806 = vector.broadcast %cst_385 : f32 to vector<2x32xf32>
    %807 = arith.select %805, %793, %806 : vector<2x32xi1>, vector<2x32xf32>
    %808 = arith.index_cast %754 : i32 to index
    %c0_386 = arith.constant 0 : index
    %c0_387 = arith.constant 0 : index
    %809 = vector.load %arg11[%808, %c0_386, %c0_387] : memref<8x2x32xf32, #tpu.memory_space<vmem>>, vector<1x2x32xf32>
    %810 = vector.shape_cast %809 : vector<1x2x32xf32> to vector<2x32xf32>
    %811 = vector.shape_cast %807 : vector<2x32xf32> to vector<1x2x32xf32>
    tpu.vector_store %arg11[%808, %c0_386, %c0_387], %811 {strides = array<i32>} : memref<8x2x32xf32, #tpu.memory_space<vmem>>, vector<1x2x32xf32>,
    %c7_i32_388 = arith.constant 7 : i32
    %812 = arith.addi %4, %c7_i32_388 : i32
    %813 = vector.broadcast %812 : i32 to vector<2x1xi32>
    %814 = arith.cmpi slt, %813, %3 : vector<2x1xi32>
    %815 = arith.index_cast %c7_i32_388 : i32 to index
    %c0_389 = arith.constant 0 : index
    %c0_390 = arith.constant 0 : index
    %816 = vector.load %arg1[%815, %c0_389, %c0_390] : memref<8x2x64xf32, #tpu.memory_space<vmem>>, vector<1x2x64xf32>
    %817 = vector.shape_cast %816 : vector<1x2x64xf32> to vector<2x64xf32>
    %818 = arith.truncf %817 : vector<2x64xf32> to vector<2x64xbf16>
    %c0_391 = arith.constant 0 : index
    %c0_392 = arith.constant 0 : index
    %819 = vector.load %arg4[%c0_391, %c0_392] : memref<64x128xbf16, #tpu.memory_space<vmem>>, vector<64x128xbf16>
    %cst_393 = arith.constant dense<0.000000e+00> : vector<2x128xf32>
    %820 = tpu.matmul %818, %819, %cst_393 {dimension_numbers = #tpu.dot_dimension_numbers<[1], [0], [0], [1], [0, 0, 1, 1], [], []>} : vector<2x64xbf16>, vector<64x128xbf16>, vector<2x128xf32> -> vector<2x128xf32>
    %c0_394 = arith.constant 0 : index
    %c0_395 = arith.constant 0 : index
    %821 = vector.load %arg12[%c0_394, %c0_395] : memref<2x32xf32, #tpu.memory_space<vmem>>, vector<2x32xf32>
    %822 = arith.truncf %821 : vector<2x32xf32> to vector<2x32xbf16>
    %c0_396 = arith.constant 0 : index
    %c0_397 = arith.constant 0 : index
    %823 = vector.load %arg8[%c0_396, %c0_397] : memref<32x128xbf16, #tpu.memory_space<vmem>>, vector<32x128xbf16>
    %cst_398 = arith.constant dense<0.000000e+00> : vector<2x128xf32>
    %824 = tpu.matmul %822, %823, %cst_398 {dimension_numbers = #tpu.dot_dimension_numbers<[1], [0], [0], [1], [0, 0, 1, 1], [], []>} : vector<2x32xbf16>, vector<32x128xbf16>, vector<2x128xf32> -> vector<2x128xf32>
    %825 = arith.addf %820, %824 : vector<2x128xf32>
    %c0_399 = arith.constant 0 : index
    %c0_400 = arith.constant 0 : index
    %826 = vector.load %arg6[%c0_399, %c0_400] : memref<1x128xf32, #tpu.memory_space<vmem>>, vector<1x128xf32>
    %827 = vector.broadcast %826 : vector<1x128xf32> to vector<2x128xf32>
    %828 = arith.addf %825, %827 : vector<2x128xf32>
    %829 = vector.extract_strided_slice %828 {offsets = [0, 0], sizes = [2, 64], strides = [1, 1]} : vector<2x128xf32> to vector<2x64xf32>
    %830 = arith.negf %829 : vector<2x64xf32>
    %831 = math.exp %830 : vector<2x64xf32>
    %cst_401 = arith.constant 1.000000e+00 : f32
    %832 = vector.broadcast %cst_401 : f32 to vector<2x64xf32>
    %833 = arith.addf %832, %831 : vector<2x64xf32>
    %834 = arith.divf %832, %833 : vector<2x64xf32>
    %835 = vector.extract_strided_slice %834 {offsets = [0, 0], sizes = [2, 32], strides = [1, 1]} : vector<2x64xf32> to vector<2x32xf32>
    %836 = vector.extract_strided_slice %834 {offsets = [0, 32], sizes = [2, 32], strides = [1, 1]} : vector<2x64xf32> to vector<2x32xf32>
    %837 = vector.extract_strided_slice %828 {offsets = [0, 64], sizes = [2, 32], strides = [1, 1]} : vector<2x128xf32> to vector<2x32xf32>
    %838 = math.tanh %837 : vector<2x32xf32>
    %839 = vector.extract_strided_slice %828 {offsets = [0, 96], sizes = [2, 32], strides = [1, 1]} : vector<2x128xf32> to vector<2x32xf32>
    %840 = arith.negf %839 : vector<2x32xf32>
    %841 = math.exp %840 : vector<2x32xf32>
    %cst_402 = arith.constant 1.000000e+00 : f32
    %842 = vector.broadcast %cst_402 : f32 to vector<2x32xf32>
    %843 = arith.addf %842, %841 : vector<2x32xf32>
    %844 = arith.divf %842, %843 : vector<2x32xf32>
    %c0_403 = arith.constant 0 : index
    %c0_404 = arith.constant 0 : index
    %845 = vector.load %arg13[%c0_403, %c0_404] : memref<2x32xf32, #tpu.memory_space<vmem>>, vector<2x32xf32>
    %846 = arith.mulf %836, %845 : vector<2x32xf32>
    %847 = arith.mulf %835, %838 : vector<2x32xf32>
    %848 = arith.addf %846, %847 : vector<2x32xf32>
    %849 = math.tanh %848 : vector<2x32xf32>
    %850 = arith.mulf %844, %849 : vector<2x32xf32>
    %c0_405 = arith.constant 0 : index
    %c0_406 = arith.constant 0 : index
    %851 = vector.load %arg13[%c0_405, %c0_406] : memref<2x32xf32, #tpu.memory_space<vmem>>, vector<2x32xf32>
    %852 = vector.shape_cast %814 : vector<2x1xi1> to vector<2x1xi1>
    %853 = vector.broadcast %852 : vector<2x1xi1> to vector<2x32xi1>
    %854 = arith.select %853, %848, %851 : vector<2x32xi1>, vector<2x32xf32>
    %c0_407 = arith.constant 0 : index
    %c0_408 = arith.constant 0 : index
    %855 = vector.load %arg13[%c0_407, %c0_408] : memref<2x32xf32, #tpu.memory_space<vmem>>, vector<2x32xf32>
    tpu.vector_store %arg13[%c0_407, %c0_408], %854 {strides = array<i32>} : memref<2x32xf32, #tpu.memory_space<vmem>>, vector<2x32xf32>,
    %c0_409 = arith.constant 0 : index
    %c0_410 = arith.constant 0 : index
    %856 = vector.load %arg12[%c0_409, %c0_410] : memref<2x32xf32, #tpu.memory_space<vmem>>, vector<2x32xf32>
    %857 = vector.shape_cast %814 : vector<2x1xi1> to vector<2x1xi1>
    %858 = vector.broadcast %857 : vector<2x1xi1> to vector<2x32xi1>
    %859 = arith.select %858, %850, %856 : vector<2x32xi1>, vector<2x32xf32>
    %c0_411 = arith.constant 0 : index
    %c0_412 = arith.constant 0 : index
    %860 = vector.load %arg12[%c0_411, %c0_412] : memref<2x32xf32, #tpu.memory_space<vmem>>, vector<2x32xf32>
    tpu.vector_store %arg12[%c0_411, %c0_412], %859 {strides = array<i32>} : memref<2x32xf32, #tpu.memory_space<vmem>>, vector<2x32xf32>,
    %cst_413 = arith.constant 0.000000e+00 : f32
    %861 = vector.shape_cast %814 : vector<2x1xi1> to vector<2x1xi1>
    %862 = vector.broadcast %861 : vector<2x1xi1> to vector<2x32xi1>
    %863 = vector.broadcast %cst_413 : f32 to vector<2x32xf32>
    %864 = arith.select %862, %850, %863 : vector<2x32xi1>, vector<2x32xf32>
    %865 = arith.index_cast %c7_i32_388 : i32 to index
    %c0_414 = arith.constant 0 : index
    %c0_415 = arith.constant 0 : index
    %866 = vector.load %arg10[%865, %c0_414, %c0_415] : memref<8x2x32xf32, #tpu.memory_space<vmem>>, vector<1x2x32xf32>
    %867 = vector.shape_cast %866 : vector<1x2x32xf32> to vector<2x32xf32>
    %868 = vector.shape_cast %864 : vector<2x32xf32> to vector<1x2x32xf32>
    tpu.vector_store %arg10[%865, %c0_414, %c0_415], %868 {strides = array<i32>} : memref<8x2x32xf32, #tpu.memory_space<vmem>>, vector<1x2x32xf32>,
    %c7_i32_416 = arith.constant 7 : i32
    %869 = arith.subi %c7_i32_416, %c7_i32_388 : i32
    %870 = arith.addi %6, %869 : i32
    %871 = vector.broadcast %870 : i32 to vector<2x1xi32>
    %872 = arith.cmpi slt, %871, %3 : vector<2x1xi32>
    %873 = arith.index_cast %869 : i32 to index
    %c0_417 = arith.constant 0 : index
    %c0_418 = arith.constant 0 : index
    %874 = vector.load %arg2[%873, %c0_417, %c0_418] : memref<8x2x64xf32, #tpu.memory_space<vmem>>, vector<1x2x64xf32>
    %875 = vector.shape_cast %874 : vector<1x2x64xf32> to vector<2x64xf32>
    %876 = arith.truncf %875 : vector<2x64xf32> to vector<2x64xbf16>
    %c0_419 = arith.constant 0 : index
    %c0_420 = arith.constant 0 : index
    %877 = vector.load %arg5[%c0_419, %c0_420] : memref<64x128xbf16, #tpu.memory_space<vmem>>, vector<64x128xbf16>
    %cst_421 = arith.constant dense<0.000000e+00> : vector<2x128xf32>
    %878 = tpu.matmul %876, %877, %cst_421 {dimension_numbers = #tpu.dot_dimension_numbers<[1], [0], [0], [1], [0, 0, 1, 1], [], []>} : vector<2x64xbf16>, vector<64x128xbf16>, vector<2x128xf32> -> vector<2x128xf32>
    %c0_422 = arith.constant 0 : index
    %c0_423 = arith.constant 0 : index
    %879 = vector.load %arg14[%c0_422, %c0_423] : memref<2x32xf32, #tpu.memory_space<vmem>>, vector<2x32xf32>
    %880 = arith.truncf %879 : vector<2x32xf32> to vector<2x32xbf16>
    %c0_424 = arith.constant 0 : index
    %c0_425 = arith.constant 0 : index
    %881 = vector.load %arg9[%c0_424, %c0_425] : memref<32x128xbf16, #tpu.memory_space<vmem>>, vector<32x128xbf16>
    %cst_426 = arith.constant dense<0.000000e+00> : vector<2x128xf32>
    %882 = tpu.matmul %880, %881, %cst_426 {dimension_numbers = #tpu.dot_dimension_numbers<[1], [0], [0], [1], [0, 0, 1, 1], [], []>} : vector<2x32xbf16>, vector<32x128xbf16>, vector<2x128xf32> -> vector<2x128xf32>
    %883 = arith.addf %878, %882 : vector<2x128xf32>
    %c0_427 = arith.constant 0 : index
    %c0_428 = arith.constant 0 : index
    %884 = vector.load %arg7[%c0_427, %c0_428] : memref<1x128xf32, #tpu.memory_space<vmem>>, vector<1x128xf32>
    %885 = vector.broadcast %884 : vector<1x128xf32> to vector<2x128xf32>
    %886 = arith.addf %883, %885 : vector<2x128xf32>
    %887 = vector.extract_strided_slice %886 {offsets = [0, 0], sizes = [2, 64], strides = [1, 1]} : vector<2x128xf32> to vector<2x64xf32>
    %888 = arith.negf %887 : vector<2x64xf32>
    %889 = math.exp %888 : vector<2x64xf32>
    %cst_429 = arith.constant 1.000000e+00 : f32
    %890 = vector.broadcast %cst_429 : f32 to vector<2x64xf32>
    %891 = arith.addf %890, %889 : vector<2x64xf32>
    %892 = arith.divf %890, %891 : vector<2x64xf32>
    %893 = vector.extract_strided_slice %892 {offsets = [0, 0], sizes = [2, 32], strides = [1, 1]} : vector<2x64xf32> to vector<2x32xf32>
    %894 = vector.extract_strided_slice %892 {offsets = [0, 32], sizes = [2, 32], strides = [1, 1]} : vector<2x64xf32> to vector<2x32xf32>
    %895 = vector.extract_strided_slice %886 {offsets = [0, 64], sizes = [2, 32], strides = [1, 1]} : vector<2x128xf32> to vector<2x32xf32>
    %896 = math.tanh %895 : vector<2x32xf32>
    %897 = vector.extract_strided_slice %886 {offsets = [0, 96], sizes = [2, 32], strides = [1, 1]} : vector<2x128xf32> to vector<2x32xf32>
    %898 = arith.negf %897 : vector<2x32xf32>
    %899 = math.exp %898 : vector<2x32xf32>
    %cst_430 = arith.constant 1.000000e+00 : f32
    %900 = vector.broadcast %cst_430 : f32 to vector<2x32xf32>
    %901 = arith.addf %900, %899 : vector<2x32xf32>
    %902 = arith.divf %900, %901 : vector<2x32xf32>
    %c0_431 = arith.constant 0 : index
    %c0_432 = arith.constant 0 : index
    %903 = vector.load %arg15[%c0_431, %c0_432] : memref<2x32xf32, #tpu.memory_space<vmem>>, vector<2x32xf32>
    %904 = arith.mulf %894, %903 : vector<2x32xf32>
    %905 = arith.mulf %893, %896 : vector<2x32xf32>
    %906 = arith.addf %904, %905 : vector<2x32xf32>
    %907 = math.tanh %906 : vector<2x32xf32>
    %908 = arith.mulf %902, %907 : vector<2x32xf32>
    %c0_433 = arith.constant 0 : index
    %c0_434 = arith.constant 0 : index
    %909 = vector.load %arg15[%c0_433, %c0_434] : memref<2x32xf32, #tpu.memory_space<vmem>>, vector<2x32xf32>
    %910 = vector.shape_cast %872 : vector<2x1xi1> to vector<2x1xi1>
    %911 = vector.broadcast %910 : vector<2x1xi1> to vector<2x32xi1>
    %912 = arith.select %911, %906, %909 : vector<2x32xi1>, vector<2x32xf32>
    %c0_435 = arith.constant 0 : index
    %c0_436 = arith.constant 0 : index
    %913 = vector.load %arg15[%c0_435, %c0_436] : memref<2x32xf32, #tpu.memory_space<vmem>>, vector<2x32xf32>
    tpu.vector_store %arg15[%c0_435, %c0_436], %912 {strides = array<i32>} : memref<2x32xf32, #tpu.memory_space<vmem>>, vector<2x32xf32>,
    %c0_437 = arith.constant 0 : index
    %c0_438 = arith.constant 0 : index
    %914 = vector.load %arg14[%c0_437, %c0_438] : memref<2x32xf32, #tpu.memory_space<vmem>>, vector<2x32xf32>
    %915 = vector.shape_cast %872 : vector<2x1xi1> to vector<2x1xi1>
    %916 = vector.broadcast %915 : vector<2x1xi1> to vector<2x32xi1>
    %917 = arith.select %916, %908, %914 : vector<2x32xi1>, vector<2x32xf32>
    %c0_439 = arith.constant 0 : index
    %c0_440 = arith.constant 0 : index
    %918 = vector.load %arg14[%c0_439, %c0_440] : memref<2x32xf32, #tpu.memory_space<vmem>>, vector<2x32xf32>
    tpu.vector_store %arg14[%c0_439, %c0_440], %917 {strides = array<i32>} : memref<2x32xf32, #tpu.memory_space<vmem>>, vector<2x32xf32>,
    %cst_441 = arith.constant 0.000000e+00 : f32
    %919 = vector.shape_cast %872 : vector<2x1xi1> to vector<2x1xi1>
    %920 = vector.broadcast %919 : vector<2x1xi1> to vector<2x32xi1>
    %921 = vector.broadcast %cst_441 : f32 to vector<2x32xf32>
    %922 = arith.select %920, %908, %921 : vector<2x32xi1>, vector<2x32xf32>
    %923 = arith.index_cast %869 : i32 to index
    %c0_442 = arith.constant 0 : index
    %c0_443 = arith.constant 0 : index
    %924 = vector.load %arg11[%923, %c0_442, %c0_443] : memref<8x2x32xf32, #tpu.memory_space<vmem>>, vector<1x2x32xf32>
    %925 = vector.shape_cast %924 : vector<1x2x32xf32> to vector<2x32xf32>
    %926 = vector.shape_cast %922 : vector<2x32xf32> to vector<1x2x32xf32>
    tpu.vector_store %arg11[%923, %c0_442, %c0_443], %926 {strides = array<i32>} : memref<8x2x32xf32, #tpu.memory_space<vmem>>, vector<1x2x32xf32>,
    %c8_i32_444 = arith.constant 8 : i32
    return
  }
  func.func @transform_0(%arg0: i32) -> (i32, i32, i32) {
    %c0_i32 = arith.constant 0 : i32
    %c0_i32_0 = arith.constant 0 : i32
    %c0_i32_1 = arith.constant 0 : i32
    return %arg0, %c0_i32, %c0_i32_0 : i32, i32, i32
  }
  func.func @transform_1(%arg0: i32) -> (i32, i32, i32) {
    %c0_i32 = arith.constant 0 : i32
    %0 = arith.subi %c0_i32, %arg0 : i32
    %c0_i32_0 = arith.constant 0 : i32
    %c0_i32_1 = arith.constant 0 : i32
    %c0_i32_2 = arith.constant 0 : i32
    return %0, %c0_i32_0, %c0_i32_1 : i32, i32, i32
  }
  func.func @transform_2(%arg0: i32) -> (i32, i32) {
    %c0_i32 = arith.constant 0 : i32
    %c0_i32_0 = arith.constant 0 : i32
    %c0_i32_1 = arith.constant 0 : i32
    return %c0_i32, %c0_i32_0 : i32, i32
  }
  func.func @transform_3(%arg0: i32) -> (i32, i32) {
    %c0_i32 = arith.constant 0 : i32
    %c0_i32_0 = arith.constant 0 : i32
    %c0_i32_1 = arith.constant 0 : i32
    return %c0_i32, %c0_i32_0 : i32, i32
  }
  func.func @transform_4(%arg0: i32) -> (i32, i32) {
    %c0_i32 = arith.constant 0 : i32
    %c0_i32_0 = arith.constant 0 : i32
    %c0_i32_1 = arith.constant 0 : i32
    return %c0_i32, %c0_i32_0 : i32, i32
  }
  func.func @transform_5(%arg0: i32) -> (i32, i32) {
    %c0_i32 = arith.constant 0 : i32
    %c0_i32_0 = arith.constant 0 : i32
    %c0_i32_1 = arith.constant 0 : i32
    return %c0_i32, %c0_i32_0 : i32, i32
  }
  func.func @transform_6(%arg0: i32) -> (i32, i32) {
    %c0_i32 = arith.constant 0 : i32
    %c0_i32_0 = arith.constant 0 : i32
    %c0_i32_1 = arith.constant 0 : i32
    return %c0_i32, %c0_i32_0 : i32, i32
  }
  func.func @transform_7(%arg0: i32) -> (i32, i32) {
    %c0_i32 = arith.constant 0 : i32
    %c0_i32_0 = arith.constant 0 : i32
    %c0_i32_1 = arith.constant 0 : i32
    return %c0_i32, %c0_i32_0 : i32, i32
  }
  func.func @transform_8(%arg0: i32) -> (i32, i32) {
    %c0_i32 = arith.constant 0 : i32
    %c0_i32_0 = arith.constant 0 : i32
    %c0_i32_1 = arith.constant 0 : i32
    return %c0_i32, %c0_i32_0 : i32, i32
  }
  func.func @transform_9(%arg0: i32) -> (i32, i32, i32) {
    %c0_i32 = arith.constant 0 : i32
    %c0_i32_0 = arith.constant 0 : i32
    %c0_i32_1 = arith.constant 0 : i32
    return %arg0, %c0_i32, %c0_i32_0 : i32, i32, i32
  }
  func.func @transform_10(%arg0: i32) -> (i32, i32, i32) {
    %c0_i32 = arith.constant 0 : i32
    %0 = arith.subi %c0_i32, %arg0 : i32
    %c0_i32_0 = arith.constant 0 : i32
    %c0_i32_1 = arith.constant 0 : i32
    %c0_i32_2 = arith.constant 0 : i32
    return %0, %c0_i32_0, %c0_i32_1 : i32, i32, i32
  }
}

</mosaic_0001>

<llo_original>
// kernel: bilstm_cls_forward.5
$region0: #{bilstm_cls_forward.5}
  #allocation0 [shape = 'u32[]', space=smem, size = 0x4, offset = 0x4, fixed_abs, tag = 'smem constant byte address 0x4 - core index']
  #allocation1 [shape = 'u32[144,128]{1,0:T(1,128)}', space=vmem, size = 0x12000, scoped, tag = 'internal scratch']
  #allocation2 [shape = 'f32[1,1]{1,0:T(1,128)S(1)}', space=vmem, size = 0x200, scoped, tag = 'scoped memory for bilstm_cls_forward.5']
  %s0 = inlined_call_operand.vmem [shape: f32[8,2,32], index: 0, kind: input, shape index: {}]
  %s1 = inlined_call_operand.vmem [shape: f32[8,2,32], index: 1, kind: input, shape index: {}]
  %s2 = inlined_call_operand.vmem [shape: s32[2,1], index: 2, kind: input, shape index: {}]
  %s3 = inlined_call_operand.vmem [shape: f32[1,32], index: 3, kind: input, shape index: {}]
  %s4 = inlined_call_operand.<no memory space> [shape: f32[1,1], index: 4, kind: input, shape index: {}]
  %s5 = inlined_call_operand.vmem [shape: f32[32,3], index: 5, kind: input, shape index: {}]
  %s6 = inlined_call_operand.vmem [shape: f32[1,3], index: 6, kind: input, shape index: {}]
  %s7 = inlined_call_operand.hbm [shape: f32[2,3], index: 7, kind: output, shape index: {}]
  %s8 = sld [smem:[#allocation0]]
  $region38: #{bilstm_cls_forward.5} parent=0
    _
  %s10 = ssub.s32 1, %s8
  %s11 = scalar_select 0, %s10, %s8
  %v12 = vstv %s4
  %13 = vst [vmem:[#allocation2] sm:$0x1] %v12
  $region1: #{bilstm_cls_forward.5} parent=0
    #allocation3 [shape = 'u8[1024]{0}', space=vmem, size = 0x400, scoped, tag = 'output window, operand 0, single buffered']
    #allocation4 [shape = 's32[1]{0}', space=sflag, size = 0x4, scoped, tag = 'scoped memory for bilstm_cls_forward.5']
    %14 = vsyncpa [#allocation4], 0
    // Predicated region
    $region2: #{bilstm_cls_forward.5} parent=1 // pred_check
      _
    $region3: #{bilstm_cls_forward.5} parent=1 // pred_check_branch
      %16 = sbr.rel (0) target = $region5
    $region4: #{bilstm_cls_forward.5} parent=1 // pred_region
      _
    $region5: #{bilstm_cls_forward.5} parent=1 // pred_fallthru
      _
    // Predicated region
    $region6: #{bilstm_cls_forward.5} parent=1 // pred_check
      _
    $region7: #{bilstm_cls_forward.5} parent=1 // pred_check_branch
      %18 = sbr.rel (0) target = $region9
    $region8: #{bilstm_cls_forward.5} parent=1 // pred_region
      _
    $region9: #{bilstm_cls_forward.5} parent=1 // pred_fallthru
      _
    // Predicated region
    $region10: #{bilstm_cls_forward.5} parent=1 // pred_check
      _
    $region11: #{bilstm_cls_forward.5} parent=1 // pred_check_branch
      %20 = sbr.rel (0) target = $region13
    $region12: #{bilstm_cls_forward.5} parent=1 // pred_region
      _
    $region13: #{bilstm_cls_forward.5} parent=1 // pred_fallthru
      _
    // Predicated region
    $region14: #{bilstm_cls_forward.5} parent=1 // pred_check
      _
    $region15: #{bilstm_cls_forward.5} parent=1 // pred_check_branch
      %22 = sbr.rel (0) target = $region17
    $region16: #{bilstm_cls_forward.5} parent=1 // pred_region
      _
    $region17: #{bilstm_cls_forward.5} parent=1 // pred_fallthru
      _
    // Predicated region
    $region18: #{bilstm_cls_forward.5} parent=1 // pred_check
      _
    $region19: #{bilstm_cls_forward.5} parent=1 // pred_check_branch
      %24 = sbr.rel (0) target = $region21
    $region20: #{bilstm_cls_forward.5} parent=1 // pred_region
      _
    $region21: #{bilstm_cls_forward.5} parent=1 // pred_fallthru
      _
    // Predicated region
    $region22: #{bilstm_cls_forward.5} parent=1 // pred_check
      _
    $region23: #{bilstm_cls_forward.5} parent=1 // pred_check_branch
      %26 = sbr.rel (0) target = $region25
    $region24: #{bilstm_cls_forward.5} parent=1 // pred_region
      _
    $region25: #{bilstm_cls_forward.5} parent=1 // pred_fallthru
      _
    // Predicated region
    $region26: #{bilstm_cls_forward.5} parent=1 // pred_check
      _
    $region27: #{bilstm_cls_forward.5} parent=1 // pred_check_branch
      %28 = sbr.rel (0) target = $region29
    $region28: #{bilstm_cls_forward.5} parent=1 // pred_region
      _
    $region29: #{bilstm_cls_forward.5} parent=1 // pred_fallthru
      _
    %v29 = vld [vmem:[%s0] sm:$0x3]
    %v30 = vld [vmem:[%s0 + $0x2] sm:$0x3]
    %v31 = vld [vmem:[%s0 + $0x4] sm:$0x3]
    %v32 = vld [vmem:[%s0 + $0x6] sm:$0x3]
    %v33 = vld [vmem:[%s0 + $0x8] sm:$0x3]
    %v34 = vld [vmem:[%s0 + $0xa] sm:$0x3]
    %v35 = vld [vmem:[%s0 + $0xc] sm:$0x3]
    %v36 = vld [vmem:[%s0 + $0xe] sm:$0x3]
    %v37 = vld [vmem:[%s1] sm:$0x3]
    %v38 = vld [vmem:[%s1 + $0x2] sm:$0x3]
    %v39 = vld [vmem:[%s1 + $0x4] sm:$0x3]
    %v40 = vld [vmem:[%s1 + $0x6] sm:$0x3]
    %v41 = vld [vmem:[%s1 + $0x8] sm:$0x3]
    %v42 = vld [vmem:[%s1 + $0xa] sm:$0x3]
    %v43 = vld [vmem:[%s1 + $0xc] sm:$0x3]
    %v44 = vld [vmem:[%s1 + $0xe] sm:$0x3]
    %v45 = vadd.f32 %v29, %v37
    %v46 = vadd.f32 %v30, %v38
    %v47 = vadd.f32 %v31, %v39
    %v48 = vadd.f32 %v32, %v40
    %v49 = vadd.f32 %v33, %v41
    %v50 = vadd.f32 %v34, %v42
    %v51 = vadd.f32 %v35, %v43
    %v52 = vadd.f32 %v36, %v44
    %v53 = vld [vmem:[%s2] sm:$0x3]
    %vm54 = vcmp.gt.s32.totalorder %v53, 0
    %vm55 = vcmp.gt.s32.totalorder %v53, 1
    %vm56 = vcmp.gt.s32.totalorder %v53, 2
    %vm57 = vcmp.gt.s32.totalorder %v53, 3
    %vm58 = vcmp.gt.s32.totalorder %v53, 4
    %vm59 = vcmp.gt.s32.totalorder %v53, 5
    %vm60 = vcmp.gt.s32.totalorder %v53, 6
    %vm61 = vcmp.gt.s32.totalorder %v53, 7
    %v62 = vld [vmem:[%s3] sm:$0x1]
    %v64 = vlaneseq
    %v65 = vshrl.u32 %v64, 7
    %v66 = vsub.s32 0, %v65
    %v67 = vrot.slane %v62, %v66
    %v69 = vmul.f32 %v45, %v67
    %v70 = vmul.f32 %v46, %v67
    %v71 = vmul.f32 %v47, %v67
    %v72 = vmul.f32 %v48, %v67
    %v73 = vmul.f32 %v49, %v67
    %v74 = vmul.f32 %v50, %v67
    %v75 = vmul.f32 %v51, %v67
    %v76 = vmul.f32 %v52, %v67
    %vm77 = vcmask 254976
    %v78 = vsel %vm77, %v69, 0.0
    %79 = vadd.xlane.f32.xlu0 %v78
    %v80 = vpop.xlane.xlu0 %79
    %v81 = vsel %vm77, %v70, 0.0
    %82 = vadd.xlane.f32.xlu0 %v81
    %v83 = vpop.xlane.xlu0 %82
    %v84 = vsel %vm77, %v71, 0.0
    %85 = vadd.xlane.f32.xlu0 %v84
    %v86 = vpop.xlane.xlu0 %85
    %v87 = vsel %vm77, %v72, 0.0
    %88 = vadd.xlane.f32.xlu0 %v87
    %v89 = vpop.xlane.xlu0 %88
    %v90 = vsel %vm77, %v73, 0.0
    %91 = vadd.xlane.f32.xlu0 %v90
    %v92 = vpop.xlane.xlu0 %91
    %v93 = vsel %vm77, %v74, 0.0
    %94 = vadd.xlane.f32.xlu0 %v93
    %v95 = vpop.xlane.xlu0 %94
    %v96 = vsel %vm77, %v75, 0.0
    %97 = vadd.xlane.f32.xlu0 %v96
    %v98 = vpop.xlane.xlu0 %97
    %v99 = vsel %vm77, %v76, 0.0
    %100 = vadd.xlane.f32.xlu0 %v99
    %v101 = vpop.xlane.xlu0 %100
    %v102 = vld [vmem:[#allocation2] sm:$0x1]
    %v104 = vlaneseq
    %v105 = vshrl.u32 %v104, 7
    %v106 = vsub.s32 0, %v105
    %v107 = vrot.slane %v102, %v106
    %v109 = vadd.f32 %v80, %v107
    %v110 = vadd.f32 %v83, %v107
    %v111 = vadd.f32 %v86, %v107
    %v112 = vadd.f32 %v89, %v107
    %v113 = vadd.f32 %v92, %v107
    %v114 = vadd.f32 %v95, %v107
    %v115 = vadd.f32 %v98, %v107
    %v116 = vadd.f32 %v101, %v107
    %v117 = vsel %vm54, %v109, -1e+30
    %v118 = vsel %vm55, %v110, -1e+30
    %v119 = vsel %vm56, %v111, -1e+30
    %v120 = vsel %vm57, %v112, -1e+30
    %v121 = vsel %vm58, %v113, -1e+30
    %v122 = vsel %vm59, %v114, -1e+30
    %v123 = vsel %vm60, %v115, -1e+30
    %v124 = vsel %vm61, %v116, -1e+30
    %vm125 = vcmask 1024
    %v126 = vsel %vm125, %v117, -inf
    %v127 = vsel %vm125, %v118, -inf
    %v128 = vsel %vm125, %v119, -inf
    %v129 = vsel %vm125, %v120, -inf
    %v130 = vsel %vm125, %v121, -inf
    %v131 = vmax.f32 %v126, %v130
    %v132 = vsel %vm125, %v122, -inf
    %v133 = vmax.f32 %v127, %v132
    %v134 = vsel %vm125, %v123, -inf
    %v135 = vmax.f32 %v128, %v134
    %v136 = vsel %vm125, %v124, -inf
    %v137 = vmax.f32 %v129, %v136
    %v138 = vmax.f32 %v131, %v133
    %v139 = vmax.f32 %v135, %v137
    %v140 = vmax.f32 %v138, %v139
    %v141 = vsub.f32 %v117, %v140
    %v142 = vsub.f32 %v118, %v140
    %v143 = vsub.f32 %v119, %v140
    %v144 = vsub.f32 %v120, %v140
    %v145 = vsub.f32 %v121, %v140
    %v146 = vsub.f32 %v122, %v140
    %v147 = vsub.f32 %v123, %v140
    %v148 = vsub.f32 %v124, %v140
    %v149 = vmul.f32 %v141, 1.442695
    %v150 = vpow.pop %v149
    %v151 = vmul.f32 %v142, 1.442695
    %v152 = vpow.pop %v151
    %v153 = vmul.f32 %v143, 1.442695
    %v154 = vpow.pop %v153
    %v155 = vmul.f32 %v144, 1.442695
    %v156 = vpow.pop %v155
    %v157 = vmul.f32 %v145, 1.442695
    %v158 = vpow.pop %v157
    %v159 = vmul.f32 %v146, 1.442695
    %v160 = vpow.pop %v159
    %v161 = vmul.f32 %v147, 1.442695
    %v162 = vpow.pop %v161
    %v163 = vmul.f32 %v148, 1.442695
    %v164 = vpow.pop %v163
    %v165 = vsel %vm54, %v150, 0.0
    %v166 = vsel %vm55, %v152, 0.0
    %v167 = vsel %vm56, %v154, 0.0
    %v168 = vsel %vm57, %v156, 0.0
    %v169 = vsel %vm58, %v158, 0.0
    %v170 = vsel %vm59, %v160, 0.0
    %v171 = vsel %vm60, %v162, 0.0
    %v172 = vsel %vm61, %v164, 0.0
    %v173 = vsel %vm125, %v165, 0.0
    %v174 = vsel %vm125, %v166, 0.0
    %v175 = vadd.f32 %v173, %v174
    %v176 = vsel %vm125, %v167, 0.0
    %v177 = vadd.f32 %v175, %v176
    %v178 = vsel %vm125, %v168, 0.0
    %v179 = vadd.f32 %v177, %v178
    %v180 = vsel %vm125, %v169, 0.0
    %v181 = vadd.f32 %v179, %v180
    %v182 = vsel %vm125, %v170, 0.0
    %v183 = vadd.f32 %v181, %v182
    %v184 = vsel %vm125, %v171, 0.0
    %v185 = vadd.f32 %v183, %v184
    %v186 = vsel %vm125, %v172, 0.0
    %v187 = vadd.f32 %v185, %v186
    %v188 = vrcp.pop %v187
    %v189 = vmul.f32 %v165, %v188
    %v190 = vmul.f32 %v166, %v188
    %v191 = vmul.f32 %v167, %v188
    %v192 = vmul.f32 %v168, %v188
    %v193 = vmul.f32 %v169, %v188
    %v194 = vmul.f32 %v170, %v188
    %v195 = vmul.f32 %v171, %v188
    %v196 = vmul.f32 %v172, %v188
    %198 = vset.pattern.permute.xlu0 0
    %199 = vperm.xlu0 %198, %v189
    %v200 = vpop.permute.xlu0 %199
    %203 = vset.pattern.permute.xlu0 0
    %204 = vperm.xlu0 %203, %v190
    %v205 = vpop.permute.xlu0 %204
    %208 = vset.pattern.permute.xlu0 0
    %209 = vperm.xlu0 %208, %v191
    %v210 = vpop.permute.xlu0 %209
    %213 = vset.pattern.permute.xlu0 0
    %214 = vperm.xlu0 %213, %v192
    %v215 = vpop.permute.xlu0 %214
    %218 = vset.pattern.permute.xlu0 0
    %219 = vperm.xlu0 %218, %v193
    %v220 = vpop.permute.xlu0 %219
    %223 = vset.pattern.permute.xlu0 0
    %224 = vperm.xlu0 %223, %v194
    %v225 = vpop.permute.xlu0 %224
    %228 = vset.pattern.permute.xlu0 0
    %229 = vperm.xlu0 %228, %v195
    %v230 = vpop.permute.xlu0 %229
    %233 = vset.pattern.permute.xlu0 0
    %234 = vperm.xlu0 %233, %v196
    %v235 = vpop.permute.xlu0 %234
    %v237 = vmul.f32 %v45, %v200
    %v238 = vmul.f32 %v46, %v205
    %v239 = vmul.f32 %v47, %v210
    %v240 = vmul.f32 %v48, %v215
    %v241 = vmul.f32 %v49, %v220
    %v242 = vmul.f32 %v50, %v225
    %v243 = vmul.f32 %v51, %v230
    %v244 = vmul.f32 %v52, %v235
    %v245 = vsel %vm77, %v237, 0.0
    %v246 = vsel %vm77, %v238, 0.0
    %v247 = vadd.f32 %v245, %v246
    %v248 = vsel %vm77, %v239, 0.0
    %v249 = vadd.f32 %v247, %v248
    %v250 = vsel %vm77, %v240, 0.0
    %v251 = vadd.f32 %v249, %v250
    %v252 = vsel %vm77, %v241, 0.0
    %v253 = vadd.f32 %v251, %v252
    %v254 = vsel %vm77, %v242, 0.0
    %v255 = vadd.f32 %v253, %v254
    %v256 = vsel %vm77, %v243, 0.0
    %v257 = vadd.f32 %v255, %v256
    %v258 = vsel %vm77, %v244, 0.0
    %v259 = vadd.f32 %v257, %v258
    %v260 = vcvt.s32.f32 %v53
    %v261 = vmax.f32 %v260, 1.0
    %263 = vset.pattern.permute.xlu0 0
    %264 = vperm.xlu0 %263, %v261
    %v265 = vpop.permute.xlu0 %264
    %v267 = vrcp.pop %v265
    %v268 = vmul.f32 %v259, %v267
    %v269 = vld [vmem:[%s5] sm:$0xff]
    %v270 = vld [vmem:[%s5 + $0x8] sm:$0xff]
    %v271 = vld [vmem:[%s5 + $0x10] sm:$0xff]
    %v272 = vld [vmem:[%s5 + $0x18] sm:$0xff]
    %v273 = vld [vmem:[%s6] sm:$0x1]
    %v275 = vlaneseq
    %v276 = vshrl.u32 %v275, 7
    %v277 = vsub.s32 0, %v276
    %v278 = vrot.slane %v273, %v277
    %vm280 = vcmask 261120
    %v282 = vsel %vm280, %v268, 0
    %284 = vmatprep.subr.mxu0 0.0
    %285 = vmatpush1.msra.mxu0 %v269
    %286 = vmatprep.subr.mxu0 0.0
    %287 = vmatpush1.msra.mxu0 %v270
    %288 = vmatprep.subr.mxu0 0.0
    %289 = vmatpush1.msra.mxu0 %v271
    %290 = vmatprep.subr.mxu0 0.0
    %291 = vmatpush1.msra.mxu0 %v272
    %292 = vmatprep.subr.mxu0 0.0
    %293 = vmatpush1.msra.mxu0 0.0
    %294 = vmatprep.subr.mxu0 0.0
    %295 = vmatpush1.msra.mxu0 0.0
    %296 = vmatprep.subr.mxu0 0.0
    %297 = vmatpush1.msra.mxu0 0.0
    %298 = vmatprep.subr.mxu0 0.0
    %299 = vmatpush1.msra.mxu0 0.0
    %300 = vmatprep.subr.mxu0 0.0
    %301 = vmatpush1.msra.mxu0 0.0
    %302 = vmatprep.subr.mxu0 0.0
    %303 = vmatpush1.msra.mxu0 0.0
    %304 = vmatprep.subr.mxu0 0.0
    %305 = vmatpush1.msra.mxu0 0.0
    %306 = vmatprep.subr.mxu0 0.0
    %307 = vmatpush1.msra.mxu0 0.0
    %308 = vmatprep.subr.mxu0 0.0
    %309 = vmatpush1.msra.mxu0 0.0
    %310 = vmatprep.subr.mxu0 0.0
    %311 = vmatpush1.msra.mxu0 0.0
    %312 = vmatprep.subr.mxu0 0.0
    %313 = vmatpush1.msra.mxu0 0.0
    %314 = vmatprep.subr.mxu0 0.0
    %315 = vmatpush1.msra.mxu0 0.0
    %316 = vmatprep.subr.mxu0 0.0
    %317 = vmatpush1.msra.mxu0 0.0
    %318 = vmatprep.subr.mxu0 0.0
    %319 = vmatpush1.msra.mxu0 0.0
    %320 = vmatprep.subr.mxu0 0.0
    %321 = vmatpush1.msra.mxu0 0.0
    %322 = vmatprep.subr.mxu0 0.0
    %323 = vmatpush1.msra.mxu0 0.0
    %324 = vmatprep.subr.mxu0 0.0
    %325 = vmatpush1.msra.mxu0 0.0
    %326 = vmatprep.subr.mxu0 0.0
    %327 = vmatpush1.msra.mxu0 0.0
    %328 = vmatprep.subr.mxu0 0.0
    %329 = vmatpush1.msra.mxu0 0.0
    %330 = vmatprep.subr.mxu0 0.0
    %331 = vmatpush1.msra.mxu0 0.0
    %332 = vmatprep.subr.mxu0 0.0
    %333 = vmatpush1.msra.mxu0 0.0
    %334 = vmatprep.subr.mxu0 0.0
    %335 = vmatpush1.msra.mxu0 0.0
    %336 = vmatprep.subr.mxu0 0.0
    %337 = vmatpush1.msra.mxu0 0.0
    %338 = vmatprep.subr.mxu0 0.0
    %339 = vmatpush1.msra.mxu0 0.0
    %340 = vmatprep.subr.mxu0 0.0
    %341 = vmatpush1.msra.mxu0 0.0
    %342 = vmatprep.subr.mxu0 0.0
    %343 = vmatpush1.msra.mxu0 0.0
    %344 = vmatprep.subr.mxu0 0.0
    %345 = vmatpush1.msra.mxu0 0.0
    %346 = vmatprep.subr.mxu0 0.0
    %347 = vmatpush1.msra.mxu0 0.0
    %348 = vmatprep.mubr.f32.mxu0 0.0
    %349 = vmatmul.mubr.f32.gmra.mrb[0].mxu0 %v282
    %v350 = vpop.f32.mrb[0].mxu0
    %v351 = vadd.f32 %v278, %v350
    %v352 = vpop.f32.mrb[0].mxu0
    %353 = vdwg.mxu0
    %vm354 = vcmask 17408
    %355 = vst.msk [vmem:[#allocation3] sm:$0x3] %vm354, %v351
    // Predicated region
    $region30: #{bilstm_cls_forward.5} parent=1 // pred_check
      _
    $region31: #{bilstm_cls_forward.5} parent=1 // pred_check_branch
      %357 = sbr.rel (0) target = $region33
    $region32: #{bilstm_cls_forward.5} parent=1 // pred_region
      %s359 = ssub.s32 32, 32
      %360 = vsyncadd [#allocation4], %s359
      %s362 = sshll.u32 [#allocation3], 4
      %s363 = int_to_ptr.vmem [resolvable:$true] %s362
      %365 = dma.vmem_to_hbm [thread:$0]  %s363, 32, %s7, [#allocation4]
    $region33: #{bilstm_cls_forward.5} parent=1 // pred_fallthru
      _
    // Predicated region
    $region34: #{bilstm_cls_forward.5} parent=1 // pred_check
      _
    $region35: #{bilstm_cls_forward.5} parent=1 // pred_check_branch
      %367 = sbr.rel (0) target = $region37
    $region36: #{bilstm_cls_forward.5} parent=1 // pred_region
      %368 = dma.done [#allocation4], 32
    $region37: #{bilstm_cls_forward.5} parent=1 // pred_fallthru
      _
    %369 = vsyncpa [#allocation4], 1

// kernel: bilstm_cls_forward.3
$region0: #{bilstm_cls_forward.3}
  #allocation0 [shape = 'u32[]', space=smem, size = 0x4, offset = 0x4, fixed_abs, tag = 'smem constant byte address 0x4 - core index']
  #allocation1 [shape = 'u32[144,128]{1,0:T(1,128)}', space=vmem, size = 0x12000, scoped, tag = 'internal scratch']
  #allocation2 [shape = 'f32[2,32]{1,0:T(2,128)}', space=vmem, size = 0x400, scoped, tag = 'scratch operand']
  #allocation3 [shape = 'f32[2,32]{1,0:T(2,128)}', space=vmem, size = 0x400, scoped, tag = 'scratch operand']
  #allocation4 [shape = 'f32[2,32]{1,0:T(2,128)}', space=vmem, size = 0x400, scoped, tag = 'scratch operand']
  #allocation5 [shape = 'f32[2,32]{1,0:T(2,128)}', space=vmem, size = 0x400, scoped, tag = 'scratch operand']
  %s0 = inlined_call_operand.vmem [shape: f32[8,2,16], index: 0, kind: input, shape index: {}, may-alias: {0,1}]
  %s1 = inlined_call_operand.vmem [shape: f32[8,2,16], index: 1, kind: input, shape index: {}, may-alias: {0,1}]
  %s2 = inlined_call_operand.vmem [shape: s32[2,1], index: 2, kind: input, shape index: {}]
  %s3 = inlined_call_operand.vmem [shape: bf16[16,128], index: 3, kind: input, shape index: {}]
  %s4 = inlined_call_operand.vmem [shape: bf16[16,128], index: 4, kind: input, shape index: {}]
  %s5 = inlined_call_operand.vmem [shape: f32[1,128], index: 5, kind: input, shape index: {}]
  %s6 = inlined_call_operand.vmem [shape: f32[1,128], index: 6, kind: input, shape index: {}]
  %s7 = inlined_call_operand.vmem [shape: bf16[32,128], index: 7, kind: input, shape index: {}]
  %s8 = inlined_call_operand.vmem [shape: bf16[32,128], index: 8, kind: input, shape index: {}]
  %s9 = inlined_call_operand.vmem [shape: f32[8,2,32], index: 9, kind: output, shape index: {0}]
  %s10 = inlined_call_operand.vmem [shape: f32[8,2,32], index: 10, kind: output, shape index: {1}]
  %11 = xla_tuple %s9, %s10
  %s12 = sld [smem:[#allocation0]]
  $region58: #{bilstm_cls_forward.3} parent=0
    _
  %s14 = ssub.s32 1, %s12
  %s15 = scalar_select 0, %s14, %s12
  // Predicated region
  $region2: #{bilstm_cls_forward.3} parent=0 // pred_check
    _
  $region3: #{bilstm_cls_forward.3} parent=0 // pred_check_branch
    %17 = sbr.rel (0) target = $region5
  $region4: #{bilstm_cls_forward.3} parent=0 // pred_region
    _
  $region5: #{bilstm_cls_forward.3} parent=0 // pred_fallthru
    _
  // Predicated region
  $region6: #{bilstm_cls_forward.3} parent=0 // pred_check
    _
  $region7: #{bilstm_cls_forward.3} parent=0 // pred_check_branch
    %19 = sbr.rel (0) target = $region9
  $region8: #{bilstm_cls_forward.3} parent=0 // pred_region
    %s20 = ssub.s32 0, 0
    %s21 = smul.u32 8, %s20
    %p22 = scmp.lt.s32.totalorder %s21, 7
    %s23 = scalar_select %p22, %s21, 7
    %s24 = smul.addr %s23, 2
    %s25 = scalar_lea.vmem %s1, %s24
    %s26 = ssub.s32 0, 0
    %s27 = smul.u32 8, %s26
  $region9: #{bilstm_cls_forward.3} parent=0 // pred_fallthru
    _
  // Predicated region
  $region10: #{bilstm_cls_forward.3} parent=0 // pred_check
    _
  $region11: #{bilstm_cls_forward.3} parent=0 // pred_check_branch
    %29 = sbr.rel (0) target = $region13
  $region12: #{bilstm_cls_forward.3} parent=0 // pred_region
    _
  $region13: #{bilstm_cls_forward.3} parent=0 // pred_fallthru
    _
  // Predicated region
  $region14: #{bilstm_cls_forward.3} parent=0 // pred_check
    _
  $region15: #{bilstm_cls_forward.3} parent=0 // pred_check_branch
    %31 = sbr.rel (0) target = $region17
  $region16: #{bilstm_cls_forward.3} parent=0 // pred_region
    _
  $region17: #{bilstm_cls_forward.3} parent=0 // pred_fallthru
    _
  // Predicated region
  $region18: #{bilstm_cls_forward.3} parent=0 // pred_check
    _
  $region19: #{bilstm_cls_forward.3} parent=0 // pred_check_branch
    %33 = sbr.rel (0) target = $region21
  $region20: #{bilstm_cls_forward.3} parent=0 // pred_region
    _
  $region21: #{bilstm_cls_forward.3} parent=0 // pred_fallthru
    _
  // Predicated region
  $region22: #{bilstm_cls_forward.3} parent=0 // pred_check
    _
  $region23: #{bilstm_cls_forward.3} parent=0 // pred_check_branch
    %35 = sbr.rel (0) target = $region25
  $region24: #{bilstm_cls_forward.3} parent=0 // pred_region
    _
  $region25: #{bilstm_cls_forward.3} parent=0 // pred_fallthru
    _
  // Predicated region
  $region26: #{bilstm_cls_forward.3} parent=0 // pred_check
    _
  $region27: #{bilstm_cls_forward.3} parent=0 // pred_check_branch
    %37 = sbr.rel (0) target = $region29
  $region28: #{bilstm_cls_forward.3} parent=0 // pred_region
    _
  $region29: #{bilstm_cls_forward.3} parent=0 // pred_fallthru
    _
  // Predicated region
  $region30: #{bilstm_cls_forward.3} parent=0 // pred_check
    _
  $region31: #{bilstm_cls_forward.3} parent=0 // pred_check_branch
    %39 = sbr.rel (0) target = $region33
  $region32: #{bilstm_cls_forward.3} parent=0 // pred_region
    _
  $region33: #{bilstm_cls_forward.3} parent=0 // pred_fallthru
    _
  // Predicated region
  $region34: #{bilstm_cls_forward.3} parent=0 // pred_check
    _
  $region35: #{bilstm_cls_forward.3} parent=0 // pred_check_branch
    %41 = sbr.rel (0) target = $region37
  $region36: #{bilstm_cls_forward.3} parent=0 // pred_region
    _
  $region37: #{bilstm_cls_forward.3} parent=0 // pred_fallthru
    _
  %s42 = ssub.s32 0, 0
  %s43 = smul.u32 8, %s42
  %p44 = scmp.lt.s32.totalorder %s43, 7
  %s45 = scalar_select %p44, %s43, 7
  %s46 = smul.addr %s45, 2
  %s47 = scalar_lea.vmem %s1, %s46
  %s48 = ssub.s32 0, 0
  %s49 = smul.u32 8, %s48
  %p50 = scmp.lt.s32.totalorder %s49, 7
  %s51 = scalar_select %p50, %s49, 7
  %s52 = smul.addr %s51, 2
  %s53 = scalar_lea.vmem %s10, %s52
  %s54 = ssub.s32 0, 0
  %s55 = smul.u32 8, %s54
  %p56 = scmp.lt.s32.totalorder %s55, 7
  %s57 = scalar_select %p56, %s55, 7
  %s58 = smul.addr %s57, 2
  %s59 = scalar_lea.vmem %s1, %s58
  %s60 = ssub.s32 0, 0
  %s61 = smul.u32 8, %s60
  %s62 = ssub.s32 0, 0
  %s63 = smul.u32 8, %s62
  %p64 = scmp.lt.s32.totalorder %s63, 7
  %s65 = scalar_select %p64, %s63, 7
  %s66 = smul.addr %s65, 2
  %s67 = scalar_lea.vmem %s10, %s66
  %s68 = ssub.s32 0, 0
  %s69 = smul.u32 8, %s68
  %p71 = scmp.eq.s32.totalorder 0, 0
  // Predicated region
  $region38: #{bilstm_cls_forward.3} parent=0 // pred_check
    %p72 = pneg %p71
  $region39: #{bilstm_cls_forward.3} parent=0 // pred_check_branch
    %74 = sbr.rel (%p72) target = $region41
  $region40: #{bilstm_cls_forward.3} parent=0 // pred_region
    %vm75 = vcmask 254976
    %76 = vst.msk [vmem:[#allocation2] sm:$0x3] %vm75, 0.0
    %77 = vst.msk [vmem:[#allocation3] sm:$0x3] %vm75, 0.0
    %78 = vst.msk [vmem:[#allocation4] sm:$0x3] %vm75, 0.0
    %79 = vst.msk [vmem:[#allocation5] sm:$0x3] %vm75, 0.0
  $region41: #{bilstm_cls_forward.3} parent=0 // pred_fallthru
    _
  %v80 = vld [vmem:[%s2] sm:$0x3]
  %s81 = smul.u32 0, 8
  %s82 = ssub.s32 0, 0
  %s83 = smul.u32 %s82, 8
  %v84 = vstv %s81
  %vm85 = vcmp.lt.s32.totalorder %v84, %v80
  %v86 = vld [vmem:[%s0] sm:$0x3]
  %v87 = vpack.c.bf16 %v86, %v86
  %v88 = vld [vmem:[%s3] sm:$0xf]
  %v89 = vld [vmem:[%s3 + $0x4] sm:$0xf]
  %v90 = vld [vmem:[#allocation2] sm:$0x3]
  %v91 = vpack.c.bf16 %v90, %v90
  %v92 = vld [vmem:[%s7] sm:$0xf]
  %v93 = vld [vmem:[%s7 + $0x4] sm:$0xf]
  %v94 = vld [vmem:[%s7 + $0x8] sm:$0xf]
  %v95 = vld [vmem:[%s7 + $0xc] sm:$0xf]
  %v100 = vunpack.c.l.b16 %v92
  %v101 = vunpack.c.l.b16 %v93
  %v102 = vunpack.c.l.b16 %v94
  %v103 = vunpack.c.l.b16 %v95
  %v104 = vpack.c.b16 %v101, %v100
  %v105 = vpack.c.b16 %v103, %v102
  %vm108 = vcmask 261120
  %v110 = vsel %vm108, %v91, 0
  %112 = vmatprep.subr.bf16.mxu0 0
  %113 = vmatpush1.bf16.msra.mxu0 %v104
  %114 = vmatprep.subr.bf16.mxu0 0
  %115 = vmatpush1.bf16.msra.mxu0 %v105
  %116 = vmatprep.subr.bf16.mxu0 0
  %117 = vmatpush1.bf16.msra.mxu0 0
  %118 = vmatprep.subr.bf16.mxu0 0
  %119 = vmatpush1.bf16.msra.mxu0 0
  %120 = vmatprep.subr.bf16.mxu0 0
  %121 = vmatpush1.bf16.msra.mxu0 0
  %122 = vmatprep.subr.bf16.mxu0 0
  %123 = vmatpush1.bf16.msra.mxu0 0
  %124 = vmatprep.subr.bf16.mxu0 0
  %125 = vmatpush1.bf16.msra.mxu0 0
  %126 = vmatprep.subr.bf16.mxu0 0
  %127 = vmatpush1.bf16.msra.mxu0 0
  %128 = vmatprep.subr.bf16.mxu0 0
  %129 = vmatpush1.bf16.msra.mxu0 0
  %130 = vmatprep.subr.bf16.mxu0 0
  %131 = vmatpush1.bf16.msra.mxu0 0
  %132 = vmatprep.subr.bf16.mxu0 0
  %133 = vmatpush1.bf16.msra.mxu0 0
  %134 = vmatprep.subr.bf16.mxu0 0
  %135 = vmatpush1.bf16.msra.mxu0 0
  %136 = vmatprep.subr.bf16.mxu0 0
  %137 = vmatpush1.bf16.msra.mxu0 0
  %138 = vmatprep.subr.bf16.mxu0 0
  %139 = vmatpush1.bf16.msra.mxu0 0
  %140 = vmatprep.subr.bf16.mxu0 0
  %141 = vmatpush1.bf16.msra.mxu0 0
  %142 = vmatprep.subr.bf16.mxu0 0
  %143 = vmatpush1.bf16.msra.mxu0 0
  %144 = vmatprep.mubr.bf16.mxu0 0
  %145 = vmatmul.mubr.bf16.gmra.mrb[0].mxu0 %v110
  %v146 = vpop.f32.mrb[0].mxu0
  %v147 = vadd.f32 0.0, %v146
  %v148 = vpop.f32.mrb[0].mxu0
  %v149 = vpop.f32.mrb[0].mxu0
  %v150 = vpop.f32.mrb[0].mxu0
  %151 = vdwg.mxu0
  %v154 = vunpack.c.l.b16 %v88
  %v155 = vunpack.c.l.b16 %v89
  %v156 = vpack.c.b16 %v155, %v154
  %vm158 = vcmask 130048
  %v160 = vsel %vm158, %v87, 0
  %162 = vmatprep.subr.bf16.mxu0 0
  %163 = vmatpush1.bf16.msra.mxu0 %v156
  %164 = vmatprep.subr.bf16.mxu0 0
  %165 = vmatpush1.bf16.msra.mxu0 0
  %166 = vmatprep.subr.bf16.mxu0 0
  %167 = vmatpush1.bf16.msra.mxu0 0
  %168 = vmatprep.subr.bf16.mxu0 0
  %169 = vmatpush1.bf16.msra.mxu0 0
  %170 = vmatprep.subr.bf16.mxu0 0
  %171 = vmatpush1.bf16.msra.mxu0 0
  %172 = vmatprep.subr.bf16.mxu0 0
  %173 = vmatpush1.bf16.msra.mxu0 0
  %174 = vmatprep.subr.bf16.mxu0 0
  %175 = vmatpush1.bf16.msra.mxu0 0
  %176 = vmatprep.subr.bf16.mxu0 0
  %177 = vmatpush1.bf16.msra.mxu0 0
  %178 = vmatprep.subr.bf16.mxu0 0
  %179 = vmatpush1.bf16.msra.mxu0 0
  %180 = vmatprep.subr.bf16.mxu0 0
  %181 = vmatpush1.bf16.msra.mxu0 0
  %182 = vmatprep.subr.bf16.mxu0 0
  %183 = vmatpush1.bf16.msra.mxu0 0
  %184 = vmatprep.subr.bf16.mxu0 0
  %185 = vmatpush1.bf16.msra.mxu0 0
  %186 = vmatprep.subr.bf16.mxu0 0
  %187 = vmatpush1.bf16.msra.mxu0 0
  %188 = vmatprep.subr.bf16.mxu0 0
  %189 = vmatpush1.bf16.msra.mxu0 0
  %190 = vmatprep.subr.bf16.mxu0 0
  %191 = vmatpush1.bf16.msra.mxu0 0
  %192 = vmatprep.subr.bf16.mxu0 0
  %193 = vmatpush1.bf16.msra.mxu0 0
  %194 = vmatprep.mubr.bf16.mxu0 0
  %195 = vmatmul.mubr.bf16.gmra.mrb[0].mxu0 %v160
  %v196 = vpop.f32.mrb[0].mxu0
  %v197 = vadd.f32 %v147, %v196
  %v198 = vpop.f32.mrb[0].mxu0
  %v199 = vpop.f32.mrb[0].mxu0
  %v200 = vpop.f32.mrb[0].mxu0
  %201 = vdwg.mxu0
  %v202 = vld [vmem:[%s5] sm:$0x1]
  %v204 = vlaneseq
  %v205 = vshrl.u32 %v204, 7
  %v206 = vsub.s32 0, %v205
  %v207 = vrot.slane %v202, %v206
  %v209 = vadd.f32 %v197, %v207
  %v210 = vxor.u32 %v209, 2147483648
  %v211 = vmul.f32 %v210, 1.442695
  %v212 = vpow.pop %v211
  %v213 = vadd.f32 %v212, 1.0
  %v214 = vrcp.pop %v213
  %v215 = vmul.f32 1.0, %v214
  %v216 = vtanh.pop %v209
  %v217 = vld [vmem:[#allocation3] sm:$0x3]
  %219 = vrot.lane.b32.xlu0 %v217, 32
  %v220 = vpop.permute.xlu0 %219
  %v222 = vmul.f32 %v215, %v220
  %224 = vrot.lane.b32.xlu0 %v216, 64
  %v225 = vpop.permute.xlu0 %224
  %v227 = vmul.f32 %v215, %v225
  %229 = vrot.lane.b32.xlu0 %v227, 32
  %v230 = vpop.permute.xlu0 %229
  %v232 = vadd.f32 %v222, %v230
  %v233 = vtanh.pop %v232
  %235 = vrot.lane.b32.xlu0 %v233, 64
  %v236 = vpop.permute.xlu0 %235
  %v238 = vmul.f32 %v215, %v236
  %v239 = vsel %vm85, 1, 0
  %240 = vset.pattern.permute.xlu0 0
  %241 = vperm.xlu0 %240, %v239
  %v242 = vpop.permute.xlu0 %241
  %vm243 = vcmp.eq.s32.totalorder %v242, 1
  %v244 = vsel %vm243, %v232, %v220
  %246 = vrot.lane.b32.xlu0 %v244, 96
  %v247 = vpop.permute.xlu0 %246
  %vm249 = vcmask 254976
  %250 = vst.msk [vmem:[#allocation3] sm:$0x3] %vm249, %v247
  %v251 = vld [vmem:[#allocation2] sm:$0x3]
  %253 = vrot.lane.b32.xlu0 %v251, 96
  %v254 = vpop.permute.xlu0 %253
  %v256 = vsel %vm243, %v238, %v254
  %258 = vrot.lane.b32.xlu0 %v256, 32
  %v259 = vpop.permute.xlu0 %258
  %261 = vst.msk [vmem:[#allocation2] sm:$0x3] %vm249, %v259
  %v262 = vsel %vm243, %v238, 0.0
  %264 = vrot.lane.b32.xlu0 %v262, 32
  %v265 = vpop.permute.xlu0 %264
  %267 = vst.msk [vmem:[%s9] sm:$0x3] %vm249, %v265
  %s268 = sadd.s32 %s83, 7
  %v269 = vstv %s268
  %vm270 = vcmp.lt.s32.totalorder %v269, %v80
  %s271 = scalar_lea.vmem %s59, 14
  %v272 = vld [vmem:[%s271] sm:$0x3]
  %v273 = vpack.c.bf16 %v272, %v272
  %v274 = vld [vmem:[%s4] sm:$0xf]
  %v275 = vld [vmem:[%s4 + $0x4] sm:$0xf]
  %v276 = vld [vmem:[#allocation4] sm:$0x3]
  %v277 = vpack.c.bf16 %v276, %v276
  %v278 = vld [vmem:[%s8] sm:$0xf]
  %v279 = vld [vmem:[%s8 + $0x4] sm:$0xf]
  %v280 = vld [vmem:[%s8 + $0x8] sm:$0xf]
  %v281 = vld [vmem:[%s8 + $0xc] sm:$0xf]
  %v286 = vunpack.c.l.b16 %v278
  %v287 = vunpack.c.l.b16 %v279
  %v288 = vunpack.c.l.b16 %v280
  %v289 = vunpack.c.l.b16 %v281
  %v290 = vpack.c.b16 %v287, %v286
  %v291 = vpack.c.b16 %v289, %v288
  %v295 = vsel %vm108, %v277, 0
  %297 = vmatprep.subr.bf16.mxu0 0
  %298 = vmatpush1.bf16.msra.mxu0 %v290
  %299 = vmatprep.subr.bf16.mxu0 0
  %300 = vmatpush1.bf16.msra.mxu0 %v291
  %301 = vmatprep.subr.bf16.mxu0 0
  %302 = vmatpush1.bf16.msra.mxu0 0
  %303 = vmatprep.subr.bf16.mxu0 0
  %304 = vmatpush1.bf16.msra.mxu0 0
  %305 = vmatprep.subr.bf16.mxu0 0
  %306 = vmatpush1.bf16.msra.mxu0 0
  %307 = vmatprep.subr.bf16.mxu0 0
  %308 = vmatpush1.bf16.msra.mxu0 0
  %309 = vmatprep.subr.bf16.mxu0 0
  %310 = vmatpush1.bf16.msra.mxu0 0
  %311 = vmatprep.subr.bf16.mxu0 0
  %312 = vmatpush1.bf16.msra.mxu0 0
  %313 = vmatprep.subr.bf16.mxu0 0
  %314 = vmatpush1.bf16.msra.mxu0 0
  %315 = vmatprep.subr.bf16.mxu0 0
  %316 = vmatpush1.bf16.msra.mxu0 0
  %317 = vmatprep.subr.bf16.mxu0 0
  %318 = vmatpush1.bf16.msra.mxu0 0
  %319 = vmatprep.subr.bf16.mxu0 0
  %320 = vmatpush1.bf16.msra.mxu0 0
  %321 = vmatprep.subr.bf16.mxu0 0
  %322 = vmatpush1.bf16.msra.mxu0 0
  %323 = vmatprep.subr.bf16.mxu0 0
  %324 = vmatpush1.bf16.msra.mxu0 0
  %325 = vmatprep.subr.bf16.mxu0 0
  %326 = vmatpush1.bf16.msra.mxu0 0
  %327 = vmatprep.subr.bf16.mxu0 0
  %328 = vmatpush1.bf16.msra.mxu0 0
  %329 = vmatprep.mubr.bf16.mxu0 0
  %330 = vmatmul.mubr.bf16.gmra.mrb[0].mxu0 %v295
  %v331 = vpop.f32.mrb[0].mxu0
  %v332 = vadd.f32 0.0, %v331
  %v333 = vpop.f32.mrb[0].mxu0
  %v334 = vpop.f32.mrb[0].mxu0
  %v335 = vpop.f32.mrb[0].mxu0
  %336 = vdwg.mxu0
  %v339 = vunpack.c.l.b16 %v274
  %v340 = vunpack.c.l.b16 %v275
  %v341 = vpack.c.b16 %v340, %v339
  %v344 = vsel %vm158, %v273, 0
  %346 = vmatprep.subr.bf16.mxu0 0
  %347 = vmatpush1.bf16.msra.mxu0 %v341
  %348 = vmatprep.subr.bf16.mxu0 0
  %349 = vmatpush1.bf16.msra.mxu0 0
  %350 = vmatprep.subr.bf16.mxu0 0
  %351 = vmatpush1.bf16.msra.mxu0 0
  %352 = vmatprep.subr.bf16.mxu0 0
  %353 = vmatpush1.bf16.msra.mxu0 0
  %354 = vmatprep.subr.bf16.mxu0 0
  %355 = vmatpush1.bf16.msra.mxu0 0
  %356 = vmatprep.subr.bf16.mxu0 0
  %357 = vmatpush1.bf16.msra.mxu0 0
  %358 = vmatprep.subr.bf16.mxu0 0
  %359 = vmatpush1.bf16.msra.mxu0 0
  %360 = vmatprep.subr.bf16.mxu0 0
  %361 = vmatpush1.bf16.msra.mxu0 0
  %362 = vmatprep.subr.bf16.mxu0 0
  %363 = vmatpush1.bf16.msra.mxu0 0
  %364 = vmatprep.subr.bf16.mxu0 0
  %365 = vmatpush1.bf16.msra.mxu0 0
  %366 = vmatprep.subr.bf16.mxu0 0
  %367 = vmatpush1.bf16.msra.mxu0 0
  %368 = vmatprep.subr.bf16.mxu0 0
  %369 = vmatpush1.bf16.msra.mxu0 0
  %370 = vmatprep.subr.bf16.mxu0 0
  %371 = vmatpush1.bf16.msra.mxu0 0
  %372 = vmatprep.subr.bf16.mxu0 0
  %373 = vmatpush1.bf16.msra.mxu0 0
  %374 = vmatprep.subr.bf16.mxu0 0
  %375 = vmatpush1.bf16.msra.mxu0 0
  %376 = vmatprep.subr.bf16.mxu0 0
  %377 = vmatpush1.bf16.msra.mxu0 0
  %378 = vmatprep.mubr.bf16.mxu0 0
  %379 = vmatmul.mubr.bf16.gmra.mrb[0].mxu0 %v344
  %v380 = vpop.f32.mrb[0].mxu0
  %v381 = vadd.f32 %v332, %v380
  %v382 = vpop.f32.mrb[0].mxu0
  %v383 = vpop.f32.mrb[0].mxu0
  %v384 = vpop.f32.mrb[0].mxu0
  %385 = vdwg.mxu0
  %v386 = vld [vmem:[%s6] sm:$0x1]
  %v388 = vlaneseq
  %v389 = vshrl.u32 %v388, 7
  %v390 = vsub.s32 0, %v389
  %v391 = vrot.slane %v386, %v390
  %v393 = vadd.f32 %v381, %v391
  %v394 = vxor.u32 %v393, 2147483648
  %v395 = vmul.f32 %v394, 1.442695
  %v396 = vpow.pop %v395
  %v397 = vadd.f32 %v396, 1.0
  %v398 = vrcp.pop %v397
  %v399 = vmul.f32 1.0, %v398
  %v400 = vtanh.pop %v393
  %v401 = vld [vmem:[#allocation5] sm:$0x3]
  %403 = vrot.lane.b32.xlu0 %v401, 32
  %v404 = vpop.permute.xlu0 %403
  %v406 = vmul.f32 %v399, %v404
  %408 = vrot.lane.b32.xlu0 %v400, 64
  %v409 = vpop.permute.xlu0 %408
  %v411 = vmul.f32 %v399, %v409
  %413 = vrot.lane.b32.xlu0 %v411, 32
  %v414 = vpop.permute.xlu0 %413
  %v416 = vadd.f32 %v406, %v414
  %v417 = vtanh.pop %v416
  %419 = vrot.lane.b32.xlu0 %v417, 64
  %v420 = vpop.permute.xlu0 %419
  %v422 = vmul.f32 %v399, %v420
  %v423 = vsel %vm270, 1, 0
  %424 = vset.pattern.permute.xlu0 0
  %425 = vperm.xlu0 %424, %v423
  %v426 = vpop.permute.xlu0 %425
  %vm427 = vcmp.eq.s32.totalorder %v426, 1
  %v428 = vsel %vm427, %v416, %v404
  %430 = vrot.lane.b32.xlu0 %v428, 96
  %v431 = vpop.permute.xlu0 %430
  %433 = vst.msk [vmem:[#allocation5] sm:$0x3] %vm249, %v431
  %v434 = vld [vmem:[#allocation4] sm:$0x3]
  %436 = vrot.lane.b32.xlu0 %v434, 96
  %v437 = vpop.permute.xlu0 %436
  %v439 = vsel %vm427, %v422, %v437
  %441 = vrot.lane.b32.xlu0 %v439, 32
  %v442 = vpop.permute.xlu0 %441
  %444 = vst.msk [vmem:[#allocation4] sm:$0x3] %vm249, %v442
  %v445 = vsel %vm427, %v422, 0.0
  %447 = vrot.lane.b32.xlu0 %v445, 32
  %v448 = vpop.permute.xlu0 %447
  %s450 = scalar_lea.vmem %s67, 14
  %451 = vst.msk [vmem:[%s450] sm:$0x3] %vm249, %v448
  %s452 = sadd.s32 %s81, 1
  %v453 = vstv %s452
  %vm454 = vcmp.lt.s32.totalorder %v453, %v80
  %s455 = scalar_lea.vmem %s0, 2
  %v456 = vld [vmem:[%s455] sm:$0x3]
  %v457 = vpack.c.bf16 %v456, %v456
  %v458 = vld [vmem:[%s3] sm:$0xf]
  %v459 = vld [vmem:[%s3 + $0x4] sm:$0xf]
  %v460 = vld [vmem:[#allocation2] sm:$0x3]
  %v461 = vpack.c.bf16 %v460, %v460
  %v462 = vld [vmem:[%s7] sm:$0xf]
  %v463 = vld [vmem:[%s7 + $0x4] sm:$0xf]
  %v464 = vld [vmem:[%s7 + $0x8] sm:$0xf]
  %v465 = vld [vmem:[%s7 + $0xc] sm:$0xf]
  %v470 = vunpack.c.l.b16 %v462
  %v471 = vunpack.c.l.b16 %v463
  %v472 = vunpack.c.l.b16 %v464
  %v473 = vunpack.c.l.b16 %v465
  %v474 = vpack.c.b16 %v471, %v470
  %v475 = vpack.c.b16 %v473, %v472
  %v479 = vsel %vm108, %v461, 0
  %481 = vmatprep.subr.bf16.mxu0 0
  %482 = vmatpush1.bf16.msra.mxu0 %v474
  %483 = vmatprep.subr.bf16.mxu0 0
  %484 = vmatpush1.bf16.msra.mxu0 %v475
  %485 = vmatprep.subr.bf16.mxu0 0
  %486 = vmatpush1.bf16.msra.mxu0 0
  %487 = vmatprep.subr.bf16.mxu0 0
  %488 = vmatpush1.bf16.msra.mxu0 0
  %489 = vmatprep.subr.bf16.mxu0 0
  %490 = vmatpush1.bf16.msra.mxu0 0
  %491 = vmatprep.subr.bf16.mxu0 0
  %492 = vmatpush1.bf16.msra.mxu0 0
  %493 = vmatprep.subr.bf16.mxu0 0
  %494 = vmatpush1.bf16.msra.mxu0 0
  %495 = vmatprep.subr.bf16.mxu0 0
  %496 = vmatpush1.bf16.msra.mxu0 0
  %497 = vmatprep.subr.bf16.mxu0 0
  %498 = vmatpush1.bf16.msra.mxu0 0
  %499 = vmatprep.subr.bf16.mxu0 0
  %500 = vmatpush1.bf16.msra.mxu0 0
  %501 = vmatprep.subr.bf16.mxu0 0
  %502 = vmatpush1.bf16.msra.mxu0 0
  %503 = vmatprep.subr.bf16.mxu0 0
  %504 = vmatpush1.bf16.msra.mxu0 0
  %505 = vmatprep.subr.bf16.mxu0 0
  %506 = vmatpush1.bf16.msra.mxu0 0
  %507 = vmatprep.subr.bf16.mxu0 0
  %508 = vmatpush1.bf16.msra.mxu0 0
  %509 = vmatprep.subr.bf16.mxu0 0
  %510 = vmatpush1.bf16.msra.mxu0 0
  %511 = vmatprep.subr.bf16.mxu0 0
  %512 = vmatpush1.bf16.msra.mxu0 0
  %513 = vmatprep.mubr.bf16.mxu0 0
  %514 = vmatmul.mubr.bf16.gmra.mrb[0].mxu0 %v479
  %v515 = vpop.f32.mrb[0].mxu0
  %v516 = vadd.f32 0.0, %v515
  %v517 = vpop.f32.mrb[0].mxu0
  %v518 = vpop.f32.mrb[0].mxu0
  %v519 = vpop.f32.mrb[0].mxu0
  %520 = vdwg.mxu0
  %v523 = vunpack.c.l.b16 %v458
  %v524 = vunpack.c.l.b16 %v459
  %v525 = vpack.c.b16 %v524, %v523
  %v528 = vsel %vm158, %v457, 0
  %530 = vmatprep.subr.bf16.mxu0 0
  %531 = vmatpush1.bf16.msra.mxu0 %v525
  %532 = vmatprep.subr.bf16.mxu0 0
  %533 = vmatpush1.bf16.msra.mxu0 0
  %534 = vmatprep.subr.bf16.mxu0 0
  %535 = vmatpush1.bf16.msra.mxu0 0
  %536 = vmatprep.subr.bf16.mxu0 0
  %537 = vmatpush1.bf16.msra.mxu0 0
  %538 = vmatprep.subr.bf16.mxu0 0
  %539 = vmatpush1.bf16.msra.mxu0 0
  %540 = vmatprep.subr.bf16.mxu0 0
  %541 = vmatpush1.bf16.msra.mxu0 0
  %542 = vmatprep.subr.bf16.mxu0 0
  %543 = vmatpush1.bf16.msra.mxu0 0
  %544 = vmatprep.subr.bf16.mxu0 0
  %545 = vmatpush1.bf16.msra.mxu0 0
  %546 = vmatprep.subr.bf16.mxu0 0
  %547 = vmatpush1.bf16.msra.mxu0 0
  %548 = vmatprep.subr.bf16.mxu0 0
  %549 = vmatpush1.bf16.msra.mxu0 0
  %550 = vmatprep.subr.bf16.mxu0 0
  %551 = vmatpush1.bf16.msra.mxu0 0
  %552 = vmatprep.subr.bf16.mxu0 0
  %553 = vmatpush1.bf16.msra.mxu0 0
  %554 = vmatprep.subr.bf16.mxu0 0
  %555 = vmatpush1.bf16.msra.mxu0 0
  %556 = vmatprep.subr.bf16.mxu0 0
  %557 = vmatpush1.bf16.msra.mxu0 0
  %558 = vmatprep.subr.bf16.mxu0 0
  %559 = vmatpush1.bf16.msra.mxu0 0
  %560 = vmatprep.subr.bf16.mxu0 0
  %561 = vmatpush1.bf16.msra.mxu0 0
  %562 = vmatprep.mubr.bf16.mxu0 0
  %563 = vmatmul.mubr.bf16.gmra.mrb[0].mxu0 %v528
  %v564 = vpop.f32.mrb[0].mxu0
  %v565 = vadd.f32 %v516, %v564
  %v566 = vpop.f32.mrb[0].mxu0
  %v567 = vpop.f32.mrb[0].mxu0
  %v568 = vpop.f32.mrb[0].mxu0
  %569 = vdwg.mxu0
  %v570 = vld [vmem:[%s5] sm:$0x1]
  %v572 = vlaneseq
  %v573 = vshrl.u32 %v572, 7
  %v574 = vsub.s32 0, %v573
  %v575 = vrot.slane %v570, %v574
  %v577 = vadd.f32 %v565, %v575
  %v578 = vxor.u32 %v577, 2147483648
  %v579 = vmul.f32 %v578, 1.442695
  %v580 = vpow.pop %v579
  %v581 = vadd.f32 %v580, 1.0
  %v582 = vrcp.pop %v581
  %v583 = vmul.f32 1.0, %v582
  %v584 = vtanh.pop %v577
  %v585 = vld [vmem:[#allocation3] sm:$0x3]
  %587 = vrot.lane.b32.xlu0 %v585, 32
  %v588 = vpop.permute.xlu0 %587
  %v590 = vmul.f32 %v583, %v588
  %592 = vrot.lane.b32.xlu0 %v584, 64
  %v593 = vpop.permute.xlu0 %592
  %v595 = vmul.f32 %v583, %v593
  %597 = vrot.lane.b32.xlu0 %v595, 32
  %v598 = vpop.permute.xlu0 %597
  %v600 = vadd.f32 %v590, %v598
  %v601 = vtanh.pop %v600
  %603 = vrot.lane.b32.xlu0 %v601, 64
  %v604 = vpop.permute.xlu0 %603
  %v606 = vmul.f32 %v583, %v604
  %v607 = vsel %vm454, 1, 0
  %608 = vset.pattern.permute.xlu0 0
  %609 = vperm.xlu0 %608, %v607
  %v610 = vpop.permute.xlu0 %609
  %vm611 = vcmp.eq.s32.totalorder %v610, 1
  %v612 = vsel %vm611, %v600, %v588
  %614 = vrot.lane.b32.xlu0 %v612, 96
  %v615 = vpop.permute.xlu0 %614
  %617 = vst.msk [vmem:[#allocation3] sm:$0x3] %vm249, %v615
  %v618 = vld [vmem:[#allocation2] sm:$0x3]
  %620 = vrot.lane.b32.xlu0 %v618, 96
  %v621 = vpop.permute.xlu0 %620
  %v623 = vsel %vm611, %v606, %v621
  %625 = vrot.lane.b32.xlu0 %v623, 32
  %v626 = vpop.permute.xlu0 %625
  %628 = vst.msk [vmem:[#allocation2] sm:$0x3] %vm249, %v626
  %v629 = vsel %vm611, %v606, 0.0
  %631 = vrot.lane.b32.xlu0 %v629, 32
  %v632 = vpop.permute.xlu0 %631
  %s634 = scalar_lea.vmem %s9, 2
  %635 = vst.msk [vmem:[%s634] sm:$0x3] %vm249, %v632
  %s636 = sadd.s32 %s83, 6
  %v637 = vstv %s636
  %vm638 = vcmp.lt.s32.totalorder %v637, %v80
  %s639 = scalar_lea.vmem %s59, 12
  %v640 = vld [vmem:[%s639] sm:$0x3]
  %v641 = vpack.c.bf16 %v640, %v640
  %v642 = vld [vmem:[%s4] sm:$0xf]
  %v643 = vld [vmem:[%s4 + $0x4] sm:$0xf]
  %v644 = vld [vmem:[#allocation4] sm:$0x3]
  %v645 = vpack.c.bf16 %v644, %v644
  %v646 = vld [vmem:[%s8] sm:$0xf]
  %v647 = vld [vmem:[%s8 + $0x4] sm:$0xf]
  %v648 = vld [vmem:[%s8 + $0x8] sm:$0xf]
  %v649 = vld [vmem:[%s8 + $0xc] sm:$0xf]
  %v654 = vunpack.c.l.b16 %v646
  %v655 = vunpack.c.l.b16 %v647
  %v656 = vunpack.c.l.b16 %v648
  %v657 = vunpack.c.l.b16 %v649
  %v658 = vpack.c.b16 %v655, %v654
  %v659 = vpack.c.b16 %v657, %v656
  %v663 = vsel %vm108, %v645, 0
  %665 = vmatprep.subr.bf16.mxu0 0
  %666 = vmatpush1.bf16.msra.mxu0 %v658
  %667 = vmatprep.subr.bf16.mxu0 0
  %668 = vmatpush1.bf16.msra.mxu0 %v659
  %669 = vmatprep.subr.bf16.mxu0 0
  %670 = vmatpush1.bf16.msra.mxu0 0
  %671 = vmatprep.subr.bf16.mxu0 0
  %672 = vmatpush1.bf16.msra.mxu0 0
  %673 = vmatprep.subr.bf16.mxu0 0
  %674 = vmatpush1.bf16.msra.mxu0 0
  %675 = vmatprep.subr.bf16.mxu0 0
  %676 = vmatpush1.bf16.msra.mxu0 0
  %677 = vmatprep.subr.bf16.mxu0 0
  %678 = vmatpush1.bf16.msra.mxu0 0
  %679 = vmatprep.subr.bf16.mxu0 0
  %680 = vmatpush1.bf16.msra.mxu0 0
  %681 = vmatprep.subr.bf16.mxu0 0
  %682 = vmatpush1.bf16.msra.mxu0 0
  %683 = vmatprep.subr.bf16.mxu0 0
  %684 = vmatpush1.bf16.msra.mxu0 0
  %685 = vmatprep.subr.bf16.mxu0 0
  %686 = vmatpush1.bf16.msra.mxu0 0
  %687 = vmatprep.subr.bf16.mxu0 0
  %688 = vmatpush1.bf16.msra.mxu0 0
  %689 = vmatprep.subr.bf16.mxu0 0
  %690 = vmatpush1.bf16.msra.mxu0 0
  %691 = vmatprep.subr.bf16.mxu0 0
  %692 = vmatpush1.bf16.msra.mxu0 0
  %693 = vmatprep.subr.bf16.mxu0 0
  %694 = vmatpush1.bf16.msra.mxu0 0
  %695 = vmatprep.subr.bf16.mxu0 0
  %696 = vmatpush1.bf16.msra.mxu0 0
  %697 = vmatprep.mubr.bf16.mxu0 0
  %698 = vmatmul.mubr.bf16.gmra.mrb[0].mxu0 %v663
  %v699 = vpop.f32.mrb[0].mxu0
  %v700 = vadd.f32 0.0, %v699
  %v701 = vpop.f32.mrb[0].mxu0
  %v702 = vpop.f32.mrb[0].mxu0
  %v703 = vpop.f32.mrb[0].mxu0
  %704 = vdwg.mxu0
  %v707 = vunpack.c.l.b16 %v642
  %v708 = vunpack.c.l.b16 %v643
  %v709 = vpack.c.b16 %v708, %v707
  %v712 = vsel %vm158, %v641, 0
  %714 = vmatprep.subr.bf16.mxu0 0
  %715 = vmatpush1.bf16.msra.mxu0 %v709
  %716 = vmatprep.subr.bf16.mxu0 0
  %717 = vmatpush1.bf16.msra.mxu0 0
  %718 = vmatprep.subr.bf16.mxu0 0
  %719 = vmatpush1.bf16.msra.mxu0 0
  %720 = vmatprep.subr.bf16.mxu0 0
  %721 = vmatpush1.bf16.msra.mxu0 0
  %722 = vmatprep.subr.bf16.mxu0 0
  %723 = vmatpush1.bf16.msra.mxu0 0
  %724 = vmatprep.subr.bf16.mxu0 0
  %725 = vmatpush1.bf16.msra.mxu0 0
  %726 = vmatprep.subr.bf16.mxu0 0
  %727 = vmatpush1.bf16.msra.mxu0 0
  %728 = vmatprep.subr.bf16.mxu0 0
  %729 = vmatpush1.bf16.msra.mxu0 0
  %730 = vmatprep.subr.bf16.mxu0 0
  %731 = vmatpush1.bf16.msra.mxu0 0
  %732 = vmatprep.subr.bf16.mxu0 0
  %733 = vmatpush1.bf16.msra.mxu0 0
  %734 = vmatprep.subr.bf16.mxu0 0
  %735 = vmatpush1.bf16.msra.mxu0 0
  %736 = vmatprep.subr.bf16.mxu0 0
  %737 = vmatpush1.bf16.msra.mxu0 0
  %738 = vmatprep.subr.bf16.mxu0 0
  %739 = vmatpush1.bf16.msra.mxu0 0
  %740 = vmatprep.subr.bf16.mxu0 0
  %741 = vmatpush1.bf16.msra.mxu0 0
  %742 = vmatprep.subr.bf16.mxu0 0
  %743 = vmatpush1.bf16.msra.mxu0 0
  %744 = vmatprep.subr.bf16.mxu0 0
  %745 = vmatpush1.bf16.msra.mxu0 0
  %746 = vmatprep.mubr.bf16.mxu0 0
  %747 = vmatmul.mubr.bf16.gmra.mrb[0].mxu0 %v712
  %v748 = vpop.f32.mrb[0].mxu0
  %v749 = vadd.f32 %v700, %v748
  %v750 = vpop.f32.mrb[0].mxu0
  %v751 = vpop.f32.mrb[0].mxu0
  %v752 = vpop.f32.mrb[0].mxu0
  %753 = vdwg.mxu0
  %v754 = vld [vmem:[%s6] sm:$0x1]
  %v756 = vlaneseq
  %v757 = vshrl.u32 %v756, 7
  %v758 = vsub.s32 0, %v757
  %v759 = vrot.slane %v754, %v758
  %v761 = vadd.f32 %v749, %v759
  %v762 = vxor.u32 %v761, 2147483648
  %v763 = vmul.f32 %v762, 1.442695
  %v764 = vpow.pop %v763
  %v765 = vadd.f32 %v764, 1.0
  %v766 = vrcp.pop %v765
  %v767 = vmul.f32 1.0, %v766
  %v768 = vtanh.pop %v761
  %v769 = vld [vmem:[#allocation5] sm:$0x3]
  %771 = vrot.lane.b32.xlu0 %v769, 32
  %v772 = vpop.permute.xlu0 %771
  %v774 = vmul.f32 %v767, %v772
  %776 = vrot.lane.b32.xlu0 %v768, 64
  %v777 = vpop.permute.xlu0 %776
  %v779 = vmul.f32 %v767, %v777
  %781 = vrot.lane.b32.xlu0 %v779, 32
  %v782 = vpop.permute.xlu0 %781
  %v784 = vadd.f32 %v774, %v782
  %v785 = vtanh.pop %v784
  %787 = vrot.lane.b32.xlu0 %v785, 64
  %v788 = vpop.permute.xlu0 %787
  %v790 = vmul.f32 %v767, %v788
  %v791 = vsel %vm638, 1, 0
  %792 = vset.pattern.permute.xlu0 0
  %793 = vperm.xlu0 %792, %v791
  %v794 = vpop.permute.xlu0 %793
  %vm795 = vcmp.eq.s32.totalorder %v794, 1
  %v796 = vsel %vm795, %v784, %v772
  %798 = vrot.lane.b32.xlu0 %v796, 96
  %v799 = vpop.permute.xlu0 %798
  %801 = vst.msk [vmem:[#allocation5] sm:$0x3] %vm249, %v799
  %v802 = vld [vmem:[#allocation4] sm:$0x3]
  %804 = vrot.lane.b32.xlu0 %v802, 96
  %v805 = vpop.permute.xlu0 %804
  %v807 = vsel %vm795, %v790, %v805
  %809 = vrot.lane.b32.xlu0 %v807, 32
  %v810 = vpop.permute.xlu0 %809
  %812 = vst.msk [vmem:[#allocation4] sm:$0x3] %vm249, %v810
  %v813 = vsel %vm795, %v790, 0.0
  %815 = vrot.lane.b32.xlu0 %v813, 32
  %v816 = vpop.permute.xlu0 %815
  %s818 = scalar_lea.vmem %s67, 12
  %819 = vst.msk [vmem:[%s818] sm:$0x3] %vm249, %v816
  %s820 = sadd.s32 %s81, 2
  %v821 = vstv %s820
  %vm822 = vcmp.lt.s32.totalorder %v821, %v80
  %s823 = scalar_lea.vmem %s0, 4
  %v824 = vld [vmem:[%s823] sm:$0x3]
  %v825 = vpack.c.bf16 %v824, %v824
  %v826 = vld [vmem:[%s3] sm:$0xf]
  %v827 = vld [vmem:[%s3 + $0x4] sm:$0xf]
  %v828 = vld [vmem:[#allocation2] sm:$0x3]
  %v829 = vpack.c.bf16 %v828, %v828
  %v830 = vld [vmem:[%s7] sm:$0xf]
  %v831 = vld [vmem:[%s7 + $0x4] sm:$0xf]
  %v832 = vld [vmem:[%s7 + $0x8] sm:$0xf]
  %v833 = vld [vmem:[%s7 + $0xc] sm:$0xf]
  %v838 = vunpack.c.l.b16 %v830
  %v839 = vunpack.c.l.b16 %v831
  %v840 = vunpack.c.l.b16 %v832
  %v841 = vunpack.c.l.b16 %v833
  %v842 = vpack.c.b16 %v839, %v838
  %v843 = vpack.c.b16 %v841, %v840
  %v847 = vsel %vm108, %v829, 0
  %849 = vmatprep.subr.bf16.mxu0 0
  %850 = vmatpush1.bf16.msra.mxu0 %v842
  %851 = vmatprep.subr.bf16.mxu0 0
  %852 = vmatpush1.bf16.msra.mxu0 %v843
  %853 = vmatprep.subr.bf16.mxu0 0
  %854 = vmatpush1.bf16.msra.mxu0 0
  %855 = vmatprep.subr.bf16.mxu0 0
  %856 = vmatpush1.bf16.msra.mxu0 0
  %857 = vmatprep.subr.bf16.mxu0 0
  %858 = vmatpush1.bf16.msra.mxu0 0
  %859 = vmatprep.subr.bf16.mxu0 0
  %860 = vmatpush1.bf16.msra.mxu0 0
  %861 = vmatprep.subr.bf16.mxu0 0
  %862 = vmatpush1.bf16.msra.mxu0 0
  %863 = vmatprep.subr.bf16.mxu0 0
  %864 = vmatpush1.bf16.msra.mxu0 0
  %865 = vmatprep.subr.bf16.mxu0 0
  %866 = vmatpush1.bf16.msra.mxu0 0
  %867 = vmatprep.subr.bf16.mxu0 0
  %868 = vmatpush1.bf16.msra.mxu0 0
  %869 = vmatprep.subr.bf16.mxu0 0
  %870 = vmatpush1.bf16.msra.mxu0 0
  %871 = vmatprep.subr.bf16.mxu0 0
  %872 = vmatpush1.bf16.msra.mxu0 0
  %873 = vmatprep.subr.bf16.mxu0 0
  %874 = vmatpush1.bf16.msra.mxu0 0
  %875 = vmatprep.subr.bf16.mxu0 0
  %876 = vmatpush1.bf16.msra.mxu0 0
  %877 = vmatprep.subr.bf16.mxu0 0
  %878 = vmatpush1.bf16.msra.mxu0 0
  %879 = vmatprep.subr.bf16.mxu0 0
  %880 = vmatpush1.bf16.msra.mxu0 0
  %881 = vmatprep.mubr.bf16.mxu0 0
  %882 = vmatmul.mubr.bf16.gmra.mrb[0].mxu0 %v847
  %v883 = vpop.f32.mrb[0].mxu0
  %v884 = vadd.f32 0.0, %v883
  %v885 = vpop.f32.mrb[0].mxu0
  %v886 = vpop.f32.mrb[0].mxu0
  %v887 = vpop.f32.mrb[0].mxu0
  %888 = vdwg.mxu0
  %v891 = vunpack.c.l.b16 %v826
  %v892 = vunpack.c.l.b16 %v827
  %v893 = vpack.c.b16 %v892, %v891
  %v896 = vsel %vm158, %v825, 0
  %898 = vmatprep.subr.bf16.mxu0 0
  %899 = vmatpush1.bf16.msra.mxu0 %v893
  %900 = vmatprep.subr.bf16.mxu0 0
  %901 = vmatpush1.bf16.msra.mxu0 0
  %902 = vmatprep.subr.bf16.mxu0 0
  %903 = vmatpush1.bf16.msra.mxu0 0
  %904 = vmatprep.subr.bf16.mxu0 0
  %905 = vmatpush1.bf16.msra.mxu0 0
  %906 = vmatprep.subr.bf16.mxu0 0
  %907 = vmatpush1.bf16.msra.mxu0 0
  %908 = vmatprep.subr.bf16.mxu0 0
  %909 = vmatpush1.bf16.msra.mxu0 0
  %910 = vmatprep.subr.bf16.mxu0 0
  %911 = vmatpush1.bf16.msra.mxu0 0
  %912 = vmatprep.subr.bf16.mxu0 0
  %913 = vmatpush1.bf16.msra.mxu0 0
  %914 = vmatprep.subr.bf16.mxu0 0
  %915 = vmatpush1.bf16.msra.mxu0 0
  %916 = vmatprep.subr.bf16.mxu0 0
  %917 = vmatpush1.bf16.msra.mxu0 0
  %918 = vmatprep.subr.bf16.mxu0 0
  %919 = vmatpush1.bf16.msra.mxu0 0
  %920 = vmatprep.subr.bf16.mxu0 0
  %921 = vmatpush1.bf16.msra.mxu0 0
  %922 = vmatprep.subr.bf16.mxu0 0
  %923 = vmatpush1.bf16.msra.mxu0 0
  %924 = vmatprep.subr.bf16.mxu0 0
  %925 = vmatpush1.bf16.msra.mxu0 0
  %926 = vmatprep.subr.bf16.mxu0 0
  %927 = vmatpush1.bf16.msra.mxu0 0
  %928 = vmatprep.subr.bf16.mxu0 0
  %929 = vmatpush1.bf16.msra.mxu0 0
  %930 = vmatprep.mubr.bf16.mxu0 0
  %931 = vmatmul.mubr.bf16.gmra.mrb[0].mxu0 %v896
  %v932 = vpop.f32.mrb[0].mxu0
  %v933 = vadd.f32 %v884, %v932
  %v934 = vpop.f32.mrb[0].mxu0
  %v935 = vpop.f32.mrb[0].mxu0
  %v936 = vpop.f32.mrb[0].mxu0
  %937 = vdwg.mxu0
  %v938 = vld [vmem:[%s5] sm:$0x1]
  %v940 = vlaneseq
  %v941 = vshrl.u32 %v940, 7
  %v942 = vsub.s32 0, %v941
  %v943 = vrot.slane %v938, %v942
  %v945 = vadd.f32 %v933, %v943
  %v946 = vxor.u32 %v945, 2147483648
  %v947 = vmul.f32 %v946, 1.442695
  %v948 = vpow.pop %v947
  %v949 = vadd.f32 %v948, 1.0
  %v950 = vrcp.pop %v949
  %v951 = vmul.f32 1.0, %v950
  %v952 = vtanh.pop %v945
  %v953 = vld [vmem:[#allocation3] sm:$0x3]
  %955 = vrot.lane.b32.xlu0 %v953, 32
  %v956 = vpop.permute.xlu0 %955
  %v958 = vmul.f32 %v951, %v956
  %960 = vrot.lane.b32.xlu0 %v952, 64
  %v961 = vpop.permute.xlu0 %960
  %v963 = vmul.f32 %v951, %v961
  %965 = vrot.lane.b32.xlu0 %v963, 32
  %v966 = vpop.permute.xlu0 %965
  %v968 = vadd.f32 %v958, %v966
  %v969 = vtanh.pop %v968
  %971 = vrot.lane.b32.xlu0 %v969, 64
  %v972 = vpop.permute.xlu0 %971
  %v974 = vmul.f32 %v951, %v972
  %v975 = vsel %vm822, 1, 0
  %976 = vset.pattern.permute.xlu0 0
  %977 = vperm.xlu0 %976, %v975
  %v978 = vpop.permute.xlu0 %977
  %vm979 = vcmp.eq.s32.totalorder %v978, 1
  %v980 = vsel %vm979, %v968, %v956
  %982 = vrot.lane.b32.xlu0 %v980, 96
  %v983 = vpop.permute.xlu0 %982
  %985 = vst.msk [vmem:[#allocation3] sm:$0x3] %vm249, %v983
  %v986 = vld [vmem:[#allocation2] sm:$0x3]
  %988 = vrot.lane.b32.xlu0 %v986, 96
  %v989 = vpop.permute.xlu0 %988
  %v991 = vsel %vm979, %v974, %v989
  %993 = vrot.lane.b32.xlu0 %v991, 32
  %v994 = vpop.permute.xlu0 %993
  %996 = vst.msk [vmem:[#allocation2] sm:$0x3] %vm249, %v994
  %v997 = vsel %vm979, %v974, 0.0
  %999 = vrot.lane.b32.xlu0 %v997, 32
  %v1000 = vpop.permute.xlu0 %999
  %s1002 = scalar_lea.vmem %s9, 4
  %1003 = vst.msk [vmem:[%s1002] sm:$0x3] %vm249, %v1000
  %s1004 = sadd.s32 %s83, 5
  %v1005 = vstv %s1004
  %vm1006 = vcmp.lt.s32.totalorder %v1005, %v80
  %s1007 = scalar_lea.vmem %s59, 10
  %v1008 = vld [vmem:[%s1007] sm:$0x3]
  %v1009 = vpack.c.bf16 %v1008, %v1008
  %v1010 = vld [vmem:[%s4] sm:$0xf]
  %v1011 = vld [vmem:[%s4 + $0x4] sm:$0xf]
  %v1012 = vld [vmem:[#allocation4] sm:$0x3]
  %v1013 = vpack.c.bf16 %v1012, %v1012
  %v1014 = vld [vmem:[%s8] sm:$0xf]
  %v1015 = vld [vmem:[%s8 + $0x4] sm:$0xf]
  %v1016 = vld [vmem:[%s8 + $0x8] sm:$0xf]
  %v1017 = vld [vmem:[%s8 + $0xc] sm:$0xf]
  %v1022 = vunpack.c.l.b16 %v1014
  %v1023 = vunpack.c.l.b16 %v1015
  %v1024 = vunpack.c.l.b16 %v1016
  %v1025 = vunpack.c.l.b16 %v1017
  %v1026 = vpack.c.b16 %v1023, %v1022
  %v1027 = vpack.c.b16 %v1025, %v1024
  %v1031 = vsel %vm108, %v1013, 0
  %1033 = vmatprep.subr.bf16.mxu0 0
  %1034 = vmatpush1.bf16.msra.mxu0 %v1026
  %1035 = vmatprep.subr.bf16.mxu0 0
  %1036 = vmatpush1.bf16.msra.mxu0 %v1027
  %1037 = vmatprep.subr.bf16.mxu0 0
  %1038 = vmatpush1.bf16.msra.mxu0 0
  %1039 = vmatprep.subr.bf16.mxu0 0
  %1040 = vmatpush1.bf16.msra.mxu0 0
  %1041 = vmatprep.subr.bf16.mxu0 0
  %1042 = vmatpush1.bf16.msra.mxu0 0
  %1043 = vmatprep.subr.bf16.mxu0 0
  %1044 = vmatpush1.bf16.msra.mxu0 0
  %1045 = vmatprep.subr.bf16.mxu0 0
  %1046 = vmatpush1.bf16.msra.mxu0 0
  %1047 = vmatprep.subr.bf16.mxu0 0
  %1048 = vmatpush1.bf16.msra.mxu0 0
  %1049 = vmatprep.subr.bf16.mxu0 0
  %1050 = vmatpush1.bf16.msra.mxu0 0
  %1051 = vmatprep.subr.bf16.mxu0 0
  %1052 = vmatpush1.bf16.msra.mxu0 0
  %1053 = vmatprep.subr.bf16.mxu0 0
  %1054 = vmatpush1.bf16.msra.mxu0 0
  %1055 = vmatprep.subr.bf16.mxu0 0
  %1056 = vmatpush1.bf16.msra.mxu0 0
  %1057 = vmatprep.subr.bf16.mxu0 0
  %1058 = vmatpush1.bf16.msra.mxu0 0
  %1059 = vmatprep.subr.bf16.mxu0 0
  %1060 = vmatpush1.bf16.msra.mxu0 0
  %1061 = vmatprep.subr.bf16.mxu0 0
  %1062 = vmatpush1.bf16.msra.mxu0 0
  %1063 = vmatprep.subr.bf16.mxu0 0
  %1064 = vmatpush1.bf16.msra.mxu0 0
  %1065 = vmatprep.mubr.bf16.mxu0 0
  %1066 = vmatmul.mubr.bf16.gmra.mrb[0].mxu0 %v1031
  %v1067 = vpop.f32.mrb[0].mxu0
  %v1068 = vadd.f32 0.0, %v1067
  %v1069 = vpop.f32.mrb[0].mxu0
  %v1070 = vpop.f32.mrb[0].mxu0
  %v1071 = vpop.f32.mrb[0].mxu0
  %1072 = vdwg.mxu0
  %v1075 = vunpack.c.l.b16 %v1010
  %v1076 = vunpack.c.l.b16 %v1011
  %v1077 = vpack.c.b16 %v1076, %v1075
  %v1080 = vsel %vm158, %v1009, 0
  %1082 = vmatprep.subr.bf16.mxu0 0
  %1083 = vmatpush1.bf16.msra.mxu0 %v1077
  %1084 = vmatprep.subr.bf16.mxu0 0
  %1085 = vmatpush1.bf16.msra.mxu0 0
  %1086 = vmatprep.subr.bf16.mxu0 0
  %1087 = vmatpush1.bf16.msra.mxu0 0
  %1088 = vmatprep.subr.bf16.mxu0 0
  %1089 = vmatpush1.bf16.msra.mxu0 0
  %1090 = vmatprep.subr.bf16.mxu0 0
  %1091 = vmatpush1.bf16.msra.mxu0 0
  %1092 = vmatprep.subr.bf16.mxu0 0
  %1093 = vmatpush1.bf16.msra.mxu0 0
  %1094 = vmatprep.subr.bf16.mxu0 0
  %1095 = vmatpush1.bf16.msra.mxu0 0
  %1096 = vmatprep.subr.bf16.mxu0 0
  %1097 = vmatpush1.bf16.msra.mxu0 0
  %1098 = vmatprep.subr.bf16.mxu0 0
  %1099 = vmatpush1.bf16.msra.mxu0 0
  %1100 = vmatprep.subr.bf16.mxu0 0
  %1101 = vmatpush1.bf16.msra.mxu0 0
  %1102 = vmatprep.subr.bf16.mxu0 0
  %1103 = vmatpush1.bf16.msra.mxu0 0
  %1104 = vmatprep.subr.bf16.mxu0 0
  %1105 = vmatpush1.bf16.msra.mxu0 0
  %1106 = vmatprep.subr.bf16.mxu0 0
  %1107 = vmatpush1.bf16.msra.mxu0 0
  %1108 = vmatprep.subr.bf16.mxu0 0
  %1109 = vmatpush1.bf16.msra.mxu0 0
  %1110 = vmatprep.subr.bf16.mxu0 0
  %1111 = vmatpush1.bf16.msra.mxu0 0
  %1112 = vmatprep.subr.bf16.mxu0 0
  %1113 = vmatpush1.bf16.msra.mxu0 0
  %1114 = vmatprep.mubr.bf16.mxu0 0
  %1115 = vmatmul.mubr.bf16.gmra.mrb[0].mxu0 %v1080
  %v1116 = vpop.f32.mrb[0].mxu0
  %v1117 = vadd.f32 %v1068, %v1116
  %v1118 = vpop.f32.mrb[0].mxu0
  %v1119 = vpop.f32.mrb[0].mxu0
  %v1120 = vpop.f32.mrb[0].mxu0
  %1121 = vdwg.mxu0
  %v1122 = vld [vmem:[%s6] sm:$0x1]
  %v1124 = vlaneseq
  %v1125 = vshrl.u32 %v1124, 7
  %v1126 = vsub.s32 0, %v1125
  %v1127 = vrot.slane %v1122, %v1126
  %v1129 = vadd.f32 %v1117, %v1127
  %v1130 = vxor.u32 %v1129, 2147483648
  %v1131 = vmul.f32 %v1130, 1.442695
  %v1132 = vpow.pop %v1131
  %v1133 = vadd.f32 %v1132, 1.0
  %v1134 = vrcp.pop %v1133
  %v1135 = vmul.f32 1.0, %v1134
  %v1136 = vtanh.pop %v1129
  %v1137 = vld [vmem:[#allocation5] sm:$0x3]
  %1139 = vrot.lane.b32.xlu0 %v1137, 32
  %v1140 = vpop.permute.xlu0 %1139
  %v1142 = vmul.f32 %v1135, %v1140
  %1144 = vrot.lane.b32.xlu0 %v1136, 64
  %v1145 = vpop.permute.xlu0 %1144
  %v1147 = vmul.f32 %v1135, %v1145
  %1149 = vrot.lane.b32.xlu0 %v1147, 32
  %v1150 = vpop.permute.xlu0 %1149
  %v1152 = vadd.f32 %v1142, %v1150
  %v1153 = vtanh.pop %v1152
  %1155 = vrot.lane.b32.xlu0 %v1153, 64
  %v1156 = vpop.permute.xlu0 %1155
  %v1158 = vmul.f32 %v1135, %v1156
  %v1159 = vsel %vm1006, 1, 0
  %1160 = vset.pattern.permute.xlu0 0
  %1161 = vperm.xlu0 %1160, %v1159
  %v1162 = vpop.permute.xlu0 %1161
  %vm1163 = vcmp.eq.s32.totalorder %v1162, 1
  %v1164 = vsel %vm1163, %v1152, %v1140
  %1166 = vrot.lane.b32.xlu0 %v1164, 96
  %v1167 = vpop.permute.xlu0 %1166
  %1169 = vst.msk [vmem:[#allocation5] sm:$0x3] %vm249, %v1167
  %v1170 = vld [vmem:[#allocation4] sm:$0x3]
  %1172 = vrot.lane.b32.xlu0 %v1170, 96
  %v1173 = vpop.permute.xlu0 %1172
  %v1175 = vsel %vm1163, %v1158, %v1173
  %1177 = vrot.lane.b32.xlu0 %v1175, 32
  %v1178 = vpop.permute.xlu0 %1177
  %1180 = vst.msk [vmem:[#allocation4] sm:$0x3] %vm249, %v1178
  %v1181 = vsel %vm1163, %v1158, 0.0
  %1183 = vrot.lane.b32.xlu0 %v1181, 32
  %v1184 = vpop.permute.xlu0 %1183
  %s1186 = scalar_lea.vmem %s67, 10
  %1187 = vst.msk [vmem:[%s1186] sm:$0x3] %vm249, %v1184
  %s1188 = sadd.s32 %s81, 3
  %v1189 = vstv %s1188
  %vm1190 = vcmp.lt.s32.totalorder %v1189, %v80
  %s1191 = scalar_lea.vmem %s0, 6
  %v1192 = vld [vmem:[%s1191] sm:$0x3]
  %v1193 = vpack.c.bf16 %v1192, %v1192
  %v1194 = vld [vmem:[%s3] sm:$0xf]
  %v1195 = vld [vmem:[%s3 + $0x4] sm:$0xf]
  %v1196 = vld [vmem:[#allocation2] sm:$0x3]
  %v1197 = vpack.c.bf16 %v1196, %v1196
  %v1198 = vld [vmem:[%s7] sm:$0xf]
  %v1199 = vld [vmem:[%s7 + $0x4] sm:$0xf]
  %v1200 = vld [vmem:[%s7 + $0x8] sm:$0xf]
  %v1201 = vld [vmem:[%s7 + $0xc] sm:$0xf]
  %v1206 = vunpack.c.l.b16 %v1198
  %v1207 = vunpack.c.l.b16 %v1199
  %v1208 = vunpack.c.l.b16 %v1200
  %v1209 = vunpack.c.l.b16 %v1201
  %v1210 = vpack.c.b16 %v1207, %v1206
  %v1211 = vpack.c.b16 %v1209, %v1208
  %v1215 = vsel %vm108, %v1197, 0
  %1217 = vmatprep.subr.bf16.mxu0 0
  %1218 = vmatpush1.bf16.msra.mxu0 %v1210
  %1219 = vmatprep.subr.bf16.mxu0 0
  %1220 = vmatpush1.bf16.msra.mxu0 %v1211
  %1221 = vmatprep.subr.bf16.mxu0 0
  %1222 = vmatpush1.bf16.msra.mxu0 0
  %1223 = vmatprep.subr.bf16.mxu0 0
  %1224 = vmatpush1.bf16.msra.mxu0 0
  %1225 = vmatprep.subr.bf16.mxu0 0
  %1226 = vmatpush1.bf16.msra.mxu0 0
  %1227 = vmatprep.subr.bf16.mxu0 0
  %1228 = vmatpush1.bf16.msra.mxu0 0
  %1229 = vmatprep.subr.bf16.mxu0 0
  %1230 = vmatpush1.bf16.msra.mxu0 0
  %1231 = vmatprep.subr.bf16.mxu0 0
  %1232 = vmatpush1.bf16.msra.mxu0 0
  %1233 = vmatprep.subr.bf16.mxu0 0
  %1234 = vmatpush1.bf16.msra.mxu0 0
  %1235 = vmatprep.subr.bf16.mxu0 0
  %1236 = vmatpush1.bf16.msra.mxu0 0
  %1237 = vmatprep.subr.bf16.mxu0 0
  %1238 = vmatpush1.bf16.msra.mxu0 0
  %1239 = vmatprep.subr.bf16.mxu0 0
  %1240 = vmatpush1.bf16.msra.mxu0 0
  %1241 = vmatprep.subr.bf16.mxu0 0
  %1242 = vmatpush1.bf16.msra.mxu0 0
  %1243 = vmatprep.subr.bf16.mxu0 0
  %1244 = vmatpush1.bf16.msra.mxu0 0
  %1245 = vmatprep.subr.bf16.mxu0 0
  %1246 = vmatpush1.bf16.msra.mxu0 0
  %1247 = vmatprep.subr.bf16.mxu0 0
  %1248 = vmatpush1.bf16.msra.mxu0 0
  %1249 = vmatprep.mubr.bf16.mxu0 0
  %1250 = vmatmul.mubr.bf16.gmra.mrb[0].mxu0 %v1215
  %v1251 = vpop.f32.mrb[0].mxu0
  %v1252 = vadd.f32 0.0, %v1251
  %v1253 = vpop.f32.mrb[0].mxu0
  %v1254 = vpop.f32.mrb[0].mxu0
  %v1255 = vpop.f32.mrb[0].mxu0
  %1256 = vdwg.mxu0
  %v1259 = vunpack.c.l.b16 %v1194
  %v1260 = vunpack.c.l.b16 %v1195
  %v1261 = vpack.c.b16 %v1260, %v1259
  %v1264 = vsel %vm158, %v1193, 0
  %1266 = vmatprep.subr.bf16.mxu0 0
  %1267 = vmatpush1.bf16.msra.mxu0 %v1261
  %1268 = vmatprep.subr.bf16.mxu0 0
  %1269 = vmatpush1.bf16.msra.mxu0 0
  %1270 = vmatprep.subr.bf16.mxu0 0
  %1271 = vmatpush1.bf16.msra.mxu0 0
  %1272 = vmatprep.subr.bf16.mxu0 0
  %1273 = vmatpush1.bf16.msra.mxu0 0
  %1274 = vmatprep.subr.bf16.mxu0 0
  %1275 = vmatpush1.bf16.msra.mxu0 0
  %1276 = vmatprep.subr.bf16.mxu0 0
  %1277 = vmatpush1.bf16.msra.mxu0 0
  %1278 = vmatprep.subr.bf16.mxu0 0
  %1279 = vmatpush1.bf16.msra.mxu0 0
  %1280 = vmatprep.subr.bf16.mxu0 0
  %1281 = vmatpush1.bf16.msra.mxu0 0
  %1282 = vmatprep.subr.bf16.mxu0 0
  %1283 = vmatpush1.bf16.msra.mxu0 0
  %1284 = vmatprep.subr.bf16.mxu0 0
  %1285 = vmatpush1.bf16.msra.mxu0 0
  %1286 = vmatprep.subr.bf16.mxu0 0
  %1287 = vmatpush1.bf16.msra.mxu0 0
  %1288 = vmatprep.subr.bf16.mxu0 0
  %1289 = vmatpush1.bf16.msra.mxu0 0
  %1290 = vmatprep.subr.bf16.mxu0 0
  %1291 = vmatpush1.bf16.msra.mxu0 0
  %1292 = vmatprep.subr.bf16.mxu0 0
  %1293 = vmatpush1.bf16.msra.mxu0 0
  %1294 = vmatprep.subr.bf16.mxu0 0
  %1295 = vmatpush1.bf16.msra.mxu0 0
  %1296 = vmatprep.subr.bf16.mxu0 0
  %1297 = vmatpush1.bf16.msra.mxu0 0
  %1298 = vmatprep.mubr.bf16.mxu0 0
  %1299 = vmatmul.mubr.bf16.gmra.mrb[0].mxu0 %v1264
  %v1300 = vpop.f32.mrb[0].mxu0
  %v1301 = vadd.f32 %v1252, %v1300
  %v1302 = vpop.f32.mrb[0].mxu0
  %v1303 = vpop.f32.mrb[0].mxu0
  %v1304 = vpop.f32.mrb[0].mxu0
  %1305 = vdwg.mxu0
  %v1306 = vld [vmem:[%s5] sm:$0x1]
  %v1308 = vlaneseq
  %v1309 = vshrl.u32 %v1308, 7
  %v1310 = vsub.s32 0, %v1309
  %v1311 = vrot.slane %v1306, %v1310
  %v1313 = vadd.f32 %v1301, %v1311
  %v1314 = vxor.u32 %v1313, 2147483648
  %v1315 = vmul.f32 %v1314, 1.442695
  %v1316 = vpow.pop %v1315
  %v1317 = vadd.f32 %v1316, 1.0
  %v1318 = vrcp.pop %v1317
  %v1319 = vmul.f32 1.0, %v1318
  %v1320 = vtanh.pop %v1313
  %v1321 = vld [vmem:[#allocation3] sm:$0x3]
  %1323 = vrot.lane.b32.xlu0 %v1321, 32
  %v1324 = vpop.permute.xlu0 %1323
  %v1326 = vmul.f32 %v1319, %v1324
  %1328 = vrot.lane.b32.xlu0 %v1320, 64
  %v1329 = vpop.permute.xlu0 %1328
  %v1331 = vmul.f32 %v1319, %v1329
  %1333 = vrot.lane.b32.xlu0 %v1331, 32
  %v1334 = vpop.permute.xlu0 %1333
  %v1336 = vadd.f32 %v1326, %v1334
  %v1337 = vtanh.pop %v1336
  %1339 = vrot.lane.b32.xlu0 %v1337, 64
  %v1340 = vpop.permute.xlu0 %1339
  %v1342 = vmul.f32 %v1319, %v1340
  %v1343 = vsel %vm1190, 1, 0
  %1344 = vset.pattern.permute.xlu0 0
  %1345 = vperm.xlu0 %1344, %v1343
  %v1346 = vpop.permute.xlu0 %1345
  %vm1347 = vcmp.eq.s32.totalorder %v1346, 1
  %v1348 = vsel %vm1347, %v1336, %v1324
  %1350 = vrot.lane.b32.xlu0 %v1348, 96
  %v1351 = vpop.permute.xlu0 %1350
  %1353 = vst.msk [vmem:[#allocation3] sm:$0x3] %vm249, %v1351
  %v1354 = vld [vmem:[#allocation2] sm:$0x3]
  %1356 = vrot.lane.b32.xlu0 %v1354, 96
  %v1357 = vpop.permute.xlu0 %1356
  %v1359 = vsel %vm1347, %v1342, %v1357
  %1361 = vrot.lane.b32.xlu0 %v1359, 32
  %v1362 = vpop.permute.xlu0 %1361
  %1364 = vst.msk [vmem:[#allocation2] sm:$0x3] %vm249, %v1362
  %v1365 = vsel %vm1347, %v1342, 0.0
  %1367 = vrot.lane.b32.xlu0 %v1365, 32
  %v1368 = vpop.permute.xlu0 %1367
  %s1370 = scalar_lea.vmem %s9, 6
  %1371 = vst.msk [vmem:[%s1370] sm:$0x3] %vm249, %v1368
  %s1372 = sadd.s32 %s83, 4
  %v1373 = vstv %s1372
  %vm1374 = vcmp.lt.s32.totalorder %v1373, %v80
  %s1375 = scalar_lea.vmem %s59, 8
  %v1376 = vld [vmem:[%s1375] sm:$0x3]
  %v1377 = vpack.c.bf16 %v1376, %v1376
  %v1378 = vld [vmem:[%s4] sm:$0xf]
  %v1379 = vld [vmem:[%s4 + $0x4] sm:$0xf]
  %v1380 = vld [vmem:[#allocation4] sm:$0x3]
  %v1381 = vpack.c.bf16 %v1380, %v1380
  %v1382 = vld [vmem:[%s8] sm:$0xf]
  %v1383 = vld [vmem:[%s8 + $0x4] sm:$0xf]
  %v1384 = vld [vmem:[%s8 + $0x8] sm:$0xf]
  %v1385 = vld [vmem:[%s8 + $0xc] sm:$0xf]
  %v1390 = vunpack.c.l.b16 %v1382
  %v1391 = vunpack.c.l.b16 %v1383
  %v1392 = vunpack.c.l.b16 %v1384
  %v1393 = vunpack.c.l.b16 %v1385
  %v1394 = vpack.c.b16 %v1391, %v1390
  %v1395 = vpack.c.b16 %v1393, %v1392
  %v1399 = vsel %vm108, %v1381, 0
  %1401 = vmatprep.subr.bf16.mxu0 0
  %1402 = vmatpush1.bf16.msra.mxu0 %v1394
  %1403 = vmatprep.subr.bf16.mxu0 0
  %1404 = vmatpush1.bf16.msra.mxu0 %v1395
  %1405 = vmatprep.subr.bf16.mxu0 0
  %1406 = vmatpush1.bf16.msra.mxu0 0
  %1407 = vmatprep.subr.bf16.mxu0 0
  %1408 = vmatpush1.bf16.msra.mxu0 0
  %1409 = vmatprep.subr.bf16.mxu0 0
  %1410 = vmatpush1.bf16.msra.mxu0 0
  %1411 = vmatprep.subr.bf16.mxu0 0
  %1412 = vmatpush1.bf16.msra.mxu0 0
  %1413 = vmatprep.subr.bf16.mxu0 0
  %1414 = vmatpush1.bf16.msra.mxu0 0
  %1415 = vmatprep.subr.bf16.mxu0 0
  %1416 = vmatpush1.bf16.msra.mxu0 0
  %1417 = vmatprep.subr.bf16.mxu0 0
  %1418 = vmatpush1.bf16.msra.mxu0 0
  %1419 = vmatprep.subr.bf16.mxu0 0
  %1420 = vmatpush1.bf16.msra.mxu0 0
  %1421 = vmatprep.subr.bf16.mxu0 0
  %1422 = vmatpush1.bf16.msra.mxu0 0
  %1423 = vmatprep.subr.bf16.mxu0 0
  %1424 = vmatpush1.bf16.msra.mxu0 0
  %1425 = vmatprep.subr.bf16.mxu0 0
  %1426 = vmatpush1.bf16.msra.mxu0 0
  %1427 = vmatprep.subr.bf16.mxu0 0
  %1428 = vmatpush1.bf16.msra.mxu0 0
  %1429 = vmatprep.subr.bf16.mxu0 0
  %1430 = vmatpush1.bf16.msra.mxu0 0
  %1431 = vmatprep.subr.bf16.mxu0 0
  %1432 = vmatpush1.bf16.msra.mxu0 0
  %1433 = vmatprep.mubr.bf16.mxu0 0
  %1434 = vmatmul.mubr.bf16.gmra.mrb[0].mxu0 %v1399
  %v1435 = vpop.f32.mrb[0].mxu0
  %v1436 = vadd.f32 0.0, %v1435
  %v1437 = vpop.f32.mrb[0].mxu0
  %v1438 = vpop.f32.mrb[0].mxu0
  %v1439 = vpop.f32.mrb[0].mxu0
  %1440 = vdwg.mxu0
  %v1443 = vunpack.c.l.b16 %v1378
  %v1444 = vunpack.c.l.b16 %v1379
  %v1445 = vpack.c.b16 %v1444, %v1443
  %v1448 = vsel %vm158, %v1377, 0
  %1450 = vmatprep.subr.bf16.mxu0 0
  %1451 = vmatpush1.bf16.msra.mxu0 %v1445
  %1452 = vmatprep.subr.bf16.mxu0 0
  %1453 = vmatpush1.bf16.msra.mxu0 0
  %1454 = vmatprep.subr.bf16.mxu0 0
  %1455 = vmatpush1.bf16.msra.mxu0 0
  %1456 = vmatprep.subr.bf16.mxu0 0
  %1457 = vmatpush1.bf16.msra.mxu0 0
  %1458 = vmatprep.subr.bf16.mxu0 0
  %1459 = vmatpush1.bf16.msra.mxu0 0
  %1460 = vmatprep.subr.bf16.mxu0 0
  %1461 = vmatpush1.bf16.msra.mxu0 0
  %1462 = vmatprep.subr.bf16.mxu0 0
  %1463 = vmatpush1.bf16.msra.mxu0 0
  %1464 = vmatprep.subr.bf16.mxu0 0
  %1465 = vmatpush1.bf16.msra.mxu0 0
  %1466 = vmatprep.subr.bf16.mxu0 0
  %1467 = vmatpush1.bf16.msra.mxu0 0
  %1468 = vmatprep.subr.bf16.mxu0 0
  %1469 = vmatpush1.bf16.msra.mxu0 0
  %1470 = vmatprep.subr.bf16.mxu0 0
  %1471 = vmatpush1.bf16.msra.mxu0 0
  %1472 = vmatprep.subr.bf16.mxu0 0
  %1473 = vmatpush1.bf16.msra.mxu0 0
  %1474 = vmatprep.subr.bf16.mxu0 0
  %1475 = vmatpush1.bf16.msra.mxu0 0
  %1476 = vmatprep.subr.bf16.mxu0 0
  %1477 = vmatpush1.bf16.msra.mxu0 0
  %1478 = vmatprep.subr.bf16.mxu0 0
  %1479 = vmatpush1.bf16.msra.mxu0 0
  %1480 = vmatprep.subr.bf16.mxu0 0
  %1481 = vmatpush1.bf16.msra.mxu0 0
  %1482 = vmatprep.mubr.bf16.mxu0 0
  %1483 = vmatmul.mubr.bf16.gmra.mrb[0].mxu0 %v1448
  %v1484 = vpop.f32.mrb[0].mxu0
  %v1485 = vadd.f32 %v1436, %v1484
  %v1486 = vpop.f32.mrb[0].mxu0
  %v1487 = vpop.f32.mrb[0].mxu0
  %v1488 = vpop.f32.mrb[0].mxu0
  %1489 = vdwg.mxu0
  %v1490 = vld [vmem:[%s6] sm:$0x1]
  %v1492 = vlaneseq
  %v1493 = vshrl.u32 %v1492, 7
  %v1494 = vsub.s32 0, %v1493
  %v1495 = vrot.slane %v1490, %v1494
  %v1497 = vadd.f32 %v1485, %v1495
  %v1498 = vxor.u32 %v1497, 2147483648
  %v1499 = vmul.f32 %v1498, 1.442695
  %v1500 = vpow.pop %v1499
  %v1501 = vadd.f32 %v1500, 1.0
  %v1502 = vrcp.pop %v1501
  %v1503 = vmul.f32 1.0, %v1502
  %v1504 = vtanh.pop %v1497
  %v1505 = vld [vmem:[#allocation5] sm:$0x3]
  %1507 = vrot.lane.b32.xlu0 %v1505, 32
  %v1508 = vpop.permute.xlu0 %1507
  %v1510 = vmul.f32 %v1503, %v1508
  %1512 = vrot.lane.b32.xlu0 %v1504, 64
  %v1513 = vpop.permute.xlu0 %1512
  %v1515 = vmul.f32 %v1503, %v1513
  %1517 = vrot.lane.b32.xlu0 %v1515, 32
  %v1518 = vpop.permute.xlu0 %1517
  %v1520 = vadd.f32 %v1510, %v1518
  %v1521 = vtanh.pop %v1520
  %1523 = vrot.lane.b32.xlu0 %v1521, 64
  %v1524 = vpop.permute.xlu0 %1523
  %v1526 = vmul.f32 %v1503, %v1524
  %v1527 = vsel %vm1374, 1, 0
  %1528 = vset.pattern.permute.xlu0 0
  %1529 = vperm.xlu0 %1528, %v1527
  %v1530 = vpop.permute.xlu0 %1529
  %vm1531 = vcmp.eq.s32.totalorder %v1530, 1
  %v1532 = vsel %vm1531, %v1520, %v1508
  %1534 = vrot.lane.b32.xlu0 %v1532, 96
  %v1535 = vpop.permute.xlu0 %1534
  %1537 = vst.msk [vmem:[#allocation5] sm:$0x3] %vm249, %v1535
  %v1538 = vld [vmem:[#allocation4] sm:$0x3]
  %1540 = vrot.lane.b32.xlu0 %v1538, 96
  %v1541 = vpop.permute.xlu0 %1540
  %v1543 = vsel %vm1531, %v1526, %v1541
  %1545 = vrot.lane.b32.xlu0 %v1543, 32
  %v1546 = vpop.permute.xlu0 %1545
  %1548 = vst.msk [vmem:[#allocation4] sm:$0x3] %vm249, %v1546
  %v1549 = vsel %vm1531, %v1526, 0.0
  %1551 = vrot.lane.b32.xlu0 %v1549, 32
  %v1552 = vpop.permute.xlu0 %1551
  %s1554 = scalar_lea.vmem %s67, 8
  %1555 = vst.msk [vmem:[%s1554] sm:$0x3] %vm249, %v1552
  %s1556 = sadd.s32 %s81, 4
  %v1557 = vstv %s1556
  %vm1558 = vcmp.lt.s32.totalorder %v1557, %v80
  %s1559 = scalar_lea.vmem %s0, 8
  %v1560 = vld [vmem:[%s1559] sm:$0x3]
  %v1561 = vpack.c.bf16 %v1560, %v1560
  %v1562 = vld [vmem:[%s3] sm:$0xf]
  %v1563 = vld [vmem:[%s3 + $0x4] sm:$0xf]
  %v1564 = vld [vmem:[#allocation2] sm:$0x3]
  %v1565 = vpack.c.bf16 %v1564, %v1564
  %v1566 = vld [vmem:[%s7] sm:$0xf]
  %v1567 = vld [vmem:[%s7 + $0x4] sm:$0xf]
  %v1568 = vld [vmem:[%s7 + $0x8] sm:$0xf]
  %v1569 = vld [vmem:[%s7 + $0xc] sm:$0xf]
  %v1574 = vunpack.c.l.b16 %v1566
  %v1575 = vunpack.c.l.b16 %v1567
  %v1576 = vunpack.c.l.b16 %v1568
  %v1577 = vunpack.c.l.b16 %v1569
  %v1578 = vpack.c.b16 %v1575, %v1574
  %v1579 = vpack.c.b16 %v1577, %v1576
  %v1583 = vsel %vm108, %v1565, 0
  %1585 = vmatprep.subr.bf16.mxu0 0
  %1586 = vmatpush1.bf16.msra.mxu0 %v1578
  %1587 = vmatprep.subr.bf16.mxu0 0
  %1588 = vmatpush1.bf16.msra.mxu0 %v1579
  %1589 = vmatprep.subr.bf16.mxu0 0
  %1590 = vmatpush1.bf16.msra.mxu0 0
  %1591 = vmatprep.subr.bf16.mxu0 0
  %1592 = vmatpush1.bf16.msra.mxu0 0
  %1593 = vmatprep.subr.bf16.mxu0 0
  %1594 = vmatpush1.bf16.msra.mxu0 0
  %1595 = vmatprep.subr.bf16.mxu0 0
  %1596 = vmatpush1.bf16.msra.mxu0 0
  %1597 = vmatprep.subr.bf16.mxu0 0
  %1598 = vmatpush1.bf16.msra.mxu0 0
  %1599 = vmatprep.subr.bf16.mxu0 0
  %1600 = vmatpush1.bf16.msra.mxu0 0
  %1601 = vmatprep.subr.bf16.mxu0 0
  %1602 = vmatpush1.bf16.msra.mxu0 0
  %1603 = vmatprep.subr.bf16.mxu0 0
  %1604 = vmatpush1.bf16.msra.mxu0 0
  %1605 = vmatprep.subr.bf16.mxu0 0
  %1606 = vmatpush1.bf16.msra.mxu0 0
  %1607 = vmatprep.subr.bf16.mxu0 0
  %1608 = vmatpush1.bf16.msra.mxu0 0
  %1609 = vmatprep.subr.bf16.mxu0 0
  %1610 = vmatpush1.bf16.msra.mxu0 0
  %1611 = vmatprep.subr.bf16.mxu0 0
  %1612 = vmatpush1.bf16.msra.mxu0 0
  %1613 = vmatprep.subr.bf16.mxu0 0
  %1614 = vmatpush1.bf16.msra.mxu0 0
  %1615 = vmatprep.subr.bf16.mxu0 0
  %1616 = vmatpush1.bf16.msra.mxu0 0
  %1617 = vmatprep.mubr.bf16.mxu0 0
  %1618 = vmatmul.mubr.bf16.gmra.mrb[0].mxu0 %v1583
  %v1619 = vpop.f32.mrb[0].mxu0
  %v1620 = vadd.f32 0.0, %v1619
  %v1621 = vpop.f32.mrb[0].mxu0
  %v1622 = vpop.f32.mrb[0].mxu0
  %v1623 = vpop.f32.mrb[0].mxu0
  %1624 = vdwg.mxu0
  %v1627 = vunpack.c.l.b16 %v1562
  %v1628 = vunpack.c.l.b16 %v1563
  %v1629 = vpack.c.b16 %v1628, %v1627
  %v1632 = vsel %vm158, %v1561, 0
  %1634 = vmatprep.subr.bf16.mxu0 0
  %1635 = vmatpush1.bf16.msra.mxu0 %v1629
  %1636 = vmatprep.subr.bf16.mxu0 0
  %1637 = vmatpush1.bf16.msra.mxu0 0
  %1638 = vmatprep.subr.bf16.mxu0 0
  %1639 = vmatpush1.bf16.msra.mxu0 0
  %1640 = vmatprep.subr.bf16.mxu0 0
  %1641 = vmatpush1.bf16.msra.mxu0 0
  %1642 = vmatprep.subr.bf16.mxu0 0
  %1643 = vmatpush1.bf16.msra.mxu0 0
  %1644 = vmatprep.subr.bf16.mxu0 0
  %1645 = vmatpush1.bf16.msra.mxu0 0
  %1646 = vmatprep.subr.bf16.mxu0 0
  %1647 = vmatpush1.bf16.msra.mxu0 0
  %1648 = vmatprep.subr.bf16.mxu0 0
  %1649 = vmatpush1.bf16.msra.mxu0 0
  %1650 = vmatprep.subr.bf16.mxu0 0
  %1651 = vmatpush1.bf16.msra.mxu0 0
  %1652 = vmatprep.subr.bf16.mxu0 0
  %1653 = vmatpush1.bf16.msra.mxu0 0
  %1654 = vmatprep.subr.bf16.mxu0 0
  %1655 = vmatpush1.bf16.msra.mxu0 0
  %1656 = vmatprep.subr.bf16.mxu0 0
  %1657 = vmatpush1.bf16.msra.mxu0 0
  %1658 = vmatprep.subr.bf16.mxu0 0
  %1659 = vmatpush1.bf16.msra.mxu0 0
  %1660 = vmatprep.subr.bf16.mxu0 0
  %1661 = vmatpush1.bf16.msra.mxu0 0
  %1662 = vmatprep.subr.bf16.mxu0 0
  %1663 = vmatpush1.bf16.msra.mxu0 0
  %1664 = vmatprep.subr.bf16.mxu0 0
  %1665 = vmatpush1.bf16.msra.mxu0 0
  %1666 = vmatprep.mubr.bf16.mxu0 0
  %1667 = vmatmul.mubr.bf16.gmra.mrb[0].mxu0 %v1632
  %v1668 = vpop.f32.mrb[0].mxu0
  %v1669 = vadd.f32 %v1620, %v1668
  %v1670 = vpop.f32.mrb[0].mxu0
  %v1671 = vpop.f32.mrb[0].mxu0
  %v1672 = vpop.f32.mrb[0].mxu0
  %1673 = vdwg.mxu0
  %v1674 = vld [vmem:[%s5] sm:$0x1]
  %v1676 = vlaneseq
  %v1677 = vshrl.u32 %v1676, 7
  %v1678 = vsub.s32 0, %v1677
  %v1679 = vrot.slane %v1674, %v1678
  %v1681 = vadd.f32 %v1669, %v1679
  %v1682 = vxor.u32 %v1681, 2147483648
  %v1683 = vmul.f32 %v1682, 1.442695
  %v1684 = vpow.pop %v1683
  %v1685 = vadd.f32 %v1684, 1.0
  %v1686 = vrcp.pop %v1685
  %v1687 = vmul.f32 1.0, %v1686
  %v1688 = vtanh.pop %v1681
  %v1689 = vld [vmem:[#allocation3] sm:$0x3]
  %1691 = vrot.lane.b32.xlu0 %v1689, 32
  %v1692 = vpop.permute.xlu0 %1691
  %v1694 = vmul.f32 %v1687, %v1692
  %1696 = vrot.lane.b32.xlu0 %v1688, 64
  %v1697 = vpop.permute.xlu0 %1696
  %v1699 = vmul.f32 %v1687, %v1697
  %1701 = vrot.lane.b32.xlu0 %v1699, 32
  %v1702 = vpop.permute.xlu0 %1701
  %v1704 = vadd.f32 %v1694, %v1702
  %v1705 = vtanh.pop %v1704
  %1707 = vrot.lane.b32.xlu0 %v1705, 64
  %v1708 = vpop.permute.xlu0 %1707
  %v1710 = vmul.f32 %v1687, %v1708
  %v1711 = vsel %vm1558, 1, 0
  %1712 = vset.pattern.permute.xlu0 0
  %1713 = vperm.xlu0 %1712, %v1711
  %v1714 = vpop.permute.xlu0 %1713
  %vm1715 = vcmp.eq.s32.totalorder %v1714, 1
  %v1716 = vsel %vm1715, %v1704, %v1692
  %1718 = vrot.lane.b32.xlu0 %v1716, 96
  %v1719 = vpop.permute.xlu0 %1718
  %1721 = vst.msk [vmem:[#allocation3] sm:$0x3] %vm249, %v1719
  %v1722 = vld [vmem:[#allocation2] sm:$0x3]
  %1724 = vrot.lane.b32.xlu0 %v1722, 96
  %v1725 = vpop.permute.xlu0 %1724
  %v1727 = vsel %vm1715, %v1710, %v1725
  %1729 = vrot.lane.b32.xlu0 %v1727, 32
  %v1730 = vpop.permute.xlu0 %1729
  %1732 = vst.msk [vmem:[#allocation2] sm:$0x3] %vm249, %v1730
  %v1733 = vsel %vm1715, %v1710, 0.0
  %1735 = vrot.lane.b32.xlu0 %v1733, 32
  %v1736 = vpop.permute.xlu0 %1735
  %s1738 = scalar_lea.vmem %s9, 8
  %1739 = vst.msk [vmem:[%s1738] sm:$0x3] %vm249, %v1736
  %s1740 = sadd.s32 %s83, 3
  %v1741 = vstv %s1740
  %vm1742 = vcmp.lt.s32.totalorder %v1741, %v80
  %s1743 = scalar_lea.vmem %s59, 6
  %v1744 = vld [vmem:[%s1743] sm:$0x3]
  %v1745 = vpack.c.bf16 %v1744, %v1744
  %v1746 = vld [vmem:[%s4] sm:$0xf]
  %v1747 = vld [vmem:[%s4 + $0x4] sm:$0xf]
  %v1748 = vld [vmem:[#allocation4] sm:$0x3]
  %v1749 = vpack.c.bf16 %v1748, %v1748
  %v1750 = vld [vmem:[%s8] sm:$0xf]
  %v1751 = vld [vmem:[%s8 + $0x4] sm:$0xf]
  %v1752 = vld [vmem:[%s8 + $0x8] sm:$0xf]
  %v1753 = vld [vmem:[%s8 + $0xc] sm:$0xf]
  %v1758 = vunpack.c.l.b16 %v1750
  %v1759 = vunpack.c.l.b16 %v1751
  %v1760 = vunpack.c.l.b16 %v1752
  %v1761 = vunpack.c.l.b16 %v1753
  %v1762 = vpack.c.b16 %v1759, %v1758
  %v1763 = vpack.c.b16 %v1761, %v1760
  %v1767 = vsel %vm108, %v1749, 0
  %1769 = vmatprep.subr.bf16.mxu0 0
  %1770 = vmatpush1.bf16.msra.mxu0 %v1762
  %1771 = vmatprep.subr.bf16.mxu0 0
  %1772 = vmatpush1.bf16.msra.mxu0 %v1763
  %1773 = vmatprep.subr.bf16.mxu0 0
  %1774 = vmatpush1.bf16.msra.mxu0 0
  %1775 = vmatprep.subr.bf16.mxu0 0
  %1776 = vmatpush1.bf16.msra.mxu0 0
  %1777 = vmatprep.subr.bf16.mxu0 0
  %1778 = vmatpush1.bf16.msra.mxu0 0
  %1779 = vmatprep.subr.bf16.mxu0 0
  %1780 = vmatpush1.bf16.msra.mxu0 0
  %1781 = vmatprep.subr.bf16.mxu0 0
  %1782 = vmatpush1.bf16.msra.mxu0 0
  %1783 = vmatprep.subr.bf16.mxu0 0
  %1784 = vmatpush1.bf16.msra.mxu0 0
  %1785 = vmatprep.subr.bf16.mxu0 0
  %1786 = vmatpush1.bf16.msra.mxu0 0
  %1787 = vmatprep.subr.bf16.mxu0 0
  %1788 = vmatpush1.bf16.msra.mxu0 0
  %1789 = vmatprep.subr.bf16.mxu0 0
  %1790 = vmatpush1.bf16.msra.mxu0 0
  %1791 = vmatprep.subr.bf16.mxu0 0
  %1792 = vmatpush1.bf16.msra.mxu0 0
  %1793 = vmatprep.subr.bf16.mxu0 0
  %1794 = vmatpush1.bf16.msra.mxu0 0
  %1795 = vmatprep.subr.bf16.mxu0 0
  %1796 = vmatpush1.bf16.msra.mxu0 0
  %1797 = vmatprep.subr.bf16.mxu0 0
  %1798 = vmatpush1.bf16.msra.mxu0 0
  %1799 = vmatprep.subr.bf16.mxu0 0
  %1800 = vmatpush1.bf16.msra.mxu0 0
  %1801 = vmatprep.mubr.bf16.mxu0 0
  %1802 = vmatmul.mubr.bf16.gmra.mrb[0].mxu0 %v1767
  %v1803 = vpop.f32.mrb[0].mxu0
  %v1804 = vadd.f32 0.0, %v1803
  %v1805 = vpop.f32.mrb[0].mxu0
  %v1806 = vpop.f32.mrb[0].mxu0
  %v1807 = vpop.f32.mrb[0].mxu0
  %1808 = vdwg.mxu0
  %v1811 = vunpack.c.l.b16 %v1746
  %v1812 = vunpack.c.l.b16 %v1747
  %v1813 = vpack.c.b16 %v1812, %v1811
  %v1816 = vsel %vm158, %v1745, 0
  %1818 = vmatprep.subr.bf16.mxu0 0
  %1819 = vmatpush1.bf16.msra.mxu0 %v1813
  %1820 = vmatprep.subr.bf16.mxu0 0
  %1821 = vmatpush1.bf16.msra.mxu0 0
  %1822 = vmatprep.subr.bf16.mxu0 0
  %1823 = vmatpush1.bf16.msra.mxu0 0
  %1824 = vmatprep.subr.bf16.mxu0 0
  %1825 = vmatpush1.bf16.msra.mxu0 0
  %1826 = vmatprep.subr.bf16.mxu0 0
  %1827 = vmatpush1.bf16.msra.mxu0 0
  %1828 = vmatprep.subr.bf16.mxu0 0
  %1829 = vmatpush1.bf16.msra.mxu0 0
  %1830 = vmatprep.subr.bf16.mxu0 0
  %1831 = vmatpush1.bf16.msra.mxu0 0
  %1832 = vmatprep.subr.bf16.mxu0 0
  %1833 = vmatpush1.bf16.msra.mxu0 0
  %1834 = vmatprep.subr.bf16.mxu0 0
  %1835 = vmatpush1.bf16.msra.mxu0 0
  %1836 = vmatprep.subr.bf16.mxu0 0
  %1837 = vmatpush1.bf16.msra.mxu0 0
  %1838 = vmatprep.subr.bf16.mxu0 0
  %1839 = vmatpush1.bf16.msra.mxu0 0
  %1840 = vmatprep.subr.bf16.mxu0 0
  %1841 = vmatpush1.bf16.msra.mxu0 0
  %1842 = vmatprep.subr.bf16.mxu0 0
  %1843 = vmatpush1.bf16.msra.mxu0 0
  %1844 = vmatprep.subr.bf16.mxu0 0
  %1845 = vmatpush1.bf16.msra.mxu0 0
  %1846 = vmatprep.subr.bf16.mxu0 0
  %1847 = vmatpush1.bf16.msra.mxu0 0
  %1848 = vmatprep.subr.bf16.mxu0 0
  %1849 = vmatpush1.bf16.msra.mxu0 0
  %1850 = vmatprep.mubr.bf16.mxu0 0
  %1851 = vmatmul.mubr.bf16.gmra.mrb[0].mxu0 %v1816
  %v1852 = vpop.f32.mrb[0].mxu0
  %v1853 = vadd.f32 %v1804, %v1852
  %v1854 = vpop.f32.mrb[0].mxu0
  %v1855 = vpop.f32.mrb[0].mxu0
  %v1856 = vpop.f32.mrb[0].mxu0
  %1857 = vdwg.mxu0
  %v1858 = vld [vmem:[%s6] sm:$0x1]
  %v1860 = vlaneseq
  %v1861 = vshrl.u32 %v1860, 7
  %v1862 = vsub.s32 0, %v1861
  %v1863 = vrot.slane %v1858, %v1862
  %v1865 = vadd.f32 %v1853, %v1863
  %v1866 = vxor.u32 %v1865, 2147483648
  %v1867 = vmul.f32 %v1866, 1.442695
  %v1868 = vpow.pop %v1867
  %v1869 = vadd.f32 %v1868, 1.0
  %v1870 = vrcp.pop %v1869
  %v1871 = vmul.f32 1.0, %v1870
  %v1872 = vtanh.pop %v1865
  %v1873 = vld [vmem:[#allocation5] sm:$0x3]
  %1875 = vrot.lane.b32.xlu0 %v1873, 32
  %v1876 = vpop.permute.xlu0 %1875
  %v1878 = vmul.f32 %v1871, %v1876
  %1880 = vrot.lane.b32.xlu0 %v1872, 64
  %v1881 = vpop.permute.xlu0 %1880
  %v1883 = vmul.f32 %v1871, %v1881
  %1885 = vrot.lane.b32.xlu0 %v1883, 32
  %v1886 = vpop.permute.xlu0 %1885
  %v1888 = vadd.f32 %v1878, %v1886
  %v1889 = vtanh.pop %v1888
  %1891 = vrot.lane.b32.xlu0 %v1889, 64
  %v1892 = vpop.permute.xlu0 %1891
  %v1894 = vmul.f32 %v1871, %v1892
  %v1895 = vsel %vm1742, 1, 0
  %1896 = vset.pattern.permute.xlu0 0
  %1897 = vperm.xlu0 %1896, %v1895
  %v1898 = vpop.permute.xlu0 %1897
  %vm1899 = vcmp.eq.s32.totalorder %v1898, 1
  %v1900 = vsel %vm1899, %v1888, %v1876
  %1902 = vrot.lane.b32.xlu0 %v1900, 96
  %v1903 = vpop.permute.xlu0 %1902
  %1905 = vst.msk [vmem:[#allocation5] sm:$0x3] %vm249, %v1903
  %v1906 = vld [vmem:[#allocation4] sm:$0x3]
  %1908 = vrot.lane.b32.xlu0 %v1906, 96
  %v1909 = vpop.permute.xlu0 %1908
  %v1911 = vsel %vm1899, %v1894, %v1909
  %1913 = vrot.lane.b32.xlu0 %v1911, 32
  %v1914 = vpop.permute.xlu0 %1913
  %1916 = vst.msk [vmem:[#allocation4] sm:$0x3] %vm249, %v1914
  %v1917 = vsel %vm1899, %v1894, 0.0
  %1919 = vrot.lane.b32.xlu0 %v1917, 32
  %v1920 = vpop.permute.xlu0 %1919
  %s1922 = scalar_lea.vmem %s67, 6
  %1923 = vst.msk [vmem:[%s1922] sm:$0x3] %vm249, %v1920
  %s1924 = sadd.s32 %s81, 5
  %v1925 = vstv %s1924
  %vm1926 = vcmp.lt.s32.totalorder %v1925, %v80
  %s1927 = scalar_lea.vmem %s0, 10
  %v1928 = vld [vmem:[%s1927] sm:$0x3]
  %v1929 = vpack.c.bf16 %v1928, %v1928
  %v1930 = vld [vmem:[%s3] sm:$0xf]
  %v1931 = vld [vmem:[%s3 + $0x4] sm:$0xf]
  %v1932 = vld [vmem:[#allocation2] sm:$0x3]
  %v1933 = vpack.c.bf16 %v1932, %v1932
  %v1934 = vld [vmem:[%s7] sm:$0xf]
  %v1935 = vld [vmem:[%s7 + $0x4] sm:$0xf]
  %v1936 = vld [vmem:[%s7 + $0x8] sm:$0xf]
  %v1937 = vld [vmem:[%s7 + $0xc] sm:$0xf]
  %v1942 = vunpack.c.l.b16 %v1934
  %v1943 = vunpack.c.l.b16 %v1935
  %v1944 = vunpack.c.l.b16 %v1936
  %v1945 = vunpack.c.l.b16 %v1937
  %v1946 = vpack.c.b16 %v1943, %v1942
  %v1947 = vpack.c.b16 %v1945, %v1944
  %v1951 = vsel %vm108, %v1933, 0
  %1953 = vmatprep.subr.bf16.mxu0 0
  %1954 = vmatpush1.bf16.msra.mxu0 %v1946
  %1955 = vmatprep.subr.bf16.mxu0 0
  %1956 = vmatpush1.bf16.msra.mxu0 %v1947
  %1957 = vmatprep.subr.bf16.mxu0 0
  %1958 = vmatpush1.bf16.msra.mxu0 0
  %1959 = vmatprep.subr.bf16.mxu0 0
  %1960 = vmatpush1.bf16.msra.mxu0 0
  %1961 = vmatprep.subr.bf16.mxu0 0
  %1962 = vmatpush1.bf16.msra.mxu0 0
  %1963 = vmatprep.subr.bf16.mxu0 0
  %1964 = vmatpush1.bf16.msra.mxu0 0
  %1965 = vmatprep.subr.bf16.mxu0 0
  %1966 = vmatpush1.bf16.msra.mxu0 0
  %1967 = vmatprep.subr.bf16.mxu0 0
  %1968 = vmatpush1.bf16.msra.mxu0 0
  %1969 = vmatprep.subr.bf16.mxu0 0
  %1970 = vmatpush1.bf16.msra.mxu0 0
  %1971 = vmatprep.subr.bf16.mxu0 0
  %1972 = vmatpush1.bf16.msra.mxu0 0
  %1973 = vmatprep.subr.bf16.mxu0 0
  %1974 = vmatpush1.bf16.msra.mxu0 0
  %1975 = vmatprep.subr.bf16.mxu0 0
  %1976 = vmatpush1.bf16.msra.mxu0 0
  %1977 = vmatprep.subr.bf16.mxu0 0
  %1978 = vmatpush1.bf16.msra.mxu0 0
  %1979 = vmatprep.subr.bf16.mxu0 0
  %1980 = vmatpush1.bf16.msra.mxu0 0
  %1981 = vmatprep.subr.bf16.mxu0 0
  %1982 = vmatpush1.bf16.msra.mxu0 0
  %1983 = vmatprep.subr.bf16.mxu0 0
  %1984 = vmatpush1.bf16.msra.mxu0 0
  %1985 = vmatprep.mubr.bf16.mxu0 0
  %1986 = vmatmul.mubr.bf16.gmra.mrb[0].mxu0 %v1951
  %v1987 = vpop.f32.mrb[0].mxu0
  %v1988 = vadd.f32 0.0, %v1987
  %v1989 = vpop.f32.mrb[0].mxu0
  %v1990 = vpop.f32.mrb[0].mxu0
  %v1991 = vpop.f32.mrb[0].mxu0
  %1992 = vdwg.mxu0
  %v1995 = vunpack.c.l.b16 %v1930
  %v1996 = vunpack.c.l.b16 %v1931
  %v1997 = vpack.c.b16 %v1996, %v1995
  %v2000 = vsel %vm158, %v1929, 0
  %2002 = vmatprep.subr.bf16.mxu0 0
  %2003 = vmatpush1.bf16.msra.mxu0 %v1997
  %2004 = vmatprep.subr.bf16.mxu0 0
  %2005 = vmatpush1.bf16.msra.mxu0 0
  %2006 = vmatprep.subr.bf16.mxu0 0
  %2007 = vmatpush1.bf16.msra.mxu0 0
  %2008 = vmatprep.subr.bf16.mxu0 0
  %2009 = vmatpush1.bf16.msra.mxu0 0
  %2010 = vmatprep.subr.bf16.mxu0 0
  %2011 = vmatpush1.bf16.msra.mxu0 0
  %2012 = vmatprep.subr.bf16.mxu0 0
  %2013 = vmatpush1.bf16.msra.mxu0 0
  %2014 = vmatprep.subr.bf16.mxu0 0
  %2015 = vmatpush1.bf16.msra.mxu0 0
  %2016 = vmatprep.subr.bf16.mxu0 0
  %2017 = vmatpush1.bf16.msra.mxu0 0
  %2018 = vmatprep.subr.bf16.mxu0 0
  %2019 = vmatpush1.bf16.msra.mxu0 0
  %2020 = vmatprep.subr.bf16.mxu0 0
  %2021 = vmatpush1.bf16.msra.mxu0 0
  %2022 = vmatprep.subr.bf16.mxu0 0
  %2023 = vmatpush1.bf16.msra.mxu0 0
  %2024 = vmatprep.subr.bf16.mxu0 0
  %2025 = vmatpush1.bf16.msra.mxu0 0
  %2026 = vmatprep.subr.bf16.mxu0 0
  %2027 = vmatpush1.bf16.msra.mxu0 0
  %2028 = vmatprep.subr.bf16.mxu0 0
  %2029 = vmatpush1.bf16.msra.mxu0 0
  %2030 = vmatprep.subr.bf16.mxu0 0
  %2031 = vmatpush1.bf16.msra.mxu0 0
  %2032 = vmatprep.subr.bf16.mxu0 0
  %2033 = vmatpush1.bf16.msra.mxu0 0
  %2034 = vmatprep.mubr.bf16.mxu0 0
  %2035 = vmatmul.mubr.bf16.gmra.mrb[0].mxu0 %v2000
  %v2036 = vpop.f32.mrb[0].mxu0
  %v2037 = vadd.f32 %v1988, %v2036
  %v2038 = vpop.f32.mrb[0].mxu0
  %v2039 = vpop.f32.mrb[0].mxu0
  %v2040 = vpop.f32.mrb[0].mxu0
  %2041 = vdwg.mxu0
  %v2042 = vld [vmem:[%s5] sm:$0x1]
  %v2044 = vlaneseq
  %v2045 = vshrl.u32 %v2044, 7
  %v2046 = vsub.s32 0, %v2045
  %v2047 = vrot.slane %v2042, %v2046
  %v2049 = vadd.f32 %v2037, %v2047
  %v2050 = vxor.u32 %v2049, 2147483648
  %v2051 = vmul.f32 %v2050, 1.442695
  %v2052 = vpow.pop %v2051
  %v2053 = vadd.f32 %v2052, 1.0
  %v2054 = vrcp.pop %v2053
  %v2055 = vmul.f32 1.0, %v2054
  %v2056 = vtanh.pop %v2049
  %v2057 = vld [vmem:[#allocation3] sm:$0x3]
  %2059 = vrot.lane.b32.xlu0 %v2057, 32
  %v2060 = vpop.permute.xlu0 %2059
  %v2062 = vmul.f32 %v2055, %v2060
  %2064 = vrot.lane.b32.xlu0 %v2056, 64
  %v2065 = vpop.permute.xlu0 %2064
  %v2067 = vmul.f32 %v2055, %v2065
  %2069 = vrot.lane.b32.xlu0 %v2067, 32
  %v2070 = vpop.permute.xlu0 %2069
  %v2072 = vadd.f32 %v2062, %v2070
  %v2073 = vtanh.pop %v2072
  %2075 = vrot.lane.b32.xlu0 %v2073, 64
  %v2076 = vpop.permute.xlu0 %2075
  %v2078 = vmul.f32 %v2055, %v2076
  %v2079 = vsel %vm1926, 1, 0
  %2080 = vset.pattern.permute.xlu0 0
  %2081 = vperm.xlu0 %2080, %v2079
  %v2082 = vpop.permute.xlu0 %2081
  %vm2083 = vcmp.eq.s32.totalorder %v2082, 1
  %v2084 = vsel %vm2083, %v2072, %v2060
  %2086 = vrot.lane.b32.xlu0 %v2084, 96
  %v2087 = vpop.permute.xlu0 %2086
  %2089 = vst.msk [vmem:[#allocation3] sm:$0x3] %vm249, %v2087
  %v2090 = vld [vmem:[#allocation2] sm:$0x3]
  %2092 = vrot.lane.b32.xlu0 %v2090, 96
  %v2093 = vpop.permute.xlu0 %2092
  %v2095 = vsel %vm2083, %v2078, %v2093
  %2097 = vrot.lane.b32.xlu0 %v2095, 32
  %v2098 = vpop.permute.xlu0 %2097
  %2100 = vst.msk [vmem:[#allocation2] sm:$0x3] %vm249, %v2098
  %v2101 = vsel %vm2083, %v2078, 0.0
  %2103 = vrot.lane.b32.xlu0 %v2101, 32
  %v2104 = vpop.permute.xlu0 %2103
  %s2106 = scalar_lea.vmem %s9, 10
  %2107 = vst.msk [vmem:[%s2106] sm:$0x3] %vm249, %v2104
  %s2108 = sadd.s32 %s83, 2
  %v2109 = vstv %s2108
  %vm2110 = vcmp.lt.s32.totalorder %v2109, %v80
  %s2111 = scalar_lea.vmem %s59, 4
  %v2112 = vld [vmem:[%s2111] sm:$0x3]
  %v2113 = vpack.c.bf16 %v2112, %v2112
  %v2114 = vld [vmem:[%s4] sm:$0xf]
  %v2115 = vld [vmem:[%s4 + $0x4] sm:$0xf]
  %v2116 = vld [vmem:[#allocation4] sm:$0x3]
  %v2117 = vpack.c.bf16 %v2116, %v2116
  %v2118 = vld [vmem:[%s8] sm:$0xf]
  %v2119 = vld [vmem:[%s8 + $0x4] sm:$0xf]
  %v2120 = vld [vmem:[%s8 + $0x8] sm:$0xf]
  %v2121 = vld [vmem:[%s8 + $0xc] sm:$0xf]
  %v2126 = vunpack.c.l.b16 %v2118
  %v2127 = vunpack.c.l.b16 %v2119
  %v2128 = vunpack.c.l.b16 %v2120
  %v2129 = vunpack.c.l.b16 %v2121
  %v2130 = vpack.c.b16 %v2127, %v2126
  %v2131 = vpack.c.b16 %v2129, %v2128
  %v2135 = vsel %vm108, %v2117, 0
  %2137 = vmatprep.subr.bf16.mxu0 0
  %2138 = vmatpush1.bf16.msra.mxu0 %v2130
  %2139 = vmatprep.subr.bf16.mxu0 0
  %2140 = vmatpush1.bf16.msra.mxu0 %v2131
  %2141 = vmatprep.subr.bf16.mxu0 0
  %2142 = vmatpush1.bf16.msra.mxu0 0
  %2143 = vmatprep.subr.bf16.mxu0 0
  %2144 = vmatpush1.bf16.msra.mxu0 0
  %2145 = vmatprep.subr.bf16.mxu0 0
  %2146 = vmatpush1.bf16.msra.mxu0 0
  %2147 = vmatprep.subr.bf16.mxu0 0
  %2148 = vmatpush1.bf16.msra.mxu0 0
  %2149 = vmatprep.subr.bf16.mxu0 0
  %2150 = vmatpush1.bf16.msra.mxu0 0
  %2151 = vmatprep.subr.bf16.mxu0 0
  %2152 = vmatpush1.bf16.msra.mxu0 0
  %2153 = vmatprep.subr.bf16.mxu0 0
  %2154 = vmatpush1.bf16.msra.mxu0 0
  %2155 = vmatprep.subr.bf16.mxu0 0
  %2156 = vmatpush1.bf16.msra.mxu0 0
  %2157 = vmatprep.subr.bf16.mxu0 0
  %2158 = vmatpush1.bf16.msra.mxu0 0
  %2159 = vmatprep.subr.bf16.mxu0 0
  %2160 = vmatpush1.bf16.msra.mxu0 0
  %2161 = vmatprep.subr.bf16.mxu0 0
  %2162 = vmatpush1.bf16.msra.mxu0 0
  %2163 = vmatprep.subr.bf16.mxu0 0
  %2164 = vmatpush1.bf16.msra.mxu0 0
  %2165 = vmatprep.subr.bf16.mxu0 0
  %2166 = vmatpush1.bf16.msra.mxu0 0
  %2167 = vmatprep.subr.bf16.mxu0 0
  %2168 = vmatpush1.bf16.msra.mxu0 0
  %2169 = vmatprep.mubr.bf16.mxu0 0
  %2170 = vmatmul.mubr.bf16.gmra.mrb[0].mxu0 %v2135
  %v2171 = vpop.f32.mrb[0].mxu0
  %v2172 = vadd.f32 0.0, %v2171
  %v2173 = vpop.f32.mrb[0].mxu0
  %v2174 = vpop.f32.mrb[0].mxu0
  %v2175 = vpop.f32.mrb[0].mxu0
  %2176 = vdwg.mxu0
  %v2179 = vunpack.c.l.b16 %v2114
  %v2180 = vunpack.c.l.b16 %v2115
  %v2181 = vpack.c.b16 %v2180, %v2179
  %v2184 = vsel %vm158, %v2113, 0
  %2186 = vmatprep.subr.bf16.mxu0 0
  %2187 = vmatpush1.bf16.msra.mxu0 %v2181
  %2188 = vmatprep.subr.bf16.mxu0 0
  %2189 = vmatpush1.bf16.msra.mxu0 0
  %2190 = vmatprep.subr.bf16.mxu0 0
  %2191 = vmatpush1.bf16.msra.mxu0 0
  %2192 = vmatprep.subr.bf16.mxu0 0
  %2193 = vmatpush1.bf16.msra.mxu0 0
  %2194 = vmatprep.subr.bf16.mxu0 0
  %2195 = vmatpush1.bf16.msra.mxu0 0
  %2196 = vmatprep.subr.bf16.mxu0 0
  %2197 = vmatpush1.bf16.msra.mxu0 0
  %2198 = vmatprep.subr.bf16.mxu0 0
  %2199 = vmatpush1.bf16.msra.mxu0 0
  %2200 = vmatprep.subr.bf16.mxu0 0
  %2201 = vmatpush1.bf16.msra.mxu0 0
  %2202 = vmatprep.subr.bf16.mxu0 0
  %2203 = vmatpush1.bf16.msra.mxu0 0
  %2204 = vmatprep.subr.bf16.mxu0 0
  %2205 = vmatpush1.bf16.msra.mxu0 0
  %2206 = vmatprep.subr.bf16.mxu0 0
  %2207 = vmatpush1.bf16.msra.mxu0 0
  %2208 = vmatprep.subr.bf16.mxu0 0
  %2209 = vmatpush1.bf16.msra.mxu0 0
  %2210 = vmatprep.subr.bf16.mxu0 0
  %2211 = vmatpush1.bf16.msra.mxu0 0
  %2212 = vmatprep.subr.bf16.mxu0 0
  %2213 = vmatpush1.bf16.msra.mxu0 0
  %2214 = vmatprep.subr.bf16.mxu0 0
  %2215 = vmatpush1.bf16.msra.mxu0 0
  %2216 = vmatprep.subr.bf16.mxu0 0
  %2217 = vmatpush1.bf16.msra.mxu0 0
  %2218 = vmatprep.mubr.bf16.mxu0 0
  %2219 = vmatmul.mubr.bf16.gmra.mrb[0].mxu0 %v2184
  %v2220 = vpop.f32.mrb[0].mxu0
  %v2221 = vadd.f32 %v2172, %v2220
  %v2222 = vpop.f32.mrb[0].mxu0
  %v2223 = vpop.f32.mrb[0].mxu0
  %v2224 = vpop.f32.mrb[0].mxu0
  %2225 = vdwg.mxu0
  %v2226 = vld [vmem:[%s6] sm:$0x1]
  %v2228 = vlaneseq
  %v2229 = vshrl.u32 %v2228, 7
  %v2230 = vsub.s32 0, %v2229
  %v2231 = vrot.slane %v2226, %v2230
  %v2233 = vadd.f32 %v2221, %v2231
  %v2234 = vxor.u32 %v2233, 2147483648
  %v2235 = vmul.f32 %v2234, 1.442695
  %v2236 = vpow.pop %v2235
  %v2237 = vadd.f32 %v2236, 1.0
  %v2238 = vrcp.pop %v2237
  %v2239 = vmul.f32 1.0, %v2238
  %v2240 = vtanh.pop %v2233
  %v2241 = vld [vmem:[#allocation5] sm:$0x3]
  %2243 = vrot.lane.b32.xlu0 %v2241, 32
  %v2244 = vpop.permute.xlu0 %2243
  %v2246 = vmul.f32 %v2239, %v2244
  %2248 = vrot.lane.b32.xlu0 %v2240, 64
  %v2249 = vpop.permute.xlu0 %2248
  %v2251 = vmul.f32 %v2239, %v2249
  %2253 = vrot.lane.b32.xlu0 %v2251, 32
  %v2254 = vpop.permute.xlu0 %2253
  %v2256 = vadd.f32 %v2246, %v2254
  %v2257 = vtanh.pop %v2256
  %2259 = vrot.lane.b32.xlu0 %v2257, 64
  %v2260 = vpop.permute.xlu0 %2259
  %v2262 = vmul.f32 %v2239, %v2260
  %v2263 = vsel %vm2110, 1, 0
  %2264 = vset.pattern.permute.xlu0 0
  %2265 = vperm.xlu0 %2264, %v2263
  %v2266 = vpop.permute.xlu0 %2265
  %vm2267 = vcmp.eq.s32.totalorder %v2266, 1
  %v2268 = vsel %vm2267, %v2256, %v2244
  %2270 = vrot.lane.b32.xlu0 %v2268, 96
  %v2271 = vpop.permute.xlu0 %2270
  %2273 = vst.msk [vmem:[#allocation5] sm:$0x3] %vm249, %v2271
  %v2274 = vld [vmem:[#allocation4] sm:$0x3]
  %2276 = vrot.lane.b32.xlu0 %v2274, 96
  %v2277 = vpop.permute.xlu0 %2276
  %v2279 = vsel %vm2267, %v2262, %v2277
  %2281 = vrot.lane.b32.xlu0 %v2279, 32
  %v2282 = vpop.permute.xlu0 %2281
  %2284 = vst.msk [vmem:[#allocation4] sm:$0x3] %vm249, %v2282
  %v2285 = vsel %vm2267, %v2262, 0.0
  %2287 = vrot.lane.b32.xlu0 %v2285, 32
  %v2288 = vpop.permute.xlu0 %2287
  %s2290 = scalar_lea.vmem %s67, 4
  %2291 = vst.msk [vmem:[%s2290] sm:$0x3] %vm249, %v2288
  %s2292 = sadd.s32 %s81, 6
  %v2293 = vstv %s2292
  %vm2294 = vcmp.lt.s32.totalorder %v2293, %v80
  %s2295 = scalar_lea.vmem %s0, 12
  %v2296 = vld [vmem:[%s2295] sm:$0x3]
  %v2297 = vpack.c.bf16 %v2296, %v2296
  %v2298 = vld [vmem:[%s3] sm:$0xf]
  %v2299 = vld [vmem:[%s3 + $0x4] sm:$0xf]
  %v2300 = vld [vmem:[#allocation2] sm:$0x3]
  %v2301 = vpack.c.bf16 %v2300, %v2300
  %v2302 = vld [vmem:[%s7] sm:$0xf]
  %v2303 = vld [vmem:[%s7 + $0x4] sm:$0xf]
  %v2304 = vld [vmem:[%s7 + $0x8] sm:$0xf]
  %v2305 = vld [vmem:[%s7 + $0xc] sm:$0xf]
  %v2310 = vunpack.c.l.b16 %v2302
  %v2311 = vunpack.c.l.b16 %v2303
  %v2312 = vunpack.c.l.b16 %v2304
  %v2313 = vunpack.c.l.b16 %v2305
  %v2314 = vpack.c.b16 %v2311, %v2310
  %v2315 = vpack.c.b16 %v2313, %v2312
  %v2319 = vsel %vm108, %v2301, 0
  %2321 = vmatprep.subr.bf16.mxu0 0
  %2322 = vmatpush1.bf16.msra.mxu0 %v2314
  %2323 = vmatprep.subr.bf16.mxu0 0
  %2324 = vmatpush1.bf16.msra.mxu0 %v2315
  %2325 = vmatprep.subr.bf16.mxu0 0
  %2326 = vmatpush1.bf16.msra.mxu0 0
  %2327 = vmatprep.subr.bf16.mxu0 0
  %2328 = vmatpush1.bf16.msra.mxu0 0
  %2329 = vmatprep.subr.bf16.mxu0 0
  %2330 = vmatpush1.bf16.msra.mxu0 0
  %2331 = vmatprep.subr.bf16.mxu0 0
  %2332 = vmatpush1.bf16.msra.mxu0 0
  %2333 = vmatprep.subr.bf16.mxu0 0
  %2334 = vmatpush1.bf16.msra.mxu0 0
  %2335 = vmatprep.subr.bf16.mxu0 0
  %2336 = vmatpush1.bf16.msra.mxu0 0
  %2337 = vmatprep.subr.bf16.mxu0 0
  %2338 = vmatpush1.bf16.msra.mxu0 0
  %2339 = vmatprep.subr.bf16.mxu0 0
  %2340 = vmatpush1.bf16.msra.mxu0 0
  %2341 = vmatprep.subr.bf16.mxu0 0
  %2342 = vmatpush1.bf16.msra.mxu0 0
  %2343 = vmatprep.subr.bf16.mxu0 0
  %2344 = vmatpush1.bf16.msra.mxu0 0
  %2345 = vmatprep.subr.bf16.mxu0 0
  %2346 = vmatpush1.bf16.msra.mxu0 0
  %2347 = vmatprep.subr.bf16.mxu0 0
  %2348 = vmatpush1.bf16.msra.mxu0 0
  %2349 = vmatprep.subr.bf16.mxu0 0
  %2350 = vmatpush1.bf16.msra.mxu0 0
  %2351 = vmatprep.subr.bf16.mxu0 0
  %2352 = vmatpush1.bf16.msra.mxu0 0
  %2353 = vmatprep.mubr.bf16.mxu0 0
  %2354 = vmatmul.mubr.bf16.gmra.mrb[0].mxu0 %v2319
  %v2355 = vpop.f32.mrb[0].mxu0
  %v2356 = vadd.f32 0.0, %v2355
  %v2357 = vpop.f32.mrb[0].mxu0
  %v2358 = vpop.f32.mrb[0].mxu0
  %v2359 = vpop.f32.mrb[0].mxu0
  %2360 = vdwg.mxu0
  %v2363 = vunpack.c.l.b16 %v2298
  %v2364 = vunpack.c.l.b16 %v2299
  %v2365 = vpack.c.b16 %v2364, %v2363
  %v2368 = vsel %vm158, %v2297, 0
  %2370 = vmatprep.subr.bf16.mxu0 0
  %2371 = vmatpush1.bf16.msra.mxu0 %v2365
  %2372 = vmatprep.subr.bf16.mxu0 0
  %2373 = vmatpush1.bf16.msra.mxu0 0
  %2374 = vmatprep.subr.bf16.mxu0 0
  %2375 = vmatpush1.bf16.msra.mxu0 0
  %2376 = vmatprep.subr.bf16.mxu0 0
  %2377 = vmatpush1.bf16.msra.mxu0 0
  %2378 = vmatprep.subr.bf16.mxu0 0
  %2379 = vmatpush1.bf16.msra.mxu0 0
  %2380 = vmatprep.subr.bf16.mxu0 0
  %2381 = vmatpush1.bf16.msra.mxu0 0
  %2382 = vmatprep.subr.bf16.mxu0 0
  %2383 = vmatpush1.bf16.msra.mxu0 0
  %2384 = vmatprep.subr.bf16.mxu0 0
  %2385 = vmatpush1.bf16.msra.mxu0 0
  %2386 = vmatprep.subr.bf16.mxu0 0
  %2387 = vmatpush1.bf16.msra.mxu0 0
  %2388 = vmatprep.subr.bf16.mxu0 0
  %2389 = vmatpush1.bf16.msra.mxu0 0
  %2390 = vmatprep.subr.bf16.mxu0 0
  %2391 = vmatpush1.bf16.msra.mxu0 0
  %2392 = vmatprep.subr.bf16.mxu0 0
  %2393 = vmatpush1.bf16.msra.mxu0 0
  %2394 = vmatprep.subr.bf16.mxu0 0
  %2395 = vmatpush1.bf16.msra.mxu0 0
  %2396 = vmatprep.subr.bf16.mxu0 0
  %2397 = vmatpush1.bf16.msra.mxu0 0
  %2398 = vmatprep.subr.bf16.mxu0 0
  %2399 = vmatpush1.bf16.msra.mxu0 0
  %2400 = vmatprep.subr.bf16.mxu0 0
  %2401 = vmatpush1.bf16.msra.mxu0 0
  %2402 = vmatprep.mubr.bf16.mxu0 0
  %2403 = vmatmul.mubr.bf16.gmra.mrb[0].mxu0 %v2368
  %v2404 = vpop.f32.mrb[0].mxu0
  %v2405 = vadd.f32 %v2356, %v2404
  %v2406 = vpop.f32.mrb[0].mxu0
  %v2407 = vpop.f32.mrb[0].mxu0
  %v2408 = vpop.f32.mrb[0].mxu0
  %2409 = vdwg.mxu0
  %v2410 = vld [vmem:[%s5] sm:$0x1]
  %v2412 = vlaneseq
  %v2413 = vshrl.u32 %v2412, 7
  %v2414 = vsub.s32 0, %v2413
  %v2415 = vrot.slane %v2410, %v2414
  %v2417 = vadd.f32 %v2405, %v2415
  %v2418 = vxor.u32 %v2417, 2147483648
  %v2419 = vmul.f32 %v2418, 1.442695
  %v2420 = vpow.pop %v2419
  %v2421 = vadd.f32 %v2420, 1.0
  %v2422 = vrcp.pop %v2421
  %v2423 = vmul.f32 1.0, %v2422
  %v2424 = vtanh.pop %v2417
  %v2425 = vld [vmem:[#allocation3] sm:$0x3]
  %2427 = vrot.lane.b32.xlu0 %v2425, 32
  %v2428 = vpop.permute.xlu0 %2427
  %v2430 = vmul.f32 %v2423, %v2428
  %2432 = vrot.lane.b32.xlu0 %v2424, 64
  %v2433 = vpop.permute.xlu0 %2432
  %v2435 = vmul.f32 %v2423, %v2433
  %2437 = vrot.lane.b32.xlu0 %v2435, 32
  %v2438 = vpop.permute.xlu0 %2437
  %v2440 = vadd.f32 %v2430, %v2438
  %v2441 = vtanh.pop %v2440
  %2443 = vrot.lane.b32.xlu0 %v2441, 64
  %v2444 = vpop.permute.xlu0 %2443
  %v2446 = vmul.f32 %v2423, %v2444
  %v2447 = vsel %vm2294, 1, 0
  %2448 = vset.pattern.permute.xlu0 0
  %2449 = vperm.xlu0 %2448, %v2447
  %v2450 = vpop.permute.xlu0 %2449
  %vm2451 = vcmp.eq.s32.totalorder %v2450, 1
  %v2452 = vsel %vm2451, %v2440, %v2428
  %2454 = vrot.lane.b32.xlu0 %v2452, 96
  %v2455 = vpop.permute.xlu0 %2454
  %2457 = vst.msk [vmem:[#allocation3] sm:$0x3] %vm249, %v2455
  %v2458 = vld [vmem:[#allocation2] sm:$0x3]
  %2460 = vrot.lane.b32.xlu0 %v2458, 96
  %v2461 = vpop.permute.xlu0 %2460
  %v2463 = vsel %vm2451, %v2446, %v2461
  %2465 = vrot.lane.b32.xlu0 %v2463, 32
  %v2466 = vpop.permute.xlu0 %2465
  %2468 = vst.msk [vmem:[#allocation2] sm:$0x3] %vm249, %v2466
  %v2469 = vsel %vm2451, %v2446, 0.0
  %2471 = vrot.lane.b32.xlu0 %v2469, 32
  %v2472 = vpop.permute.xlu0 %2471
  %s2474 = scalar_lea.vmem %s9, 12
  %2475 = vst.msk [vmem:[%s2474] sm:$0x3] %vm249, %v2472
  %s2476 = sadd.s32 %s83, 1
  %v2477 = vstv %s2476
  %vm2478 = vcmp.lt.s32.totalorder %v2477, %v80
  %s2479 = scalar_lea.vmem %s59, 2
  %v2480 = vld [vmem:[%s2479] sm:$0x3]
  %v2481 = vpack.c.bf16 %v2480, %v2480
  %v2482 = vld [vmem:[%s4] sm:$0xf]
  %v2483 = vld [vmem:[%s4 + $0x4] sm:$0xf]
  %v2484 = vld [vmem:[#allocation4] sm:$0x3]
  %v2485 = vpack.c.bf16 %v2484, %v2484
  %v2486 = vld [vmem:[%s8] sm:$0xf]
  %v2487 = vld [vmem:[%s8 + $0x4] sm:$0xf]
  %v2488 = vld [vmem:[%s8 + $0x8] sm:$0xf]
  %v2489 = vld [vmem:[%s8 + $0xc] sm:$0xf]
  %v2494 = vunpack.c.l.b16 %v2486
  %v2495 = vunpack.c.l.b16 %v2487
  %v2496 = vunpack.c.l.b16 %v2488
  %v2497 = vunpack.c.l.b16 %v2489
  %v2498 = vpack.c.b16 %v2495, %v2494
  %v2499 = vpack.c.b16 %v2497, %v2496
  %v2503 = vsel %vm108, %v2485, 0
  %2505 = vmatprep.subr.bf16.mxu0 0
  %2506 = vmatpush1.bf16.msra.mxu0 %v2498
  %2507 = vmatprep.subr.bf16.mxu0 0
  %2508 = vmatpush1.bf16.msra.mxu0 %v2499
  %2509 = vmatprep.subr.bf16.mxu0 0
  %2510 = vmatpush1.bf16.msra.mxu0 0
  %2511 = vmatprep.subr.bf16.mxu0 0
  %2512 = vmatpush1.bf16.msra.mxu0 0
  %2513 = vmatprep.subr.bf16.mxu0 0
  %2514 = vmatpush1.bf16.msra.mxu0 0
  %2515 = vmatprep.subr.bf16.mxu0 0
  %2516 = vmatpush1.bf16.msra.mxu0 0
  %2517 = vmatprep.subr.bf16.mxu0 0
  %2518 = vmatpush1.bf16.msra.mxu0 0
  %2519 = vmatprep.subr.bf16.mxu0 0
  %2520 = vmatpush1.bf16.msra.mxu0 0
  %2521 = vmatprep.subr.bf16.mxu0 0
  %2522 = vmatpush1.bf16.msra.mxu0 0
  %2523 = vmatprep.subr.bf16.mxu0 0
  %2524 = vmatpush1.bf16.msra.mxu0 0
  %2525 = vmatprep.subr.bf16.mxu0 0
  %2526 = vmatpush1.bf16.msra.mxu0 0
  %2527 = vmatprep.subr.bf16.mxu0 0
  %2528 = vmatpush1.bf16.msra.mxu0 0
  %2529 = vmatprep.subr.bf16.mxu0 0
  %2530 = vmatpush1.bf16.msra.mxu0 0
  %2531 = vmatprep.subr.bf16.mxu0 0
  %2532 = vmatpush1.bf16.msra.mxu0 0
  %2533 = vmatprep.subr.bf16.mxu0 0
  %2534 = vmatpush1.bf16.msra.mxu0 0
  %2535 = vmatprep.subr.bf16.mxu0 0
  %2536 = vmatpush1.bf16.msra.mxu0 0
  %2537 = vmatprep.mubr.bf16.mxu0 0
  %2538 = vmatmul.mubr.bf16.gmra.mrb[0].mxu0 %v2503
  %v2539 = vpop.f32.mrb[0].mxu0
  %v2540 = vadd.f32 0.0, %v2539
  %v2541 = vpop.f32.mrb[0].mxu0
  %v2542 = vpop.f32.mrb[0].mxu0
  %v2543 = vpop.f32.mrb[0].mxu0
  %2544 = vdwg.mxu0
  %v2547 = vunpack.c.l.b16 %v2482
  %v2548 = vunpack.c.l.b16 %v2483
  %v2549 = vpack.c.b16 %v2548, %v2547
  %v2552 = vsel %vm158, %v2481, 0
  %2554 = vmatprep.subr.bf16.mxu0 0
  %2555 = vmatpush1.bf16.msra.mxu0 %v2549
  %2556 = vmatprep.subr.bf16.mxu0 0
  %2557 = vmatpush1.bf16.msra.mxu0 0
  %2558 = vmatprep.subr.bf16.mxu0 0
  %2559 = vmatpush1.bf16.msra.mxu0 0
  %2560 = vmatprep.subr.bf16.mxu0 0
  %2561 = vmatpush1.bf16.msra.mxu0 0
  %2562 = vmatprep.subr.bf16.mxu0 0
  %2563 = vmatpush1.bf16.msra.mxu0 0
  %2564 = vmatprep.subr.bf16.mxu0 0
  %2565 = vmatpush1.bf16.msra.mxu0 0
  %2566 = vmatprep.subr.bf16.mxu0 0
  %2567 = vmatpush1.bf16.msra.mxu0 0
  %2568 = vmatprep.subr.bf16.mxu0 0
  %2569 = vmatpush1.bf16.msra.mxu0 0
  %2570 = vmatprep.subr.bf16.mxu0 0
  %2571 = vmatpush1.bf16.msra.mxu0 0
  %2572 = vmatprep.subr.bf16.mxu0 0
  %2573 = vmatpush1.bf16.msra.mxu0 0
  %2574 = vmatprep.subr.bf16.mxu0 0
  %2575 = vmatpush1.bf16.msra.mxu0 0
  %2576 = vmatprep.subr.bf16.mxu0 0
  %2577 = vmatpush1.bf16.msra.mxu0 0
  %2578 = vmatprep.subr.bf16.mxu0 0
  %2579 = vmatpush1.bf16.msra.mxu0 0
  %2580 = vmatprep.subr.bf16.mxu0 0
  %2581 = vmatpush1.bf16.msra.mxu0 0
  %2582 = vmatprep.subr.bf16.mxu0 0
  %2583 = vmatpush1.bf16.msra.mxu0 0
  %2584 = vmatprep.subr.bf16.mxu0 0
  %2585 = vmatpush1.bf16.msra.mxu0 0
  %2586 = vmatprep.mubr.bf16.mxu0 0
  %2587 = vmatmul.mubr.bf16.gmra.mrb[0].mxu0 %v2552
  %v2588 = vpop.f32.mrb[0].mxu0
  %v2589 = vadd.f32 %v2540, %v2588
  %v2590 = vpop.f32.mrb[0].mxu0
  %v2591 = vpop.f32.mrb[0].mxu0
  %v2592 = vpop.f32.mrb[0].mxu0
  %2593 = vdwg.mxu0
  %v2594 = vld [vmem:[%s6] sm:$0x1]
  %v2596 = vlaneseq
  %v2597 = vshrl.u32 %v2596, 7
  %v2598 = vsub.s32 0, %v2597
  %v2599 = vrot.slane %v2594, %v2598
  %v2601 = vadd.f32 %v2589, %v2599
  %v2602 = vxor.u32 %v2601, 2147483648
  %v2603 = vmul.f32 %v2602, 1.442695
  %v2604 = vpow.pop %v2603
  %v2605 = vadd.f32 %v2604, 1.0
  %v2606 = vrcp.pop %v2605
  %v2607 = vmul.f32 1.0, %v2606
  %v2608 = vtanh.pop %v2601
  %v2609 = vld [vmem:[#allocation5] sm:$0x3]
  %2611 = vrot.lane.b32.xlu0 %v2609, 32
  %v2612 = vpop.permute.xlu0 %2611
  %v2614 = vmul.f32 %v2607, %v2612
  %2616 = vrot.lane.b32.xlu0 %v2608, 64
  %v2617 = vpop.permute.xlu0 %2616
  %v2619 = vmul.f32 %v2607, %v2617
  %2621 = vrot.lane.b32.xlu0 %v2619, 32
  %v2622 = vpop.permute.xlu0 %2621
  %v2624 = vadd.f32 %v2614, %v2622
  %v2625 = vtanh.pop %v2624
  %2627 = vrot.lane.b32.xlu0 %v2625, 64
  %v2628 = vpop.permute.xlu0 %2627
  %v2630 = vmul.f32 %v2607, %v2628
  %v2631 = vsel %vm2478, 1, 0
  %2632 = vset.pattern.permute.xlu0 0
  %2633 = vperm.xlu0 %2632, %v2631
  %v2634 = vpop.permute.xlu0 %2633
  %vm2635 = vcmp.eq.s32.totalorder %v2634, 1
  %v2636 = vsel %vm2635, %v2624, %v2612
  %2638 = vrot.lane.b32.xlu0 %v2636, 96
  %v2639 = vpop.permute.xlu0 %2638
  %2641 = vst.msk [vmem:[#allocation5] sm:$0x3] %vm249, %v2639
  %v2642 = vld [vmem:[#allocation4] sm:$0x3]
  %2644 = vrot.lane.b32.xlu0 %v2642, 96
  %v2645 = vpop.permute.xlu0 %2644
  %v2647 = vsel %vm2635, %v2630, %v2645
  %2649 = vrot.lane.b32.xlu0 %v2647, 32
  %v2650 = vpop.permute.xlu0 %2649
  %2652 = vst.msk [vmem:[#allocation4] sm:$0x3] %vm249, %v2650
  %v2653 = vsel %vm2635, %v2630, 0.0
  %2655 = vrot.lane.b32.xlu0 %v2653, 32
  %v2656 = vpop.permute.xlu0 %2655
  %s2658 = scalar_lea.vmem %s67, 2
  %2659 = vst.msk [vmem:[%s2658] sm:$0x3] %vm249, %v2656
  %s2660 = sadd.s32 %s81, 7
  %v2661 = vstv %s2660
  %vm2662 = vcmp.lt.s32.totalorder %v2661, %v80
  %s2663 = scalar_lea.vmem %s0, 14
  %v2664 = vld [vmem:[%s2663] sm:$0x3]
  %v2665 = vpack.c.bf16 %v2664, %v2664
  %v2666 = vld [vmem:[%s3] sm:$0xf]
  %v2667 = vld [vmem:[%s3 + $0x4] sm:$0xf]
  %v2668 = vld [vmem:[#allocation2] sm:$0x3]
  %v2669 = vpack.c.bf16 %v2668, %v2668
  %v2670 = vld [vmem:[%s7] sm:$0xf]
  %v2671 = vld [vmem:[%s7 + $0x4] sm:$0xf]
  %v2672 = vld [vmem:[%s7 + $0x8] sm:$0xf]
  %v2673 = vld [vmem:[%s7 + $0xc] sm:$0xf]
  %v2678 = vunpack.c.l.b16 %v2670
  %v2679 = vunpack.c.l.b16 %v2671
  %v2680 = vunpack.c.l.b16 %v2672
  %v2681 = vunpack.c.l.b16 %v2673
  %v2682 = vpack.c.b16 %v2679, %v2678
  %v2683 = vpack.c.b16 %v2681, %v2680
  %v2687 = vsel %vm108, %v2669, 0
  %2689 = vmatprep.subr.bf16.mxu0 0
  %2690 = vmatpush1.bf16.msra.mxu0 %v2682
  %2691 = vmatprep.subr.bf16.mxu0 0
  %2692 = vmatpush1.bf16.msra.mxu0 %v2683
  %2693 = vmatprep.subr.bf16.mxu0 0
  %2694 = vmatpush1.bf16.msra.mxu0 0
  %2695 = vmatprep.subr.bf16.mxu0 0
  %2696 = vmatpush1.bf16.msra.mxu0 0
  %2697 = vmatprep.subr.bf16.mxu0 0
  %2698 = vmatpush1.bf16.msra.mxu0 0
  %2699 = vmatprep.subr.bf16.mxu0 0
  %2700 = vmatpush1.bf16.msra.mxu0 0
  %2701 = vmatprep.subr.bf16.mxu0 0
  %2702 = vmatpush1.bf16.msra.mxu0 0
  %2703 = vmatprep.subr.bf16.mxu0 0
  %2704 = vmatpush1.bf16.msra.mxu0 0
  %2705 = vmatprep.subr.bf16.mxu0 0
  %2706 = vmatpush1.bf16.msra.mxu0 0
  %2707 = vmatprep.subr.bf16.mxu0 0
  %2708 = vmatpush1.bf16.msra.mxu0 0
  %2709 = vmatprep.subr.bf16.mxu0 0
  %2710 = vmatpush1.bf16.msra.mxu0 0
  %2711 = vmatprep.subr.bf16.mxu0 0
  %2712 = vmatpush1.bf16.msra.mxu0 0
  %2713 = vmatprep.subr.bf16.mxu0 0
  %2714 = vmatpush1.bf16.msra.mxu0 0
  %2715 = vmatprep.subr.bf16.mxu0 0
  %2716 = vmatpush1.bf16.msra.mxu0 0
  %2717 = vmatprep.subr.bf16.mxu0 0
  %2718 = vmatpush1.bf16.msra.mxu0 0
  %2719 = vmatprep.subr.bf16.mxu0 0
  %2720 = vmatpush1.bf16.msra.mxu0 0
  %2721 = vmatprep.mubr.bf16.mxu0 0
  %2722 = vmatmul.mubr.bf16.gmra.mrb[0].mxu0 %v2687
  %v2723 = vpop.f32.mrb[0].mxu0
  %v2724 = vadd.f32 0.0, %v2723
  %v2725 = vpop.f32.mrb[0].mxu0
  %v2726 = vpop.f32.mrb[0].mxu0
  %v2727 = vpop.f32.mrb[0].mxu0
  %2728 = vdwg.mxu0
  %v2731 = vunpack.c.l.b16 %v2666
  %v2732 = vunpack.c.l.b16 %v2667
  %v2733 = vpack.c.b16 %v2732, %v2731
  %v2736 = vsel %vm158, %v2665, 0
  %2738 = vmatprep.subr.bf16.mxu0 0
  %2739 = vmatpush1.bf16.msra.mxu0 %v2733
  %2740 = vmatprep.subr.bf16.mxu0 0
  %2741 = vmatpush1.bf16.msra.mxu0 0
  %2742 = vmatprep.subr.bf16.mxu0 0
  %2743 = vmatpush1.bf16.msra.mxu0 0
  %2744 = vmatprep.subr.bf16.mxu0 0
  %2745 = vmatpush1.bf16.msra.mxu0 0
  %2746 = vmatprep.subr.bf16.mxu0 0
  %2747 = vmatpush1.bf16.msra.mxu0 0
  %2748 = vmatprep.subr.bf16.mxu0 0
  %2749 = vmatpush1.bf16.msra.mxu0 0
  %2750 = vmatprep.subr.bf16.mxu0 0
  %2751 = vmatpush1.bf16.msra.mxu0 0
  %2752 = vmatprep.subr.bf16.mxu0 0
  %2753 = vmatpush1.bf16.msra.mxu0 0
  %2754 = vmatprep.subr.bf16.mxu0 0
  %2755 = vmatpush1.bf16.msra.mxu0 0
  %2756 = vmatprep.subr.bf16.mxu0 0
  %2757 = vmatpush1.bf16.msra.mxu0 0
  %2758 = vmatprep.subr.bf16.mxu0 0
  %2759 = vmatpush1.bf16.msra.mxu0 0
  %2760 = vmatprep.subr.bf16.mxu0 0
  %2761 = vmatpush1.bf16.msra.mxu0 0
  %2762 = vmatprep.subr.bf16.mxu0 0
  %2763 = vmatpush1.bf16.msra.mxu0 0
  %2764 = vmatprep.subr.bf16.mxu0 0
  %2765 = vmatpush1.bf16.msra.mxu0 0
  %2766 = vmatprep.subr.bf16.mxu0 0
  %2767 = vmatpush1.bf16.msra.mxu0 0
  %2768 = vmatprep.subr.bf16.mxu0 0
  %2769 = vmatpush1.bf16.msra.mxu0 0
  %2770 = vmatprep.mubr.bf16.mxu0 0
  %2771 = vmatmul.mubr.bf16.gmra.mrb[0].mxu0 %v2736
  %v2772 = vpop.f32.mrb[0].mxu0
  %v2773 = vadd.f32 %v2724, %v2772
  %v2774 = vpop.f32.mrb[0].mxu0
  %v2775 = vpop.f32.mrb[0].mxu0
  %v2776 = vpop.f32.mrb[0].mxu0
  %2777 = vdwg.mxu0
  %v2778 = vld [vmem:[%s5] sm:$0x1]
  %v2780 = vlaneseq
  %v2781 = vshrl.u32 %v2780, 7
  %v2782 = vsub.s32 0, %v2781
  %v2783 = vrot.slane %v2778, %v2782
  %v2785 = vadd.f32 %v2773, %v2783
  %v2786 = vxor.u32 %v2785, 2147483648
  %v2787 = vmul.f32 %v2786, 1.442695
  %v2788 = vpow.pop %v2787
  %v2789 = vadd.f32 %v2788, 1.0
  %v2790 = vrcp.pop %v2789
  %v2791 = vmul.f32 1.0, %v2790
  %v2792 = vtanh.pop %v2785
  %v2793 = vld [vmem:[#allocation3] sm:$0x3]
  %2795 = vrot.lane.b32.xlu0 %v2793, 32
  %v2796 = vpop.permute.xlu0 %2795
  %v2798 = vmul.f32 %v2791, %v2796
  %2800 = vrot.lane.b32.xlu0 %v2792, 64
  %v2801 = vpop.permute.xlu0 %2800
  %v2803 = vmul.f32 %v2791, %v2801
  %2805 = vrot.lane.b32.xlu0 %v2803, 32
  %v2806 = vpop.permute.xlu0 %2805
  %v2808 = vadd.f32 %v2798, %v2806
  %v2809 = vtanh.pop %v2808
  %2811 = vrot.lane.b32.xlu0 %v2809, 64
  %v2812 = vpop.permute.xlu0 %2811
  %v2814 = vmul.f32 %v2791, %v2812
  %v2815 = vsel %vm2662, 1, 0
  %2816 = vset.pattern.permute.xlu0 0
  %2817 = vperm.xlu0 %2816, %v2815
  %v2818 = vpop.permute.xlu0 %2817
  %vm2819 = vcmp.eq.s32.totalorder %v2818, 1
  %v2820 = vsel %vm2819, %v2808, %v2796
  %2822 = vrot.lane.b32.xlu0 %v2820, 96
  %v2823 = vpop.permute.xlu0 %2822
  %2825 = vst.msk [vmem:[#allocation3] sm:$0x3] %vm249, %v2823
  %v2826 = vld [vmem:[#allocation2] sm:$0x3]
  %2828 = vrot.lane.b32.xlu0 %v2826, 96
  %v2829 = vpop.permute.xlu0 %2828
  %v2831 = vsel %vm2819, %v2814, %v2829
  %2833 = vrot.lane.b32.xlu0 %v2831, 32
  %v2834 = vpop.permute.xlu0 %2833
  %2836 = vst.msk [vmem:[#allocation2] sm:$0x3] %vm249, %v2834
  %v2837 = vsel %vm2819, %v2814, 0.0
  %2839 = vrot.lane.b32.xlu0 %v2837, 32
  %v2840 = vpop.permute.xlu0 %2839
  %s2842 = scalar_lea.vmem %s9, 14
  %2843 = vst.msk [vmem:[%s2842] sm:$0x3] %vm249, %v2840
  %v2844 = vstv %s83
  %vm2845 = vcmp.lt.s32.totalorder %v2844, %v80
  %v2846 = vld [vmem:[%s59] sm:$0x3]
  %v2847 = vpack.c.bf16 %v2846, %v2846
  %v2848 = vld [vmem:[%s4] sm:$0xf]
  %v2849 = vld [vmem:[%s4 + $0x4] sm:$0xf]
  %v2850 = vld [vmem:[#allocation4] sm:$0x3]
  %v2851 = vpack.c.bf16 %v2850, %v2850
  %v2852 = vld [vmem:[%s8] sm:$0xf]
  %v2853 = vld [vmem:[%s8 + $0x4] sm:$0xf]
  %v2854 = vld [vmem:[%s8 + $0x8] sm:$0xf]
  %v2855 = vld [vmem:[%s8 + $0xc] sm:$0xf]
  %v2860 = vunpack.c.l.b16 %v2852
  %v2861 = vunpack.c.l.b16 %v2853
  %v2862 = vunpack.c.l.b16 %v2854
  %v2863 = vunpack.c.l.b16 %v2855
  %v2864 = vpack.c.b16 %v2861, %v2860
  %v2865 = vpack.c.b16 %v2863, %v2862
  %v2869 = vsel %vm108, %v2851, 0
  %2871 = vmatprep.subr.bf16.mxu0 0
  %2872 = vmatpush1.bf16.msra.mxu0 %v2864
  %2873 = vmatprep.subr.bf16.mxu0 0
  %2874 = vmatpush1.bf16.msra.mxu0 %v2865
  %2875 = vmatprep.subr.bf16.mxu0 0
  %2876 = vmatpush1.bf16.msra.mxu0 0
  %2877 = vmatprep.subr.bf16.mxu0 0
  %2878 = vmatpush1.bf16.msra.mxu0 0
  %2879 = vmatprep.subr.bf16.mxu0 0
  %2880 = vmatpush1.bf16.msra.mxu0 0
  %2881 = vmatprep.subr.bf16.mxu0 0
  %2882 = vmatpush1.bf16.msra.mxu0 0
  %2883 = vmatprep.subr.bf16.mxu0 0
  %2884 = vmatpush1.bf16.msra.mxu0 0
  %2885 = vmatprep.subr.bf16.mxu0 0
  %2886 = vmatpush1.bf16.msra.mxu0 0
  %2887 = vmatprep.subr.bf16.mxu0 0
  %2888 = vmatpush1.bf16.msra.mxu0 0
  %2889 = vmatprep.subr.bf16.mxu0 0
  %2890 = vmatpush1.bf16.msra.mxu0 0
  %2891 = vmatprep.subr.bf16.mxu0 0
  %2892 = vmatpush1.bf16.msra.mxu0 0
  %2893 = vmatprep.subr.bf16.mxu0 0
  %2894 = vmatpush1.bf16.msra.mxu0 0
  %2895 = vmatprep.subr.bf16.mxu0 0
  %2896 = vmatpush1.bf16.msra.mxu0 0
  %2897 = vmatprep.subr.bf16.mxu0 0
  %2898 = vmatpush1.bf16.msra.mxu0 0
  %2899 = vmatprep.subr.bf16.mxu0 0
  %2900 = vmatpush1.bf16.msra.mxu0 0
  %2901 = vmatprep.subr.bf16.mxu0 0
  %2902 = vmatpush1.bf16.msra.mxu0 0
  %2903 = vmatprep.mubr.bf16.mxu0 0
  %2904 = vmatmul.mubr.bf16.gmra.mrb[0].mxu0 %v2869
  %v2905 = vpop.f32.mrb[0].mxu0
  %v2906 = vadd.f32 0.0, %v2905
  %v2907 = vpop.f32.mrb[0].mxu0
  %v2908 = vpop.f32.mrb[0].mxu0
  %v2909 = vpop.f32.mrb[0].mxu0
  %2910 = vdwg.mxu0
  %v2913 = vunpack.c.l.b16 %v2848
  %v2914 = vunpack.c.l.b16 %v2849
  %v2915 = vpack.c.b16 %v2914, %v2913
  %v2918 = vsel %vm158, %v2847, 0
  %2920 = vmatprep.subr.bf16.mxu0 0
  %2921 = vmatpush1.bf16.msra.mxu0 %v2915
  %2922 = vmatprep.subr.bf16.mxu0 0
  %2923 = vmatpush1.bf16.msra.mxu0 0
  %2924 = vmatprep.subr.bf16.mxu0 0
  %2925 = vmatpush1.bf16.msra.mxu0 0
  %2926 = vmatprep.subr.bf16.mxu0 0
  %2927 = vmatpush1.bf16.msra.mxu0 0
  %2928 = vmatprep.subr.bf16.mxu0 0
  %2929 = vmatpush1.bf16.msra.mxu0 0
  %2930 = vmatprep.subr.bf16.mxu0 0
  %2931 = vmatpush1.bf16.msra.mxu0 0
  %2932 = vmatprep.subr.bf16.mxu0 0
  %2933 = vmatpush1.bf16.msra.mxu0 0
  %2934 = vmatprep.subr.bf16.mxu0 0
  %2935 = vmatpush1.bf16.msra.mxu0 0
  %2936 = vmatprep.subr.bf16.mxu0 0
  %2937 = vmatpush1.bf16.msra.mxu0 0
  %2938 = vmatprep.subr.bf16.mxu0 0
  %2939 = vmatpush1.bf16.msra.mxu0 0
  %2940 = vmatprep.subr.bf16.mxu0 0
  %2941 = vmatpush1.bf16.msra.mxu0 0
  %2942 = vmatprep.subr.bf16.mxu0 0
  %2943 = vmatpush1.bf16.msra.mxu0 0
  %2944 = vmatprep.subr.bf16.mxu0 0
  %2945 = vmatpush1.bf16.msra.mxu0 0
  %2946 = vmatprep.subr.bf16.mxu0 0
  %2947 = vmatpush1.bf16.msra.mxu0 0
  %2948 = vmatprep.subr.bf16.mxu0 0
  %2949 = vmatpush1.bf16.msra.mxu0 0
  %2950 = vmatprep.subr.bf16.mxu0 0
  %2951 = vmatpush1.bf16.msra.mxu0 0
  %2952 = vmatprep.mubr.bf16.mxu0 0
  %2953 = vmatmul.mubr.bf16.gmra.mrb[0].mxu0 %v2918
  %v2954 = vpop.f32.mrb[0].mxu0
  %v2955 = vadd.f32 %v2906, %v2954
  %v2956 = vpop.f32.mrb[0].mxu0
  %v2957 = vpop.f32.mrb[0].mxu0
  %v2958 = vpop.f32.mrb[0].mxu0
  %2959 = vdwg.mxu0
  %v2960 = vld [vmem:[%s6] sm:$0x1]
  %v2962 = vlaneseq
  %v2963 = vshrl.u32 %v2962, 7
  %v2964 = vsub.s32 0, %v2963
  %v2965 = vrot.slane %v2960, %v2964
  %v2967 = vadd.f32 %v2955, %v2965
  %v2968 = vxor.u32 %v2967, 2147483648
  %v2969 = vmul.f32 %v2968, 1.442695
  %v2970 = vpow.pop %v2969
  %v2971 = vadd.f32 %v2970, 1.0
  %v2972 = vrcp.pop %v2971
  %v2973 = vmul.f32 1.0, %v2972
  %v2974 = vtanh.pop %v2967
  %v2975 = vld [vmem:[#allocation5] sm:$0x3]
  %2977 = vrot.lane.b32.xlu0 %v2975, 32
  %v2978 = vpop.permute.xlu0 %2977
  %v2980 = vmul.f32 %v2973, %v2978
  %2982 = vrot.lane.b32.xlu0 %v2974, 64
  %v2983 = vpop.permute.xlu0 %2982
  %v2985 = vmul.f32 %v2973, %v2983
  %2987 = vrot.lane.b32.xlu0 %v2985, 32
  %v2988 = vpop.permute.xlu0 %2987
  %v2990 = vadd.f32 %v2980, %v2988
  %v2991 = vtanh.pop %v2990
  %2993 = vrot.lane.b32.xlu0 %v2991, 64
  %v2994 = vpop.permute.xlu0 %2993
  %v2996 = vmul.f32 %v2973, %v2994
  %v2997 = vsel %vm2845, 1, 0
  %2998 = vset.pattern.permute.xlu0 0
  %2999 = vperm.xlu0 %2998, %v2997
  %v3000 = vpop.permute.xlu0 %2999
  %vm3001 = vcmp.eq.s32.totalorder %v3000, 1
  %v3002 = vsel %vm3001, %v2990, %v2978
  %3004 = vrot.lane.b32.xlu0 %v3002, 96
  %v3005 = vpop.permute.xlu0 %3004
  %3007 = vst.msk [vmem:[#allocation5] sm:$0x3] %vm249, %v3005
  %v3008 = vld [vmem:[#allocation4] sm:$0x3]
  %3010 = vrot.lane.b32.xlu0 %v3008, 96
  %v3011 = vpop.permute.xlu0 %3010
  %v3013 = vsel %vm3001, %v2996, %v3011
  %3015 = vrot.lane.b32.xlu0 %v3013, 32
  %v3016 = vpop.permute.xlu0 %3015
  %3018 = vst.msk [vmem:[#allocation4] sm:$0x3] %vm249, %v3016
  %v3019 = vsel %vm3001, %v2996, 0.0
  %3021 = vrot.lane.b32.xlu0 %v3019, 32
  %v3022 = vpop.permute.xlu0 %3021
  %3024 = vst.msk [vmem:[%s67] sm:$0x3] %vm249, %v3022
  %s3025 = ssub.s32 0, 0
  %s3026 = smul.u32 8, %s3025
  %p3027 = scmp.lt.s32.totalorder %s3026, 7
  %s3028 = scalar_select %p3027, %s3026, 7
  %s3029 = smul.addr %s3028, 2
  %s3030 = scalar_lea.vmem %s10, %s3029
  // Predicated region
  $region42: #{bilstm_cls_forward.3} parent=0 // pred_check
    _
  $region43: #{bilstm_cls_forward.3} parent=0 // pred_check_branch
    %3032 = sbr.rel (0) target = $region45
  $region44: #{bilstm_cls_forward.3} parent=0 // pred_region
    _
  $region45: #{bilstm_cls_forward.3} parent=0 // pred_fallthru
    _
  // Predicated region
  $region46: #{bilstm_cls_forward.3} parent=0 // pred_check
    _
  $region47: #{bilstm_cls_forward.3} parent=0 // pred_check_branch
    %3034 = sbr.rel (0) target = $region49
  $region48: #{bilstm_cls_forward.3} parent=0 // pred_region
    %s3035 = ssub.s32 0, 0
    %s3036 = smul.u32 8, %s3035
  $region49: #{bilstm_cls_forward.3} parent=0 // pred_fallthru
    _
  // Predicated region
  $region50: #{bilstm_cls_forward.3} parent=0 // pred_check
    _
  $region51: #{bilstm_cls_forward.3} parent=0 // pred_check_branch
    %3038 = sbr.rel (0) target = $region53
  $region52: #{bilstm_cls_forward.3} parent=0 // pred_region
    _
  $region53: #{bilstm_cls_forward.3} parent=0 // pred_fallthru
    _
  // Predicated region
  $region54: #{bilstm_cls_forward.3} parent=0 // pred_check
    _
  $region55: #{bilstm_cls_forward.3} parent=0 // pred_check_branch
    %3040 = sbr.rel (0) target = $region57
  $region56: #{bilstm_cls_forward.3} parent=0 // pred_region
    %s3041 = ssub.s32 0, 0
    %s3042 = smul.u32 8, %s3041
    %p3043 = scmp.lt.s32.totalorder %s3042, 7
    %s3044 = scalar_select %p3043, %s3042, 7
    %s3045 = smul.addr %s3044, 2
    %s3046 = scalar_lea.vmem %s10, %s3045
  $region57: #{bilstm_cls_forward.3} parent=0 // pred_fallthru
    _

// kernel: bilstm_cls_forward.4
$region0: #{bilstm_cls_forward.4}
  #allocation0 [shape = 'u32[]', space=smem, size = 0x4, offset = 0x4, fixed_abs, tag = 'smem constant byte address 0x4 - core index']
  #allocation1 [shape = 'u32[144,128]{1,0:T(1,128)}', space=vmem, size = 0x12000, scoped, tag = 'internal scratch']
  #allocation2 [shape = 'f32[2,32]{1,0:T(2,128)}', space=vmem, size = 0x400, scoped, tag = 'scratch operand']
  #allocation3 [shape = 'f32[2,32]{1,0:T(2,128)}', space=vmem, size = 0x400, scoped, tag = 'scratch operand']
  #allocation4 [shape = 'f32[2,32]{1,0:T(2,128)}', space=vmem, size = 0x400, scoped, tag = 'scratch operand']
  #allocation5 [shape = 'f32[2,32]{1,0:T(2,128)}', space=vmem, size = 0x400, scoped, tag = 'scratch operand']
  %s0 = inlined_call_operand.vmem [shape: f32[8,2,64], index: 0, kind: input, shape index: {}, may-alias: {0,1}]
  %s1 = inlined_call_operand.vmem [shape: f32[8,2,64], index: 1, kind: input, shape index: {}, may-alias: {0,1}]
  %s2 = inlined_call_operand.vmem [shape: s32[2,1], index: 2, kind: input, shape index: {}]
  %s3 = inlined_call_operand.vmem [shape: bf16[64,128], index: 3, kind: input, shape index: {}]
  %s4 = inlined_call_operand.vmem [shape: bf16[64,128], index: 4, kind: input, shape index: {}]
  %s5 = inlined_call_operand.vmem [shape: f32[1,128], index: 5, kind: input, shape index: {}]
  %s6 = inlined_call_operand.vmem [shape: f32[1,128], index: 6, kind: input, shape index: {}]
  %s7 = inlined_call_operand.vmem [shape: bf16[32,128], index: 7, kind: input, shape index: {}]
  %s8 = inlined_call_operand.vmem [shape: bf16[32,128], index: 8, kind: input, shape index: {}]
  %s9 = inlined_call_operand.vmem [shape: f32[8,2,32], index: 9, kind: output, shape index: {0}]
  %s10 = inlined_call_operand.vmem [shape: f32[8,2,32], index: 10, kind: output, shape index: {1}]
  %11 = xla_tuple %s9, %s10
  %s12 = sld [smem:[#allocation0]]
  $region58: #{bilstm_cls_forward.4} parent=0
    _
  %s14 = ssub.s32 1, %s12
  %s15 = scalar_select 0, %s14, %s12
  // Predicated region
  $region2: #{bilstm_cls_forward.4} parent=0 // pred_check
    _
  $region3: #{bilstm_cls_forward.4} parent=0 // pred_check_branch
    %17 = sbr.rel (0) target = $region5
  $region4: #{bilstm_cls_forward.4} parent=0 // pred_region
    _
  $region5: #{bilstm_cls_forward.4} parent=0 // pred_fallthru
    _
  // Predicated region
  $region6: #{bilstm_cls_forward.4} parent=0 // pred_check
    _
  $region7: #{bilstm_cls_forward.4} parent=0 // pred_check_branch
    %19 = sbr.rel (0) target = $region9
  $region8: #{bilstm_cls_forward.4} parent=0 // pred_region
    %s20 = ssub.s32 0, 0
    %s21 = smul.u32 8, %s20
    %p22 = scmp.lt.s32.totalorder %s21, 7
    %s23 = scalar_select %p22, %s21, 7
    %s24 = smul.addr %s23, 2
    %s25 = scalar_lea.vmem %s1, %s24
    %s26 = ssub.s32 0, 0
    %s27 = smul.u32 8, %s26
  $region9: #{bilstm_cls_forward.4} parent=0 // pred_fallthru
    _
  // Predicated region
  $region10: #{bilstm_cls_forward.4} parent=0 // pred_check
    _
  $region11: #{bilstm_cls_forward.4} parent=0 // pred_check_branch
    %29 = sbr.rel (0) target = $region13
  $region12: #{bilstm_cls_forward.4} parent=0 // pred_region
    _
  $region13: #{bilstm_cls_forward.4} parent=0 // pred_fallthru
    _
  // Predicated region
  $region14: #{bilstm_cls_forward.4} parent=0 // pred_check
    _
  $region15: #{bilstm_cls_forward.4} parent=0 // pred_check_branch
    %31 = sbr.rel (0) target = $region17
  $region16: #{bilstm_cls_forward.4} parent=0 // pred_region
    _
  $region17: #{bilstm_cls_forward.4} parent=0 // pred_fallthru
    _
  // Predicated region
  $region18: #{bilstm_cls_forward.4} parent=0 // pred_check
    _
  $region19: #{bilstm_cls_forward.4} parent=0 // pred_check_branch
    %33 = sbr.rel (0) target = $region21
  $region20: #{bilstm_cls_forward.4} parent=0 // pred_region
    _
  $region21: #{bilstm_cls_forward.4} parent=0 // pred_fallthru
    _
  // Predicated region
  $region22: #{bilstm_cls_forward.4} parent=0 // pred_check
    _
  $region23: #{bilstm_cls_forward.4} parent=0 // pred_check_branch
    %35 = sbr.rel (0) target = $region25
  $region24: #{bilstm_cls_forward.4} parent=0 // pred_region
    _
  $region25: #{bilstm_cls_forward.4} parent=0 // pred_fallthru
    _
  // Predicated region
  $region26: #{bilstm_cls_forward.4} parent=0 // pred_check
    _
  $region27: #{bilstm_cls_forward.4} parent=0 // pred_check_branch
    %37 = sbr.rel (0) target = $region29
  $region28: #{bilstm_cls_forward.4} parent=0 // pred_region
    _
  $region29: #{bilstm_cls_forward.4} parent=0 // pred_fallthru
    _
  // Predicated region
  $region30: #{bilstm_cls_forward.4} parent=0 // pred_check
    _
  $region31: #{bilstm_cls_forward.4} parent=0 // pred_check_branch
    %39 = sbr.rel (0) target = $region33
  $region32: #{bilstm_cls_forward.4} parent=0 // pred_region
    _
  $region33: #{bilstm_cls_forward.4} parent=0 // pred_fallthru
    _
  // Predicated region
  $region34: #{bilstm_cls_forward.4} parent=0 // pred_check
    _
  $region35: #{bilstm_cls_forward.4} parent=0 // pred_check_branch
    %41 = sbr.rel (0) target = $region37
  $region36: #{bilstm_cls_forward.4} parent=0 // pred_region
    _
  $region37: #{bilstm_cls_forward.4} parent=0 // pred_fallthru
    _
  %s42 = ssub.s32 0, 0
  %s43 = smul.u32 8, %s42
  %p44 = scmp.lt.s32.totalorder %s43, 7
  %s45 = scalar_select %p44, %s43, 7
  %s46 = smul.addr %s45, 2
  %s47 = scalar_lea.vmem %s1, %s46
  %s48 = ssub.s32 0, 0
  %s49 = smul.u32 8, %s48
  %p50 = scmp.lt.s32.totalorder %s49, 7
  %s51 = scalar_select %p50, %s49, 7
  %s52 = smul.addr %s51, 2
  %s53 = scalar_lea.vmem %s10, %s52
  %s54 = ssub.s32 0, 0
  %s55 = smul.u32 8, %s54
  %p56 = scmp.lt.s32.totalorder %s55, 7
  %s57 = scalar_select %p56, %s55, 7
  %s58 = smul.addr %s57, 2
  %s59 = scalar_lea.vmem %s1, %s58
  %s60 = ssub.s32 0, 0
  %s61 = smul.u32 8, %s60
  %s62 = ssub.s32 0, 0
  %s63 = smul.u32 8, %s62
  %p64 = scmp.lt.s32.totalorder %s63, 7
  %s65 = scalar_select %p64, %s63, 7
  %s66 = smul.addr %s65, 2
  %s67 = scalar_lea.vmem %s10, %s66
  %s68 = ssub.s32 0, 0
  %s69 = smul.u32 8, %s68
  %p71 = scmp.eq.s32.totalorder 0, 0
  // Predicated region
  $region38: #{bilstm_cls_forward.4} parent=0 // pred_check
    %p72 = pneg %p71
  $region39: #{bilstm_cls_forward.4} parent=0 // pred_check_branch
    %74 = sbr.rel (%p72) target = $region41
  $region40: #{bilstm_cls_forward.4} parent=0 // pred_region
    %vm75 = vcmask 254976
    %76 = vst.msk [vmem:[#allocation2] sm:$0x3] %vm75, 0.0
    %77 = vst.msk [vmem:[#allocation3] sm:$0x3] %vm75, 0.0
    %78 = vst.msk [vmem:[#allocation4] sm:$0x3] %vm75, 0.0
    %79 = vst.msk [vmem:[#allocation5] sm:$0x3] %vm75, 0.0
  $region41: #{bilstm_cls_forward.4} parent=0 // pred_fallthru
    _
  %v80 = vld [vmem:[%s2] sm:$0x3]
  %s81 = smul.u32 0, 8
  %s82 = ssub.s32 0, 0
  %s83 = smul.u32 %s82, 8
  %v84 = vstv %s81
  %vm85 = vcmp.lt.s32.totalorder %v84, %v80
  %v86 = vld [vmem:[%s0] sm:$0x3]
  %v87 = vpack.c.bf16 %v86, %v86
  %v88 = vld [vmem:[%s3] sm:$0xf]
  %v89 = vld [vmem:[%s3 + $0x4] sm:$0xf]
  %v90 = vld [vmem:[%s3 + $0x8] sm:$0xf]
  %v91 = vld [vmem:[%s3 + $0xc] sm:$0xf]
  %v92 = vld [vmem:[%s3 + $0x10] sm:$0xf]
  %v93 = vld [vmem:[%s3 + $0x14] sm:$0xf]
  %v94 = vld [vmem:[%s3 + $0x18] sm:$0xf]
  %v95 = vld [vmem:[%s3 + $0x1c] sm:$0xf]
  %v96 = vld [vmem:[#allocation2] sm:$0x3]
  %v97 = vpack.c.bf16 %v96, %v96
  %v98 = vld [vmem:[%s7] sm:$0xf]
  %v99 = vld [vmem:[%s7 + $0x4] sm:$0xf]
  %v100 = vld [vmem:[%s7 + $0x8] sm:$0xf]
  %v101 = vld [vmem:[%s7 + $0xc] sm:$0xf]
  %v106 = vunpack.c.l.b16 %v98
  %v107 = vunpack.c.l.b16 %v99
  %v108 = vunpack.c.l.b16 %v100
  %v109 = vunpack.c.l.b16 %v101
  %v110 = vpack.c.b16 %v107, %v106
  %v111 = vpack.c.b16 %v109, %v108
  %vm114 = vcmask 261120
  %v116 = vsel %vm114, %v97, 0
  %118 = vmatprep.subr.bf16.mxu0 0
  %119 = vmatpush1.bf16.msra.mxu0 %v110
  %120 = vmatprep.subr.bf16.mxu0 0
  %121 = vmatpush1.bf16.msra.mxu0 %v111
  %122 = vmatprep.subr.bf16.mxu0 0
  %123 = vmatpush1.bf16.msra.mxu0 0
  %124 = vmatprep.subr.bf16.mxu0 0
  %125 = vmatpush1.bf16.msra.mxu0 0
  %126 = vmatprep.subr.bf16.mxu0 0
  %127 = vmatpush1.bf16.msra.mxu0 0
  %128 = vmatprep.subr.bf16.mxu0 0
  %129 = vmatpush1.bf16.msra.mxu0 0
  %130 = vmatprep.subr.bf16.mxu0 0
  %131 = vmatpush1.bf16.msra.mxu0 0
  %132 = vmatprep.subr.bf16.mxu0 0
  %133 = vmatpush1.bf16.msra.mxu0 0
  %134 = vmatprep.subr.bf16.mxu0 0
  %135 = vmatpush1.bf16.msra.mxu0 0
  %136 = vmatprep.subr.bf16.mxu0 0
  %137 = vmatpush1.bf16.msra.mxu0 0
  %138 = vmatprep.subr.bf16.mxu0 0
  %139 = vmatpush1.bf16.msra.mxu0 0
  %140 = vmatprep.subr.bf16.mxu0 0
  %141 = vmatpush1.bf16.msra.mxu0 0
  %142 = vmatprep.subr.bf16.mxu0 0
  %143 = vmatpush1.bf16.msra.mxu0 0
  %144 = vmatprep.subr.bf16.mxu0 0
  %145 = vmatpush1.bf16.msra.mxu0 0
  %146 = vmatprep.subr.bf16.mxu0 0
  %147 = vmatpush1.bf16.msra.mxu0 0
  %148 = vmatprep.subr.bf16.mxu0 0
  %149 = vmatpush1.bf16.msra.mxu0 0
  %150 = vmatprep.mubr.bf16.mxu0 0
  %151 = vmatmul.mubr.bf16.gmra.mrb[0].mxu0 %v116
  %v152 = vpop.f32.mrb[0].mxu0
  %v153 = vadd.f32 0.0, %v152
  %v154 = vpop.f32.mrb[0].mxu0
  %v155 = vpop.f32.mrb[0].mxu0
  %v156 = vpop.f32.mrb[0].mxu0
  %157 = vdwg.mxu0
  %v166 = vunpack.c.l.b16 %v88
  %v167 = vunpack.c.l.b16 %v89
  %v168 = vunpack.c.l.b16 %v90
  %v169 = vunpack.c.l.b16 %v91
  %v170 = vunpack.c.l.b16 %v92
  %v171 = vunpack.c.l.b16 %v93
  %v172 = vunpack.c.l.b16 %v94
  %v173 = vunpack.c.l.b16 %v95
  %v174 = vpack.c.b16 %v167, %v166
  %v175 = vpack.c.b16 %v169, %v168
  %v176 = vpack.c.b16 %v171, %v170
  %v177 = vpack.c.b16 %v173, %v172
  %vm182 = vcmask 523264
  %v184 = vsel %vm182, %v87, 0
  %186 = vmatprep.subr.bf16.mxu0 0
  %187 = vmatpush1.bf16.msra.mxu0 %v174
  %188 = vmatprep.subr.bf16.mxu0 0
  %189 = vmatpush1.bf16.msra.mxu0 %v175
  %190 = vmatprep.subr.bf16.mxu0 0
  %191 = vmatpush1.bf16.msra.mxu0 %v176
  %192 = vmatprep.subr.bf16.mxu0 0
  %193 = vmatpush1.bf16.msra.mxu0 %v177
  %194 = vmatprep.subr.bf16.mxu0 0
  %195 = vmatpush1.bf16.msra.mxu0 0
  %196 = vmatprep.subr.bf16.mxu0 0
  %197 = vmatpush1.bf16.msra.mxu0 0
  %198 = vmatprep.subr.bf16.mxu0 0
  %199 = vmatpush1.bf16.msra.mxu0 0
  %200 = vmatprep.subr.bf16.mxu0 0
  %201 = vmatpush1.bf16.msra.mxu0 0
  %202 = vmatprep.subr.bf16.mxu0 0
  %203 = vmatpush1.bf16.msra.mxu0 0
  %204 = vmatprep.subr.bf16.mxu0 0
  %205 = vmatpush1.bf16.msra.mxu0 0
  %206 = vmatprep.subr.bf16.mxu0 0
  %207 = vmatpush1.bf16.msra.mxu0 0
  %208 = vmatprep.subr.bf16.mxu0 0
  %209 = vmatpush1.bf16.msra.mxu0 0
  %210 = vmatprep.subr.bf16.mxu0 0
  %211 = vmatpush1.bf16.msra.mxu0 0
  %212 = vmatprep.subr.bf16.mxu0 0
  %213 = vmatpush1.bf16.msra.mxu0 0
  %214 = vmatprep.subr.bf16.mxu0 0
  %215 = vmatpush1.bf16.msra.mxu0 0
  %216 = vmatprep.subr.bf16.mxu0 0
  %217 = vmatpush1.bf16.msra.mxu0 0
  %218 = vmatprep.mubr.bf16.mxu0 0
  %219 = vmatmul.mubr.bf16.gmra.mrb[0].mxu0 %v184
  %v220 = vpop.f32.mrb[0].mxu0
  %v221 = vadd.f32 %v153, %v220
  %v222 = vpop.f32.mrb[0].mxu0
  %v223 = vpop.f32.mrb[0].mxu0
  %v224 = vpop.f32.mrb[0].mxu0
  %225 = vdwg.mxu0
  %v226 = vld [vmem:[%s5] sm:$0x1]
  %v228 = vlaneseq
  %v229 = vshrl.u32 %v228, 7
  %v230 = vsub.s32 0, %v229
  %v231 = vrot.slane %v226, %v230
  %v233 = vadd.f32 %v221, %v231
  %v234 = vxor.u32 %v233, 2147483648
  %v235 = vmul.f32 %v234, 1.442695
  %v236 = vpow.pop %v235
  %v237 = vadd.f32 %v236, 1.0
  %v238 = vrcp.pop %v237
  %v239 = vmul.f32 1.0, %v238
  %v240 = vtanh.pop %v233
  %v241 = vld [vmem:[#allocation3] sm:$0x3]
  %243 = vrot.lane.b32.xlu0 %v241, 32
  %v244 = vpop.permute.xlu0 %243
  %v246 = vmul.f32 %v239, %v244
  %248 = vrot.lane.b32.xlu0 %v240, 64
  %v249 = vpop.permute.xlu0 %248
  %v251 = vmul.f32 %v239, %v249
  %253 = vrot.lane.b32.xlu0 %v251, 32
  %v254 = vpop.permute.xlu0 %253
  %v256 = vadd.f32 %v246, %v254
  %v257 = vtanh.pop %v256
  %259 = vrot.lane.b32.xlu0 %v257, 64
  %v260 = vpop.permute.xlu0 %259
  %v262 = vmul.f32 %v239, %v260
  %v263 = vsel %vm85, 1, 0
  %264 = vset.pattern.permute.xlu0 0
  %265 = vperm.xlu0 %264, %v263
  %v266 = vpop.permute.xlu0 %265
  %vm267 = vcmp.eq.s32.totalorder %v266, 1
  %v268 = vsel %vm267, %v256, %v244
  %270 = vrot.lane.b32.xlu0 %v268, 96
  %v271 = vpop.permute.xlu0 %270
  %vm273 = vcmask 254976
  %274 = vst.msk [vmem:[#allocation3] sm:$0x3] %vm273, %v271
  %v275 = vld [vmem:[#allocation2] sm:$0x3]
  %277 = vrot.lane.b32.xlu0 %v275, 96
  %v278 = vpop.permute.xlu0 %277
  %v280 = vsel %vm267, %v262, %v278
  %282 = vrot.lane.b32.xlu0 %v280, 32
  %v283 = vpop.permute.xlu0 %282
  %285 = vst.msk [vmem:[#allocation2] sm:$0x3] %vm273, %v283
  %v286 = vsel %vm267, %v262, 0.0
  %288 = vrot.lane.b32.xlu0 %v286, 32
  %v289 = vpop.permute.xlu0 %288
  %291 = vst.msk [vmem:[%s9] sm:$0x3] %vm273, %v289
  %s292 = sadd.s32 %s83, 7
  %v293 = vstv %s292
  %vm294 = vcmp.lt.s32.totalorder %v293, %v80
  %s295 = scalar_lea.vmem %s59, 14
  %v296 = vld [vmem:[%s295] sm:$0x3]
  %v297 = vpack.c.bf16 %v296, %v296
  %v298 = vld [vmem:[%s4] sm:$0xf]
  %v299 = vld [vmem:[%s4 + $0x4] sm:$0xf]
  %v300 = vld [vmem:[%s4 + $0x8] sm:$0xf]
  %v301 = vld [vmem:[%s4 + $0xc] sm:$0xf]
  %v302 = vld [vmem:[%s4 + $0x10] sm:$0xf]
  %v303 = vld [vmem:[%s4 + $0x14] sm:$0xf]
  %v304 = vld [vmem:[%s4 + $0x18] sm:$0xf]
  %v305 = vld [vmem:[%s4 + $0x1c] sm:$0xf]
  %v306 = vld [vmem:[#allocation4] sm:$0x3]
  %v307 = vpack.c.bf16 %v306, %v306
  %v308 = vld [vmem:[%s8] sm:$0xf]
  %v309 = vld [vmem:[%s8 + $0x4] sm:$0xf]
  %v310 = vld [vmem:[%s8 + $0x8] sm:$0xf]
  %v311 = vld [vmem:[%s8 + $0xc] sm:$0xf]
  %v316 = vunpack.c.l.b16 %v308
  %v317 = vunpack.c.l.b16 %v309
  %v318 = vunpack.c.l.b16 %v310
  %v319 = vunpack.c.l.b16 %v311
  %v320 = vpack.c.b16 %v317, %v316
  %v321 = vpack.c.b16 %v319, %v318
  %v325 = vsel %vm114, %v307, 0
  %327 = vmatprep.subr.bf16.mxu0 0
  %328 = vmatpush1.bf16.msra.mxu0 %v320
  %329 = vmatprep.subr.bf16.mxu0 0
  %330 = vmatpush1.bf16.msra.mxu0 %v321
  %331 = vmatprep.subr.bf16.mxu0 0
  %332 = vmatpush1.bf16.msra.mxu0 0
  %333 = vmatprep.subr.bf16.mxu0 0
  %334 = vmatpush1.bf16.msra.mxu0 0
  %335 = vmatprep.subr.bf16.mxu0 0
  %336 = vmatpush1.bf16.msra.mxu0 0
  %337 = vmatprep.subr.bf16.mxu0 0
  %338 = vmatpush1.bf16.msra.mxu0 0
  %339 = vmatprep.subr.bf16.mxu0 0
  %340 = vmatpush1.bf16.msra.mxu0 0
  %341 = vmatprep.subr.bf16.mxu0 0
  %342 = vmatpush1.bf16.msra.mxu0 0
  %343 = vmatprep.subr.bf16.mxu0 0
  %344 = vmatpush1.bf16.msra.mxu0 0
  %345 = vmatprep.subr.bf16.mxu0 0
  %346 = vmatpush1.bf16.msra.mxu0 0
  %347 = vmatprep.subr.bf16.mxu0 0
  %348 = vmatpush1.bf16.msra.mxu0 0
  %349 = vmatprep.subr.bf16.mxu0 0
  %350 = vmatpush1.bf16.msra.mxu0 0
  %351 = vmatprep.subr.bf16.mxu0 0
  %352 = vmatpush1.bf16.msra.mxu0 0
  %353 = vmatprep.subr.bf16.mxu0 0
  %354 = vmatpush1.bf16.msra.mxu0 0
  %355 = vmatprep.subr.bf16.mxu0 0
  %356 = vmatpush1.bf16.msra.mxu0 0
  %357 = vmatprep.subr.bf16.mxu0 0
  %358 = vmatpush1.bf16.msra.mxu0 0
  %359 = vmatprep.mubr.bf16.mxu0 0
  %360 = vmatmul.mubr.bf16.gmra.mrb[0].mxu0 %v325
  %v361 = vpop.f32.mrb[0].mxu0
  %v362 = vadd.f32 0.0, %v361
  %v363 = vpop.f32.mrb[0].mxu0
  %v364 = vpop.f32.mrb[0].mxu0
  %v365 = vpop.f32.mrb[0].mxu0
  %366 = vdwg.mxu0
  %v375 = vunpack.c.l.b16 %v298
  %v376 = vunpack.c.l.b16 %v299
  %v377 = vunpack.c.l.b16 %v300
  %v378 = vunpack.c.l.b16 %v301
  %v379 = vunpack.c.l.b16 %v302
  %v380 = vunpack.c.l.b16 %v303
  %v381 = vunpack.c.l.b16 %v304
  %v382 = vunpack.c.l.b16 %v305
  %v383 = vpack.c.b16 %v376, %v375
  %v384 = vpack.c.b16 %v378, %v377
  %v385 = vpack.c.b16 %v380, %v379
  %v386 = vpack.c.b16 %v382, %v381
  %v392 = vsel %vm182, %v297, 0
  %394 = vmatprep.subr.bf16.mxu0 0
  %395 = vmatpush1.bf16.msra.mxu0 %v383
  %396 = vmatprep.subr.bf16.mxu0 0
  %397 = vmatpush1.bf16.msra.mxu0 %v384
  %398 = vmatprep.subr.bf16.mxu0 0
  %399 = vmatpush1.bf16.msra.mxu0 %v385
  %400 = vmatprep.subr.bf16.mxu0 0
  %401 = vmatpush1.bf16.msra.mxu0 %v386
  %402 = vmatprep.subr.bf16.mxu0 0
  %403 = vmatpush1.bf16.msra.mxu0 0
  %404 = vmatprep.subr.bf16.mxu0 0
  %405 = vmatpush1.bf16.msra.mxu0 0
  %406 = vmatprep.subr.bf16.mxu0 0
  %407 = vmatpush1.bf16.msra.mxu0 0
  %408 = vmatprep.subr.bf16.mxu0 0
  %409 = vmatpush1.bf16.msra.mxu0 0
  %410 = vmatprep.subr.bf16.mxu0 0
  %411 = vmatpush1.bf16.msra.mxu0 0
  %412 = vmatprep.subr.bf16.mxu0 0
  %413 = vmatpush1.bf16.msra.mxu0 0
  %414 = vmatprep.subr.bf16.mxu0 0
  %415 = vmatpush1.bf16.msra.mxu0 0
  %416 = vmatprep.subr.bf16.mxu0 0
  %417 = vmatpush1.bf16.msra.mxu0 0
  %418 = vmatprep.subr.bf16.mxu0 0
  %419 = vmatpush1.bf16.msra.mxu0 0
  %420 = vmatprep.subr.bf16.mxu0 0
  %421 = vmatpush1.bf16.msra.mxu0 0
  %422 = vmatprep.subr.bf16.mxu0 0
  %423 = vmatpush1.bf16.msra.mxu0 0
  %424 = vmatprep.subr.bf16.mxu0 0
  %425 = vmatpush1.bf16.msra.mxu0 0
  %426 = vmatprep.mubr.bf16.mxu0 0
  %427 = vmatmul.mubr.bf16.gmra.mrb[0].mxu0 %v392
  %v428 = vpop.f32.mrb[0].mxu0
  %v429 = vadd.f32 %v362, %v428
  %v430 = vpop.f32.mrb[0].mxu0
  %v431 = vpop.f32.mrb[0].mxu0
  %v432 = vpop.f32.mrb[0].mxu0
  %433 = vdwg.mxu0
  %v434 = vld [vmem:[%s6] sm:$0x1]
  %v436 = vlaneseq
  %v437 = vshrl.u32 %v436, 7
  %v438 = vsub.s32 0, %v437
  %v439 = vrot.slane %v434, %v438
  %v441 = vadd.f32 %v429, %v439
  %v442 = vxor.u32 %v441, 2147483648
  %v443 = vmul.f32 %v442, 1.442695
  %v444 = vpow.pop %v443
  %v445 = vadd.f32 %v444, 1.0
  %v446 = vrcp.pop %v445
  %v447 = vmul.f32 1.0, %v446
  %v448 = vtanh.pop %v441
  %v449 = vld [vmem:[#allocation5] sm:$0x3]
  %451 = vrot.lane.b32.xlu0 %v449, 32
  %v452 = vpop.permute.xlu0 %451
  %v454 = vmul.f32 %v447, %v452
  %456 = vrot.lane.b32.xlu0 %v448, 64
  %v457 = vpop.permute.xlu0 %456
  %v459 = vmul.f32 %v447, %v457
  %461 = vrot.lane.b32.xlu0 %v459, 32
  %v462 = vpop.permute.xlu0 %461
  %v464 = vadd.f32 %v454, %v462
  %v465 = vtanh.pop %v464
  %467 = vrot.lane.b32.xlu0 %v465, 64
  %v468 = vpop.permute.xlu0 %467
  %v470 = vmul.f32 %v447, %v468
  %v471 = vsel %vm294, 1, 0
  %472 = vset.pattern.permute.xlu0 0
  %473 = vperm.xlu0 %472, %v471
  %v474 = vpop.permute.xlu0 %473
  %vm475 = vcmp.eq.s32.totalorder %v474, 1
  %v476 = vsel %vm475, %v464, %v452
  %478 = vrot.lane.b32.xlu0 %v476, 96
  %v479 = vpop.permute.xlu0 %478
  %481 = vst.msk [vmem:[#allocation5] sm:$0x3] %vm273, %v479
  %v482 = vld [vmem:[#allocation4] sm:$0x3]
  %484 = vrot.lane.b32.xlu0 %v482, 96
  %v485 = vpop.permute.xlu0 %484
  %v487 = vsel %vm475, %v470, %v485
  %489 = vrot.lane.b32.xlu0 %v487, 32
  %v490 = vpop.permute.xlu0 %489
  %492 = vst.msk [vmem:[#allocation4] sm:$0x3] %vm273, %v490
  %v493 = vsel %vm475, %v470, 0.0
  %495 = vrot.lane.b32.xlu0 %v493, 32
  %v496 = vpop.permute.xlu0 %495
  %s498 = scalar_lea.vmem %s67, 14
  %499 = vst.msk [vmem:[%s498] sm:$0x3] %vm273, %v496
  %s500 = sadd.s32 %s81, 1
  %v501 = vstv %s500
  %vm502 = vcmp.lt.s32.totalorder %v501, %v80
  %s503 = scalar_lea.vmem %s0, 2
  %v504 = vld [vmem:[%s503] sm:$0x3]
  %v505 = vpack.c.bf16 %v504, %v504
  %v506 = vld [vmem:[%s3] sm:$0xf]
  %v507 = vld [vmem:[%s3 + $0x4] sm:$0xf]
  %v508 = vld [vmem:[%s3 + $0x8] sm:$0xf]
  %v509 = vld [vmem:[%s3 + $0xc] sm:$0xf]
  %v510 = vld [vmem:[%s3 + $0x10] sm:$0xf]
  %v511 = vld [vmem:[%s3 + $0x14] sm:$0xf]
  %v512 = vld [vmem:[%s3 + $0x18] sm:$0xf]
  %v513 = vld [vmem:[%s3 + $0x1c] sm:$0xf]
  %v514 = vld [vmem:[#allocation2] sm:$0x3]
  %v515 = vpack.c.bf16 %v514, %v514
  %v516 = vld [vmem:[%s7] sm:$0xf]
  %v517 = vld [vmem:[%s7 + $0x4] sm:$0xf]
  %v518 = vld [vmem:[%s7 + $0x8] sm:$0xf]
  %v519 = vld [vmem:[%s7 + $0xc] sm:$0xf]
  %v524 = vunpack.c.l.b16 %v516
  %v525 = vunpack.c.l.b16 %v517
  %v526 = vunpack.c.l.b16 %v518
  %v527 = vunpack.c.l.b16 %v519
  %v528 = vpack.c.b16 %v525, %v524
  %v529 = vpack.c.b16 %v527, %v526
  %v533 = vsel %vm114, %v515, 0
  %535 = vmatprep.subr.bf16.mxu0 0
  %536 = vmatpush1.bf16.msra.mxu0 %v528
  %537 = vmatprep.subr.bf16.mxu0 0
  %538 = vmatpush1.bf16.msra.mxu0 %v529
  %539 = vmatprep.subr.bf16.mxu0 0
  %540 = vmatpush1.bf16.msra.mxu0 0
  %541 = vmatprep.subr.bf16.mxu0 0
  %542 = vmatpush1.bf16.msra.mxu0 0
  %543 = vmatprep.subr.bf16.mxu0 0
  %544 = vmatpush1.bf16.msra.mxu0 0
  %545 = vmatprep.subr.bf16.mxu0 0
  %546 = vmatpush1.bf16.msra.mxu0 0
  %547 = vmatprep.subr.bf16.mxu0 0
  %548 = vmatpush1.bf16.msra.mxu0 0
  %549 = vmatprep.subr.bf16.mxu0 0
  %550 = vmatpush1.bf16.msra.mxu0 0
  %551 = vmatprep.subr.bf16.mxu0 0
  %552 = vmatpush1.bf16.msra.mxu0 0
  %553 = vmatprep.subr.bf16.mxu0 0
  %554 = vmatpush1.bf16.msra.mxu0 0
  %555 = vmatprep.subr.bf16.mxu0 0
  %556 = vmatpush1.bf16.msra.mxu0 0
  %557 = vmatprep.subr.bf16.mxu0 0
  %558 = vmatpush1.bf16.msra.mxu0 0
  %559 = vmatprep.subr.bf16.mxu0 0
  %560 = vmatpush1.bf16.msra.mxu0 0
  %561 = vmatprep.subr.bf16.mxu0 0
  %562 = vmatpush1.bf16.msra.mxu0 0
  %563 = vmatprep.subr.bf16.mxu0 0
  %564 = vmatpush1.bf16.msra.mxu0 0
  %565 = vmatprep.subr.bf16.mxu0 0
  %566 = vmatpush1.bf16.msra.mxu0 0
  %567 = vmatprep.mubr.bf16.mxu0 0
  %568 = vmatmul.mubr.bf16.gmra.mrb[0].mxu0 %v533
  %v569 = vpop.f32.mrb[0].mxu0
  %v570 = vadd.f32 0.0, %v569
  %v571 = vpop.f32.mrb[0].mxu0
  %v572 = vpop.f32.mrb[0].mxu0
  %v573 = vpop.f32.mrb[0].mxu0
  %574 = vdwg.mxu0
  %v583 = vunpack.c.l.b16 %v506
  %v584 = vunpack.c.l.b16 %v507
  %v585 = vunpack.c.l.b16 %v508
  %v586 = vunpack.c.l.b16 %v509
  %v587 = vunpack.c.l.b16 %v510
  %v588 = vunpack.c.l.b16 %v511
  %v589 = vunpack.c.l.b16 %v512
  %v590 = vunpack.c.l.b16 %v513
  %v591 = vpack.c.b16 %v584, %v583
  %v592 = vpack.c.b16 %v586, %v585
  %v593 = vpack.c.b16 %v588, %v587
  %v594 = vpack.c.b16 %v590, %v589
  %v600 = vsel %vm182, %v505, 0
  %602 = vmatprep.subr.bf16.mxu0 0
  %603 = vmatpush1.bf16.msra.mxu0 %v591
  %604 = vmatprep.subr.bf16.mxu0 0
  %605 = vmatpush1.bf16.msra.mxu0 %v592
  %606 = vmatprep.subr.bf16.mxu0 0
  %607 = vmatpush1.bf16.msra.mxu0 %v593
  %608 = vmatprep.subr.bf16.mxu0 0
  %609 = vmatpush1.bf16.msra.mxu0 %v594
  %610 = vmatprep.subr.bf16.mxu0 0
  %611 = vmatpush1.bf16.msra.mxu0 0
  %612 = vmatprep.subr.bf16.mxu0 0
  %613 = vmatpush1.bf16.msra.mxu0 0
  %614 = vmatprep.subr.bf16.mxu0 0
  %615 = vmatpush1.bf16.msra.mxu0 0
  %616 = vmatprep.subr.bf16.mxu0 0
  %617 = vmatpush1.bf16.msra.mxu0 0
  %618 = vmatprep.subr.bf16.mxu0 0
  %619 = vmatpush1.bf16.msra.mxu0 0
  %620 = vmatprep.subr.bf16.mxu0 0
  %621 = vmatpush1.bf16.msra.mxu0 0
  %622 = vmatprep.subr.bf16.mxu0 0
  %623 = vmatpush1.bf16.msra.mxu0 0
  %624 = vmatprep.subr.bf16.mxu0 0
  %625 = vmatpush1.bf16.msra.mxu0 0
  %626 = vmatprep.subr.bf16.mxu0 0
  %627 = vmatpush1.bf16.msra.mxu0 0
  %628 = vmatprep.subr.bf16.mxu0 0
  %629 = vmatpush1.bf16.msra.mxu0 0
  %630 = vmatprep.subr.bf16.mxu0 0
  %631 = vmatpush1.bf16.msra.mxu0 0
  %632 = vmatprep.subr.bf16.mxu0 0
  %633 = vmatpush1.bf16.msra.mxu0 0
  %634 = vmatprep.mubr.bf16.mxu0 0
  %635 = vmatmul.mubr.bf16.gmra.mrb[0].mxu0 %v600
  %v636 = vpop.f32.mrb[0].mxu0
  %v637 = vadd.f32 %v570, %v636
  %v638 = vpop.f32.mrb[0].mxu0
  %v639 = vpop.f32.mrb[0].mxu0
  %v640 = vpop.f32.mrb[0].mxu0
  %641 = vdwg.mxu0
  %v642 = vld [vmem:[%s5] sm:$0x1]
  %v644 = vlaneseq
  %v645 = vshrl.u32 %v644, 7
  %v646 = vsub.s32 0, %v645
  %v647 = vrot.slane %v642, %v646
  %v649 = vadd.f32 %v637, %v647
  %v650 = vxor.u32 %v649, 2147483648
  %v651 = vmul.f32 %v650, 1.442695
  %v652 = vpow.pop %v651
  %v653 = vadd.f32 %v652, 1.0
  %v654 = vrcp.pop %v653
  %v655 = vmul.f32 1.0, %v654
  %v656 = vtanh.pop %v649
  %v657 = vld [vmem:[#allocation3] sm:$0x3]
  %659 = vrot.lane.b32.xlu0 %v657, 32
  %v660 = vpop.permute.xlu0 %659
  %v662 = vmul.f32 %v655, %v660
  %664 = vrot.lane.b32.xlu0 %v656, 64
  %v665 = vpop.permute.xlu0 %664
  %v667 = vmul.f32 %v655, %v665
  %669 = vrot.lane.b32.xlu0 %v667, 32
  %v670 = vpop.permute.xlu0 %669
  %v672 = vadd.f32 %v662, %v670
  %v673 = vtanh.pop %v672
  %675 = vrot.lane.b32.xlu0 %v673, 64
  %v676 = vpop.permute.xlu0 %675
  %v678 = vmul.f32 %v655, %v676
  %v679 = vsel %vm502, 1, 0
  %680 = vset.pattern.permute.xlu0 0
  %681 = vperm.xlu0 %680, %v679
  %v682 = vpop.permute.xlu0 %681
  %vm683 = vcmp.eq.s32.totalorder %v682, 1
  %v684 = vsel %vm683, %v672, %v660
  %686 = vrot.lane.b32.xlu0 %v684, 96
  %v687 = vpop.permute.xlu0 %686
  %689 = vst.msk [vmem:[#allocation3] sm:$0x3] %vm273, %v687
  %v690 = vld [vmem:[#allocation2] sm:$0x3]
  %692 = vrot.lane.b32.xlu0 %v690, 96
  %v693 = vpop.permute.xlu0 %692
  %v695 = vsel %vm683, %v678, %v693
  %697 = vrot.lane.b32.xlu0 %v695, 32
  %v698 = vpop.permute.xlu0 %697
  %700 = vst.msk [vmem:[#allocation2] sm:$0x3] %vm273, %v698
  %v701 = vsel %vm683, %v678, 0.0
  %703 = vrot.lane.b32.xlu0 %v701, 32
  %v704 = vpop.permute.xlu0 %703
  %s706 = scalar_lea.vmem %s9, 2
  %707 = vst.msk [vmem:[%s706] sm:$0x3] %vm273, %v704
  %s708 = sadd.s32 %s83, 6
  %v709 = vstv %s708
  %vm710 = vcmp.lt.s32.totalorder %v709, %v80
  %s711 = scalar_lea.vmem %s59, 12
  %v712 = vld [vmem:[%s711] sm:$0x3]
  %v713 = vpack.c.bf16 %v712, %v712
  %v714 = vld [vmem:[%s4] sm:$0xf]
  %v715 = vld [vmem:[%s4 + $0x4] sm:$0xf]
  %v716 = vld [vmem:[%s4 + $0x8] sm:$0xf]
  %v717 = vld [vmem:[%s4 + $0xc] sm:$0xf]
  %v718 = vld [vmem:[%s4 + $0x10] sm:$0xf]
  %v719 = vld [vmem:[%s4 + $0x14] sm:$0xf]
  %v720 = vld [vmem:[%s4 + $0x18] sm:$0xf]
  %v721 = vld [vmem:[%s4 + $0x1c] sm:$0xf]
  %v722 = vld [vmem:[#allocation4] sm:$0x3]
  %v723 = vpack.c.bf16 %v722, %v722
  %v724 = vld [vmem:[%s8] sm:$0xf]
  %v725 = vld [vmem:[%s8 + $0x4] sm:$0xf]
  %v726 = vld [vmem:[%s8 + $0x8] sm:$0xf]
  %v727 = vld [vmem:[%s8 + $0xc] sm:$0xf]
  %v732 = vunpack.c.l.b16 %v724
  %v733 = vunpack.c.l.b16 %v725
  %v734 = vunpack.c.l.b16 %v726
  %v735 = vunpack.c.l.b16 %v727
  %v736 = vpack.c.b16 %v733, %v732
  %v737 = vpack.c.b16 %v735, %v734
  %v741 = vsel %vm114, %v723, 0
  %743 = vmatprep.subr.bf16.mxu0 0
  %744 = vmatpush1.bf16.msra.mxu0 %v736
  %745 = vmatprep.subr.bf16.mxu0 0
  %746 = vmatpush1.bf16.msra.mxu0 %v737
  %747 = vmatprep.subr.bf16.mxu0 0
  %748 = vmatpush1.bf16.msra.mxu0 0
  %749 = vmatprep.subr.bf16.mxu0 0
  %750 = vmatpush1.bf16.msra.mxu0 0
  %751 = vmatprep.subr.bf16.mxu0 0
  %752 = vmatpush1.bf16.msra.mxu0 0
  %753 = vmatprep.subr.bf16.mxu0 0
  %754 = vmatpush1.bf16.msra.mxu0 0
  %755 = vmatprep.subr.bf16.mxu0 0
  %756 = vmatpush1.bf16.msra.mxu0 0
  %757 = vmatprep.subr.bf16.mxu0 0
  %758 = vmatpush1.bf16.msra.mxu0 0
  %759 = vmatprep.subr.bf16.mxu0 0
  %760 = vmatpush1.bf16.msra.mxu0 0
  %761 = vmatprep.subr.bf16.mxu0 0
  %762 = vmatpush1.bf16.msra.mxu0 0
  %763 = vmatprep.subr.bf16.mxu0 0
  %764 = vmatpush1.bf16.msra.mxu0 0
  %765 = vmatprep.subr.bf16.mxu0 0
  %766 = vmatpush1.bf16.msra.mxu0 0
  %767 = vmatprep.subr.bf16.mxu0 0
  %768 = vmatpush1.bf16.msra.mxu0 0
  %769 = vmatprep.subr.bf16.mxu0 0
  %770 = vmatpush1.bf16.msra.mxu0 0
  %771 = vmatprep.subr.bf16.mxu0 0
  %772 = vmatpush1.bf16.msra.mxu0 0
  %773 = vmatprep.subr.bf16.mxu0 0
  %774 = vmatpush1.bf16.msra.mxu0 0
  %775 = vmatprep.mubr.bf16.mxu0 0
  %776 = vmatmul.mubr.bf16.gmra.mrb[0].mxu0 %v741
  %v777 = vpop.f32.mrb[0].mxu0
  %v778 = vadd.f32 0.0, %v777
  %v779 = vpop.f32.mrb[0].mxu0
  %v780 = vpop.f32.mrb[0].mxu0
  %v781 = vpop.f32.mrb[0].mxu0
  %782 = vdwg.mxu0
  %v791 = vunpack.c.l.b16 %v714
  %v792 = vunpack.c.l.b16 %v715
  %v793 = vunpack.c.l.b16 %v716
  %v794 = vunpack.c.l.b16 %v717
  %v795 = vunpack.c.l.b16 %v718
  %v796 = vunpack.c.l.b16 %v719
  %v797 = vunpack.c.l.b16 %v720
  %v798 = vunpack.c.l.b16 %v721
  %v799 = vpack.c.b16 %v792, %v791
  %v800 = vpack.c.b16 %v794, %v793
  %v801 = vpack.c.b16 %v796, %v795
  %v802 = vpack.c.b16 %v798, %v797
  %v808 = vsel %vm182, %v713, 0
  %810 = vmatprep.subr.bf16.mxu0 0
  %811 = vmatpush1.bf16.msra.mxu0 %v799
  %812 = vmatprep.subr.bf16.mxu0 0
  %813 = vmatpush1.bf16.msra.mxu0 %v800
  %814 = vmatprep.subr.bf16.mxu0 0
  %815 = vmatpush1.bf16.msra.mxu0 %v801
  %816 = vmatprep.subr.bf16.mxu0 0
  %817 = vmatpush1.bf16.msra.mxu0 %v802
  %818 = vmatprep.subr.bf16.mxu0 0
  %819 = vmatpush1.bf16.msra.mxu0 0
  %820 = vmatprep.subr.bf16.mxu0 0
  %821 = vmatpush1.bf16.msra.mxu0 0
  %822 = vmatprep.subr.bf16.mxu0 0
  %823 = vmatpush1.bf16.msra.mxu0 0
  %824 = vmatprep.subr.bf16.mxu0 0
  %825 = vmatpush1.bf16.msra.mxu0 0
  %826 = vmatprep.subr.bf16.mxu0 0
  %827 = vmatpush1.bf16.msra.mxu0 0
  %828 = vmatprep.subr.bf16.mxu0 0
  %829 = vmatpush1.bf16.msra.mxu0 0
  %830 = vmatprep.subr.bf16.mxu0 0
  %831 = vmatpush1.bf16.msra.mxu0 0
  %832 = vmatprep.subr.bf16.mxu0 0
  %833 = vmatpush1.bf16.msra.mxu0 0
  %834 = vmatprep.subr.bf16.mxu0 0
  %835 = vmatpush1.bf16.msra.mxu0 0
  %836 = vmatprep.subr.bf16.mxu0 0
  %837 = vmatpush1.bf16.msra.mxu0 0
  %838 = vmatprep.subr.bf16.mxu0 0
  %839 = vmatpush1.bf16.msra.mxu0 0
  %840 = vmatprep.subr.bf16.mxu0 0
  %841 = vmatpush1.bf16.msra.mxu0 0
  %842 = vmatprep.mubr.bf16.mxu0 0
  %843 = vmatmul.mubr.bf16.gmra.mrb[0].mxu0 %v808
  %v844 = vpop.f32.mrb[0].mxu0
  %v845 = vadd.f32 %v778, %v844
  %v846 = vpop.f32.mrb[0].mxu0
  %v847 = vpop.f32.mrb[0].mxu0
  %v848 = vpop.f32.mrb[0].mxu0
  %849 = vdwg.mxu0
  %v850 = vld [vmem:[%s6] sm:$0x1]
  %v852 = vlaneseq
  %v853 = vshrl.u32 %v852, 7
  %v854 = vsub.s32 0, %v853
  %v855 = vrot.slane %v850, %v854
  %v857 = vadd.f32 %v845, %v855
  %v858 = vxor.u32 %v857, 2147483648
  %v859 = vmul.f32 %v858, 1.442695
  %v860 = vpow.pop %v859
  %v861 = vadd.f32 %v860, 1.0
  %v862 = vrcp.pop %v861
  %v863 = vmul.f32 1.0, %v862
  %v864 = vtanh.pop %v857
  %v865 = vld [vmem:[#allocation5] sm:$0x3]
  %867 = vrot.lane.b32.xlu0 %v865, 32
  %v868 = vpop.permute.xlu0 %867
  %v870 = vmul.f32 %v863, %v868
  %872 = vrot.lane.b32.xlu0 %v864, 64
  %v873 = vpop.permute.xlu0 %872
  %v875 = vmul.f32 %v863, %v873
  %877 = vrot.lane.b32.xlu0 %v875, 32
  %v878 = vpop.permute.xlu0 %877
  %v880 = vadd.f32 %v870, %v878
  %v881 = vtanh.pop %v880
  %883 = vrot.lane.b32.xlu0 %v881, 64
  %v884 = vpop.permute.xlu0 %883
  %v886 = vmul.f32 %v863, %v884
  %v887 = vsel %vm710, 1, 0
  %888 = vset.pattern.permute.xlu0 0
  %889 = vperm.xlu0 %888, %v887
  %v890 = vpop.permute.xlu0 %889
  %vm891 = vcmp.eq.s32.totalorder %v890, 1
  %v892 = vsel %vm891, %v880, %v868
  %894 = vrot.lane.b32.xlu0 %v892, 96
  %v895 = vpop.permute.xlu0 %894
  %897 = vst.msk [vmem:[#allocation5] sm:$0x3] %vm273, %v895
  %v898 = vld [vmem:[#allocation4] sm:$0x3]
  %900 = vrot.lane.b32.xlu0 %v898, 96
  %v901 = vpop.permute.xlu0 %900
  %v903 = vsel %vm891, %v886, %v901
  %905 = vrot.lane.b32.xlu0 %v903, 32
  %v906 = vpop.permute.xlu0 %905
  %908 = vst.msk [vmem:[#allocation4] sm:$0x3] %vm273, %v906
  %v909 = vsel %vm891, %v886, 0.0
  %911 = vrot.lane.b32.xlu0 %v909, 32
  %v912 = vpop.permute.xlu0 %911
  %s914 = scalar_lea.vmem %s67, 12
  %915 = vst.msk [vmem:[%s914] sm:$0x3] %vm273, %v912
  %s916 = sadd.s32 %s81, 2
  %v917 = vstv %s916
  %vm918 = vcmp.lt.s32.totalorder %v917, %v80
  %s919 = scalar_lea.vmem %s0, 4
  %v920 = vld [vmem:[%s919] sm:$0x3]
  %v921 = vpack.c.bf16 %v920, %v920
  %v922 = vld [vmem:[%s3] sm:$0xf]
  %v923 = vld [vmem:[%s3 + $0x4] sm:$0xf]
  %v924 = vld [vmem:[%s3 + $0x8] sm:$0xf]
  %v925 = vld [vmem:[%s3 + $0xc] sm:$0xf]
  %v926 = vld [vmem:[%s3 + $0x10] sm:$0xf]
  %v927 = vld [vmem:[%s3 + $0x14] sm:$0xf]
  %v928 = vld [vmem:[%s3 + $0x18] sm:$0xf]
  %v929 = vld [vmem:[%s3 + $0x1c] sm:$0xf]
  %v930 = vld [vmem:[#allocation2] sm:$0x3]
  %v931 = vpack.c.bf16 %v930, %v930
  %v932 = vld [vmem:[%s7] sm:$0xf]
  %v933 = vld [vmem:[%s7 + $0x4] sm:$0xf]
  %v934 = vld [vmem:[%s7 + $0x8] sm:$0xf]
  %v935 = vld [vmem:[%s7 + $0xc] sm:$0xf]
  %v940 = vunpack.c.l.b16 %v932
  %v941 = vunpack.c.l.b16 %v933
  %v942 = vunpack.c.l.b16 %v934
  %v943 = vunpack.c.l.b16 %v935
  %v944 = vpack.c.b16 %v941, %v940
  %v945 = vpack.c.b16 %v943, %v942
  %v949 = vsel %vm114, %v931, 0
  %951 = vmatprep.subr.bf16.mxu0 0
  %952 = vmatpush1.bf16.msra.mxu0 %v944
  %953 = vmatprep.subr.bf16.mxu0 0
  %954 = vmatpush1.bf16.msra.mxu0 %v945
  %955 = vmatprep.subr.bf16.mxu0 0
  %956 = vmatpush1.bf16.msra.mxu0 0
  %957 = vmatprep.subr.bf16.mxu0 0
  %958 = vmatpush1.bf16.msra.mxu0 0
  %959 = vmatprep.subr.bf16.mxu0 0
  %960 = vmatpush1.bf16.msra.mxu0 0
  %961 = vmatprep.subr.bf16.mxu0 0
  %962 = vmatpush1.bf16.msra.mxu0 0
  %963 = vmatprep.subr.bf16.mxu0 0
  %964 = vmatpush1.bf16.msra.mxu0 0
  %965 = vmatprep.subr.bf16.mxu0 0
  %966 = vmatpush1.bf16.msra.mxu0 0
  %967 = vmatprep.subr.bf16.mxu0 0
  %968 = vmatpush1.bf16.msra.mxu0 0
  %969 = vmatprep.subr.bf16.mxu0 0
  %970 = vmatpush1.bf16.msra.mxu0 0
  %971 = vmatprep.subr.bf16.mxu0 0
  %972 = vmatpush1.bf16.msra.mxu0 0
  %973 = vmatprep.subr.bf16.mxu0 0
  %974 = vmatpush1.bf16.msra.mxu0 0
  %975 = vmatprep.subr.bf16.mxu0 0
  %976 = vmatpush1.bf16.msra.mxu0 0
  %977 = vmatprep.subr.bf16.mxu0 0
  %978 = vmatpush1.bf16.msra.mxu0 0
  %979 = vmatprep.subr.bf16.mxu0 0
  %980 = vmatpush1.bf16.msra.mxu0 0
  %981 = vmatprep.subr.bf16.mxu0 0
  %982 = vmatpush1.bf16.msra.mxu0 0
  %983 = vmatprep.mubr.bf16.mxu0 0
  %984 = vmatmul.mubr.bf16.gmra.mrb[0].mxu0 %v949
  %v985 = vpop.f32.mrb[0].mxu0
  %v986 = vadd.f32 0.0, %v985
  %v987 = vpop.f32.mrb[0].mxu0
  %v988 = vpop.f32.mrb[0].mxu0
  %v989 = vpop.f32.mrb[0].mxu0
  %990 = vdwg.mxu0
  %v999 = vunpack.c.l.b16 %v922
  %v1000 = vunpack.c.l.b16 %v923
  %v1001 = vunpack.c.l.b16 %v924
  %v1002 = vunpack.c.l.b16 %v925
  %v1003 = vunpack.c.l.b16 %v926
  %v1004 = vunpack.c.l.b16 %v927
  %v1005 = vunpack.c.l.b16 %v928
  %v1006 = vunpack.c.l.b16 %v929
  %v1007 = vpack.c.b16 %v1000, %v999
  %v1008 = vpack.c.b16 %v1002, %v1001
  %v1009 = vpack.c.b16 %v1004, %v1003
  %v1010 = vpack.c.b16 %v1006, %v1005
  %v1016 = vsel %vm182, %v921, 0
  %1018 = vmatprep.subr.bf16.mxu0 0
  %1019 = vmatpush1.bf16.msra.mxu0 %v1007
  %1020 = vmatprep.subr.bf16.mxu0 0
  %1021 = vmatpush1.bf16.msra.mxu0 %v1008
  %1022 = vmatprep.subr.bf16.mxu0 0
  %1023 = vmatpush1.bf16.msra.mxu0 %v1009
  %1024 = vmatprep.subr.bf16.mxu0 0
  %1025 = vmatpush1.bf16.msra.mxu0 %v1010
  %1026 = vmatprep.subr.bf16.mxu0 0
  %1027 = vmatpush1.bf16.msra.mxu0 0
  %1028 = vmatprep.subr.bf16.mxu0 0
  %1029 = vmatpush1.bf16.msra.mxu0 0
  %1030 = vmatprep.subr.bf16.mxu0 0
  %1031 = vmatpush1.bf16.msra.mxu0 0
  %1032 = vmatprep.subr.bf16.mxu0 0
  %1033 = vmatpush1.bf16.msra.mxu0 0
  %1034 = vmatprep.subr.bf16.mxu0 0
  %1035 = vmatpush1.bf16.msra.mxu0 0
  %1036 = vmatprep.subr.bf16.mxu0 0
  %1037 = vmatpush1.bf16.msra.mxu0 0
  %1038 = vmatprep.subr.bf16.mxu0 0
  %1039 = vmatpush1.bf16.msra.mxu0 0
  %1040 = vmatprep.subr.bf16.mxu0 0
  %1041 = vmatpush1.bf16.msra.mxu0 0
  %1042 = vmatprep.subr.bf16.mxu0 0
  %1043 = vmatpush1.bf16.msra.mxu0 0
  %1044 = vmatprep.subr.bf16.mxu0 0
  %1045 = vmatpush1.bf16.msra.mxu0 0
  %1046 = vmatprep.subr.bf16.mxu0 0
  %1047 = vmatpush1.bf16.msra.mxu0 0
  %1048 = vmatprep.subr.bf16.mxu0 0
  %1049 = vmatpush1.bf16.msra.mxu0 0
  %1050 = vmatprep.mubr.bf16.mxu0 0
  %1051 = vmatmul.mubr.bf16.gmra.mrb[0].mxu0 %v1016
  %v1052 = vpop.f32.mrb[0].mxu0
  %v1053 = vadd.f32 %v986, %v1052
  %v1054 = vpop.f32.mrb[0].mxu0
  %v1055 = vpop.f32.mrb[0].mxu0
  %v1056 = vpop.f32.mrb[0].mxu0
  %1057 = vdwg.mxu0
  %v1058 = vld [vmem:[%s5] sm:$0x1]
  %v1060 = vlaneseq
  %v1061 = vshrl.u32 %v1060, 7
  %v1062 = vsub.s32 0, %v1061
  %v1063 = vrot.slane %v1058, %v1062
  %v1065 = vadd.f32 %v1053, %v1063
  %v1066 = vxor.u32 %v1065, 2147483648
  %v1067 = vmul.f32 %v1066, 1.442695
  %v1068 = vpow.pop %v1067
  %v1069 = vadd.f32 %v1068, 1.0
  %v1070 = vrcp.pop %v1069
  %v1071 = vmul.f32 1.0, %v1070
  %v1072 = vtanh.pop %v1065
  %v1073 = vld [vmem:[#allocation3] sm:$0x3]
  %1075 = vrot.lane.b32.xlu0 %v1073, 32
  %v1076 = vpop.permute.xlu0 %1075
  %v1078 = vmul.f32 %v1071, %v1076
  %1080 = vrot.lane.b32.xlu0 %v1072, 64
  %v1081 = vpop.permute.xlu0 %1080
  %v1083 = vmul.f32 %v1071, %v1081
  %1085 = vrot.lane.b32.xlu0 %v1083, 32
  %v1086 = vpop.permute.xlu0 %1085
  %v1088 = vadd.f32 %v1078, %v1086
  %v1089 = vtanh.pop %v1088
  %1091 = vrot.lane.b32.xlu0 %v1089, 64
  %v1092 = vpop.permute.xlu0 %1091
  %v1094 = vmul.f32 %v1071, %v1092
  %v1095 = vsel %vm918, 1, 0
  %1096 = vset.pattern.permute.xlu0 0
  %1097 = vperm.xlu0 %1096, %v1095
  %v1098 = vpop.permute.xlu0 %1097
  %vm1099 = vcmp.eq.s32.totalorder %v1098, 1
  %v1100 = vsel %vm1099, %v1088, %v1076
  %1102 = vrot.lane.b32.xlu0 %v1100, 96
  %v1103 = vpop.permute.xlu0 %1102
  %1105 = vst.msk [vmem:[#allocation3] sm:$0x3] %vm273, %v1103
  %v1106 = vld [vmem:[#allocation2] sm:$0x3]
  %1108 = vrot.lane.b32.xlu0 %v1106, 96
  %v1109 = vpop.permute.xlu0 %1108
  %v1111 = vsel %vm1099, %v1094, %v1109
  %1113 = vrot.lane.b32.xlu0 %v1111, 32
  %v1114 = vpop.permute.xlu0 %1113
  %1116 = vst.msk [vmem:[#allocation2] sm:$0x3] %vm273, %v1114
  %v1117 = vsel %vm1099, %v1094, 0.0
  %1119 = vrot.lane.b32.xlu0 %v1117, 32
  %v1120 = vpop.permute.xlu0 %1119
  %s1122 = scalar_lea.vmem %s9, 4
  %1123 = vst.msk [vmem:[%s1122] sm:$0x3] %vm273, %v1120
  %s1124 = sadd.s32 %s83, 5
  %v1125 = vstv %s1124
  %vm1126 = vcmp.lt.s32.totalorder %v1125, %v80
  %s1127 = scalar_lea.vmem %s59, 10
  %v1128 = vld [vmem:[%s1127] sm:$0x3]
  %v1129 = vpack.c.bf16 %v1128, %v1128
  %v1130 = vld [vmem:[%s4] sm:$0xf]
  %v1131 = vld [vmem:[%s4 + $0x4] sm:$0xf]
  %v1132 = vld [vmem:[%s4 + $0x8] sm:$0xf]
  %v1133 = vld [vmem:[%s4 + $0xc] sm:$0xf]
  %v1134 = vld [vmem:[%s4 + $0x10] sm:$0xf]
  %v1135 = vld [vmem:[%s4 + $0x14] sm:$0xf]
  %v1136 = vld [vmem:[%s4 + $0x18] sm:$0xf]
  %v1137 = vld [vmem:[%s4 + $0x1c] sm:$0xf]
  %v1138 = vld [vmem:[#allocation4] sm:$0x3]
  %v1139 = vpack.c.bf16 %v1138, %v1138
  %v1140 = vld [vmem:[%s8] sm:$0xf]
  %v1141 = vld [vmem:[%s8 + $0x4] sm:$0xf]
  %v1142 = vld [vmem:[%s8 + $0x8] sm:$0xf]
  %v1143 = vld [vmem:[%s8 + $0xc] sm:$0xf]
  %v1148 = vunpack.c.l.b16 %v1140
  %v1149 = vunpack.c.l.b16 %v1141
  %v1150 = vunpack.c.l.b16 %v1142
  %v1151 = vunpack.c.l.b16 %v1143
  %v1152 = vpack.c.b16 %v1149, %v1148
  %v1153 = vpack.c.b16 %v1151, %v1150
  %v1157 = vsel %vm114, %v1139, 0
  %1159 = vmatprep.subr.bf16.mxu0 0
  %1160 = vmatpush1.bf16.msra.mxu0 %v1152
  %1161 = vmatprep.subr.bf16.mxu0 0
  %1162 = vmatpush1.bf16.msra.mxu0 %v1153
  %1163 = vmatprep.subr.bf16.mxu0 0
  %1164 = vmatpush1.bf16.msra.mxu0 0
  %1165 = vmatprep.subr.bf16.mxu0 0
  %1166 = vmatpush1.bf16.msra.mxu0 0
  %1167 = vmatprep.subr.bf16.mxu0 0
  %1168 = vmatpush1.bf16.msra.mxu0 0
  %1169 = vmatprep.subr.bf16.mxu0 0
  %1170 = vmatpush1.bf16.msra.mxu0 0
  %1171 = vmatprep.subr.bf16.mxu0 0
  %1172 = vmatpush1.bf16.msra.mxu0 0
  %1173 = vmatprep.subr.bf16.mxu0 0
  %1174 = vmatpush1.bf16.msra.mxu0 0
  %1175 = vmatprep.subr.bf16.mxu0 0
  %1176 = vmatpush1.bf16.msra.mxu0 0
  %1177 = vmatprep.subr.bf16.mxu0 0
  %1178 = vmatpush1.bf16.msra.mxu0 0
  %1179 = vmatprep.subr.bf16.mxu0 0
  %1180 = vmatpush1.bf16.msra.mxu0 0
  %1181 = vmatprep.subr.bf16.mxu0 0
  %1182 = vmatpush1.bf16.msra.mxu0 0
  %1183 = vmatprep.subr.bf16.mxu0 0
  %1184 = vmatpush1.bf16.msra.mxu0 0
  %1185 = vmatprep.subr.bf16.mxu0 0
  %1186 = vmatpush1.bf16.msra.mxu0 0
  %1187 = vmatprep.subr.bf16.mxu0 0
  %1188 = vmatpush1.bf16.msra.mxu0 0
  %1189 = vmatprep.subr.bf16.mxu0 0
  %1190 = vmatpush1.bf16.msra.mxu0 0
  %1191 = vmatprep.mubr.bf16.mxu0 0
  %1192 = vmatmul.mubr.bf16.gmra.mrb[0].mxu0 %v1157
  %v1193 = vpop.f32.mrb[0].mxu0
  %v1194 = vadd.f32 0.0, %v1193
  %v1195 = vpop.f32.mrb[0].mxu0
  %v1196 = vpop.f32.mrb[0].mxu0
  %v1197 = vpop.f32.mrb[0].mxu0
  %1198 = vdwg.mxu0
  %v1207 = vunpack.c.l.b16 %v1130
  %v1208 = vunpack.c.l.b16 %v1131
  %v1209 = vunpack.c.l.b16 %v1132
  %v1210 = vunpack.c.l.b16 %v1133
  %v1211 = vunpack.c.l.b16 %v1134
  %v1212 = vunpack.c.l.b16 %v1135
  %v1213 = vunpack.c.l.b16 %v1136
  %v1214 = vunpack.c.l.b16 %v1137
  %v1215 = vpack.c.b16 %v1208, %v1207
  %v1216 = vpack.c.b16 %v1210, %v1209
  %v1217 = vpack.c.b16 %v1212, %v1211
  %v1218 = vpack.c.b16 %v1214, %v1213
  %v1224 = vsel %vm182, %v1129, 0
  %1226 = vmatprep.subr.bf16.mxu0 0
  %1227 = vmatpush1.bf16.msra.mxu0 %v1215
  %1228 = vmatprep.subr.bf16.mxu0 0
  %1229 = vmatpush1.bf16.msra.mxu0 %v1216
  %1230 = vmatprep.subr.bf16.mxu0 0
  %1231 = vmatpush1.bf16.msra.mxu0 %v1217
  %1232 = vmatprep.subr.bf16.mxu0 0
  %1233 = vmatpush1.bf16.msra.mxu0 %v1218
  %1234 = vmatprep.subr.bf16.mxu0 0
  %1235 = vmatpush1.bf16.msra.mxu0 0
  %1236 = vmatprep.subr.bf16.mxu0 0
  %1237 = vmatpush1.bf16.msra.mxu0 0
  %1238 = vmatprep.subr.bf16.mxu0 0
  %1239 = vmatpush1.bf16.msra.mxu0 0
  %1240 = vmatprep.subr.bf16.mxu0 0
  %1241 = vmatpush1.bf16.msra.mxu0 0
  %1242 = vmatprep.subr.bf16.mxu0 0
  %1243 = vmatpush1.bf16.msra.mxu0 0
  %1244 = vmatprep.subr.bf16.mxu0 0
  %1245 = vmatpush1.bf16.msra.mxu0 0
  %1246 = vmatprep.subr.bf16.mxu0 0
  %1247 = vmatpush1.bf16.msra.mxu0 0
  %1248 = vmatprep.subr.bf16.mxu0 0
  %1249 = vmatpush1.bf16.msra.mxu0 0
  %1250 = vmatprep.subr.bf16.mxu0 0
  %1251 = vmatpush1.bf16.msra.mxu0 0
  %1252 = vmatprep.subr.bf16.mxu0 0
  %1253 = vmatpush1.bf16.msra.mxu0 0
  %1254 = vmatprep.subr.bf16.mxu0 0
  %1255 = vmatpush1.bf16.msra.mxu0 0
  %1256 = vmatprep.subr.bf16.mxu0 0
  %1257 = vmatpush1.bf16.msra.mxu0 0
  %1258 = vmatprep.mubr.bf16.mxu0 0
  %1259 = vmatmul.mubr.bf16.gmra.mrb[0].mxu0 %v1224
  %v1260 = vpop.f32.mrb[0].mxu0
  %v1261 = vadd.f32 %v1194, %v1260
  %v1262 = vpop.f32.mrb[0].mxu0
  %v1263 = vpop.f32.mrb[0].mxu0
  %v1264 = vpop.f32.mrb[0].mxu0
  %1265 = vdwg.mxu0
  %v1266 = vld [vmem:[%s6] sm:$0x1]
  %v1268 = vlaneseq
  %v1269 = vshrl.u32 %v1268, 7
  %v1270 = vsub.s32 0, %v1269
  %v1271 = vrot.slane %v1266, %v1270
  %v1273 = vadd.f32 %v1261, %v1271
  %v1274 = vxor.u32 %v1273, 2147483648
  %v1275 = vmul.f32 %v1274, 1.442695
  %v1276 = vpow.pop %v1275
  %v1277 = vadd.f32 %v1276, 1.0
  %v1278 = vrcp.pop %v1277
  %v1279 = vmul.f32 1.0, %v1278
  %v1280 = vtanh.pop %v1273
  %v1281 = vld [vmem:[#allocation5] sm:$0x3]
  %1283 = vrot.lane.b32.xlu0 %v1281, 32
  %v1284 = vpop.permute.xlu0 %1283
  %v1286 = vmul.f32 %v1279, %v1284
  %1288 = vrot.lane.b32.xlu0 %v1280, 64
  %v1289 = vpop.permute.xlu0 %1288
  %v1291 = vmul.f32 %v1279, %v1289
  %1293 = vrot.lane.b32.xlu0 %v1291, 32
  %v1294 = vpop.permute.xlu0 %1293
  %v1296 = vadd.f32 %v1286, %v1294
  %v1297 = vtanh.pop %v1296
  %1299 = vrot.lane.b32.xlu0 %v1297, 64
  %v1300 = vpop.permute.xlu0 %1299
  %v1302 = vmul.f32 %v1279, %v1300
  %v1303 = vsel %vm1126, 1, 0
  %1304 = vset.pattern.permute.xlu0 0
  %1305 = vperm.xlu0 %1304, %v1303
  %v1306 = vpop.permute.xlu0 %1305
  %vm1307 = vcmp.eq.s32.totalorder %v1306, 1
  %v1308 = vsel %vm1307, %v1296, %v1284
  %1310 = vrot.lane.b32.xlu0 %v1308, 96
  %v1311 = vpop.permute.xlu0 %1310
  %1313 = vst.msk [vmem:[#allocation5] sm:$0x3] %vm273, %v1311
  %v1314 = vld [vmem:[#allocation4] sm:$0x3]
  %1316 = vrot.lane.b32.xlu0 %v1314, 96
  %v1317 = vpop.permute.xlu0 %1316
  %v1319 = vsel %vm1307, %v1302, %v1317
  %1321 = vrot.lane.b32.xlu0 %v1319, 32
  %v1322 = vpop.permute.xlu0 %1321
  %1324 = vst.msk [vmem:[#allocation4] sm:$0x3] %vm273, %v1322
  %v1325 = vsel %vm1307, %v1302, 0.0
  %1327 = vrot.lane.b32.xlu0 %v1325, 32
  %v1328 = vpop.permute.xlu0 %1327
  %s1330 = scalar_lea.vmem %s67, 10
  %1331 = vst.msk [vmem:[%s1330] sm:$0x3] %vm273, %v1328
  %s1332 = sadd.s32 %s81, 3
  %v1333 = vstv %s1332
  %vm1334 = vcmp.lt.s32.totalorder %v1333, %v80
  %s1335 = scalar_lea.vmem %s0, 6
  %v1336 = vld [vmem:[%s1335] sm:$0x3]
  %v1337 = vpack.c.bf16 %v1336, %v1336
  %v1338 = vld [vmem:[%s3] sm:$0xf]
  %v1339 = vld [vmem:[%s3 + $0x4] sm:$0xf]
  %v1340 = vld [vmem:[%s3 + $0x8] sm:$0xf]
  %v1341 = vld [vmem:[%s3 + $0xc] sm:$0xf]
  %v1342 = vld [vmem:[%s3 + $0x10] sm:$0xf]
  %v1343 = vld [vmem:[%s3 + $0x14] sm:$0xf]
  %v1344 = vld [vmem:[%s3 + $0x18] sm:$0xf]
  %v1345 = vld [vmem:[%s3 + $0x1c] sm:$0xf]
  %v1346 = vld [vmem:[#allocation2] sm:$0x3]
  %v1347 = vpack.c.bf16 %v1346, %v1346
  %v1348 = vld [vmem:[%s7] sm:$0xf]
  %v1349 = vld [vmem:[%s7 + $0x4] sm:$0xf]
  %v1350 = vld [vmem:[%s7 + $0x8] sm:$0xf]
  %v1351 = vld [vmem:[%s7 + $0xc] sm:$0xf]
  %v1356 = vunpack.c.l.b16 %v1348
  %v1357 = vunpack.c.l.b16 %v1349
  %v1358 = vunpack.c.l.b16 %v1350
  %v1359 = vunpack.c.l.b16 %v1351
  %v1360 = vpack.c.b16 %v1357, %v1356
  %v1361 = vpack.c.b16 %v1359, %v1358
  %v1365 = vsel %vm114, %v1347, 0
  %1367 = vmatprep.subr.bf16.mxu0 0
  %1368 = vmatpush1.bf16.msra.mxu0 %v1360
  %1369 = vmatprep.subr.bf16.mxu0 0
  %1370 = vmatpush1.bf16.msra.mxu0 %v1361
  %1371 = vmatprep.subr.bf16.mxu0 0
  %1372 = vmatpush1.bf16.msra.mxu0 0
  %1373 = vmatprep.subr.bf16.mxu0 0
  %1374 = vmatpush1.bf16.msra.mxu0 0
  %1375 = vmatprep.subr.bf16.mxu0 0
  %1376 = vmatpush1.bf16.msra.mxu0 0
  %1377 = vmatprep.subr.bf16.mxu0 0
  %1378 = vmatpush1.bf16.msra.mxu0 0
  %1379 = vmatprep.subr.bf16.mxu0 0
  %1380 = vmatpush1.bf16.msra.mxu0 0
  %1381 = vmatprep.subr.bf16.mxu0 0
  %1382 = vmatpush1.bf16.msra.mxu0 0
  %1383 = vmatprep.subr.bf16.mxu0 0
  %1384 = vmatpush1.bf16.msra.mxu0 0
  %1385 = vmatprep.subr.bf16.mxu0 0
  %1386 = vmatpush1.bf16.msra.mxu0 0
  %1387 = vmatprep.subr.bf16.mxu0 0
  %1388 = vmatpush1.bf16.msra.mxu0 0
  %1389 = vmatprep.subr.bf16.mxu0 0
  %1390 = vmatpush1.bf16.msra.mxu0 0
  %1391 = vmatprep.subr.bf16.mxu0 0
  %1392 = vmatpush1.bf16.msra.mxu0 0
  %1393 = vmatprep.subr.bf16.mxu0 0
  %1394 = vmatpush1.bf16.msra.mxu0 0
  %1395 = vmatprep.subr.bf16.mxu0 0
  %1396 = vmatpush1.bf16.msra.mxu0 0
  %1397 = vmatprep.subr.bf16.mxu0 0
  %1398 = vmatpush1.bf16.msra.mxu0 0
  %1399 = vmatprep.mubr.bf16.mxu0 0
  %1400 = vmatmul.mubr.bf16.gmra.mrb[0].mxu0 %v1365
  %v1401 = vpop.f32.mrb[0].mxu0
  %v1402 = vadd.f32 0.0, %v1401
  %v1403 = vpop.f32.mrb[0].mxu0
  %v1404 = vpop.f32.mrb[0].mxu0
  %v1405 = vpop.f32.mrb[0].mxu0
  %1406 = vdwg.mxu0
  %v1415 = vunpack.c.l.b16 %v1338
  %v1416 = vunpack.c.l.b16 %v1339
  %v1417 = vunpack.c.l.b16 %v1340
  %v1418 = vunpack.c.l.b16 %v1341
  %v1419 = vunpack.c.l.b16 %v1342
  %v1420 = vunpack.c.l.b16 %v1343
  %v1421 = vunpack.c.l.b16 %v1344
  %v1422 = vunpack.c.l.b16 %v1345
  %v1423 = vpack.c.b16 %v1416, %v1415
  %v1424 = vpack.c.b16 %v1418, %v1417
  %v1425 = vpack.c.b16 %v1420, %v1419
  %v1426 = vpack.c.b16 %v1422, %v1421
  %v1432 = vsel %vm182, %v1337, 0
  %1434 = vmatprep.subr.bf16.mxu0 0
  %1435 = vmatpush1.bf16.msra.mxu0 %v1423
  %1436 = vmatprep.subr.bf16.mxu0 0
  %1437 = vmatpush1.bf16.msra.mxu0 %v1424
  %1438 = vmatprep.subr.bf16.mxu0 0
  %1439 = vmatpush1.bf16.msra.mxu0 %v1425
  %1440 = vmatprep.subr.bf16.mxu0 0
  %1441 = vmatpush1.bf16.msra.mxu0 %v1426
  %1442 = vmatprep.subr.bf16.mxu0 0
  %1443 = vmatpush1.bf16.msra.mxu0 0
  %1444 = vmatprep.subr.bf16.mxu0 0
  %1445 = vmatpush1.bf16.msra.mxu0 0
  %1446 = vmatprep.subr.bf16.mxu0 0
  %1447 = vmatpush1.bf16.msra.mxu0 0
  %1448 = vmatprep.subr.bf16.mxu0 0
  %1449 = vmatpush1.bf16.msra.mxu0 0
  %1450 = vmatprep.subr.bf16.mxu0 0
  %1451 = vmatpush1.bf16.msra.mxu0 0
  %1452 = vmatprep.subr.bf16.mxu0 0
  %1453 = vmatpush1.bf16.msra.mxu0 0
  %1454 = vmatprep.subr.bf16.mxu0 0
  %1455 = vmatpush1.bf16.msra.mxu0 0
  %1456 = vmatprep.subr.bf16.mxu0 0
  %1457 = vmatpush1.bf16.msra.mxu0 0
  %1458 = vmatprep.subr.bf16.mxu0 0
  %1459 = vmatpush1.bf16.msra.mxu0 0
  %1460 = vmatprep.subr.bf16.mxu0 0
  %1461 = vmatpush1.bf16.msra.mxu0 0
  %1462 = vmatprep.subr.bf16.mxu0 0
  %1463 = vmatpush1.bf16.msra.mxu0 0
  %1464 = vmatprep.subr.bf16.mxu0 0
  %1465 = vmatpush1.bf16.msra.mxu0 0
  %1466 = vmatprep.mubr.bf16.mxu0 0
  %1467 = vmatmul.mubr.bf16.gmra.mrb[0].mxu0 %v1432
  %v1468 = vpop.f32.mrb[0].mxu0
  %v1469 = vadd.f32 %v1402, %v1468
  %v1470 = vpop.f32.mrb[0].mxu0
  %v1471 = vpop.f32.mrb[0].mxu0
  %v1472 = vpop.f32.mrb[0].mxu0
  %1473 = vdwg.mxu0
  %v1474 = vld [vmem:[%s5] sm:$0x1]
  %v1476 = vlaneseq
  %v1477 = vshrl.u32 %v1476, 7
  %v1478 = vsub.s32 0, %v1477
  %v1479 = vrot.slane %v1474, %v1478
  %v1481 = vadd.f32 %v1469, %v1479
  %v1482 = vxor.u32 %v1481, 2147483648
  %v1483 = vmul.f32 %v1482, 1.442695
  %v1484 = vpow.pop %v1483
  %v1485 = vadd.f32 %v1484, 1.0
  %v1486 = vrcp.pop %v1485
  %v1487 = vmul.f32 1.0, %v1486
  %v1488 = vtanh.pop %v1481
  %v1489 = vld [vmem:[#allocation3] sm:$0x3]
  %1491 = vrot.lane.b32.xlu0 %v1489, 32
  %v1492 = vpop.permute.xlu0 %1491
  %v1494 = vmul.f32 %v1487, %v1492
  %1496 = vrot.lane.b32.xlu0 %v1488, 64
  %v1497 = vpop.permute.xlu0 %1496
  %v1499 = vmul.f32 %v1487, %v1497
  %1501 = vrot.lane.b32.xlu0 %v1499, 32
  %v1502 = vpop.permute.xlu0 %1501
  %v1504 = vadd.f32 %v1494, %v1502
  %v1505 = vtanh.pop %v1504
  %1507 = vrot.lane.b32.xlu0 %v1505, 64
  %v1508 = vpop.permute.xlu0 %1507
  %v1510 = vmul.f32 %v1487, %v1508
  %v1511 = vsel %vm1334, 1, 0
  %1512 = vset.pattern.permute.xlu0 0
  %1513 = vperm.xlu0 %1512, %v1511
  %v1514 = vpop.permute.xlu0 %1513
  %vm1515 = vcmp.eq.s32.totalorder %v1514, 1
  %v1516 = vsel %vm1515, %v1504, %v1492
  %1518 = vrot.lane.b32.xlu0 %v1516, 96
  %v1519 = vpop.permute.xlu0 %1518
  %1521 = vst.msk [vmem:[#allocation3] sm:$0x3] %vm273, %v1519
  %v1522 = vld [vmem:[#allocation2] sm:$0x3]
  %1524 = vrot.lane.b32.xlu0 %v1522, 96
  %v1525 = vpop.permute.xlu0 %1524
  %v1527 = vsel %vm1515, %v1510, %v1525
  %1529 = vrot.lane.b32.xlu0 %v1527, 32
  %v1530 = vpop.permute.xlu0 %1529
  %1532 = vst.msk [vmem:[#allocation2] sm:$0x3] %vm273, %v1530
  %v1533 = vsel %vm1515, %v1510, 0.0
  %1535 = vrot.lane.b32.xlu0 %v1533, 32
  %v1536 = vpop.permute.xlu0 %1535
  %s1538 = scalar_lea.vmem %s9, 6
  %1539 = vst.msk [vmem:[%s1538] sm:$0x3] %vm273, %v1536
  %s1540 = sadd.s32 %s83, 4
  %v1541 = vstv %s1540
  %vm1542 = vcmp.lt.s32.totalorder %v1541, %v80
  %s1543 = scalar_lea.vmem %s59, 8
  %v1544 = vld [vmem:[%s1543] sm:$0x3]
  %v1545 = vpack.c.bf16 %v1544, %v1544
  %v1546 = vld [vmem:[%s4] sm:$0xf]
  %v1547 = vld [vmem:[%s4 + $0x4] sm:$0xf]
  %v1548 = vld [vmem:[%s4 + $0x8] sm:$0xf]
  %v1549 = vld [vmem:[%s4 + $0xc] sm:$0xf]
  %v1550 = vld [vmem:[%s4 + $0x10] sm:$0xf]
  %v1551 = vld [vmem:[%s4 + $0x14] sm:$0xf]
  %v1552 = vld [vmem:[%s4 + $0x18] sm:$0xf]
  %v1553 = vld [vmem:[%s4 + $0x1c] sm:$0xf]
  %v1554 = vld [vmem:[#allocation4] sm:$0x3]
  %v1555 = vpack.c.bf16 %v1554, %v1554
  %v1556 = vld [vmem:[%s8] sm:$0xf]
  %v1557 = vld [vmem:[%s8 + $0x4] sm:$0xf]
  %v1558 = vld [vmem:[%s8 + $0x8] sm:$0xf]
  %v1559 = vld [vmem:[%s8 + $0xc] sm:$0xf]
  %v1564 = vunpack.c.l.b16 %v1556
  %v1565 = vunpack.c.l.b16 %v1557
  %v1566 = vunpack.c.l.b16 %v1558
  %v1567 = vunpack.c.l.b16 %v1559
  %v1568 = vpack.c.b16 %v1565, %v1564
  %v1569 = vpack.c.b16 %v1567, %v1566
  %v1573 = vsel %vm114, %v1555, 0
  %1575 = vmatprep.subr.bf16.mxu0 0
  %1576 = vmatpush1.bf16.msra.mxu0 %v1568
  %1577 = vmatprep.subr.bf16.mxu0 0
  %1578 = vmatpush1.bf16.msra.mxu0 %v1569
  %1579 = vmatprep.subr.bf16.mxu0 0
  %1580 = vmatpush1.bf16.msra.mxu0 0
  %1581 = vmatprep.subr.bf16.mxu0 0
  %1582 = vmatpush1.bf16.msra.mxu0 0
  %1583 = vmatprep.subr.bf16.mxu0 0
  %1584 = vmatpush1.bf16.msra.mxu0 0
  %1585 = vmatprep.subr.bf16.mxu0 0
  %1586 = vmatpush1.bf16.msra.mxu0 0
  %1587 = vmatprep.subr.bf16.mxu0 0
  %1588 = vmatpush1.bf16.msra.mxu0 0
  %1589 = vmatprep.subr.bf16.mxu0 0
  %1590 = vmatpush1.bf16.msra.mxu0 0
  %1591 = vmatprep.subr.bf16.mxu0 0
  %1592 = vmatpush1.bf16.msra.mxu0 0
  %1593 = vmatprep.subr.bf16.mxu0 0
  %1594 = vmatpush1.bf16.msra.mxu0 0
  %1595 = vmatprep.subr.bf16.mxu0 0
  %1596 = vmatpush1.bf16.msra.mxu0 0
  %1597 = vmatprep.subr.bf16.mxu0 0
  %1598 = vmatpush1.bf16.msra.mxu0 0
  %1599 = vmatprep.subr.bf16.mxu0 0
  %1600 = vmatpush1.bf16.msra.mxu0 0
  %1601 = vmatprep.subr.bf16.mxu0 0
  %1602 = vmatpush1.bf16.msra.mxu0 0
  %1603 = vmatprep.subr.bf16.mxu0 0
  %1604 = vmatpush1.bf16.msra.mxu0 0
  %1605 = vmatprep.subr.bf16.mxu0 0
  %1606 = vmatpush1.bf16.msra.mxu0 0
  %1607 = vmatprep.mubr.bf16.mxu0 0
  %1608 = vmatmul.mubr.bf16.gmra.mrb[0].mxu0 %v1573
  %v1609 = vpop.f32.mrb[0].mxu0
  %v1610 = vadd.f32 0.0, %v1609
  %v1611 = vpop.f32.mrb[0].mxu0
  %v1612 = vpop.f32.mrb[0].mxu0
  %v1613 = vpop.f32.mrb[0].mxu0
  %1614 = vdwg.mxu0
  %v1623 = vunpack.c.l.b16 %v1546
  %v1624 = vunpack.c.l.b16 %v1547
  %v1625 = vunpack.c.l.b16 %v1548
  %v1626 = vunpack.c.l.b16 %v1549
  %v1627 = vunpack.c.l.b16 %v1550
  %v1628 = vunpack.c.l.b16 %v1551
  %v1629 = vunpack.c.l.b16 %v1552
  %v1630 = vunpack.c.l.b16 %v1553
  %v1631 = vpack.c.b16 %v1624, %v1623
  %v1632 = vpack.c.b16 %v1626, %v1625
  %v1633 = vpack.c.b16 %v1628, %v1627
  %v1634 = vpack.c.b16 %v1630, %v1629
  %v1640 = vsel %vm182, %v1545, 0
  %1642 = vmatprep.subr.bf16.mxu0 0
  %1643 = vmatpush1.bf16.msra.mxu0 %v1631
  %1644 = vmatprep.subr.bf16.mxu0 0
  %1645 = vmatpush1.bf16.msra.mxu0 %v1632
  %1646 = vmatprep.subr.bf16.mxu0 0
  %1647 = vmatpush1.bf16.msra.mxu0 %v1633
  %1648 = vmatprep.subr.bf16.mxu0 0
  %1649 = vmatpush1.bf16.msra.mxu0 %v1634
  %1650 = vmatprep.subr.bf16.mxu0 0
  %1651 = vmatpush1.bf16.msra.mxu0 0
  %1652 = vmatprep.subr.bf16.mxu0 0
  %1653 = vmatpush1.bf16.msra.mxu0 0
  %1654 = vmatprep.subr.bf16.mxu0 0
  %1655 = vmatpush1.bf16.msra.mxu0 0
  %1656 = vmatprep.subr.bf16.mxu0 0
  %1657 = vmatpush1.bf16.msra.mxu0 0
  %1658 = vmatprep.subr.bf16.mxu0 0
  %1659 = vmatpush1.bf16.msra.mxu0 0
  %1660 = vmatprep.subr.bf16.mxu0 0
  %1661 = vmatpush1.bf16.msra.mxu0 0
  %1662 = vmatprep.subr.bf16.mxu0 0
  %1663 = vmatpush1.bf16.msra.mxu0 0
  %1664 = vmatprep.subr.bf16.mxu0 0
  %1665 = vmatpush1.bf16.msra.mxu0 0
  %1666 = vmatprep.subr.bf16.mxu0 0
  %1667 = vmatpush1.bf16.msra.mxu0 0
  %1668 = vmatprep.subr.bf16.mxu0 0
  %1669 = vmatpush1.bf16.msra.mxu0 0
  %1670 = vmatprep.subr.bf16.mxu0 0
  %1671 = vmatpush1.bf16.msra.mxu0 0
  %1672 = vmatprep.subr.bf16.mxu0 0
  %1673 = vmatpush1.bf16.msra.mxu0 0
  %1674 = vmatprep.mubr.bf16.mxu0 0
  %1675 = vmatmul.mubr.bf16.gmra.mrb[0].mxu0 %v1640
  %v1676 = vpop.f32.mrb[0].mxu0
  %v1677 = vadd.f32 %v1610, %v1676
  %v1678 = vpop.f32.mrb[0].mxu0
  %v1679 = vpop.f32.mrb[0].mxu0
  %v1680 = vpop.f32.mrb[0].mxu0
  %1681 = vdwg.mxu0
  %v1682 = vld [vmem:[%s6] sm:$0x1]
  %v1684 = vlaneseq
  %v1685 = vshrl.u32 %v1684, 7
  %v1686 = vsub.s32 0, %v1685
  %v1687 = vrot.slane %v1682, %v1686
  %v1689 = vadd.f32 %v1677, %v1687
  %v1690 = vxor.u32 %v1689, 2147483648
  %v1691 = vmul.f32 %v1690, 1.442695
  %v1692 = vpow.pop %v1691
  %v1693 = vadd.f32 %v1692, 1.0
  %v1694 = vrcp.pop %v1693
  %v1695 = vmul.f32 1.0, %v1694
  %v1696 = vtanh.pop %v1689
  %v1697 = vld [vmem:[#allocation5] sm:$0x3]
  %1699 = vrot.lane.b32.xlu0 %v1697, 32
  %v1700 = vpop.permute.xlu0 %1699
  %v1702 = vmul.f32 %v1695, %v1700
  %1704 = vrot.lane.b32.xlu0 %v1696, 64
  %v1705 = vpop.permute.xlu0 %1704
  %v1707 = vmul.f32 %v1695, %v1705
  %1709 = vrot.lane.b32.xlu0 %v1707, 32
  %v1710 = vpop.permute.xlu0 %1709
  %v1712 = vadd.f32 %v1702, %v1710
  %v1713 = vtanh.pop %v1712
  %1715 = vrot.lane.b32.xlu0 %v1713, 64
  %v1716 = vpop.permute.xlu0 %1715
  %v1718 = vmul.f32 %v1695, %v1716
  %v1719 = vsel %vm1542, 1, 0
  %1720 = vset.pattern.permute.xlu0 0
  %1721 = vperm.xlu0 %1720, %v1719
  %v1722 = vpop.permute.xlu0 %1721
  %vm1723 = vcmp.eq.s32.totalorder %v1722, 1
  %v1724 = vsel %vm1723, %v1712, %v1700
  %1726 = vrot.lane.b32.xlu0 %v1724, 96
  %v1727 = vpop.permute.xlu0 %1726
  %1729 = vst.msk [vmem:[#allocation5] sm:$0x3] %vm273, %v1727
  %v1730 = vld [vmem:[#allocation4] sm:$0x3]
  %1732 = vrot.lane.b32.xlu0 %v1730, 96
  %v1733 = vpop.permute.xlu0 %1732
  %v1735 = vsel %vm1723, %v1718, %v1733
  %1737 = vrot.lane.b32.xlu0 %v1735, 32
  %v1738 = vpop.permute.xlu0 %1737
  %1740 = vst.msk [vmem:[#allocation4] sm:$0x3] %vm273, %v1738
  %v1741 = vsel %vm1723, %v1718, 0.0
  %1743 = vrot.lane.b32.xlu0 %v1741, 32
  %v1744 = vpop.permute.xlu0 %1743
  %s1746 = scalar_lea.vmem %s67, 8
  %1747 = vst.msk [vmem:[%s1746] sm:$0x3] %vm273, %v1744
  %s1748 = sadd.s32 %s81, 4
  %v1749 = vstv %s1748
  %vm1750 = vcmp.lt.s32.totalorder %v1749, %v80
  %s1751 = scalar_lea.vmem %s0, 8
  %v1752 = vld [vmem:[%s1751] sm:$0x3]
  %v1753 = vpack.c.bf16 %v1752, %v1752
  %v1754 = vld [vmem:[%s3] sm:$0xf]
  %v1755 = vld [vmem:[%s3 + $0x4] sm:$0xf]
  %v1756 = vld [vmem:[%s3 + $0x8] sm:$0xf]
  %v1757 = vld [vmem:[%s3 + $0xc] sm:$0xf]
  %v1758 = vld [vmem:[%s3 + $0x10] sm:$0xf]
  %v1759 = vld [vmem:[%s3 + $0x14] sm:$0xf]
  %v1760 = vld [vmem:[%s3 + $0x18] sm:$0xf]
  %v1761 = vld [vmem:[%s3 + $0x1c] sm:$0xf]
  %v1762 = vld [vmem:[#allocation2] sm:$0x3]
  %v1763 = vpack.c.bf16 %v1762, %v1762
  %v1764 = vld [vmem:[%s7] sm:$0xf]
  %v1765 = vld [vmem:[%s7 + $0x4] sm:$0xf]
  %v1766 = vld [vmem:[%s7 + $0x8] sm:$0xf]
  %v1767 = vld [vmem:[%s7 + $0xc] sm:$0xf]
  %v1772 = vunpack.c.l.b16 %v1764
  %v1773 = vunpack.c.l.b16 %v1765
  %v1774 = vunpack.c.l.b16 %v1766
  %v1775 = vunpack.c.l.b16 %v1767
  %v1776 = vpack.c.b16 %v1773, %v1772
  %v1777 = vpack.c.b16 %v1775, %v1774
  %v1781 = vsel %vm114, %v1763, 0
  %1783 = vmatprep.subr.bf16.mxu0 0
  %1784 = vmatpush1.bf16.msra.mxu0 %v1776
  %1785 = vmatprep.subr.bf16.mxu0 0
  %1786 = vmatpush1.bf16.msra.mxu0 %v1777
  %1787 = vmatprep.subr.bf16.mxu0 0
  %1788 = vmatpush1.bf16.msra.mxu0 0
  %1789 = vmatprep.subr.bf16.mxu0 0
  %1790 = vmatpush1.bf16.msra.mxu0 0
  %1791 = vmatprep.subr.bf16.mxu0 0
  %1792 = vmatpush1.bf16.msra.mxu0 0
  %1793 = vmatprep.subr.bf16.mxu0 0
  %1794 = vmatpush1.bf16.msra.mxu0 0
  %1795 = vmatprep.subr.bf16.mxu0 0
  %1796 = vmatpush1.bf16.msra.mxu0 0
  %1797 = vmatprep.subr.bf16.mxu0 0
  %1798 = vmatpush1.bf16.msra.mxu0 0
  %1799 = vmatprep.subr.bf16.mxu0 0
  %1800 = vmatpush1.bf16.msra.mxu0 0
  %1801 = vmatprep.subr.bf16.mxu0 0
  %1802 = vmatpush1.bf16.msra.mxu0 0
  %1803 = vmatprep.subr.bf16.mxu0 0
  %1804 = vmatpush1.bf16.msra.mxu0 0
  %1805 = vmatprep.subr.bf16.mxu0 0
  %1806 = vmatpush1.bf16.msra.mxu0 0
  %1807 = vmatprep.subr.bf16.mxu0 0
  %1808 = vmatpush1.bf16.msra.mxu0 0
  %1809 = vmatprep.subr.bf16.mxu0 0
  %1810 = vmatpush1.bf16.msra.mxu0 0
  %1811 = vmatprep.subr.bf16.mxu0 0
  %1812 = vmatpush1.bf16.msra.mxu0 0
  %1813 = vmatprep.subr.bf16.mxu0 0
  %1814 = vmatpush1.bf16.msra.mxu0 0
  %1815 = vmatprep.mubr.bf16.mxu0 0
  %1816 = vmatmul.mubr.bf16.gmra.mrb[0].mxu0 %v1781
  %v1817 = vpop.f32.mrb[0].mxu0
  %v1818 = vadd.f32 0.0, %v1817
  %v1819 = vpop.f32.mrb[0].mxu0
  %v1820 = vpop.f32.mrb[0].mxu0
  %v1821 = vpop.f32.mrb[0].mxu0
  %1822 = vdwg.mxu0
  %v1831 = vunpack.c.l.b16 %v1754
  %v1832 = vunpack.c.l.b16 %v1755
  %v1833 = vunpack.c.l.b16 %v1756
  %v1834 = vunpack.c.l.b16 %v1757
  %v1835 = vunpack.c.l.b16 %v1758
  %v1836 = vunpack.c.l.b16 %v1759
  %v1837 = vunpack.c.l.b16 %v1760
  %v1838 = vunpack.c.l.b16 %v1761
  %v1839 = vpack.c.b16 %v1832, %v1831
  %v1840 = vpack.c.b16 %v1834, %v1833
  %v1841 = vpack.c.b16 %v1836, %v1835
  %v1842 = vpack.c.b16 %v1838, %v1837
  %v1848 = vsel %vm182, %v1753, 0
  %1850 = vmatprep.subr.bf16.mxu0 0
  %1851 = vmatpush1.bf16.msra.mxu0 %v1839
  %1852 = vmatprep.subr.bf16.mxu0 0
  %1853 = vmatpush1.bf16.msra.mxu0 %v1840
  %1854 = vmatprep.subr.bf16.mxu0 0
  %1855 = vmatpush1.bf16.msra.mxu0 %v1841
  %1856 = vmatprep.subr.bf16.mxu0 0
  %1857 = vmatpush1.bf16.msra.mxu0 %v1842
  %1858 = vmatprep.subr.bf16.mxu0 0
  %1859 = vmatpush1.bf16.msra.mxu0 0
  %1860 = vmatprep.subr.bf16.mxu0 0
  %1861 = vmatpush1.bf16.msra.mxu0 0
  %1862 = vmatprep.subr.bf16.mxu0 0
  %1863 = vmatpush1.bf16.msra.mxu0 0
  %1864 = vmatprep.subr.bf16.mxu0 0
  %1865 = vmatpush1.bf16.msra.mxu0 0
  %1866 = vmatprep.subr.bf16.mxu0 0
  %1867 = vmatpush1.bf16.msra.mxu0 0
  %1868 = vmatprep.subr.bf16.mxu0 0
  %1869 = vmatpush1.bf16.msra.mxu0 0
  %1870 = vmatprep.subr.bf16.mxu0 0
  %1871 = vmatpush1.bf16.msra.mxu0 0
  %1872 = vmatprep.subr.bf16.mxu0 0
  %1873 = vmatpush1.bf16.msra.mxu0 0
  %1874 = vmatprep.subr.bf16.mxu0 0
  %1875 = vmatpush1.bf16.msra.mxu0 0
  %1876 = vmatprep.subr.bf16.mxu0 0
  %1877 = vmatpush1.bf16.msra.mxu0 0
  %1878 = vmatprep.subr.bf16.mxu0 0
  %1879 = vmatpush1.bf16.msra.mxu0 0
  %1880 = vmatprep.subr.bf16.mxu0 0
  %1881 = vmatpush1.bf16.msra.mxu0 0
  %1882 = vmatprep.mubr.bf16.mxu0 0
  %1883 = vmatmul.mubr.bf16.gmra.mrb[0].mxu0 %v1848
  %v1884 = vpop.f32.mrb[0].mxu0
  %v1885 = vadd.f32 %v1818, %v1884
  %v1886 = vpop.f32.mrb[0].mxu0
  %v1887 = vpop.f32.mrb[0].mxu0
  %v1888 = vpop.f32.mrb[0].mxu0
  %1889 = vdwg.mxu0
  %v1890 = vld [vmem:[%s5] sm:$0x1]
  %v1892 = vlaneseq
  %v1893 = vshrl.u32 %v1892, 7
  %v1894 = vsub.s32 0, %v1893
  %v1895 = vrot.slane %v1890, %v1894
  %v1897 = vadd.f32 %v1885, %v1895
  %v1898 = vxor.u32 %v1897, 2147483648
  %v1899 = vmul.f32 %v1898, 1.442695
  %v1900 = vpow.pop %v1899
  %v1901 = vadd.f32 %v1900, 1.0
  %v1902 = vrcp.pop %v1901
  %v1903 = vmul.f32 1.0, %v1902
  %v1904 = vtanh.pop %v1897
  %v1905 = vld [vmem:[#allocation3] sm:$0x3]
  %1907 = vrot.lane.b32.xlu0 %v1905, 32
  %v1908 = vpop.permute.xlu0 %1907
  %v1910 = vmul.f32 %v1903, %v1908
  %1912 = vrot.lane.b32.xlu0 %v1904, 64
  %v1913 = vpop.permute.xlu0 %1912
  %v1915 = vmul.f32 %v1903, %v1913
  %1917 = vrot.lane.b32.xlu0 %v1915, 32
  %v1918 = vpop.permute.xlu0 %1917
  %v1920 = vadd.f32 %v1910, %v1918
  %v1921 = vtanh.pop %v1920
  %1923 = vrot.lane.b32.xlu0 %v1921, 64
  %v1924 = vpop.permute.xlu0 %1923
  %v1926 = vmul.f32 %v1903, %v1924
  %v1927 = vsel %vm1750, 1, 0
  %1928 = vset.pattern.permute.xlu0 0
  %1929 = vperm.xlu0 %1928, %v1927
  %v1930 = vpop.permute.xlu0 %1929
  %vm1931 = vcmp.eq.s32.totalorder %v1930, 1
  %v1932 = vsel %vm1931, %v1920, %v1908
  %1934 = vrot.lane.b32.xlu0 %v1932, 96
  %v1935 = vpop.permute.xlu0 %1934
  %1937 = vst.msk [vmem:[#allocation3] sm:$0x3] %vm273, %v1935
  %v1938 = vld [vmem:[#allocation2] sm:$0x3]
  %1940 = vrot.lane.b32.xlu0 %v1938, 96
  %v1941 = vpop.permute.xlu0 %1940
  %v1943 = vsel %vm1931, %v1926, %v1941
  %1945 = vrot.lane.b32.xlu0 %v1943, 32
  %v1946 = vpop.permute.xlu0 %1945
  %1948 = vst.msk [vmem:[#allocation2] sm:$0x3] %vm273, %v1946
  %v1949 = vsel %vm1931, %v1926, 0.0
  %1951 = vrot.lane.b32.xlu0 %v1949, 32
  %v1952 = vpop.permute.xlu0 %1951
  %s1954 = scalar_lea.vmem %s9, 8
  %1955 = vst.msk [vmem:[%s1954] sm:$0x3] %vm273, %v1952
  %s1956 = sadd.s32 %s83, 3
  %v1957 = vstv %s1956
  %vm1958 = vcmp.lt.s32.totalorder %v1957, %v80
  %s1959 = scalar_lea.vmem %s59, 6
  %v1960 = vld [vmem:[%s1959] sm:$0x3]
  %v1961 = vpack.c.bf16 %v1960, %v1960
  %v1962 = vld [vmem:[%s4] sm:$0xf]
  %v1963 = vld [vmem:[%s4 + $0x4] sm:$0xf]
  %v1964 = vld [vmem:[%s4 + $0x8] sm:$0xf]
  %v1965 = vld [vmem:[%s4 + $0xc] sm:$0xf]
  %v1966 = vld [vmem:[%s4 + $0x10] sm:$0xf]
  %v1967 = vld [vmem:[%s4 + $0x14] sm:$0xf]
  %v1968 = vld [vmem:[%s4 + $0x18] sm:$0xf]
  %v1969 = vld [vmem:[%s4 + $0x1c] sm:$0xf]
  %v1970 = vld [vmem:[#allocation4] sm:$0x3]
  %v1971 = vpack.c.bf16 %v1970, %v1970
  %v1972 = vld [vmem:[%s8] sm:$0xf]
  %v1973 = vld [vmem:[%s8 + $0x4] sm:$0xf]
  %v1974 = vld [vmem:[%s8 + $0x8] sm:$0xf]
  %v1975 = vld [vmem:[%s8 + $0xc] sm:$0xf]
  %v1980 = vunpack.c.l.b16 %v1972
  %v1981 = vunpack.c.l.b16 %v1973
  %v1982 = vunpack.c.l.b16 %v1974
  %v1983 = vunpack.c.l.b16 %v1975
  %v1984 = vpack.c.b16 %v1981, %v1980
  %v1985 = vpack.c.b16 %v1983, %v1982
  %v1989 = vsel %vm114, %v1971, 0
  %1991 = vmatprep.subr.bf16.mxu0 0
  %1992 = vmatpush1.bf16.msra.mxu0 %v1984
  %1993 = vmatprep.subr.bf16.mxu0 0
  %1994 = vmatpush1.bf16.msra.mxu0 %v1985
  %1995 = vmatprep.subr.bf16.mxu0 0
  %1996 = vmatpush1.bf16.msra.mxu0 0
  %1997 = vmatprep.subr.bf16.mxu0 0
  %1998 = vmatpush1.bf16.msra.mxu0 0
  %1999 = vmatprep.subr.bf16.mxu0 0
  %2000 = vmatpush1.bf16.msra.mxu0 0
  %2001 = vmatprep.subr.bf16.mxu0 0
  %2002 = vmatpush1.bf16.msra.mxu0 0
  %2003 = vmatprep.subr.bf16.mxu0 0
  %2004 = vmatpush1.bf16.msra.mxu0 0
  %2005 = vmatprep.subr.bf16.mxu0 0
  %2006 = vmatpush1.bf16.msra.mxu0 0
  %2007 = vmatprep.subr.bf16.mxu0 0
  %2008 = vmatpush1.bf16.msra.mxu0 0
  %2009 = vmatprep.subr.bf16.mxu0 0
  %2010 = vmatpush1.bf16.msra.mxu0 0
  %2011 = vmatprep.subr.bf16.mxu0 0
  %2012 = vmatpush1.bf16.msra.mxu0 0
  %2013 = vmatprep.subr.bf16.mxu0 0
  %2014 = vmatpush1.bf16.msra.mxu0 0
  %2015 = vmatprep.subr.bf16.mxu0 0
  %2016 = vmatpush1.bf16.msra.mxu0 0
  %2017 = vmatprep.subr.bf16.mxu0 0
  %2018 = vmatpush1.bf16.msra.mxu0 0
  %2019 = vmatprep.subr.bf16.mxu0 0
  %2020 = vmatpush1.bf16.msra.mxu0 0
  %2021 = vmatprep.subr.bf16.mxu0 0
  %2022 = vmatpush1.bf16.msra.mxu0 0
  %2023 = vmatprep.mubr.bf16.mxu0 0
  %2024 = vmatmul.mubr.bf16.gmra.mrb[0].mxu0 %v1989
  %v2025 = vpop.f32.mrb[0].mxu0
  %v2026 = vadd.f32 0.0, %v2025
  %v2027 = vpop.f32.mrb[0].mxu0
  %v2028 = vpop.f32.mrb[0].mxu0
  %v2029 = vpop.f32.mrb[0].mxu0
  %2030 = vdwg.mxu0
  %v2039 = vunpack.c.l.b16 %v1962
  %v2040 = vunpack.c.l.b16 %v1963
  %v2041 = vunpack.c.l.b16 %v1964
  %v2042 = vunpack.c.l.b16 %v1965
  %v2043 = vunpack.c.l.b16 %v1966
  %v2044 = vunpack.c.l.b16 %v1967
  %v2045 = vunpack.c.l.b16 %v1968
  %v2046 = vunpack.c.l.b16 %v1969
  %v2047 = vpack.c.b16 %v2040, %v2039
  %v2048 = vpack.c.b16 %v2042, %v2041
  %v2049 = vpack.c.b16 %v2044, %v2043
  %v2050 = vpack.c.b16 %v2046, %v2045
  %v2056 = vsel %vm182, %v1961, 0
  %2058 = vmatprep.subr.bf16.mxu0 0
  %2059 = vmatpush1.bf16.msra.mxu0 %v2047
  %2060 = vmatprep.subr.bf16.mxu0 0
  %2061 = vmatpush1.bf16.msra.mxu0 %v2048
  %2062 = vmatprep.subr.bf16.mxu0 0
  %2063 = vmatpush1.bf16.msra.mxu0 %v2049
  %2064 = vmatprep.subr.bf16.mxu0 0
  %2065 = vmatpush1.bf16.msra.mxu0 %v2050
  %2066 = vmatprep.subr.bf16.mxu0 0
  %2067 = vmatpush1.bf16.msra.mxu0 0
  %2068 = vmatprep.subr.bf16.mxu0 0
  %2069 = vmatpush1.bf16.msra.mxu0 0
  %2070 = vmatprep.subr.bf16.mxu0 0
  %2071 = vmatpush1.bf16.msra.mxu0 0
  %2072 = vmatprep.subr.bf16.mxu0 0
  %2073 = vmatpush1.bf16.msra.mxu0 0
  %2074 = vmatprep.subr.bf16.mxu0 0
  %2075 = vmatpush1.bf16.msra.mxu0 0
  %2076 = vmatprep.subr.bf16.mxu0 0
  %2077 = vmatpush1.bf16.msra.mxu0 0
  %2078 = vmatprep.subr.bf16.mxu0 0
  %2079 = vmatpush1.bf16.msra.mxu0 0
  %2080 = vmatprep.subr.bf16.mxu0 0
  %2081 = vmatpush1.bf16.msra.mxu0 0
  %2082 = vmatprep.subr.bf16.mxu0 0
  %2083 = vmatpush1.bf16.msra.mxu0 0
  %2084 = vmatprep.subr.bf16.mxu0 0
  %2085 = vmatpush1.bf16.msra.mxu0 0
  %2086 = vmatprep.subr.bf16.mxu0 0
  %2087 = vmatpush1.bf16.msra.mxu0 0
  %2088 = vmatprep.subr.bf16.mxu0 0
  %2089 = vmatpush1.bf16.msra.mxu0 0
  %2090 = vmatprep.mubr.bf16.mxu0 0
  %2091 = vmatmul.mubr.bf16.gmra.mrb[0].mxu0 %v2056
  %v2092 = vpop.f32.mrb[0].mxu0
  %v2093 = vadd.f32 %v2026, %v2092
  %v2094 = vpop.f32.mrb[0].mxu0
  %v2095 = vpop.f32.mrb[0].mxu0
  %v2096 = vpop.f32.mrb[0].mxu0
  %2097 = vdwg.mxu0
  %v2098 = vld [vmem:[%s6] sm:$0x1]
  %v2100 = vlaneseq
  %v2101 = vshrl.u32 %v2100, 7
  %v2102 = vsub.s32 0, %v2101
  %v2103 = vrot.slane %v2098, %v2102
  %v2105 = vadd.f32 %v2093, %v2103
  %v2106 = vxor.u32 %v2105, 2147483648
  %v2107 = vmul.f32 %v2106, 1.442695
  %v2108 = vpow.pop %v2107
  %v2109 = vadd.f32 %v2108, 1.0
  %v2110 = vrcp.pop %v2109
  %v2111 = vmul.f32 1.0, %v2110
  %v2112 = vtanh.pop %v2105
  %v2113 = vld [vmem:[#allocation5] sm:$0x3]
  %2115 = vrot.lane.b32.xlu0 %v2113, 32
  %v2116 = vpop.permute.xlu0 %2115
  %v2118 = vmul.f32 %v2111, %v2116
  %2120 = vrot.lane.b32.xlu0 %v2112, 64
  %v2121 = vpop.permute.xlu0 %2120
  %v2123 = vmul.f32 %v2111, %v2121
  %2125 = vrot.lane.b32.xlu0 %v2123, 32
  %v2126 = vpop.permute.xlu0 %2125
  %v2128 = vadd.f32 %v2118, %v2126
  %v2129 = vtanh.pop %v2128
  %2131 = vrot.lane.b32.xlu0 %v2129, 64
  %v2132 = vpop.permute.xlu0 %2131
  %v2134 = vmul.f32 %v2111, %v2132
  %v2135 = vsel %vm1958, 1, 0
  %2136 = vset.pattern.permute.xlu0 0
  %2137 = vperm.xlu0 %2136, %v2135
  %v2138 = vpop.permute.xlu0 %2137
  %vm2139 = vcmp.eq.s32.totalorder %v2138, 1
  %v2140 = vsel %vm2139, %v2128, %v2116
  %2142 = vrot.lane.b32.xlu0 %v2140, 96
  %v2143 = vpop.permute.xlu0 %2142
  %2145 = vst.msk [vmem:[#allocation5] sm:$0x3] %vm273, %v2143
  %v2146 = vld [vmem:[#allocation4] sm:$0x3]
  %2148 = vrot.lane.b32.xlu0 %v2146, 96
  %v2149 = vpop.permute.xlu0 %2148
  %v2151 = vsel %vm2139, %v2134, %v2149
  %2153 = vrot.lane.b32.xlu0 %v2151, 32
  %v2154 = vpop.permute.xlu0 %2153
  %2156 = vst.msk [vmem:[#allocation4] sm:$0x3] %vm273, %v2154
  %v2157 = vsel %vm2139, %v2134, 0.0
  %2159 = vrot.lane.b32.xlu0 %v2157, 32
  %v2160 = vpop.permute.xlu0 %2159
  %s2162 = scalar_lea.vmem %s67, 6
  %2163 = vst.msk [vmem:[%s2162] sm:$0x3] %vm273, %v2160
  %s2164 = sadd.s32 %s81, 5
  %v2165 = vstv %s2164
  %vm2166 = vcmp.lt.s32.totalorder %v2165, %v80
  %s2167 = scalar_lea.vmem %s0, 10
  %v2168 = vld [vmem:[%s2167] sm:$0x3]
  %v2169 = vpack.c.bf16 %v2168, %v2168
  %v2170 = vld [vmem:[%s3] sm:$0xf]
  %v2171 = vld [vmem:[%s3 + $0x4] sm:$0xf]
  %v2172 = vld [vmem:[%s3 + $0x8] sm:$0xf]
  %v2173 = vld [vmem:[%s3 + $0xc] sm:$0xf]
  %v2174 = vld [vmem:[%s3 + $0x10] sm:$0xf]
  %v2175 = vld [vmem:[%s3 + $0x14] sm:$0xf]
  %v2176 = vld [vmem:[%s3 + $0x18] sm:$0xf]
  %v2177 = vld [vmem:[%s3 + $0x1c] sm:$0xf]
  %v2178 = vld [vmem:[#allocation2] sm:$0x3]
  %v2179 = vpack.c.bf16 %v2178, %v2178
  %v2180 = vld [vmem:[%s7] sm:$0xf]
  %v2181 = vld [vmem:[%s7 + $0x4] sm:$0xf]
  %v2182 = vld [vmem:[%s7 + $0x8] sm:$0xf]
  %v2183 = vld [vmem:[%s7 + $0xc] sm:$0xf]
  %v2188 = vunpack.c.l.b16 %v2180
  %v2189 = vunpack.c.l.b16 %v2181
  %v2190 = vunpack.c.l.b16 %v2182
  %v2191 = vunpack.c.l.b16 %v2183
  %v2192 = vpack.c.b16 %v2189, %v2188
  %v2193 = vpack.c.b16 %v2191, %v2190
  %v2197 = vsel %vm114, %v2179, 0
  %2199 = vmatprep.subr.bf16.mxu0 0
  %2200 = vmatpush1.bf16.msra.mxu0 %v2192
  %2201 = vmatprep.subr.bf16.mxu0 0
  %2202 = vmatpush1.bf16.msra.mxu0 %v2193
  %2203 = vmatprep.subr.bf16.mxu0 0
  %2204 = vmatpush1.bf16.msra.mxu0 0
  %2205 = vmatprep.subr.bf16.mxu0 0
  %2206 = vmatpush1.bf16.msra.mxu0 0
  %2207 = vmatprep.subr.bf16.mxu0 0
  %2208 = vmatpush1.bf16.msra.mxu0 0
  %2209 = vmatprep.subr.bf16.mxu0 0
  %2210 = vmatpush1.bf16.msra.mxu0 0
  %2211 = vmatprep.subr.bf16.mxu0 0
  %2212 = vmatpush1.bf16.msra.mxu0 0
  %2213 = vmatprep.subr.bf16.mxu0 0
  %2214 = vmatpush1.bf16.msra.mxu0 0
  %2215 = vmatprep.subr.bf16.mxu0 0
  %2216 = vmatpush1.bf16.msra.mxu0 0
  %2217 = vmatprep.subr.bf16.mxu0 0
  %2218 = vmatpush1.bf16.msra.mxu0 0
  %2219 = vmatprep.subr.bf16.mxu0 0
  %2220 = vmatpush1.bf16.msra.mxu0 0
  %2221 = vmatprep.subr.bf16.mxu0 0
  %2222 = vmatpush1.bf16.msra.mxu0 0
  %2223 = vmatprep.subr.bf16.mxu0 0
  %2224 = vmatpush1.bf16.msra.mxu0 0
  %2225 = vmatprep.subr.bf16.mxu0 0
  %2226 = vmatpush1.bf16.msra.mxu0 0
  %2227 = vmatprep.subr.bf16.mxu0 0
  %2228 = vmatpush1.bf16.msra.mxu0 0
  %2229 = vmatprep.subr.bf16.mxu0 0
  %2230 = vmatpush1.bf16.msra.mxu0 0
  %2231 = vmatprep.mubr.bf16.mxu0 0
  %2232 = vmatmul.mubr.bf16.gmra.mrb[0].mxu0 %v2197
  %v2233 = vpop.f32.mrb[0].mxu0
  %v2234 = vadd.f32 0.0, %v2233
  %v2235 = vpop.f32.mrb[0].mxu0
  %v2236 = vpop.f32.mrb[0].mxu0
  %v2237 = vpop.f32.mrb[0].mxu0
  %2238 = vdwg.mxu0
  %v2247 = vunpack.c.l.b16 %v2170
  %v2248 = vunpack.c.l.b16 %v2171
  %v2249 = vunpack.c.l.b16 %v2172
  %v2250 = vunpack.c.l.b16 %v2173
  %v2251 = vunpack.c.l.b16 %v2174
  %v2252 = vunpack.c.l.b16 %v2175
  %v2253 = vunpack.c.l.b16 %v2176
  %v2254 = vunpack.c.l.b16 %v2177
  %v2255 = vpack.c.b16 %v2248, %v2247
  %v2256 = vpack.c.b16 %v2250, %v2249
  %v2257 = vpack.c.b16 %v2252, %v2251
  %v2258 = vpack.c.b16 %v2254, %v2253
  %v2264 = vsel %vm182, %v2169, 0
  %2266 = vmatprep.subr.bf16.mxu0 0
  %2267 = vmatpush1.bf16.msra.mxu0 %v2255
  %2268 = vmatprep.subr.bf16.mxu0 0
  %2269 = vmatpush1.bf16.msra.mxu0 %v2256
  %2270 = vmatprep.subr.bf16.mxu0 0
  %2271 = vmatpush1.bf16.msra.mxu0 %v2257
  %2272 = vmatprep.subr.bf16.mxu0 0
  %2273 = vmatpush1.bf16.msra.mxu0 %v2258
  %2274 = vmatprep.subr.bf16.mxu0 0
  %2275 = vmatpush1.bf16.msra.mxu0 0
  %2276 = vmatprep.subr.bf16.mxu0 0
  %2277 = vmatpush1.bf16.msra.mxu0 0
  %2278 = vmatprep.subr.bf16.mxu0 0
  %2279 = vmatpush1.bf16.msra.mxu0 0
  %2280 = vmatprep.subr.bf16.mxu0 0
  %2281 = vmatpush1.bf16.msra.mxu0 0
  %2282 = vmatprep.subr.bf16.mxu0 0
  %2283 = vmatpush1.bf16.msra.mxu0 0
  %2284 = vmatprep.subr.bf16.mxu0 0
  %2285 = vmatpush1.bf16.msra.mxu0 0
  %2286 = vmatprep.subr.bf16.mxu0 0
  %2287 = vmatpush1.bf16.msra.mxu0 0
  %2288 = vmatprep.subr.bf16.mxu0 0
  %2289 = vmatpush1.bf16.msra.mxu0 0
  %2290 = vmatprep.subr.bf16.mxu0 0
  %2291 = vmatpush1.bf16.msra.mxu0 0
  %2292 = vmatprep.subr.bf16.mxu0 0
  %2293 = vmatpush1.bf16.msra.mxu0 0
  %2294 = vmatprep.subr.bf16.mxu0 0
  %2295 = vmatpush1.bf16.msra.mxu0 0
  %2296 = vmatprep.subr.bf16.mxu0 0
  %2297 = vmatpush1.bf16.msra.mxu0 0
  %2298 = vmatprep.mubr.bf16.mxu0 0
  %2299 = vmatmul.mubr.bf16.gmra.mrb[0].mxu0 %v2264
  %v2300 = vpop.f32.mrb[0].mxu0
  %v2301 = vadd.f32 %v2234, %v2300
  %v2302 = vpop.f32.mrb[0].mxu0
  %v2303 = vpop.f32.mrb[0].mxu0
  %v2304 = vpop.f32.mrb[0].mxu0
  %2305 = vdwg.mxu0
  %v2306 = vld [vmem:[%s5] sm:$0x1]
  %v2308 = vlaneseq
  %v2309 = vshrl.u32 %v2308, 7
  %v2310 = vsub.s32 0, %v2309
  %v2311 = vrot.slane %v2306, %v2310
  %v2313 = vadd.f32 %v2301, %v2311
  %v2314 = vxor.u32 %v2313, 2147483648
  %v2315 = vmul.f32 %v2314, 1.442695
  %v2316 = vpow.pop %v2315
  %v2317 = vadd.f32 %v2316, 1.0
  %v2318 = vrcp.pop %v2317
  %v2319 = vmul.f32 1.0, %v2318
  %v2320 = vtanh.pop %v2313
  %v2321 = vld [vmem:[#allocation3] sm:$0x3]
  %2323 = vrot.lane.b32.xlu0 %v2321, 32
  %v2324 = vpop.permute.xlu0 %2323
  %v2326 = vmul.f32 %v2319, %v2324
  %2328 = vrot.lane.b32.xlu0 %v2320, 64
  %v2329 = vpop.permute.xlu0 %2328
  %v2331 = vmul.f32 %v2319, %v2329
  %2333 = vrot.lane.b32.xlu0 %v2331, 32
  %v2334 = vpop.permute.xlu0 %2333
  %v2336 = vadd.f32 %v2326, %v2334
  %v2337 = vtanh.pop %v2336
  %2339 = vrot.lane.b32.xlu0 %v2337, 64
  %v2340 = vpop.permute.xlu0 %2339
  %v2342 = vmul.f32 %v2319, %v2340
  %v2343 = vsel %vm2166, 1, 0
  %2344 = vset.pattern.permute.xlu0 0
  %2345 = vperm.xlu0 %2344, %v2343
  %v2346 = vpop.permute.xlu0 %2345
  %vm2347 = vcmp.eq.s32.totalorder %v2346, 1
  %v2348 = vsel %vm2347, %v2336, %v2324
  %2350 = vrot.lane.b32.xlu0 %v2348, 96
  %v2351 = vpop.permute.xlu0 %2350
  %2353 = vst.msk [vmem:[#allocation3] sm:$0x3] %vm273, %v2351
  %v2354 = vld [vmem:[#allocation2] sm:$0x3]
  %2356 = vrot.lane.b32.xlu0 %v2354, 96
  %v2357 = vpop.permute.xlu0 %2356
  %v2359 = vsel %vm2347, %v2342, %v2357
  %2361 = vrot.lane.b32.xlu0 %v2359, 32
  %v2362 = vpop.permute.xlu0 %2361
  %2364 = vst.msk [vmem:[#allocation2] sm:$0x3] %vm273, %v2362
  %v2365 = vsel %vm2347, %v2342, 0.0
  %2367 = vrot.lane.b32.xlu0 %v2365, 32
  %v2368 = vpop.permute.xlu0 %2367
  %s2370 = scalar_lea.vmem %s9, 10
  %2371 = vst.msk [vmem:[%s2370] sm:$0x3] %vm273, %v2368
  %s2372 = sadd.s32 %s83, 2
  %v2373 = vstv %s2372
  %vm2374 = vcmp.lt.s32.totalorder %v2373, %v80
  %s2375 = scalar_lea.vmem %s59, 4
  %v2376 = vld [vmem:[%s2375] sm:$0x3]
  %v2377 = vpack.c.bf16 %v2376, %v2376
  %v2378 = vld [vmem:[%s4] sm:$0xf]
  %v2379 = vld [vmem:[%s4 + $0x4] sm:$0xf]
  %v2380 = vld [vmem:[%s4 + $0x8] sm:$0xf]
  %v2381 = vld [vmem:[%s4 + $0xc] sm:$0xf]
  %v2382 = vld [vmem:[%s4 + $0x10] sm:$0xf]
  %v2383 = vld [vmem:[%s4 + $0x14] sm:$0xf]
  %v2384 = vld [vmem:[%s4 + $0x18] sm:$0xf]
  %v2385 = vld [vmem:[%s4 + $0x1c] sm:$0xf]
  %v2386 = vld [vmem:[#allocation4] sm:$0x3]
  %v2387 = vpack.c.bf16 %v2386, %v2386
  %v2388 = vld [vmem:[%s8] sm:$0xf]
  %v2389 = vld [vmem:[%s8 + $0x4] sm:$0xf]
  %v2390 = vld [vmem:[%s8 + $0x8] sm:$0xf]
  %v2391 = vld [vmem:[%s8 + $0xc] sm:$0xf]
  %v2396 = vunpack.c.l.b16 %v2388
  %v2397 = vunpack.c.l.b16 %v2389
  %v2398 = vunpack.c.l.b16 %v2390
  %v2399 = vunpack.c.l.b16 %v2391
  %v2400 = vpack.c.b16 %v2397, %v2396
  %v2401 = vpack.c.b16 %v2399, %v2398
  %v2405 = vsel %vm114, %v2387, 0
  %2407 = vmatprep.subr.bf16.mxu0 0
  %2408 = vmatpush1.bf16.msra.mxu0 %v2400
  %2409 = vmatprep.subr.bf16.mxu0 0
  %2410 = vmatpush1.bf16.msra.mxu0 %v2401
  %2411 = vmatprep.subr.bf16.mxu0 0
  %2412 = vmatpush1.bf16.msra.mxu0 0
  %2413 = vmatprep.subr.bf16.mxu0 0
  %2414 = vmatpush1.bf16.msra.mxu0 0
  %2415 = vmatprep.subr.bf16.mxu0 0
  %2416 = vmatpush1.bf16.msra.mxu0 0
  %2417 = vmatprep.subr.bf16.mxu0 0
  %2418 = vmatpush1.bf16.msra.mxu0 0
  %2419 = vmatprep.subr.bf16.mxu0 0
  %2420 = vmatpush1.bf16.msra.mxu0 0
  %2421 = vmatprep.subr.bf16.mxu0 0
  %2422 = vmatpush1.bf16.msra.mxu0 0
  %2423 = vmatprep.subr.bf16.mxu0 0
  %2424 = vmatpush1.bf16.msra.mxu0 0
  %2425 = vmatprep.subr.bf16.mxu0 0
  %2426 = vmatpush1.bf16.msra.mxu0 0
  %2427 = vmatprep.subr.bf16.mxu0 0
  %2428 = vmatpush1.bf16.msra.mxu0 0
  %2429 = vmatprep.subr.bf16.mxu0 0
  %2430 = vmatpush1.bf16.msra.mxu0 0
  %2431 = vmatprep.subr.bf16.mxu0 0
  %2432 = vmatpush1.bf16.msra.mxu0 0
  %2433 = vmatprep.subr.bf16.mxu0 0
  %2434 = vmatpush1.bf16.msra.mxu0 0
  %2435 = vmatprep.subr.bf16.mxu0 0
  %2436 = vmatpush1.bf16.msra.mxu0 0
  %2437 = vmatprep.subr.bf16.mxu0 0
  %2438 = vmatpush1.bf16.msra.mxu0 0
  %2439 = vmatprep.mubr.bf16.mxu0 0
  %2440 = vmatmul.mubr.bf16.gmra.mrb[0].mxu0 %v2405
  %v2441 = vpop.f32.mrb[0].mxu0
  %v2442 = vadd.f32 0.0, %v2441
  %v2443 = vpop.f32.mrb[0].mxu0
  %v2444 = vpop.f32.mrb[0].mxu0
  %v2445 = vpop.f32.mrb[0].mxu0
  %2446 = vdwg.mxu0
  %v2455 = vunpack.c.l.b16 %v2378
  %v2456 = vunpack.c.l.b16 %v2379
  %v2457 = vunpack.c.l.b16 %v2380
  %v2458 = vunpack.c.l.b16 %v2381
  %v2459 = vunpack.c.l.b16 %v2382
  %v2460 = vunpack.c.l.b16 %v2383
  %v2461 = vunpack.c.l.b16 %v2384
  %v2462 = vunpack.c.l.b16 %v2385
  %v2463 = vpack.c.b16 %v2456, %v2455
  %v2464 = vpack.c.b16 %v2458, %v2457
  %v2465 = vpack.c.b16 %v2460, %v2459
  %v2466 = vpack.c.b16 %v2462, %v2461
  %v2472 = vsel %vm182, %v2377, 0
  %2474 = vmatprep.subr.bf16.mxu0 0
  %2475 = vmatpush1.bf16.msra.mxu0 %v2463
  %2476 = vmatprep.subr.bf16.mxu0 0
  %2477 = vmatpush1.bf16.msra.mxu0 %v2464
  %2478 = vmatprep.subr.bf16.mxu0 0
  %2479 = vmatpush1.bf16.msra.mxu0 %v2465
  %2480 = vmatprep.subr.bf16.mxu0 0
  %2481 = vmatpush1.bf16.msra.mxu0 %v2466
  %2482 = vmatprep.subr.bf16.mxu0 0
  %2483 = vmatpush1.bf16.msra.mxu0 0
  %2484 = vmatprep.subr.bf16.mxu0 0
  %2485 = vmatpush1.bf16.msra.mxu0 0
  %2486 = vmatprep.subr.bf16.mxu0 0
  %2487 = vmatpush1.bf16.msra.mxu0 0
  %2488 = vmatprep.subr.bf16.mxu0 0
  %2489 = vmatpush1.bf16.msra.mxu0 0
  %2490 = vmatprep.subr.bf16.mxu0 0
  %2491 = vmatpush1.bf16.msra.mxu0 0
  %2492 = vmatprep.subr.bf16.mxu0 0
  %2493 = vmatpush1.bf16.msra.mxu0 0
  %2494 = vmatprep.subr.bf16.mxu0 0
  %2495 = vmatpush1.bf16.msra.mxu0 0
  %2496 = vmatprep.subr.bf16.mxu0 0
  %2497 = vmatpush1.bf16.msra.mxu0 0
  %2498 = vmatprep.subr.bf16.mxu0 0
  %2499 = vmatpush1.bf16.msra.mxu0 0
  %2500 = vmatprep.subr.bf16.mxu0 0
  %2501 = vmatpush1.bf16.msra.mxu0 0
  %2502 = vmatprep.subr.bf16.mxu0 0
  %2503 = vmatpush1.bf16.msra.mxu0 0
  %2504 = vmatprep.subr.bf16.mxu0 0
  %2505 = vmatpush1.bf16.msra.mxu0 0
  %2506 = vmatprep.mubr.bf16.mxu0 0
  %2507 = vmatmul.mubr.bf16.gmra.mrb[0].mxu0 %v2472
  %v2508 = vpop.f32.mrb[0].mxu0
  %v2509 = vadd.f32 %v2442, %v2508
  %v2510 = vpop.f32.mrb[0].mxu0
  %v2511 = vpop.f32.mrb[0].mxu0
  %v2512 = vpop.f32.mrb[0].mxu0
  %2513 = vdwg.mxu0
  %v2514 = vld [vmem:[%s6] sm:$0x1]
  %v2516 = vlaneseq
  %v2517 = vshrl.u32 %v2516, 7
  %v2518 = vsub.s32 0, %v2517
  %v2519 = vrot.slane %v2514, %v2518
  %v2521 = vadd.f32 %v2509, %v2519
  %v2522 = vxor.u32 %v2521, 2147483648
  %v2523 = vmul.f32 %v2522, 1.442695
  %v2524 = vpow.pop %v2523
  %v2525 = vadd.f32 %v2524, 1.0
  %v2526 = vrcp.pop %v2525
  %v2527 = vmul.f32 1.0, %v2526
  %v2528 = vtanh.pop %v2521
  %v2529 = vld [vmem:[#allocation5] sm:$0x3]
  %2531 = vrot.lane.b32.xlu0 %v2529, 32
  %v2532 = vpop.permute.xlu0 %2531
  %v2534 = vmul.f32 %v2527, %v2532
  %2536 = vrot.lane.b32.xlu0 %v2528, 64
  %v2537 = vpop.permute.xlu0 %2536
  %v2539 = vmul.f32 %v2527, %v2537
  %2541 = vrot.lane.b32.xlu0 %v2539, 32
  %v2542 = vpop.permute.xlu0 %2541
  %v2544 = vadd.f32 %v2534, %v2542
  %v2545 = vtanh.pop %v2544
  %2547 = vrot.lane.b32.xlu0 %v2545, 64
  %v2548 = vpop.permute.xlu0 %2547
  %v2550 = vmul.f32 %v2527, %v2548
  %v2551 = vsel %vm2374, 1, 0
  %2552 = vset.pattern.permute.xlu0 0
  %2553 = vperm.xlu0 %2552, %v2551
  %v2554 = vpop.permute.xlu0 %2553
  %vm2555 = vcmp.eq.s32.totalorder %v2554, 1
  %v2556 = vsel %vm2555, %v2544, %v2532
  %2558 = vrot.lane.b32.xlu0 %v2556, 96
  %v2559 = vpop.permute.xlu0 %2558
  %2561 = vst.msk [vmem:[#allocation5] sm:$0x3] %vm273, %v2559
  %v2562 = vld [vmem:[#allocation4] sm:$0x3]
  %2564 = vrot.lane.b32.xlu0 %v2562, 96
  %v2565 = vpop.permute.xlu0 %2564
  %v2567 = vsel %vm2555, %v2550, %v2565
  %2569 = vrot.lane.b32.xlu0 %v2567, 32
  %v2570 = vpop.permute.xlu0 %2569
  %2572 = vst.msk [vmem:[#allocation4] sm:$0x3] %vm273, %v2570
  %v2573 = vsel %vm2555, %v2550, 0.0
  %2575 = vrot.lane.b32.xlu0 %v2573, 32
  %v2576 = vpop.permute.xlu0 %2575
  %s2578 = scalar_lea.vmem %s67, 4
  %2579 = vst.msk [vmem:[%s2578] sm:$0x3] %vm273, %v2576
  %s2580 = sadd.s32 %s81, 6
  %v2581 = vstv %s2580
  %vm2582 = vcmp.lt.s32.totalorder %v2581, %v80
  %s2583 = scalar_lea.vmem %s0, 12
  %v2584 = vld [vmem:[%s2583] sm:$0x3]
  %v2585 = vpack.c.bf16 %v2584, %v2584
  %v2586 = vld [vmem:[%s3] sm:$0xf]
  %v2587 = vld [vmem:[%s3 + $0x4] sm:$0xf]
  %v2588 = vld [vmem:[%s3 + $0x8] sm:$0xf]
  %v2589 = vld [vmem:[%s3 + $0xc] sm:$0xf]
  %v2590 = vld [vmem:[%s3 + $0x10] sm:$0xf]
  %v2591 = vld [vmem:[%s3 + $0x14] sm:$0xf]
  %v2592 = vld [vmem:[%s3 + $0x18] sm:$0xf]
  %v2593 = vld [vmem:[%s3 + $0x1c] sm:$0xf]
  %v2594 = vld [vmem:[#allocation2] sm:$0x3]
  %v2595 = vpack.c.bf16 %v2594, %v2594
  %v2596 = vld [vmem:[%s7] sm:$0xf]
  %v2597 = vld [vmem:[%s7 + $0x4] sm:$0xf]
  %v2598 = vld [vmem:[%s7 + $0x8] sm:$0xf]
  %v2599 = vld [vmem:[%s7 + $0xc] sm:$0xf]
  %v2604 = vunpack.c.l.b16 %v2596
  %v2605 = vunpack.c.l.b16 %v2597
  %v2606 = vunpack.c.l.b16 %v2598
  %v2607 = vunpack.c.l.b16 %v2599
  %v2608 = vpack.c.b16 %v2605, %v2604
  %v2609 = vpack.c.b16 %v2607, %v2606
  %v2613 = vsel %vm114, %v2595, 0
  %2615 = vmatprep.subr.bf16.mxu0 0
  %2616 = vmatpush1.bf16.msra.mxu0 %v2608
  %2617 = vmatprep.subr.bf16.mxu0 0
  %2618 = vmatpush1.bf16.msra.mxu0 %v2609
  %2619 = vmatprep.subr.bf16.mxu0 0
  %2620 = vmatpush1.bf16.msra.mxu0 0
  %2621 = vmatprep.subr.bf16.mxu0 0
  %2622 = vmatpush1.bf16.msra.mxu0 0
  %2623 = vmatprep.subr.bf16.mxu0 0
  %2624 = vmatpush1.bf16.msra.mxu0 0
  %2625 = vmatprep.subr.bf16.mxu0 0
  %2626 = vmatpush1.bf16.msra.mxu0 0
  %2627 = vmatprep.subr.bf16.mxu0 0
  %2628 = vmatpush1.bf16.msra.mxu0 0
  %2629 = vmatprep.subr.bf16.mxu0 0
  %2630 = vmatpush1.bf16.msra.mxu0 0
  %2631 = vmatprep.subr.bf16.mxu0 0
  %2632 = vmatpush1.bf16.msra.mxu0 0
  %2633 = vmatprep.subr.bf16.mxu0 0
  %2634 = vmatpush1.bf16.msra.mxu0 0
  %2635 = vmatprep.subr.bf16.mxu0 0
  %2636 = vmatpush1.bf16.msra.mxu0 0
  %2637 = vmatprep.subr.bf16.mxu0 0
  %2638 = vmatpush1.bf16.msra.mxu0 0
  %2639 = vmatprep.subr.bf16.mxu0 0
  %2640 = vmatpush1.bf16.msra.mxu0 0
  %2641 = vmatprep.subr.bf16.mxu0 0
  %2642 = vmatpush1.bf16.msra.mxu0 0
  %2643 = vmatprep.subr.bf16.mxu0 0
  %2644 = vmatpush1.bf16.msra.mxu0 0
  %2645 = vmatprep.subr.bf16.mxu0 0
  %2646 = vmatpush1.bf16.msra.mxu0 0
  %2647 = vmatprep.mubr.bf16.mxu0 0
  %2648 = vmatmul.mubr.bf16.gmra.mrb[0].mxu0 %v2613
  %v2649 = vpop.f32.mrb[0].mxu0
  %v2650 = vadd.f32 0.0, %v2649
  %v2651 = vpop.f32.mrb[0].mxu0
  %v2652 = vpop.f32.mrb[0].mxu0
  %v2653 = vpop.f32.mrb[0].mxu0
  %2654 = vdwg.mxu0
  %v2663 = vunpack.c.l.b16 %v2586
  %v2664 = vunpack.c.l.b16 %v2587
  %v2665 = vunpack.c.l.b16 %v2588
  %v2666 = vunpack.c.l.b16 %v2589
  %v2667 = vunpack.c.l.b16 %v2590
  %v2668 = vunpack.c.l.b16 %v2591
  %v2669 = vunpack.c.l.b16 %v2592
  %v2670 = vunpack.c.l.b16 %v2593
  %v2671 = vpack.c.b16 %v2664, %v2663
  %v2672 = vpack.c.b16 %v2666, %v2665
  %v2673 = vpack.c.b16 %v2668, %v2667
  %v2674 = vpack.c.b16 %v2670, %v2669
  %v2680 = vsel %vm182, %v2585, 0
  %2682 = vmatprep.subr.bf16.mxu0 0
  %2683 = vmatpush1.bf16.msra.mxu0 %v2671
  %2684 = vmatprep.subr.bf16.mxu0 0
  %2685 = vmatpush1.bf16.msra.mxu0 %v2672
  %2686 = vmatprep.subr.bf16.mxu0 0
  %2687 = vmatpush1.bf16.msra.mxu0 %v2673
  %2688 = vmatprep.subr.bf16.mxu0 0
  %2689 = vmatpush1.bf16.msra.mxu0 %v2674
  %2690 = vmatprep.subr.bf16.mxu0 0
  %2691 = vmatpush1.bf16.msra.mxu0 0
  %2692 = vmatprep.subr.bf16.mxu0 0
  %2693 = vmatpush1.bf16.msra.mxu0 0
  %2694 = vmatprep.subr.bf16.mxu0 0
  %2695 = vmatpush1.bf16.msra.mxu0 0
  %2696 = vmatprep.subr.bf16.mxu0 0
  %2697 = vmatpush1.bf16.msra.mxu0 0
  %2698 = vmatprep.subr.bf16.mxu0 0
  %2699 = vmatpush1.bf16.msra.mxu0 0
  %2700 = vmatprep.subr.bf16.mxu0 0
  %2701 = vmatpush1.bf16.msra.mxu0 0
  %2702 = vmatprep.subr.bf16.mxu0 0
  %2703 = vmatpush1.bf16.msra.mxu0 0
  %2704 = vmatprep.subr.bf16.mxu0 0
  %2705 = vmatpush1.bf16.msra.mxu0 0
  %2706 = vmatprep.subr.bf16.mxu0 0
  %2707 = vmatpush1.bf16.msra.mxu0 0
  %2708 = vmatprep.subr.bf16.mxu0 0
  %2709 = vmatpush1.bf16.msra.mxu0 0
  %2710 = vmatprep.subr.bf16.mxu0 0
  %2711 = vmatpush1.bf16.msra.mxu0 0
  %2712 = vmatprep.subr.bf16.mxu0 0
  %2713 = vmatpush1.bf16.msra.mxu0 0
  %2714 = vmatprep.mubr.bf16.mxu0 0
  %2715 = vmatmul.mubr.bf16.gmra.mrb[0].mxu0 %v2680
  %v2716 = vpop.f32.mrb[0].mxu0
  %v2717 = vadd.f32 %v2650, %v2716
  %v2718 = vpop.f32.mrb[0].mxu0
  %v2719 = vpop.f32.mrb[0].mxu0
  %v2720 = vpop.f32.mrb[0].mxu0
  %2721 = vdwg.mxu0
  %v2722 = vld [vmem:[%s5] sm:$0x1]
  %v2724 = vlaneseq
  %v2725 = vshrl.u32 %v2724, 7
  %v2726 = vsub.s32 0, %v2725
  %v2727 = vrot.slane %v2722, %v2726
  %v2729 = vadd.f32 %v2717, %v2727
  %v2730 = vxor.u32 %v2729, 2147483648
  %v2731 = vmul.f32 %v2730, 1.442695
  %v2732 = vpow.pop %v2731
  %v2733 = vadd.f32 %v2732, 1.0
  %v2734 = vrcp.pop %v2733
  %v2735 = vmul.f32 1.0, %v2734
  %v2736 = vtanh.pop %v2729
  %v2737 = vld [vmem:[#allocation3] sm:$0x3]
  %2739 = vrot.lane.b32.xlu0 %v2737, 32
  %v2740 = vpop.permute.xlu0 %2739
  %v2742 = vmul.f32 %v2735, %v2740
  %2744 = vrot.lane.b32.xlu0 %v2736, 64
  %v2745 = vpop.permute.xlu0 %2744
  %v2747 = vmul.f32 %v2735, %v2745
  %2749 = vrot.lane.b32.xlu0 %v2747, 32
  %v2750 = vpop.permute.xlu0 %2749
  %v2752 = vadd.f32 %v2742, %v2750
  %v2753 = vtanh.pop %v2752
  %2755 = vrot.lane.b32.xlu0 %v2753, 64
  %v2756 = vpop.permute.xlu0 %2755
  %v2758 = vmul.f32 %v2735, %v2756
  %v2759 = vsel %vm2582, 1, 0
  %2760 = vset.pattern.permute.xlu0 0
  %2761 = vperm.xlu0 %2760, %v2759
  %v2762 = vpop.permute.xlu0 %2761
  %vm2763 = vcmp.eq.s32.totalorder %v2762, 1
  %v2764 = vsel %vm2763, %v2752, %v2740
  %2766 = vrot.lane.b32.xlu0 %v2764, 96
  %v2767 = vpop.permute.xlu0 %2766
  %2769 = vst.msk [vmem:[#allocation3] sm:$0x3] %vm273, %v2767
  %v2770 = vld [vmem:[#allocation2] sm:$0x3]
  %2772 = vrot.lane.b32.xlu0 %v2770, 96
  %v2773 = vpop.permute.xlu0 %2772
  %v2775 = vsel %vm2763, %v2758, %v2773
  %2777 = vrot.lane.b32.xlu0 %v2775, 32
  %v2778 = vpop.permute.xlu0 %2777
  %2780 = vst.msk [vmem:[#allocation2] sm:$0x3] %vm273, %v2778
  %v2781 = vsel %vm2763, %v2758, 0.0
  %2783 = vrot.lane.b32.xlu0 %v2781, 32
  %v2784 = vpop.permute.xlu0 %2783
  %s2786 = scalar_lea.vmem %s9, 12
  %2787 = vst.msk [vmem:[%s2786] sm:$0x3] %vm273, %v2784
  %s2788 = sadd.s32 %s83, 1
  %v2789 = vstv %s2788
  %vm2790 = vcmp.lt.s32.totalorder %v2789, %v80
  %s2791 = scalar_lea.vmem %s59, 2
  %v2792 = vld [vmem:[%s2791] sm:$0x3]
  %v2793 = vpack.c.bf16 %v2792, %v2792
  %v2794 = vld [vmem:[%s4] sm:$0xf]
  %v2795 = vld [vmem:[%s4 + $0x4] sm:$0xf]
  %v2796 = vld [vmem:[%s4 + $0x8] sm:$0xf]
  %v2797 = vld [vmem:[%s4 + $0xc] sm:$0xf]
  %v2798 = vld [vmem:[%s4 + $0x10] sm:$0xf]
  %v2799 = vld [vmem:[%s4 + $0x14] sm:$0xf]
  %v2800 = vld [vmem:[%s4 + $0x18] sm:$0xf]
  %v2801 = vld [vmem:[%s4 + $0x1c] sm:$0xf]
  %v2802 = vld [vmem:[#allocation4] sm:$0x3]
  %v2803 = vpack.c.bf16 %v2802, %v2802
  %v2804 = vld [vmem:[%s8] sm:$0xf]
  %v2805 = vld [vmem:[%s8 + $0x4] sm:$0xf]
  %v2806 = vld [vmem:[%s8 + $0x8] sm:$0xf]
  %v2807 = vld [vmem:[%s8 + $0xc] sm:$0xf]
  %v2812 = vunpack.c.l.b16 %v2804
  %v2813 = vunpack.c.l.b16 %v2805
  %v2814 = vunpack.c.l.b16 %v2806
  %v2815 = vunpack.c.l.b16 %v2807
  %v2816 = vpack.c.b16 %v2813, %v2812
  %v2817 = vpack.c.b16 %v2815, %v2814
  %v2821 = vsel %vm114, %v2803, 0
  %2823 = vmatprep.subr.bf16.mxu0 0
  %2824 = vmatpush1.bf16.msra.mxu0 %v2816
  %2825 = vmatprep.subr.bf16.mxu0 0
  %2826 = vmatpush1.bf16.msra.mxu0 %v2817
  %2827 = vmatprep.subr.bf16.mxu0 0
  %2828 = vmatpush1.bf16.msra.mxu0 0
  %2829 = vmatprep.subr.bf16.mxu0 0
  %2830 = vmatpush1.bf16.msra.mxu0 0
  %2831 = vmatprep.subr.bf16.mxu0 0
  %2832 = vmatpush1.bf16.msra.mxu0 0
  %2833 = vmatprep.subr.bf16.mxu0 0
  %2834 = vmatpush1.bf16.msra.mxu0 0
  %2835 = vmatprep.subr.bf16.mxu0 0
  %2836 = vmatpush1.bf16.msra.mxu0 0
  %2837 = vmatprep.subr.bf16.mxu0 0
  %2838 = vmatpush1.bf16.msra.mxu0 0
  %2839 = vmatprep.subr.bf16.mxu0 0
  %2840 = vmatpush1.bf16.msra.mxu0 0
  %2841 = vmatprep.subr.bf16.mxu0 0
  %2842 = vmatpush1.bf16.msra.mxu0 0
  %2843 = vmatprep.subr.bf16.mxu0 0
  %2844 = vmatpush1.bf16.msra.mxu0 0
  %2845 = vmatprep.subr.bf16.mxu0 0
  %2846 = vmatpush1.bf16.msra.mxu0 0
  %2847 = vmatprep.subr.bf16.mxu0 0
  %2848 = vmatpush1.bf16.msra.mxu0 0
  %2849 = vmatprep.subr.bf16.mxu0 0
  %2850 = vmatpush1.bf16.msra.mxu0 0
  %2851 = vmatprep.subr.bf16.mxu0 0
  %2852 = vmatpush1.bf16.msra.mxu0 0
  %2853 = vmatprep.subr.bf16.mxu0 0
  %2854 = vmatpush1.bf16.msra.mxu0 0
  %2855 = vmatprep.mubr.bf16.mxu0 0
  %2856 = vmatmul.mubr.bf16.gmra.mrb[0].mxu0 %v2821
  %v2857 = vpop.f32.mrb[0].mxu0
  %v2858 = vadd.f32 0.0, %v2857
  %v2859 = vpop.f32.mrb[0].mxu0
  %v2860 = vpop.f32.mrb[0].mxu0
  %v2861 = vpop.f32.mrb[0].mxu0
  %2862 = vdwg.mxu0
  %v2871 = vunpack.c.l.b16 %v2794
  %v2872 = vunpack.c.l.b16 %v2795
  %v2873 = vunpack.c.l.b16 %v2796
  %v2874 = vunpack.c.l.b16 %v2797
  %v2875 = vunpack.c.l.b16 %v2798
  %v2876 = vunpack.c.l.b16 %v2799
  %v2877 = vunpack.c.l.b16 %v2800
  %v2878 = vunpack.c.l.b16 %v2801
  %v2879 = vpack.c.b16 %v2872, %v2871
  %v2880 = vpack.c.b16 %v2874, %v2873
  %v2881 = vpack.c.b16 %v2876, %v2875
  %v2882 = vpack.c.b16 %v2878, %v2877
  %v2888 = vsel %vm182, %v2793, 0
  %2890 = vmatprep.subr.bf16.mxu0 0
  %2891 = vmatpush1.bf16.msra.mxu0 %v2879
  %2892 = vmatprep.subr.bf16.mxu0 0
  %2893 = vmatpush1.bf16.msra.mxu0 %v2880
  %2894 = vmatprep.subr.bf16.mxu0 0
  %2895 = vmatpush1.bf16.msra.mxu0 %v2881
  %2896 = vmatprep.subr.bf16.mxu0 0
  %2897 = vmatpush1.bf16.msra.mxu0 %v2882
  %2898 = vmatprep.subr.bf16.mxu0 0
  %2899 = vmatpush1.bf16.msra.mxu0 0
  %2900 = vmatprep.subr.bf16.mxu0 0
  %2901 = vmatpush1.bf16.msra.mxu0 0
  %2902 = vmatprep.subr.bf16.mxu0 0
  %2903 = vmatpush1.bf16.msra.mxu0 0
  %2904 = vmatprep.subr.bf16.mxu0 0
  %2905 = vmatpush1.bf16.msra.mxu0 0
  %2906 = vmatprep.subr.bf16.mxu0 0
  %2907 = vmatpush1.bf16.msra.mxu0 0
  %2908 = vmatprep.subr.bf16.mxu0 0
  %2909 = vmatpush1.bf16.msra.mxu0 0
  %2910 = vmatprep.subr.bf16.mxu0 0
  %2911 = vmatpush1.bf16.msra.mxu0 0
  %2912 = vmatprep.subr.bf16.mxu0 0
  %2913 = vmatpush1.bf16.msra.mxu0 0
  %2914 = vmatprep.subr.bf16.mxu0 0
  %2915 = vmatpush1.bf16.msra.mxu0 0
  %2916 = vmatprep.subr.bf16.mxu0 0
  %2917 = vmatpush1.bf16.msra.mxu0 0
  %2918 = vmatprep.subr.bf16.mxu0 0
  %2919 = vmatpush1.bf16.msra.mxu0 0
  %2920 = vmatprep.subr.bf16.mxu0 0
  %2921 = vmatpush1.bf16.msra.mxu0 0
  %2922 = vmatprep.mubr.bf16.mxu0 0
  %2923 = vmatmul.mubr.bf16.gmra.mrb[0].mxu0 %v2888
  %v2924 = vpop.f32.mrb[0].mxu0
  %v2925 = vadd.f32 %v2858, %v2924
  %v2926 = vpop.f32.mrb[0].mxu0
  %v2927 = vpop.f32.mrb[0].mxu0
  %v2928 = vpop.f32.mrb[0].mxu0
  %2929 = vdwg.mxu0
  %v2930 = vld [vmem:[%s6] sm:$0x1]
  %v2932 = vlaneseq
  %v2933 = vshrl.u32 %v2932, 7
  %v2934 = vsub.s32 0, %v2933
  %v2935 = vrot.slane %v2930, %v2934
  %v2937 = vadd.f32 %v2925, %v2935
  %v2938 = vxor.u32 %v2937, 2147483648
  %v2939 = vmul.f32 %v2938, 1.442695
  %v2940 = vpow.pop %v2939
  %v2941 = vadd.f32 %v2940, 1.0
  %v2942 = vrcp.pop %v2941
  %v2943 = vmul.f32 1.0, %v2942
  %v2944 = vtanh.pop %v2937
  %v2945 = vld [vmem:[#allocation5] sm:$0x3]
  %2947 = vrot.lane.b32.xlu0 %v2945, 32
  %v2948 = vpop.permute.xlu0 %2947
  %v2950 = vmul.f32 %v2943, %v2948
  %2952 = vrot.lane.b32.xlu0 %v2944, 64
  %v2953 = vpop.permute.xlu0 %2952
  %v2955 = vmul.f32 %v2943, %v2953
  %2957 = vrot.lane.b32.xlu0 %v2955, 32
  %v2958 = vpop.permute.xlu0 %2957
  %v2960 = vadd.f32 %v2950, %v2958
  %v2961 = vtanh.pop %v2960
  %2963 = vrot.lane.b32.xlu0 %v2961, 64
  %v2964 = vpop.permute.xlu0 %2963
  %v2966 = vmul.f32 %v2943, %v2964
  %v2967 = vsel %vm2790, 1, 0
  %2968 = vset.pattern.permute.xlu0 0
  %2969 = vperm.xlu0 %2968, %v2967
  %v2970 = vpop.permute.xlu0 %2969
  %vm2971 = vcmp.eq.s32.totalorder %v2970, 1
  %v2972 = vsel %vm2971, %v2960, %v2948
  %2974 = vrot.lane.b32.xlu0 %v2972, 96
  %v2975 = vpop.permute.xlu0 %2974
  %2977 = vst.msk [vmem:[#allocation5] sm:$0x3] %vm273, %v2975
  %v2978 = vld [vmem:[#allocation4] sm:$0x3]
  %2980 = vrot.lane.b32.xlu0 %v2978, 96
  %v2981 = vpop.permute.xlu0 %2980
  %v2983 = vsel %vm2971, %v2966, %v2981
  %2985 = vrot.lane.b32.xlu0 %v2983, 32
  %v2986 = vpop.permute.xlu0 %2985
  %2988 = vst.msk [vmem:[#allocation4] sm:$0x3] %vm273, %v2986
  %v2989 = vsel %vm2971, %v2966, 0.0
  %2991 = vrot.lane.b32.xlu0 %v2989, 32
  %v2992 = vpop.permute.xlu0 %2991
  %s2994 = scalar_lea.vmem %s67, 2
  %2995 = vst.msk [vmem:[%s2994] sm:$0x3] %vm273, %v2992
  %s2996 = sadd.s32 %s81, 7
  %v2997 = vstv %s2996
  %vm2998 = vcmp.lt.s32.totalorder %v2997, %v80
  %s2999 = scalar_lea.vmem %s0, 14
  %v3000 = vld [vmem:[%s2999] sm:$0x3]
  %v3001 = vpack.c.bf16 %v3000, %v3000
  %v3002 = vld [vmem:[%s3] sm:$0xf]
  %v3003 = vld [vmem:[%s3 + $0x4] sm:$0xf]
  %v3004 = vld [vmem:[%s3 + $0x8] sm:$0xf]
  %v3005 = vld [vmem:[%s3 + $0xc] sm:$0xf]
  %v3006 = vld [vmem:[%s3 + $0x10] sm:$0xf]
  %v3007 = vld [vmem:[%s3 + $0x14] sm:$0xf]
  %v3008 = vld [vmem:[%s3 + $0x18] sm:$0xf]
  %v3009 = vld [vmem:[%s3 + $0x1c] sm:$0xf]
  %v3010 = vld [vmem:[#allocation2] sm:$0x3]
  %v3011 = vpack.c.bf16 %v3010, %v3010
  %v3012 = vld [vmem:[%s7] sm:$0xf]
  %v3013 = vld [vmem:[%s7 + $0x4] sm:$0xf]
  %v3014 = vld [vmem:[%s7 + $0x8] sm:$0xf]
  %v3015 = vld [vmem:[%s7 + $0xc] sm:$0xf]
  %v3020 = vunpack.c.l.b16 %v3012
  %v3021 = vunpack.c.l.b16 %v3013
  %v3022 = vunpack.c.l.b16 %v3014
  %v3023 = vunpack.c.l.b16 %v3015
  %v3024 = vpack.c.b16 %v3021, %v3020
  %v3025 = vpack.c.b16 %v3023, %v3022
  %v3029 = vsel %vm114, %v3011, 0
  %3031 = vmatprep.subr.bf16.mxu0 0
  %3032 = vmatpush1.bf16.msra.mxu0 %v3024
  %3033 = vmatprep.subr.bf16.mxu0 0
  %3034 = vmatpush1.bf16.msra.mxu0 %v3025
  %3035 = vmatprep.subr.bf16.mxu0 0
  %3036 = vmatpush1.bf16.msra.mxu0 0
  %3037 = vmatprep.subr.bf16.mxu0 0
  %3038 = vmatpush1.bf16.msra.mxu0 0
  %3039 = vmatprep.subr.bf16.mxu0 0
  %3040 = vmatpush1.bf16.msra.mxu0 0
  %3041 = vmatprep.subr.bf16.mxu0 0
  %3042 = vmatpush1.bf16.msra.mxu0 0
  %3043 = vmatprep.subr.bf16.mxu0 0
  %3044 = vmatpush1.bf16.msra.mxu0 0
  %3045 = vmatprep.subr.bf16.mxu0 0
  %3046 = vmatpush1.bf16.msra.mxu0 0
  %3047 = vmatprep.subr.bf16.mxu0 0
  %3048 = vmatpush1.bf16.msra.mxu0 0
  %3049 = vmatprep.subr.bf16.mxu0 0
  %3050 = vmatpush1.bf16.msra.mxu0 0
  %3051 = vmatprep.subr.bf16.mxu0 0
  %3052 = vmatpush1.bf16.msra.mxu0 0
  %3053 = vmatprep.subr.bf16.mxu0 0
  %3054 = vmatpush1.bf16.msra.mxu0 0
  %3055 = vmatprep.subr.bf16.mxu0 0
  %3056 = vmatpush1.bf16.msra.mxu0 0
  %3057 = vmatprep.subr.bf16.mxu0 0
  %3058 = vmatpush1.bf16.msra.mxu0 0
  %3059 = vmatprep.subr.bf16.mxu0 0
  %3060 = vmatpush1.bf16.msra.mxu0 0
  %3061 = vmatprep.subr.bf16.mxu0 0
  %3062 = vmatpush1.bf16.msra.mxu0 0
  %3063 = vmatprep.mubr.bf16.mxu0 0
  %3064 = vmatmul.mubr.bf16.gmra.mrb[0].mxu0 %v3029
  %v3065 = vpop.f32.mrb[0].mxu0
  %v3066 = vadd.f32 0.0, %v3065
  %v3067 = vpop.f32.mrb[0].mxu0
  %v3068 = vpop.f32.mrb[0].mxu0
  %v3069 = vpop.f32.mrb[0].mxu0
  %3070 = vdwg.mxu0
  %v3079 = vunpack.c.l.b16 %v3002
  %v3080 = vunpack.c.l.b16 %v3003
  %v3081 = vunpack.c.l.b16 %v3004
  %v3082 = vunpack.c.l.b16 %v3005
  %v3083 = vunpack.c.l.b16 %v3006
  %v3084 = vunpack.c.l.b16 %v3007
  %v3085 = vunpack.c.l.b16 %v3008
  %v3086 = vunpack.c.l.b16 %v3009
  %v3087 = vpack.c.b16 %v3080, %v3079
  %v3088 = vpack.c.b16 %v3082, %v3081
  %v3089 = vpack.c.b16 %v3084, %v3083
  %v3090 = vpack.c.b16 %v3086, %v3085
  %v3096 = vsel %vm182, %v3001, 0
  %3098 = vmatprep.subr.bf16.mxu0 0
  %3099 = vmatpush1.bf16.msra.mxu0 %v3087
  %3100 = vmatprep.subr.bf16.mxu0 0
  %3101 = vmatpush1.bf16.msra.mxu0 %v3088
  %3102 = vmatprep.subr.bf16.mxu0 0
  %3103 = vmatpush1.bf16.msra.mxu0 %v3089
  %3104 = vmatprep.subr.bf16.mxu0 0
  %3105 = vmatpush1.bf16.msra.mxu0 %v3090
  %3106 = vmatprep.subr.bf16.mxu0 0
  %3107 = vmatpush1.bf16.msra.mxu0 0
  %3108 = vmatprep.subr.bf16.mxu0 0
  %3109 = vmatpush1.bf16.msra.mxu0 0
  %3110 = vmatprep.subr.bf16.mxu0 0
  %3111 = vmatpush1.bf16.msra.mxu0 0
  %3112 = vmatprep.subr.bf16.mxu0 0
  %3113 = vmatpush1.bf16.msra.mxu0 0
  %3114 = vmatprep.subr.bf16.mxu0 0
  %3115 = vmatpush1.bf16.msra.mxu0 0
  %3116 = vmatprep.subr.bf16.mxu0 0
  %3117 = vmatpush1.bf16.msra.mxu0 0
  %3118 = vmatprep.subr.bf16.mxu0 0
  %3119 = vmatpush1.bf16.msra.mxu0 0
  %3120 = vmatprep.subr.bf16.mxu0 0
  %3121 = vmatpush1.bf16.msra.mxu0 0
  %3122 = vmatprep.subr.bf16.mxu0 0
  %3123 = vmatpush1.bf16.msra.mxu0 0
  %3124 = vmatprep.subr.bf16.mxu0 0
  %3125 = vmatpush1.bf16.msra.mxu0 0
  %3126 = vmatprep.subr.bf16.mxu0 0
  %3127 = vmatpush1.bf16.msra.mxu0 0
  %3128 = vmatprep.subr.bf16.mxu0 0
  %3129 = vmatpush1.bf16.msra.mxu0 0
  %3130 = vmatprep.mubr.bf16.mxu0 0
  %3131 = vmatmul.mubr.bf16.gmra.mrb[0].mxu0 %v3096
  %v3132 = vpop.f32.mrb[0].mxu0
  %v3133 = vadd.f32 %v3066, %v3132
  %v3134 = vpop.f32.mrb[0].mxu0
  %v3135 = vpop.f32.mrb[0].mxu0
  %v3136 = vpop.f32.mrb[0].mxu0
  %3137 = vdwg.mxu0
  %v3138 = vld [vmem:[%s5] sm:$0x1]
  %v3140 = vlaneseq
  %v3141 = vshrl.u32 %v3140, 7
  %v3142 = vsub.s32 0, %v3141
  %v3143 = vrot.slane %v3138, %v3142
  %v3145 = vadd.f32 %v3133, %v3143
  %v3146 = vxor.u32 %v3145, 2147483648
  %v3147 = vmul.f32 %v3146, 1.442695
  %v3148 = vpow.pop %v3147
  %v3149 = vadd.f32 %v3148, 1.0
  %v3150 = vrcp.pop %v3149
  %v3151 = vmul.f32 1.0, %v3150
  %v3152 = vtanh.pop %v3145
  %v3153 = vld [vmem:[#allocation3] sm:$0x3]
  %3155 = vrot.lane.b32.xlu0 %v3153, 32
  %v3156 = vpop.permute.xlu0 %3155
  %v3158 = vmul.f32 %v3151, %v3156
  %3160 = vrot.lane.b32.xlu0 %v3152, 64
  %v3161 = vpop.permute.xlu0 %3160
  %v3163 = vmul.f32 %v3151, %v3161
  %3165 = vrot.lane.b32.xlu0 %v3163, 32
  %v3166 = vpop.permute.xlu0 %3165
  %v3168 = vadd.f32 %v3158, %v3166
  %v3169 = vtanh.pop %v3168
  %3171 = vrot.lane.b32.xlu0 %v3169, 64
  %v3172 = vpop.permute.xlu0 %3171
  %v3174 = vmul.f32 %v3151, %v3172
  %v3175 = vsel %vm2998, 1, 0
  %3176 = vset.pattern.permute.xlu0 0
  %3177 = vperm.xlu0 %3176, %v3175
  %v3178 = vpop.permute.xlu0 %3177
  %vm3179 = vcmp.eq.s32.totalorder %v3178, 1
  %v3180 = vsel %vm3179, %v3168, %v3156
  %3182 = vrot.lane.b32.xlu0 %v3180, 96
  %v3183 = vpop.permute.xlu0 %3182
  %3185 = vst.msk [vmem:[#allocation3] sm:$0x3] %vm273, %v3183
  %v3186 = vld [vmem:[#allocation2] sm:$0x3]
  %3188 = vrot.lane.b32.xlu0 %v3186, 96
  %v3189 = vpop.permute.xlu0 %3188
  %v3191 = vsel %vm3179, %v3174, %v3189
  %3193 = vrot.lane.b32.xlu0 %v3191, 32
  %v3194 = vpop.permute.xlu0 %3193
  %3196 = vst.msk [vmem:[#allocation2] sm:$0x3] %vm273, %v3194
  %v3197 = vsel %vm3179, %v3174, 0.0
  %3199 = vrot.lane.b32.xlu0 %v3197, 32
  %v3200 = vpop.permute.xlu0 %3199
  %s3202 = scalar_lea.vmem %s9, 14
  %3203 = vst.msk [vmem:[%s3202] sm:$0x3] %vm273, %v3200
  %v3204 = vstv %s83
  %vm3205 = vcmp.lt.s32.totalorder %v3204, %v80
  %v3206 = vld [vmem:[%s59] sm:$0x3]
  %v3207 = vpack.c.bf16 %v3206, %v3206
  %v3208 = vld [vmem:[%s4] sm:$0xf]
  %v3209 = vld [vmem:[%s4 + $0x4] sm:$0xf]
  %v3210 = vld [vmem:[%s4 + $0x8] sm:$0xf]
  %v3211 = vld [vmem:[%s4 + $0xc] sm:$0xf]
  %v3212 = vld [vmem:[%s4 + $0x10] sm:$0xf]
  %v3213 = vld [vmem:[%s4 + $0x14] sm:$0xf]
  %v3214 = vld [vmem:[%s4 + $0x18] sm:$0xf]
  %v3215 = vld [vmem:[%s4 + $0x1c] sm:$0xf]
  %v3216 = vld [vmem:[#allocation4] sm:$0x3]
  %v3217 = vpack.c.bf16 %v3216, %v3216
  %v3218 = vld [vmem:[%s8] sm:$0xf]
  %v3219 = vld [vmem:[%s8 + $0x4] sm:$0xf]
  %v3220 = vld [vmem:[%s8 + $0x8] sm:$0xf]
  %v3221 = vld [vmem:[%s8 + $0xc] sm:$0xf]
  %v3226 = vunpack.c.l.b16 %v3218
  %v3227 = vunpack.c.l.b16 %v3219
  %v3228 = vunpack.c.l.b16 %v3220
  %v3229 = vunpack.c.l.b16 %v3221
  %v3230 = vpack.c.b16 %v3227, %v3226
  %v3231 = vpack.c.b16 %v3229, %v3228
  %v3235 = vsel %vm114, %v3217, 0
  %3237 = vmatprep.subr.bf16.mxu0 0
  %3238 = vmatpush1.bf16.msra.mxu0 %v3230
  %3239 = vmatprep.subr.bf16.mxu0 0
  %3240 = vmatpush1.bf16.msra.mxu0 %v3231
  %3241 = vmatprep.subr.bf16.mxu0 0
  %3242 = vmatpush1.bf16.msra.mxu0 0
  %3243 = vmatprep.subr.bf16.mxu0 0
  %3244 = vmatpush1.bf16.msra.mxu0 0
  %3245 = vmatprep.subr.bf16.mxu0 0
  %3246 = vmatpush1.bf16.msra.mxu0 0
  %3247 = vmatprep.subr.bf16.mxu0 0
  %3248 = vmatpush1.bf16.msra.mxu0 0
  %3249 = vmatprep.subr.bf16.mxu0 0
  %3250 = vmatpush1.bf16.msra.mxu0 0
  %3251 = vmatprep.subr.bf16.mxu0 0
  %3252 = vmatpush1.bf16.msra.mxu0 0
  %3253 = vmatprep.subr.bf16.mxu0 0
  %3254 = vmatpush1.bf16.msra.mxu0 0
  %3255 = vmatprep.subr.bf16.mxu0 0
  %3256 = vmatpush1.bf16.msra.mxu0 0
  %3257 = vmatprep.subr.bf16.mxu0 0
  %3258 = vmatpush1.bf16.msra.mxu0 0
  %3259 = vmatprep.subr.bf16.mxu0 0
  %3260 = vmatpush1.bf16.msra.mxu0 0
  %3261 = vmatprep.subr.bf16.mxu0 0
  %3262 = vmatpush1.bf16.msra.mxu0 0
  %3263 = vmatprep.subr.bf16.mxu0 0
  %3264 = vmatpush1.bf16.msra.mxu0 0
  %3265 = vmatprep.subr.bf16.mxu0 0
  %3266 = vmatpush1.bf16.msra.mxu0 0
  %3267 = vmatprep.subr.bf16.mxu0 0
  %3268 = vmatpush1.bf16.msra.mxu0 0
  %3269 = vmatprep.mubr.bf16.mxu0 0
  %3270 = vmatmul.mubr.bf16.gmra.mrb[0].mxu0 %v3235
  %v3271 = vpop.f32.mrb[0].mxu0
  %v3272 = vadd.f32 0.0, %v3271
  %v3273 = vpop.f32.mrb[0].mxu0
  %v3274 = vpop.f32.mrb[0].mxu0
  %v3275 = vpop.f32.mrb[0].mxu0
  %3276 = vdwg.mxu0
  %v3285 = vunpack.c.l.b16 %v3208
  %v3286 = vunpack.c.l.b16 %v3209
  %v3287 = vunpack.c.l.b16 %v3210
  %v3288 = vunpack.c.l.b16 %v3211
  %v3289 = vunpack.c.l.b16 %v3212
  %v3290 = vunpack.c.l.b16 %v3213
  %v3291 = vunpack.c.l.b16 %v3214
  %v3292 = vunpack.c.l.b16 %v3215
  %v3293 = vpack.c.b16 %v3286, %v3285
  %v3294 = vpack.c.b16 %v3288, %v3287
  %v3295 = vpack.c.b16 %v3290, %v3289
  %v3296 = vpack.c.b16 %v3292, %v3291
  %v3302 = vsel %vm182, %v3207, 0
  %3304 = vmatprep.subr.bf16.mxu0 0
  %3305 = vmatpush1.bf16.msra.mxu0 %v3293
  %3306 = vmatprep.subr.bf16.mxu0 0
  %3307 = vmatpush1.bf16.msra.mxu0 %v3294
  %3308 = vmatprep.subr.bf16.mxu0 0
  %3309 = vmatpush1.bf16.msra.mxu0 %v3295
  %3310 = vmatprep.subr.bf16.mxu0 0
  %3311 = vmatpush1.bf16.msra.mxu0 %v3296
  %3312 = vmatprep.subr.bf16.mxu0 0
  %3313 = vmatpush1.bf16.msra.mxu0 0
  %3314 = vmatprep.subr.bf16.mxu0 0
  %3315 = vmatpush1.bf16.msra.mxu0 0
  %3316 = vmatprep.subr.bf16.mxu0 0
  %3317 = vmatpush1.bf16.msra.mxu0 0
  %3318 = vmatprep.subr.bf16.mxu0 0
  %3319 = vmatpush1.bf16.msra.mxu0 0
  %3320 = vmatprep.subr.bf16.mxu0 0
  %3321 = vmatpush1.bf16.msra.mxu0 0
  %3322 = vmatprep.subr.bf16.mxu0 0
  %3323 = vmatpush1.bf16.msra.mxu0 0
  %3324 = vmatprep.subr.bf16.mxu0 0
  %3325 = vmatpush1.bf16.msra.mxu0 0
  %3326 = vmatprep.subr.bf16.mxu0 0
  %3327 = vmatpush1.bf16.msra.mxu0 0
  %3328 = vmatprep.subr.bf16.mxu0 0
  %3329 = vmatpush1.bf16.msra.mxu0 0
  %3330 = vmatprep.subr.bf16.mxu0 0
  %3331 = vmatpush1.bf16.msra.mxu0 0
  %3332 = vmatprep.subr.bf16.mxu0 0
  %3333 = vmatpush1.bf16.msra.mxu0 0
  %3334 = vmatprep.subr.bf16.mxu0 0
  %3335 = vmatpush1.bf16.msra.mxu0 0
  %3336 = vmatprep.mubr.bf16.mxu0 0
  %3337 = vmatmul.mubr.bf16.gmra.mrb[0].mxu0 %v3302
  %v3338 = vpop.f32.mrb[0].mxu0
  %v3339 = vadd.f32 %v3272, %v3338
  %v3340 = vpop.f32.mrb[0].mxu0
  %v3341 = vpop.f32.mrb[0].mxu0
  %v3342 = vpop.f32.mrb[0].mxu0
  %3343 = vdwg.mxu0
  %v3344 = vld [vmem:[%s6] sm:$0x1]
  %v3346 = vlaneseq
  %v3347 = vshrl.u32 %v3346, 7
  %v3348 = vsub.s32 0, %v3347
  %v3349 = vrot.slane %v3344, %v3348
  %v3351 = vadd.f32 %v3339, %v3349
  %v3352 = vxor.u32 %v3351, 2147483648
  %v3353 = vmul.f32 %v3352, 1.442695
  %v3354 = vpow.pop %v3353
  %v3355 = vadd.f32 %v3354, 1.0
  %v3356 = vrcp.pop %v3355
  %v3357 = vmul.f32 1.0, %v3356
  %v3358 = vtanh.pop %v3351
  %v3359 = vld [vmem:[#allocation5] sm:$0x3]
  %3361 = vrot.lane.b32.xlu0 %v3359, 32
  %v3362 = vpop.permute.xlu0 %3361
  %v3364 = vmul.f32 %v3357, %v3362
  %3366 = vrot.lane.b32.xlu0 %v3358, 64
  %v3367 = vpop.permute.xlu0 %3366
  %v3369 = vmul.f32 %v3357, %v3367
  %3371 = vrot.lane.b32.xlu0 %v3369, 32
  %v3372 = vpop.permute.xlu0 %3371
  %v3374 = vadd.f32 %v3364, %v3372
  %v3375 = vtanh.pop %v3374
  %3377 = vrot.lane.b32.xlu0 %v3375, 64
  %v3378 = vpop.permute.xlu0 %3377
  %v3380 = vmul.f32 %v3357, %v3378
  %v3381 = vsel %vm3205, 1, 0
  %3382 = vset.pattern.permute.xlu0 0
  %3383 = vperm.xlu0 %3382, %v3381
  %v3384 = vpop.permute.xlu0 %3383
  %vm3385 = vcmp.eq.s32.totalorder %v3384, 1
  %v3386 = vsel %vm3385, %v3374, %v3362
  %3388 = vrot.lane.b32.xlu0 %v3386, 96
  %v3389 = vpop.permute.xlu0 %3388
  %3391 = vst.msk [vmem:[#allocation5] sm:$0x3] %vm273, %v3389
  %v3392 = vld [vmem:[#allocation4] sm:$0x3]
  %3394 = vrot.lane.b32.xlu0 %v3392, 96
  %v3395 = vpop.permute.xlu0 %3394
  %v3397 = vsel %vm3385, %v3380, %v3395
  %3399 = vrot.lane.b32.xlu0 %v3397, 32
  %v3400 = vpop.permute.xlu0 %3399
  %3402 = vst.msk [vmem:[#allocation4] sm:$0x3] %vm273, %v3400
  %v3403 = vsel %vm3385, %v3380, 0.0
  %3405 = vrot.lane.b32.xlu0 %v3403, 32
  %v3406 = vpop.permute.xlu0 %3405
  %3408 = vst.msk [vmem:[%s67] sm:$0x3] %vm273, %v3406
  %s3409 = ssub.s32 0, 0
  %s3410 = smul.u32 8, %s3409
  %p3411 = scmp.lt.s32.totalorder %s3410, 7
  %s3412 = scalar_select %p3411, %s3410, 7
  %s3413 = smul.addr %s3412, 2
  %s3414 = scalar_lea.vmem %s10, %s3413
  // Predicated region
  $region42: #{bilstm_cls_forward.4} parent=0 // pred_check
    _
  $region43: #{bilstm_cls_forward.4} parent=0 // pred_check_branch
    %3416 = sbr.rel (0) target = $region45
  $region44: #{bilstm_cls_forward.4} parent=0 // pred_region
    _
  $region45: #{bilstm_cls_forward.4} parent=0 // pred_fallthru
    _
  // Predicated region
  $region46: #{bilstm_cls_forward.4} parent=0 // pred_check
    _
  $region47: #{bilstm_cls_forward.4} parent=0 // pred_check_branch
    %3418 = sbr.rel (0) target = $region49
  $region48: #{bilstm_cls_forward.4} parent=0 // pred_region
    %s3419 = ssub.s32 0, 0
    %s3420 = smul.u32 8, %s3419
  $region49: #{bilstm_cls_forward.4} parent=0 // pred_fallthru
    _
  // Predicated region
  $region50: #{bilstm_cls_forward.4} parent=0 // pred_check
    _
  $region51: #{bilstm_cls_forward.4} parent=0 // pred_check_branch
    %3422 = sbr.rel (0) target = $region53
  $region52: #{bilstm_cls_forward.4} parent=0 // pred_region
    _
  $region53: #{bilstm_cls_forward.4} parent=0 // pred_fallthru
    _
  // Predicated region
  $region54: #{bilstm_cls_forward.4} parent=0 // pred_check
    _
  $region55: #{bilstm_cls_forward.4} parent=0 // pred_check_branch
    %3424 = sbr.rel (0) target = $region57
  $region56: #{bilstm_cls_forward.4} parent=0 // pred_region
    %s3425 = ssub.s32 0, 0
    %s3426 = smul.u32 8, %s3425
    %p3427 = scmp.lt.s32.totalorder %s3426, 7
    %s3428 = scalar_select %p3427, %s3426, 7
    %s3429 = smul.addr %s3428, 2
    %s3430 = scalar_lea.vmem %s10, %s3429
  $region57: #{bilstm_cls_forward.4} parent=0 // pred_fallthru
    _

</llo_original>
